<compile_context>
chip_gen: v7x
topology: tpu7x:2x2x1
jax: 0.10.0
libtpu: 0.0.40
codegen_flags: <defaults>
</compile_context>

<pallas_src>
import functools
import math

import jax
import jax.numpy as jnp
from jax.experimental import pallas as pl
from jax.experimental.pallas import tpu as pltpu

# ----------------------------- small config ---------------------------------
HIDDEN = 32          # analog of 768
NUM_HEADS = 4
HEAD_DIM = HIDDEN // NUM_HEADS
FFN = 128            # 4 * HIDDEN (BERT intermediate)
VOCAB = 128
MAX_POS = 16
SEQ = 8
BATCH = 2
N_LAYERS = 12
PEACOCK_DIM = 4      # pw  (module default 32, scaled down)
PEACOCK_I = 10       # pi
N_GROUPS = 8
GROUP_EMB_DIM = 48   # analog of 768 + 128 (gating MLP input width)
MLP_HIDDEN = 64      # analog of 512
LN_EPS = 1e-12

_WNAMES = ("qkv_w", "qkv_b", "ao_w", "ao_b", "ln1_g", "ln1_b",
           "i_w", "i_b", "o_w", "o_b", "ln2_g", "ln2_b")
_WSHAPES = {
    "qkv_w": (HIDDEN, 3 * HIDDEN), "qkv_b": (1, 3 * HIDDEN),
    "ao_w": (HIDDEN, HIDDEN), "ao_b": (1, HIDDEN),
    "ln1_g": (1, HIDDEN), "ln1_b": (1, HIDDEN),
    "i_w": (HIDDEN, FFN), "i_b": (1, FFN),
    "o_w": (FFN, HIDDEN), "o_b": (1, HIDDEN),
    "ln2_g": (1, HIDDEN), "ln2_b": (1, HIDDEN),
}

# --------------------------- in-kernel helpers --------------------------------


def _layernorm_val(x, g, b):
    mu = jnp.mean(x, axis=-1, keepdims=True)
    var = jnp.mean((x - mu) ** 2, axis=-1, keepdims=True)
    return (x - mu) * jax.lax.rsqrt(var + LN_EPS) * g + b


def _layer_body(x, mask_bias, qkv_w, qkv_b, ao_w, ao_b,
                ln1_g, ln1_b, i_w, i_b, o_w, o_b, ln2_g, ln2_b):
    """One full BERT encoder layer on an (M, H) activation slab."""
    M, H = x.shape
    nb = M // SEQ                                   # batch rows in this block
    # fused Q/K/V projection: one MXU push instead of three.
    qkv = jnp.dot(x, qkv_w, preferred_element_type=jnp.float32) + qkv_b
    q = qkv[:, :H].reshape(nb, SEQ, H)
    k = qkv[:, H:2 * H].reshape(nb, SEQ, H)
    v = qkv[:, 2 * H:].reshape(nb, SEQ, H)

    scale = 1.0 / math.sqrt(HEAD_DIM)
    attn = jnp.zeros((M, H), jnp.float32)
    for h in range(NUM_HEADS):                      # static unrolled head loop
        sl = slice(h * HEAD_DIM, (h + 1) * HEAD_DIM)
        s = jnp.einsum("bqd,bkd->bqk", q[:, :, sl], k[:, :, sl],
                       preferred_element_type=jnp.float32) * scale
        s = s + mask_bias                           # (nb, 1, S) additive bias
        s = s - jnp.max(s, axis=-1, keepdims=True)
        p = jnp.exp(s)
        p = p * pl.reciprocal(jnp.sum(p, axis=-1, keepdims=True), approx=True)
        ctx = jnp.einsum("bqk,bkd->bqd", p, v[:, :, sl],
                         preferred_element_type=jnp.float32)
        # fold the per-head slice of the attention-output projection in here,
        # so heads are merged by accumulation (no concat / transpose).
        attn = attn + jnp.dot(ctx.reshape(M, HEAD_DIM), ao_w[sl, :],
                              preferred_element_type=jnp.float32)
    attn = attn + ao_b

    h1 = _layernorm_val(attn + x, ln1_g, ln1_b)
    # TODO(synk): PyTorch nn.GELU default is exact erf-GELU; tanh approximation
    # is used here for robust Mosaic lowering (numerically ~equal).
    inter = jax.nn.gelu(
        jnp.dot(h1, i_w, preferred_element_type=jnp.float32) + i_b,
        approximate=True)
    out = jnp.dot(inter, o_w, preferred_element_type=jnp.float32) + o_b
    return _layernorm_val(out + h1, ln2_g, ln2_b)


# ------------------------------ Pallas kernels --------------------------------


def _encoder_kernel(mask_ref, x_ref,
                    qkv_w_ref, qkv_b_ref, ao_w_ref, ao_b_ref,
                    ln1_g_ref, ln1_b_ref, i_w_ref, i_b_ref,
                    o_w_ref, o_b_ref, ln2_g_ref, ln2_b_ref,
                    o_ref):
    # grid = (batch, n_layers); o_ref is the VMEM-resident carried activation.
    layer = pl.program_id(1)

    @pl.when(layer == 0)
    def _():
        o_ref[...] = x_ref[...]

    x = o_ref[...]
    o_ref[...] = _layer_body(
        x, mask_ref[...],
        qkv_w_ref[0], qkv_b_ref[0], ao_w_ref[0], ao_b_ref[0],
        ln1_g_ref[0], ln1_b_ref[0], i_w_ref[0], i_b_ref[0],
        o_w_ref[0], o_b_ref[0], ln2_g_ref[0], ln2_b_ref[0])


def _peacock_kernel(mask_ref, gate_ref, x_ref,
                    qkv_w_ref, qkv_b_ref, ao_w_ref, ao_b_ref,
                    ln1_g_ref, ln1_b_ref, i_w_ref, i_b_ref,
                    o_w_ref, o_b_ref, ln2_g_ref, ln2_b_ref,
                    o_ref):
    # grid = (batch, n_experts); o_ref accumulates the gate-weighted mixture.
    expert = pl.program_id(1)

    @pl.when(expert == 0)
    def _():
        o_ref[...] = jnp.zeros_like(o_ref)

    y = _layer_body(
        x_ref[...], mask_ref[...],
        qkv_w_ref[0], qkv_b_ref[0], ao_w_ref[0], ao_b_ref[0],
        ln1_g_ref[0], ln1_b_ref[0], i_w_ref[0], i_b_ref[0],
        o_w_ref[0], o_b_ref[0], ln2_g_ref[0], ln2_b_ref[0])
    o_ref[...] = o_ref[...] + gate_ref[0] * y        # gate_ref[0]: (S, 1)


def _layernorm_kernel(x_ref, g_ref, b_ref, o_ref):
    o_ref[...] = _layernorm_val(x_ref[...], g_ref[...], b_ref[...])


def _gate_mlp_kernel(g_ref, w1_ref, b1_ref, w2_ref, b2_ref, o_ref):
    # mlp = Linear -> GELU -> Linear -> Softmax(dim=1)
    h = (jnp.dot(g_ref[...], w1_ref[...], preferred_element_type=jnp.float32)
         + b1_ref[...])
    h = jax.nn.gelu(h, approximate=True)
    z = (jnp.dot(h, w2_ref[...], preferred_element_type=jnp.float32)
         + b2_ref[...])
    z = z - jnp.max(z, axis=-1, keepdims=True)
    e = jnp.exp(z)
    o_ref[...] = e * pl.reciprocal(jnp.sum(e, axis=-1, keepdims=True),
                                   approx=True)


def _mlm_head_loss_kernel(x_ref, tw_ref, tb_ref, lg_ref, lb_ref,
                          dw_ref, db_ref, lab_ref, o_ref):
    # cls transform (dense + GELU + LN), vocab decoder, masked-LM CE loss.
    x = x_ref[...]
    t = jax.nn.gelu(
        jnp.dot(x, tw_ref[...], preferred_element_type=jnp.float32)
        + tb_ref[...], approximate=True)
    t = _layernorm_val(t, lg_ref[...], lb_ref[...])
    logits = (jnp.dot(t, dw_ref[...], preferred_element_type=jnp.float32)
              + db_ref[...])                                   # (M, V)
    m = jnp.max(logits, axis=-1, keepdims=True)
    lse = m + jnp.log(jnp.sum(jnp.exp(logits - m), axis=-1, keepdims=True))
    lab = lab_ref[...]                                         # (M, 1) int32
    col = jax.lax.broadcasted_iota(jnp.int32, logits.shape, 1)
    tgt = jnp.sum(jnp.where(col == lab, logits, 0.0), axis=-1, keepdims=True)
    valid = (lab >= 0).astype(jnp.float32)   # CrossEntropyLoss ignore_index<0
    per_row = (lse - tgt) * valid
    total = jnp.sum(per_row, keepdims=True)                    # (1, 1)
    count = jnp.sum(valid, keepdims=True)                      # (1, 1)
    o_ref[...] = total / jnp.maximum(count, 1.0)


# --------------------------- pallas_call wrappers ------------------------------


def _full_spec(shape):
    return pl.BlockSpec(shape, lambda i, _n=len(shape): (0,) * _n)


def _stacked_weight_specs():
    specs = []
    for name in _WNAMES:
        shape = _WSHAPES[name]
        nd = len(shape)
        specs.append(pl.BlockSpec((1,) + shape,
                                  lambda b, l, _nd=nd: (l,) + (0,) * _nd))
    return specs


def pallas_encoder_stack(x2, mask_bias, stack):
    n_layers = stack["qkv_w"].shape[0]
    if n_layers == 0:
        return x2
    M, H = x2.shape
    B = M // SEQ
    in_specs = [
        pl.BlockSpec((1, 1, SEQ), lambda b, l: (b, 0, 0)),     # mask bias
        pl.BlockSpec((SEQ, H), lambda b, l: (b, 0)),           # input x
    ] + _stacked_weight_specs()
    return pl.pallas_call(
        _encoder_kernel,
        grid=(B, n_layers),
        in_specs=in_specs,
        out_specs=pl.BlockSpec((SEQ, H), lambda b, l: (b, 0)),
        out_shape=jax.ShapeDtypeStruct((M, H), jnp.float32),
        compiler_params=pltpu.CompilerParams(
            dimension_semantics=("parallel", "arbitrary")),
    )(mask_bias, x2, *[stack[name] for name in _WNAMES])


def pallas_peacock(x2, mask_bias, gate_tok, stack):
    n_exp = stack["qkv_w"].shape[0]
    M, H = x2.shape
    B = M // SEQ
    in_specs = [
        pl.BlockSpec((1, 1, SEQ), lambda b, j: (b, 0, 0)),     # mask bias
        pl.BlockSpec((1, SEQ, 1), lambda b, j: (j, b, 0)),     # per-token gate
        pl.BlockSpec((SEQ, H), lambda b, j: (b, 0)),           # shared input x
    ] + _stacked_weight_specs()
    return pl.pallas_call(
        _peacock_kernel,
        grid=(B, n_exp),
        in_specs=in_specs,
        out_specs=pl.BlockSpec((SEQ, H), lambda b, j: (b, 0)),
        out_shape=jax.ShapeDtypeStruct((M, H), jnp.float32),
        compiler_params=pltpu.CompilerParams(
            dimension_semantics=("parallel", "arbitrary")),
    )(mask_bias, gate_tok, x2, *[stack[name] for name in _WNAMES])


def pallas_layernorm(x, gamma, beta):
    M, H = x.shape
    return pl.pallas_call(
        _layernorm_kernel,
        grid=(1,),
        in_specs=[_full_spec((M, H)), _full_spec((1, H)), _full_spec((1, H))],
        out_specs=_full_spec((M, H)),
        out_shape=jax.ShapeDtypeStruct((M, H), jnp.float32),
    )(x, gamma.reshape(1, H), beta.reshape(1, H))


def pallas_gate_mlp(gr, w1, b1, w2, b2):
    B, GE = gr.shape
    MH = w1.shape[1]
    PW = w2.shape[1]
    return pl.pallas_call(
        _gate_mlp_kernel,
        grid=(1,),
        in_specs=[_full_spec((B, GE)), _full_spec((GE, MH)), _full_spec((1, MH)),
                  _full_spec((MH, PW)), _full_spec((1, PW))],
        out_specs=_full_spec((B, PW)),
        out_shape=jax.ShapeDtypeStruct((B, PW), jnp.float32),
    )(gr, w1, b1.reshape(1, MH), w2, b2.reshape(1, PW))


def pallas_mlm_head_loss(x2, t_w, t_b, ln_g, ln_b, d_w, d_b, labels2):
    M, H = x2.shape
    V = d_w.shape[1]
    return pl.pallas_call(
        _mlm_head_loss_kernel,
        grid=(1,),
        in_specs=[_full_spec((M, H)),
                  _full_spec((H, H)), _full_spec((1, H)),
                  _full_spec((1, H)), _full_spec((1, H)),
                  _full_spec((H, V)), _full_spec((1, V)),
                  _full_spec((M, 1))],
        out_specs=_full_spec((1, 1)),
        out_shape=jax.ShapeDtypeStruct((1, 1), jnp.float32),
    )(x2, t_w, t_b.reshape(1, H), ln_g.reshape(1, H), ln_b.reshape(1, H),
      d_w, d_b.reshape(1, V), labels2)


# ------------------------------- parameters ------------------------------------


def _dense(key, fan_in, fan_out):
    w = jax.random.normal(key, (fan_in, fan_out), dtype=jnp.float32) * 0.02
    b = jnp.zeros((fan_out,), dtype=jnp.float32)
    return w, b


def _init_layer(key):
    ks = jax.random.split(key, 6)
    p = {}
    p["q_w"], p["q_b"] = _dense(ks[0], HIDDEN, HIDDEN)
    p["k_w"], p["k_b"] = _dense(ks[1], HIDDEN, HIDDEN)
    p["v_w"], p["v_b"] = _dense(ks[2], HIDDEN, HIDDEN)
    p["ao_w"], p["ao_b"] = _dense(ks[3], HIDDEN, HIDDEN)
    p["ln1_g"] = jnp.ones((HIDDEN,), jnp.float32)
    p["ln1_b"] = jnp.zeros((HIDDEN,), jnp.float32)
    p["i_w"], p["i_b"] = _dense(ks[4], HIDDEN, FFN)
    p["o_w"], p["o_b"] = _dense(ks[5], FFN, HIDDEN)
    p["ln2_g"] = jnp.ones((HIDDEN,), jnp.float32)
    p["ln2_b"] = jnp.zeros((HIDDEN,), jnp.float32)
    return p


def init_params(key):
    ks = jax.random.split(key, 10)
    p = {}
    p["word_emb"] = jax.random.normal(ks[0], (VOCAB, HIDDEN), jnp.float32) * 0.02
    p["pos_emb"] = jax.random.normal(ks[1], (MAX_POS, HIDDEN), jnp.float32) * 0.02
    p["type_emb"] = jax.random.normal(ks[2], (2, HIDDEN), jnp.float32) * 0.02
    p["emb_ln_g"] = jnp.ones((HIDDEN,), jnp.float32)
    p["emb_ln_b"] = jnp.zeros((HIDDEN,), jnp.float32)
    p["layers"] = [_init_layer(k) for k in jax.random.split(ks[3], N_LAYERS)]
    # peacock = pw deep copies of encoder layer `pi` (identical weights, as in
    # copy.deepcopy of the pretrained layer).
    p["peacock"] = [
        jax.tree_util.tree_map(lambda a: a, p["layers"][PEACOCK_I])
        for _ in range(PEACOCK_DIM)
    ]
    p["group_emb"] = jax.random.normal(ks[4], (N_GROUPS, GROUP_EMB_DIM),
                                       jnp.float32)
    p["mlp_w1"], p["mlp_b1"] = _dense(ks[5], GROUP_EMB_DIM, MLP_HIDDEN)
    p["mlp_w2"], p["mlp_b2"] = _dense(ks[6], MLP_HIDDEN, PEACOCK_DIM)
    # MLM head (cls): transform dense + GELU + LN, then decoder to vocab.
    p["cls_t_w"], p["cls_t_b"] = _dense(ks[7], HIDDEN, HIDDEN)
    p["cls_ln_g"] = jnp.ones((HIDDEN,), jnp.float32)
    p["cls_ln_b"] = jnp.zeros((HIDDEN,), jnp.float32)
    p["cls_d_w"], p["cls_d_b"] = _dense(ks[8], HIDDEN, VOCAB)
    return p


def _stack_layer_params(layer_list):
    """Merge Q/K/V and stack all per-layer weights along a leading axis."""
    def one(p):
        return dict(
            qkv_w=jnp.concatenate([p["q_w"], p["k_w"], p["v_w"]], axis=1),
            qkv_b=jnp.concatenate([p["q_b"], p["k_b"], p["v_b"]])[None, :],
            ao_w=p["ao_w"], ao_b=p["ao_b"][None, :],
            ln1_g=p["ln1_g"][None, :], ln1_b=p["ln1_b"][None, :],
            i_w=p["i_w"], i_b=p["i_b"][None, :],
            o_w=p["o_w"], o_b=p["o_b"][None, :],
            ln2_g=p["ln2_g"][None, :], ln2_b=p["ln2_b"][None, :],
        )
    per = [one(p) for p in layer_list]
    return {k: jnp.stack([d[k] for d in per], axis=0) for k in _WNAMES}


def prepare_model(params):
    keep = ("word_emb", "pos_emb", "type_emb", "emb_ln_g", "emb_ln_b",
            "group_emb", "mlp_w1", "mlp_b1", "mlp_w2", "mlp_b2",
            "cls_t_w", "cls_t_b", "cls_ln_g", "cls_ln_b", "cls_d_w", "cls_d_b")
    model = {k: params[k] for k in keep}
    model["enc"] = _stack_layer_params(params["layers"])
    model["peacock"] = _stack_layer_params(params["peacock"])
    return model


def _slice_stack(stack, lo, hi):
    return {k: v[lo:hi] for k, v in stack.items()}


# ------------------------------- forward pass ----------------------------------


def bert_embeddings(model, input_ids):
    B, S = input_ids.shape
    we = jnp.take(model["word_emb"], input_ids, axis=0)          # (B, S, H)
    pe = model["pos_emb"][:S][None, :, :]                        # (1, S, H)
    te = model["type_emb"][0][None, None, :]                     # (1, 1, H)
    x = (we + pe + te).reshape(B * S, HIDDEN)
    return pallas_layernorm(x, model["emb_ln_g"], model["emb_ln_b"])


def bert_peacock_forward(model, input_ids, attention_mask, labels, group_ids):
    B, S = input_ids.shape
    # HF get_extended_attention_mask: additive large negative on masked keys.
    mask_bias = (1.0 - attention_mask.astype(jnp.float32))[:, None, :] * (-1e9)

    x = bert_embeddings(model, input_ids)                        # (B*S, H)

    if group_ids is None:
        # plain BertForMaskedLM path: all 12 original layers in one kernel.
        x = pallas_encoder_stack(x, mask_bias, model["enc"])
    else:
        gr = jnp.take(model["group_emb"], group_ids, axis=0)     # (B, GE)
        gate = pallas_gate_mlp(gr, model["mlp_w1"], model["mlp_b1"],
                               model["mlp_w2"], model["mlp_b2"])  # (B, pw)
        gate_tok = jnp.broadcast_to(
            gate.T[:, :, None], (PEACOCK_DIM, B, S)
        ).reshape(PEACOCK_DIM, B * S, 1)                         # (pw, B*S, 1)
        x = pallas_encoder_stack(x, mask_bias,
                                 _slice_stack(model["enc"], 0, PEACOCK_I))
        x = pallas_peacock(x, mask_bias, gate_tok, model["peacock"])
        x = pallas_encoder_stack(x, mask_bias,
                                 _slice_stack(model["enc"], PEACOCK_I + 1,
                                              N_LAYERS))

    labels2 = labels.reshape(B * S, 1).astype(jnp.int32)
    loss = pallas_mlm_head_loss(x, model["cls_t_w"], model["cls_t_b"],
                                model["cls_ln_g"], model["cls_ln_b"],
                                model["cls_d_w"], model["cls_d_b"], labels2)
    return loss[0, 0]


@functools.partial(jax.jit, static_argnames=("use_groups",))
def loss_fn(model, input_ids, attention_mask, labels, group_ids, use_groups):
    return bert_peacock_forward(
        model, input_ids, attention_mask, labels,
        group_ids if use_groups else None)


# ---------------------------------- main ----------------------------------------

if __name__ == "__main__":
    key = jax.random.PRNGKey(0)
    kp, ki, kl, kg = jax.random.split(key, 4)
    params = init_params(kp)
    model = prepare_model(params)

    input_ids = jax.random.randint(ki, (BATCH, SEQ), 0, VOCAB, dtype=jnp.int32)
    attention_mask = (
        jnp.ones((BATCH, SEQ), dtype=jnp.int32).at[1, SEQ - 2:].set(0)
    )
    labels = jax.random.randint(kl, (BATCH, SEQ), 0, VOCAB, dtype=jnp.int32)
    group_ids = jax.random.randint(kg, (BATCH,), 0, N_GROUPS, dtype=jnp.int32)

    # peacock (group-conditioned) path
    loss = loss_fn(model, input_ids, attention_mask, labels, group_ids, True)
    jax.block_until_ready(loss)
    # group_ids=None path (plain MLM forward)
    loss_plain = loss_fn(model, input_ids, attention_mask, labels, group_ids,
                         False)
    jax.block_until_ready(loss_plain)

    print("KERNEL_OK")
</pallas_src>

<mosaic_0001>
module attributes {stable_mosaic.version = 11 : i64} {
  func.func @_layernorm_kernel(%arg0: i32, %arg1: memref<16x32xf32, #tpu.memory_space<vmem>>, %arg2: memref<1x32xf32, #tpu.memory_space<vmem>>, %arg3: memref<1x32xf32, #tpu.memory_space<vmem>>, %arg4: memref<16x32xf32, #tpu.memory_space<vmem>>) attributes {dimension_semantics = [#tpu.dimension_semantics<arbitrary>], iteration_bounds = array<i64: 1>, scalar_prefetch = 0 : i64, scratch_operands = 0 : i64, tpu.core_type = #tpu.core_type<tc>, window_params = [{pipeline_mode = #tpu.pipeline_mode<synchronous>, transform_indices = @transform_0, window_bounds = array<i64: 16, 32>}, {pipeline_mode = #tpu.pipeline_mode<synchronous>, transform_indices = @transform_1, window_bounds = array<i64: 1, 32>}, {pipeline_mode = #tpu.pipeline_mode<synchronous>, transform_indices = @transform_2, window_bounds = array<i64: 1, 32>}, {pipeline_mode = #tpu.pipeline_mode<synchronous>, transform_indices = @transform_3, window_bounds = array<i64: 16, 32>}]} {
    %c0 = arith.constant 0 : index
    %c0_0 = arith.constant 0 : index
    %0 = vector.load %arg1[%c0, %c0_0] : memref<16x32xf32, #tpu.memory_space<vmem>>, vector<16x32xf32>
    %c0_1 = arith.constant 0 : index
    %c0_2 = arith.constant 0 : index
    %1 = vector.load %arg2[%c0_1, %c0_2] : memref<1x32xf32, #tpu.memory_space<vmem>>, vector<1x32xf32>
    %c0_3 = arith.constant 0 : index
    %c0_4 = arith.constant 0 : index
    %2 = vector.load %arg3[%c0_3, %c0_4] : memref<1x32xf32, #tpu.memory_space<vmem>>, vector<1x32xf32>
    %cst = arith.constant dense<0.000000e+00> : vector<16xf32>
    %3 = vector.multi_reduction <add>, %0, %cst [1] : vector<16x32xf32> to vector<16xf32>
    %4 = vector.shape_cast %3 : vector<16xf32> to vector<16x1xf32>
    %cst_5 = arith.constant 3.200000e+01 : f32
    %5 = vector.broadcast %cst_5 : f32 to vector<16x1xf32>
    %6 = arith.divf %4, %5 : vector<16x1xf32>
    %7 = vector.broadcast %6 : vector<16x1xf32> to vector<16x32xf32>
    %8 = arith.subf %0, %7 : vector<16x32xf32>
    %9 = arith.mulf %8, %8 : vector<16x32xf32>
    %cst_6 = arith.constant dense<0.000000e+00> : vector<16xf32>
    %10 = vector.multi_reduction <add>, %9, %cst_6 [1] : vector<16x32xf32> to vector<16xf32>
    %11 = vector.shape_cast %10 : vector<16xf32> to vector<16x1xf32>
    %cst_7 = arith.constant 3.200000e+01 : f32
    %12 = vector.broadcast %cst_7 : f32 to vector<16x1xf32>
    %13 = arith.divf %11, %12 : vector<16x1xf32>
    %14 = vector.broadcast %6 : vector<16x1xf32> to vector<16x32xf32>
    %15 = arith.subf %0, %14 : vector<16x32xf32>
    %cst_8 = arith.constant 9.99999996E-13 : f32
    %16 = vector.broadcast %cst_8 : f32 to vector<16x1xf32>
    %17 = arith.addf %13, %16 : vector<16x1xf32>
    %18 = math.rsqrt %17 : vector<16x1xf32>
    %19 = vector.broadcast %18 : vector<16x1xf32> to vector<16x32xf32>
    %20 = arith.mulf %15, %19 : vector<16x32xf32>
    %21 = vector.broadcast %1 : vector<1x32xf32> to vector<16x32xf32>
    %22 = arith.mulf %20, %21 : vector<16x32xf32>
    %23 = vector.broadcast %2 : vector<1x32xf32> to vector<16x32xf32>
    %24 = arith.addf %22, %23 : vector<16x32xf32>
    %c0_9 = arith.constant 0 : index
    %c0_10 = arith.constant 0 : index
    %25 = vector.load %arg4[%c0_9, %c0_10] : memref<16x32xf32, #tpu.memory_space<vmem>>, vector<16x32xf32>
    tpu.vector_store %arg4[%c0_9, %c0_10], %24 {strides = array<i32>} : memref<16x32xf32, #tpu.memory_space<vmem>>, vector<16x32xf32>,
    return
  }
  func.func @transform_0(%arg0: i32) -> (i32, i32) {
    %c0_i32 = arith.constant 0 : i32
    %c0_i32_0 = arith.constant 0 : i32
    %c0_i32_1 = arith.constant 0 : i32
    return %c0_i32, %c0_i32_0 : i32, i32
  }
  func.func @transform_1(%arg0: i32) -> (i32, i32) {
    %c0_i32 = arith.constant 0 : i32
    %c0_i32_0 = arith.constant 0 : i32
    %c0_i32_1 = arith.constant 0 : i32
    return %c0_i32, %c0_i32_0 : i32, i32
  }
  func.func @transform_2(%arg0: i32) -> (i32, i32) {
    %c0_i32 = arith.constant 0 : i32
    %c0_i32_0 = arith.constant 0 : i32
    %c0_i32_1 = arith.constant 0 : i32
    return %c0_i32, %c0_i32_0 : i32, i32
  }
  func.func @transform_3(%arg0: i32) -> (i32, i32) {
    %c0_i32 = arith.constant 0 : i32
    %c0_i32_0 = arith.constant 0 : i32
    %c0_i32_1 = arith.constant 0 : i32
    return %c0_i32, %c0_i32_0 : i32, i32
  }
}

module attributes {stable_mosaic.version = 11 : i64} {
  func.func @_encoder_kernel(%arg0: i32, %arg1: i32, %arg2: memref<1x1x8xf32, #tpu.memory_space<vmem>>, %arg3: memref<8x32xf32, #tpu.memory_space<vmem>>, %arg4: memref<1x32x96xf32, #tpu.memory_space<vmem>>, %arg5: memref<1x1x96xf32, #tpu.memory_space<vmem>>, %arg6: memref<1x32x32xf32, #tpu.memory_space<vmem>>, %arg7: memref<1x1x32xf32, #tpu.memory_space<vmem>>, %arg8: memref<1x1x32xf32, #tpu.memory_space<vmem>>, %arg9: memref<1x1x32xf32, #tpu.memory_space<vmem>>, %arg10: memref<1x32x128xf32, #tpu.memory_space<vmem>>, %arg11: memref<1x1x128xf32, #tpu.memory_space<vmem>>, %arg12: memref<1x128x32xf32, #tpu.memory_space<vmem>>, %arg13: memref<1x1x32xf32, #tpu.memory_space<vmem>>, %arg14: memref<1x1x32xf32, #tpu.memory_space<vmem>>, %arg15: memref<1x1x32xf32, #tpu.memory_space<vmem>>, %arg16: memref<8x32xf32, #tpu.memory_space<vmem>>) attributes {dimension_semantics = [#tpu.dimension_semantics<parallel>, #tpu.dimension_semantics<arbitrary>], iteration_bounds = array<i64: 2, 10>, scalar_prefetch = 0 : i64, scratch_operands = 0 : i64, tpu.core_type = #tpu.core_type<tc>, window_params = [{transform_indices = @transform_0, window_bounds = array<i64: 1, 1, 8>}, {transform_indices = @transform_1, window_bounds = array<i64: 8, 32>}, {transform_indices = @transform_2, window_bounds = array<i64: 1, 32, 96>}, {transform_indices = @transform_3, window_bounds = array<i64: 1, 1, 96>}, {transform_indices = @transform_4, window_bounds = array<i64: 1, 32, 32>}, {transform_indices = @transform_5, window_bounds = array<i64: 1, 1, 32>}, {transform_indices = @transform_6, window_bounds = array<i64: 1, 1, 32>}, {transform_indices = @transform_7, window_bounds = array<i64: 1, 1, 32>}, {transform_indices = @transform_8, window_bounds = array<i64: 1, 32, 128>}, {transform_indices = @transform_9, window_bounds = array<i64: 1, 1, 128>}, {transform_indices = @transform_10, window_bounds = array<i64: 1, 128, 32>}, {transform_indices = @transform_11, window_bounds = array<i64: 1, 1, 32>}, {transform_indices = @transform_12, window_bounds = array<i64: 1, 1, 32>}, {transform_indices = @transform_13, window_bounds = array<i64: 1, 1, 32>}, {transform_indices = @transform_14, window_bounds = array<i64: 8, 32>}]} {
    %c0_i32 = arith.constant 0 : i32
    %0 = arith.cmpi eq, %arg1, %c0_i32 : i32
    %1 = arith.extui %0 : i1 to i32
    %c0_i32_0 = arith.constant 0 : i32
    %2 = arith.cmpi ne, %1, %c0_i32_0 : i32
    scf.if %2 {
      %c0_84 = arith.constant 0 : index
      %c0_85 = arith.constant 0 : index
      %199 = vector.load %arg3[%c0_84, %c0_85] : memref<8x32xf32, #tpu.memory_space<vmem>>, vector<8x32xf32>
      %c0_86 = arith.constant 0 : index
      %c0_87 = arith.constant 0 : index
      %200 = vector.load %arg16[%c0_86, %c0_87] : memref<8x32xf32, #tpu.memory_space<vmem>>, vector<8x32xf32>
      tpu.vector_store %arg16[%c0_86, %c0_87], %199 {strides = array<i32>} : memref<8x32xf32, #tpu.memory_space<vmem>>, vector<8x32xf32>,
    } else {
    }
    %c0 = arith.constant 0 : index
    %c0_1 = arith.constant 0 : index
    %3 = vector.load %arg16[%c0, %c0_1] : memref<8x32xf32, #tpu.memory_space<vmem>>, vector<8x32xf32>
    %c0_2 = arith.constant 0 : index
    %c0_3 = arith.constant 0 : index
    %c0_4 = arith.constant 0 : index
    %4 = vector.load %arg2[%c0_2, %c0_3, %c0_4] : memref<1x1x8xf32, #tpu.memory_space<vmem>>, vector<1x1x8xf32>
    %c0_5 = arith.constant 0 : index
    %c0_6 = arith.constant 0 : index
    %c0_7 = arith.constant 0 : index
    %5 = vector.load %arg4[%c0_5, %c0_6, %c0_7] : memref<1x32x96xf32, #tpu.memory_space<vmem>>, vector<1x32x96xf32>
    %6 = vector.shape_cast %5 : vector<1x32x96xf32> to vector<32x96xf32>
    %c0_8 = arith.constant 0 : index
    %c0_9 = arith.constant 0 : index
    %c0_10 = arith.constant 0 : index
    %7 = vector.load %arg5[%c0_8, %c0_9, %c0_10] : memref<1x1x96xf32, #tpu.memory_space<vmem>>, vector<1x1x96xf32>
    %8 = vector.shape_cast %7 : vector<1x1x96xf32> to vector<1x96xf32>
    %c0_11 = arith.constant 0 : index
    %c0_12 = arith.constant 0 : index
    %c0_13 = arith.constant 0 : index
    %9 = vector.load %arg6[%c0_11, %c0_12, %c0_13] : memref<1x32x32xf32, #tpu.memory_space<vmem>>, vector<1x32x32xf32>
    %10 = vector.shape_cast %9 : vector<1x32x32xf32> to vector<32x32xf32>
    %c0_14 = arith.constant 0 : index
    %c0_15 = arith.constant 0 : index
    %c0_16 = arith.constant 0 : index
    %11 = vector.load %arg7[%c0_14, %c0_15, %c0_16] : memref<1x1x32xf32, #tpu.memory_space<vmem>>, vector<1x1x32xf32>
    %12 = vector.shape_cast %11 : vector<1x1x32xf32> to vector<1x32xf32>
    %c0_17 = arith.constant 0 : index
    %c0_18 = arith.constant 0 : index
    %c0_19 = arith.constant 0 : index
    %13 = vector.load %arg8[%c0_17, %c0_18, %c0_19] : memref<1x1x32xf32, #tpu.memory_space<vmem>>, vector<1x1x32xf32>
    %14 = vector.shape_cast %13 : vector<1x1x32xf32> to vector<1x32xf32>
    %c0_20 = arith.constant 0 : index
    %c0_21 = arith.constant 0 : index
    %c0_22 = arith.constant 0 : index
    %15 = vector.load %arg9[%c0_20, %c0_21, %c0_22] : memref<1x1x32xf32, #tpu.memory_space<vmem>>, vector<1x1x32xf32>
    %16 = vector.shape_cast %15 : vector<1x1x32xf32> to vector<1x32xf32>
    %c0_23 = arith.constant 0 : index
    %c0_24 = arith.constant 0 : index
    %c0_25 = arith.constant 0 : index
    %17 = vector.load %arg10[%c0_23, %c0_24, %c0_25] : memref<1x32x128xf32, #tpu.memory_space<vmem>>, vector<1x32x128xf32>
    %18 = vector.shape_cast %17 : vector<1x32x128xf32> to vector<32x128xf32>
    %c0_26 = arith.constant 0 : index
    %c0_27 = arith.constant 0 : index
    %c0_28 = arith.constant 0 : index
    %19 = vector.load %arg11[%c0_26, %c0_27, %c0_28] : memref<1x1x128xf32, #tpu.memory_space<vmem>>, vector<1x1x128xf32>
    %20 = vector.shape_cast %19 : vector<1x1x128xf32> to vector<1x128xf32>
    %c0_29 = arith.constant 0 : index
    %c0_30 = arith.constant 0 : index
    %c0_31 = arith.constant 0 : index
    %21 = vector.load %arg12[%c0_29, %c0_30, %c0_31] : memref<1x128x32xf32, #tpu.memory_space<vmem>>, vector<1x128x32xf32>
    %22 = vector.shape_cast %21 : vector<1x128x32xf32> to vector<128x32xf32>
    %c0_32 = arith.constant 0 : index
    %c0_33 = arith.constant 0 : index
    %c0_34 = arith.constant 0 : index
    %23 = vector.load %arg13[%c0_32, %c0_33, %c0_34] : memref<1x1x32xf32, #tpu.memory_space<vmem>>, vector<1x1x32xf32>
    %24 = vector.shape_cast %23 : vector<1x1x32xf32> to vector<1x32xf32>
    %c0_35 = arith.constant 0 : index
    %c0_36 = arith.constant 0 : index
    %c0_37 = arith.constant 0 : index
    %25 = vector.load %arg14[%c0_35, %c0_36, %c0_37] : memref<1x1x32xf32, #tpu.memory_space<vmem>>, vector<1x1x32xf32>
    %26 = vector.shape_cast %25 : vector<1x1x32xf32> to vector<1x32xf32>
    %c0_38 = arith.constant 0 : index
    %c0_39 = arith.constant 0 : index
    %c0_40 = arith.constant 0 : index
    %27 = vector.load %arg15[%c0_38, %c0_39, %c0_40] : memref<1x1x32xf32, #tpu.memory_space<vmem>>, vector<1x1x32xf32>
    %28 = vector.shape_cast %27 : vector<1x1x32xf32> to vector<1x32xf32>
    %cst = arith.constant dense<0.000000e+00> : vector<8x96xf32>
    %29 = tpu.matmul %3, %6, %cst {dimension_numbers = #tpu.dot_dimension_numbers<[1], [0], [0], [1], [0, 0, 1, 1], [], []>} : vector<8x32xf32>, vector<32x96xf32>, vector<8x96xf32> -> vector<8x96xf32>
    %30 = vector.broadcast %8 : vector<1x96xf32> to vector<8x96xf32>
    %31 = arith.addf %29, %30 : vector<8x96xf32>
    %32 = vector.extract_strided_slice %31 {offsets = [0, 0], sizes = [8, 32], strides = [1, 1]} : vector<8x96xf32> to vector<8x32xf32>
    %33 = vector.shape_cast %32 : vector<8x32xf32> to vector<1x8x32xf32>
    %34 = vector.extract_strided_slice %31 {offsets = [0, 32], sizes = [8, 32], strides = [1, 1]} : vector<8x96xf32> to vector<8x32xf32>
    %35 = vector.shape_cast %34 : vector<8x32xf32> to vector<1x8x32xf32>
    %36 = vector.extract_strided_slice %31 {offsets = [0, 64], sizes = [8, 32], strides = [1, 1]} : vector<8x96xf32> to vector<8x32xf32>
    %37 = vector.shape_cast %36 : vector<8x32xf32> to vector<1x8x32xf32>
    %cst_41 = arith.constant 0.000000e+00 : f32
    %38 = vector.broadcast %cst_41 : f32 to vector<8x32xf32>
    %39 = vector.extract_strided_slice %33 {offsets = [0, 0, 0], sizes = [1, 8, 8], strides = [1, 1, 1]} : vector<1x8x32xf32> to vector<1x8x8xf32>
    %40 = vector.extract_strided_slice %35 {offsets = [0, 0, 0], sizes = [1, 8, 8], strides = [1, 1, 1]} : vector<1x8x32xf32> to vector<1x8x8xf32>
    "tpu.trace_start"() <{level = 10 : i32, message = "bqd,bkd->bqk"}> : () -> ()
    %cst_42 = arith.constant dense<0.000000e+00> : vector<1x8x8xf32>
    %41 = tpu.matmul %39, %40, %cst_42 {dimension_numbers = #tpu.dot_dimension_numbers<[2], [2], [1], [1], [0, 0, 0, 1, 1, 1], [0], [0]>} : vector<1x8x8xf32>, vector<1x8x8xf32>, vector<1x8x8xf32> -> vector<1x8x8xf32>
    "tpu.trace_stop"() : () -> ()
    %cst_43 = arith.constant 0.353553385 : f32
    %42 = vector.broadcast %cst_43 : f32 to vector<1x8x8xf32>
    %43 = arith.mulf %41, %42 : vector<1x8x8xf32>
    %44 = vector.broadcast %4 : vector<1x1x8xf32> to vector<1x8x8xf32>
    %45 = arith.addf %43, %44 : vector<1x8x8xf32>
    %cst_44 = arith.constant dense<0xFF800000> : vector<1x8xf32>
    %46 = vector.multi_reduction <maximumf>, %45, %cst_44 [2] : vector<1x8x8xf32> to vector<1x8xf32>
    %47 = vector.shape_cast %46 : vector<1x8xf32> to vector<1x8x1xf32>
    %48 = vector.broadcast %47 : vector<1x8x1xf32> to vector<1x8x8xf32>
    %49 = arith.subf %45, %48 : vector<1x8x8xf32>
    %50 = math.exp %49 : vector<1x8x8xf32>
    %cst_45 = arith.constant dense<0.000000e+00> : vector<1x8xf32>
    %51 = vector.multi_reduction <add>, %50, %cst_45 [2] : vector<1x8x8xf32> to vector<1x8xf32>
    %52 = vector.shape_cast %51 : vector<1x8xf32> to vector<1x8x1xf32>
    %53 = tpu.reciprocal %52 {approx = true} : vector<1x8x1xf32> -> vector<1x8x1xf32>
    %54 = vector.broadcast %53 : vector<1x8x1xf32> to vector<1x8x8xf32>
    %55 = arith.mulf %50, %54 : vector<1x8x8xf32>
    %56 = vector.extract_strided_slice %37 {offsets = [0, 0, 0], sizes = [1, 8, 8], strides = [1, 1, 1]} : vector<1x8x32xf32> to vector<1x8x8xf32>
    "tpu.trace_start"() <{level = 10 : i32, message = "bqk,bkd->bqd"}> : () -> ()
    %cst_46 = arith.constant dense<0.000000e+00> : vector<1x8x8xf32>
    %57 = tpu.matmul %55, %56, %cst_46 {dimension_numbers = #tpu.dot_dimension_numbers<[2], [1], [1], [2], [0, 0, 0, 1, 1, 2], [0], [0]>} : vector<1x8x8xf32>, vector<1x8x8xf32>, vector<1x8x8xf32> -> vector<1x8x8xf32>
    "tpu.trace_stop"() : () -> ()
    %58 = vector.shape_cast %57 : vector<1x8x8xf32> to vector<8x8xf32>
    %59 = vector.extract_strided_slice %10 {offsets = [0, 0], sizes = [8, 32], strides = [1, 1]} : vector<32x32xf32> to vector<8x32xf32>
    %cst_47 = arith.constant dense<0.000000e+00> : vector<8x32xf32>
    %60 = tpu.matmul %58, %59, %cst_47 {dimension_numbers = #tpu.dot_dimension_numbers<[1], [0], [0], [1], [0, 0, 1, 1], [], []>} : vector<8x8xf32>, vector<8x32xf32>, vector<8x32xf32> -> vector<8x32xf32>
    %61 = arith.addf %38, %60 : vector<8x32xf32>
    %62 = vector.extract_strided_slice %33 {offsets = [0, 0, 8], sizes = [1, 8, 8], strides = [1, 1, 1]} : vector<1x8x32xf32> to vector<1x8x8xf32>
    %63 = vector.extract_strided_slice %35 {offsets = [0, 0, 8], sizes = [1, 8, 8], strides = [1, 1, 1]} : vector<1x8x32xf32> to vector<1x8x8xf32>
    "tpu.trace_start"() <{level = 10 : i32, message = "bqd,bkd->bqk"}> : () -> ()
    %cst_48 = arith.constant dense<0.000000e+00> : vector<1x8x8xf32>
    %64 = tpu.matmul %62, %63, %cst_48 {dimension_numbers = #tpu.dot_dimension_numbers<[2], [2], [1], [1], [0, 0, 0, 1, 1, 1], [0], [0]>} : vector<1x8x8xf32>, vector<1x8x8xf32>, vector<1x8x8xf32> -> vector<1x8x8xf32>
    "tpu.trace_stop"() : () -> ()
    %cst_49 = arith.constant 0.353553385 : f32
    %65 = vector.broadcast %cst_49 : f32 to vector<1x8x8xf32>
    %66 = arith.mulf %64, %65 : vector<1x8x8xf32>
    %67 = vector.broadcast %4 : vector<1x1x8xf32> to vector<1x8x8xf32>
    %68 = arith.addf %66, %67 : vector<1x8x8xf32>
    %cst_50 = arith.constant dense<0xFF800000> : vector<1x8xf32>
    %69 = vector.multi_reduction <maximumf>, %68, %cst_50 [2] : vector<1x8x8xf32> to vector<1x8xf32>
    %70 = vector.shape_cast %69 : vector<1x8xf32> to vector<1x8x1xf32>
    %71 = vector.broadcast %70 : vector<1x8x1xf32> to vector<1x8x8xf32>
    %72 = arith.subf %68, %71 : vector<1x8x8xf32>
    %73 = math.exp %72 : vector<1x8x8xf32>
    %cst_51 = arith.constant dense<0.000000e+00> : vector<1x8xf32>
    %74 = vector.multi_reduction <add>, %73, %cst_51 [2] : vector<1x8x8xf32> to vector<1x8xf32>
    %75 = vector.shape_cast %74 : vector<1x8xf32> to vector<1x8x1xf32>
    %76 = tpu.reciprocal %75 {approx = true} : vector<1x8x1xf32> -> vector<1x8x1xf32>
    %77 = vector.broadcast %76 : vector<1x8x1xf32> to vector<1x8x8xf32>
    %78 = arith.mulf %73, %77 : vector<1x8x8xf32>
    %79 = vector.extract_strided_slice %37 {offsets = [0, 0, 8], sizes = [1, 8, 8], strides = [1, 1, 1]} : vector<1x8x32xf32> to vector<1x8x8xf32>
    "tpu.trace_start"() <{level = 10 : i32, message = "bqk,bkd->bqd"}> : () -> ()
    %cst_52 = arith.constant dense<0.000000e+00> : vector<1x8x8xf32>
    %80 = tpu.matmul %78, %79, %cst_52 {dimension_numbers = #tpu.dot_dimension_numbers<[2], [1], [1], [2], [0, 0, 0, 1, 1, 2], [0], [0]>} : vector<1x8x8xf32>, vector<1x8x8xf32>, vector<1x8x8xf32> -> vector<1x8x8xf32>
    "tpu.trace_stop"() : () -> ()
    %81 = vector.shape_cast %80 : vector<1x8x8xf32> to vector<8x8xf32>
    %82 = vector.extract_strided_slice %10 {offsets = [8, 0], sizes = [8, 32], strides = [1, 1]} : vector<32x32xf32> to vector<8x32xf32>
    %cst_53 = arith.constant dense<0.000000e+00> : vector<8x32xf32>
    %83 = tpu.matmul %81, %82, %cst_53 {dimension_numbers = #tpu.dot_dimension_numbers<[1], [0], [0], [1], [0, 0, 1, 1], [], []>} : vector<8x8xf32>, vector<8x32xf32>, vector<8x32xf32> -> vector<8x32xf32>
    %84 = arith.addf %61, %83 : vector<8x32xf32>
    %85 = vector.extract_strided_slice %33 {offsets = [0, 0, 16], sizes = [1, 8, 8], strides = [1, 1, 1]} : vector<1x8x32xf32> to vector<1x8x8xf32>
    %86 = vector.extract_strided_slice %35 {offsets = [0, 0, 16], sizes = [1, 8, 8], strides = [1, 1, 1]} : vector<1x8x32xf32> to vector<1x8x8xf32>
    "tpu.trace_start"() <{level = 10 : i32, message = "bqd,bkd->bqk"}> : () -> ()
    %cst_54 = arith.constant dense<0.000000e+00> : vector<1x8x8xf32>
    %87 = tpu.matmul %85, %86, %cst_54 {dimension_numbers = #tpu.dot_dimension_numbers<[2], [2], [1], [1], [0, 0, 0, 1, 1, 1], [0], [0]>} : vector<1x8x8xf32>, vector<1x8x8xf32>, vector<1x8x8xf32> -> vector<1x8x8xf32>
    "tpu.trace_stop"() : () -> ()
    %cst_55 = arith.constant 0.353553385 : f32
    %88 = vector.broadcast %cst_55 : f32 to vector<1x8x8xf32>
    %89 = arith.mulf %87, %88 : vector<1x8x8xf32>
    %90 = vector.broadcast %4 : vector<1x1x8xf32> to vector<1x8x8xf32>
    %91 = arith.addf %89, %90 : vector<1x8x8xf32>
    %cst_56 = arith.constant dense<0xFF800000> : vector<1x8xf32>
    %92 = vector.multi_reduction <maximumf>, %91, %cst_56 [2] : vector<1x8x8xf32> to vector<1x8xf32>
    %93 = vector.shape_cast %92 : vector<1x8xf32> to vector<1x8x1xf32>
    %94 = vector.broadcast %93 : vector<1x8x1xf32> to vector<1x8x8xf32>
    %95 = arith.subf %91, %94 : vector<1x8x8xf32>
    %96 = math.exp %95 : vector<1x8x8xf32>
    %cst_57 = arith.constant dense<0.000000e+00> : vector<1x8xf32>
    %97 = vector.multi_reduction <add>, %96, %cst_57 [2] : vector<1x8x8xf32> to vector<1x8xf32>
    %98 = vector.shape_cast %97 : vector<1x8xf32> to vector<1x8x1xf32>
    %99 = tpu.reciprocal %98 {approx = true} : vector<1x8x1xf32> -> vector<1x8x1xf32>
    %100 = vector.broadcast %99 : vector<1x8x1xf32> to vector<1x8x8xf32>
    %101 = arith.mulf %96, %100 : vector<1x8x8xf32>
    %102 = vector.extract_strided_slice %37 {offsets = [0, 0, 16], sizes = [1, 8, 8], strides = [1, 1, 1]} : vector<1x8x32xf32> to vector<1x8x8xf32>
    "tpu.trace_start"() <{level = 10 : i32, message = "bqk,bkd->bqd"}> : () -> ()
    %cst_58 = arith.constant dense<0.000000e+00> : vector<1x8x8xf32>
    %103 = tpu.matmul %101, %102, %cst_58 {dimension_numbers = #tpu.dot_dimension_numbers<[2], [1], [1], [2], [0, 0, 0, 1, 1, 2], [0], [0]>} : vector<1x8x8xf32>, vector<1x8x8xf32>, vector<1x8x8xf32> -> vector<1x8x8xf32>
    "tpu.trace_stop"() : () -> ()
    %104 = vector.shape_cast %103 : vector<1x8x8xf32> to vector<8x8xf32>
    %105 = vector.extract_strided_slice %10 {offsets = [16, 0], sizes = [8, 32], strides = [1, 1]} : vector<32x32xf32> to vector<8x32xf32>
    %cst_59 = arith.constant dense<0.000000e+00> : vector<8x32xf32>
    %106 = tpu.matmul %104, %105, %cst_59 {dimension_numbers = #tpu.dot_dimension_numbers<[1], [0], [0], [1], [0, 0, 1, 1], [], []>} : vector<8x8xf32>, vector<8x32xf32>, vector<8x32xf32> -> vector<8x32xf32>
    %107 = arith.addf %84, %106 : vector<8x32xf32>
    %108 = vector.extract_strided_slice %33 {offsets = [0, 0, 24], sizes = [1, 8, 8], strides = [1, 1, 1]} : vector<1x8x32xf32> to vector<1x8x8xf32>
    %109 = vector.extract_strided_slice %35 {offsets = [0, 0, 24], sizes = [1, 8, 8], strides = [1, 1, 1]} : vector<1x8x32xf32> to vector<1x8x8xf32>
    "tpu.trace_start"() <{level = 10 : i32, message = "bqd,bkd->bqk"}> : () -> ()
    %cst_60 = arith.constant dense<0.000000e+00> : vector<1x8x8xf32>
    %110 = tpu.matmul %108, %109, %cst_60 {dimension_numbers = #tpu.dot_dimension_numbers<[2], [2], [1], [1], [0, 0, 0, 1, 1, 1], [0], [0]>} : vector<1x8x8xf32>, vector<1x8x8xf32>, vector<1x8x8xf32> -> vector<1x8x8xf32>
    "tpu.trace_stop"() : () -> ()
    %cst_61 = arith.constant 0.353553385 : f32
    %111 = vector.broadcast %cst_61 : f32 to vector<1x8x8xf32>
    %112 = arith.mulf %110, %111 : vector<1x8x8xf32>
    %113 = vector.broadcast %4 : vector<1x1x8xf32> to vector<1x8x8xf32>
    %114 = arith.addf %112, %113 : vector<1x8x8xf32>
    %cst_62 = arith.constant dense<0xFF800000> : vector<1x8xf32>
    %115 = vector.multi_reduction <maximumf>, %114, %cst_62 [2] : vector<1x8x8xf32> to vector<1x8xf32>
    %116 = vector.shape_cast %115 : vector<1x8xf32> to vector<1x8x1xf32>
    %117 = vector.broadcast %116 : vector<1x8x1xf32> to vector<1x8x8xf32>
    %118 = arith.subf %114, %117 : vector<1x8x8xf32>
    %119 = math.exp %118 : vector<1x8x8xf32>
    %cst_63 = arith.constant dense<0.000000e+00> : vector<1x8xf32>
    %120 = vector.multi_reduction <add>, %119, %cst_63 [2] : vector<1x8x8xf32> to vector<1x8xf32>
    %121 = vector.shape_cast %120 : vector<1x8xf32> to vector<1x8x1xf32>
    %122 = tpu.reciprocal %121 {approx = true} : vector<1x8x1xf32> -> vector<1x8x1xf32>
    %123 = vector.broadcast %122 : vector<1x8x1xf32> to vector<1x8x8xf32>
    %124 = arith.mulf %119, %123 : vector<1x8x8xf32>
    %125 = vector.extract_strided_slice %37 {offsets = [0, 0, 24], sizes = [1, 8, 8], strides = [1, 1, 1]} : vector<1x8x32xf32> to vector<1x8x8xf32>
    "tpu.trace_start"() <{level = 10 : i32, message = "bqk,bkd->bqd"}> : () -> ()
    %cst_64 = arith.constant dense<0.000000e+00> : vector<1x8x8xf32>
    %126 = tpu.matmul %124, %125, %cst_64 {dimension_numbers = #tpu.dot_dimension_numbers<[2], [1], [1], [2], [0, 0, 0, 1, 1, 2], [0], [0]>} : vector<1x8x8xf32>, vector<1x8x8xf32>, vector<1x8x8xf32> -> vector<1x8x8xf32>
    "tpu.trace_stop"() : () -> ()
    %127 = vector.shape_cast %126 : vector<1x8x8xf32> to vector<8x8xf32>
    %128 = vector.extract_strided_slice %10 {offsets = [24, 0], sizes = [8, 32], strides = [1, 1]} : vector<32x32xf32> to vector<8x32xf32>
    %cst_65 = arith.constant dense<0.000000e+00> : vector<8x32xf32>
    %129 = tpu.matmul %127, %128, %cst_65 {dimension_numbers = #tpu.dot_dimension_numbers<[1], [0], [0], [1], [0, 0, 1, 1], [], []>} : vector<8x8xf32>, vector<8x32xf32>, vector<8x32xf32> -> vector<8x32xf32>
    %130 = arith.addf %107, %129 : vector<8x32xf32>
    %131 = vector.broadcast %12 : vector<1x32xf32> to vector<8x32xf32>
    %132 = arith.addf %130, %131 : vector<8x32xf32>
    %133 = arith.addf %132, %3 : vector<8x32xf32>
    %cst_66 = arith.constant dense<0.000000e+00> : vector<8xf32>
    %134 = vector.multi_reduction <add>, %133, %cst_66 [1] : vector<8x32xf32> to vector<8xf32>
    %135 = vector.shape_cast %134 : vector<8xf32> to vector<8x1xf32>
    %cst_67 = arith.constant 3.200000e+01 : f32
    %136 = vector.broadcast %cst_67 : f32 to vector<8x1xf32>
    %137 = arith.divf %135, %136 : vector<8x1xf32>
    %138 = vector.broadcast %137 : vector<8x1xf32> to vector<8x32xf32>
    %139 = arith.subf %133, %138 : vector<8x32xf32>
    %140 = arith.mulf %139, %139 : vector<8x32xf32>
    %cst_68 = arith.constant dense<0.000000e+00> : vector<8xf32>
    %141 = vector.multi_reduction <add>, %140, %cst_68 [1] : vector<8x32xf32> to vector<8xf32>
    %142 = vector.shape_cast %141 : vector<8xf32> to vector<8x1xf32>
    %cst_69 = arith.constant 3.200000e+01 : f32
    %143 = vector.broadcast %cst_69 : f32 to vector<8x1xf32>
    %144 = arith.divf %142, %143 : vector<8x1xf32>
    %145 = vector.broadcast %137 : vector<8x1xf32> to vector<8x32xf32>
    %146 = arith.subf %133, %145 : vector<8x32xf32>
    %cst_70 = arith.constant 9.99999996E-13 : f32
    %147 = vector.broadcast %cst_70 : f32 to vector<8x1xf32>
    %148 = arith.addf %144, %147 : vector<8x1xf32>
    %149 = math.rsqrt %148 : vector<8x1xf32>
    %150 = vector.broadcast %149 : vector<8x1xf32> to vector<8x32xf32>
    %151 = arith.mulf %146, %150 : vector<8x32xf32>
    %152 = vector.broadcast %14 : vector<1x32xf32> to vector<8x32xf32>
    %153 = arith.mulf %151, %152 : vector<8x32xf32>
    %154 = vector.broadcast %16 : vector<1x32xf32> to vector<8x32xf32>
    %155 = arith.addf %153, %154 : vector<8x32xf32>
    %cst_71 = arith.constant dense<0.000000e+00> : vector<8x128xf32>
    %156 = tpu.matmul %155, %18, %cst_71 {dimension_numbers = #tpu.dot_dimension_numbers<[1], [0], [0], [1], [0, 0, 1, 1], [], []>} : vector<8x32xf32>, vector<32x128xf32>, vector<8x128xf32> -> vector<8x128xf32>
    %157 = vector.broadcast %20 : vector<1x128xf32> to vector<8x128xf32>
    %158 = arith.addf %156, %157 : vector<8x128xf32>
    %159 = arith.mulf %158, %158 : vector<8x128xf32>
    %160 = arith.mulf %158, %159 : vector<8x128xf32>
    %cst_72 = arith.constant 4.471500e-02 : f32
    %161 = vector.broadcast %cst_72 : f32 to vector<8x128xf32>
    %162 = arith.mulf %161, %160 : vector<8x128xf32>
    %163 = arith.addf %158, %162 : vector<8x128xf32>
    %cst_73 = arith.constant 0.797884583 : f32
    %164 = vector.broadcast %cst_73 : f32 to vector<8x128xf32>
    %165 = arith.mulf %164, %163 : vector<8x128xf32>
    %166 = math.tanh %165 : vector<8x128xf32>
    %cst_74 = arith.constant 1.000000e+00 : f32
    %167 = vector.broadcast %cst_74 : f32 to vector<8x128xf32>
    %168 = arith.addf %167, %166 : vector<8x128xf32>
    %cst_75 = arith.constant 5.000000e-01 : f32
    %169 = vector.broadcast %cst_75 : f32 to vector<8x128xf32>
    %170 = arith.mulf %169, %168 : vector<8x128xf32>
    %171 = arith.mulf %158, %170 : vector<8x128xf32>
    %cst_76 = arith.constant dense<0.000000e+00> : vector<8x32xf32>
    %172 = tpu.matmul %171, %22, %cst_76 {dimension_numbers = #tpu.dot_dimension_numbers<[1], [0], [0], [1], [0, 0, 1, 1], [], []>} : vector<8x128xf32>, vector<128x32xf32>, vector<8x32xf32> -> vector<8x32xf32>
    %173 = vector.broadcast %24 : vector<1x32xf32> to vector<8x32xf32>
    %174 = arith.addf %172, %173 : vector<8x32xf32>
    %175 = arith.addf %174, %155 : vector<8x32xf32>
    %cst_77 = arith.constant dense<0.000000e+00> : vector<8xf32>
    %176 = vector.multi_reduction <add>, %175, %cst_77 [1] : vector<8x32xf32> to vector<8xf32>
    %177 = vector.shape_cast %176 : vector<8xf32> to vector<8x1xf32>
    %cst_78 = arith.constant 3.200000e+01 : f32
    %178 = vector.broadcast %cst_78 : f32 to vector<8x1xf32>
    %179 = arith.divf %177, %178 : vector<8x1xf32>
    %180 = vector.broadcast %179 : vector<8x1xf32> to vector<8x32xf32>
    %181 = arith.subf %175, %180 : vector<8x32xf32>
    %182 = arith.mulf %181, %181 : vector<8x32xf32>
    %cst_79 = arith.constant dense<0.000000e+00> : vector<8xf32>
    %183 = vector.multi_reduction <add>, %182, %cst_79 [1] : vector<8x32xf32> to vector<8xf32>
    %184 = vector.shape_cast %183 : vector<8xf32> to vector<8x1xf32>
    %cst_80 = arith.constant 3.200000e+01 : f32
    %185 = vector.broadcast %cst_80 : f32 to vector<8x1xf32>
    %186 = arith.divf %184, %185 : vector<8x1xf32>
    %187 = vector.broadcast %179 : vector<8x1xf32> to vector<8x32xf32>
    %188 = arith.subf %175, %187 : vector<8x32xf32>
    %cst_81 = arith.constant 9.99999996E-13 : f32
    %189 = vector.broadcast %cst_81 : f32 to vector<8x1xf32>
    %190 = arith.addf %186, %189 : vector<8x1xf32>
    %191 = math.rsqrt %190 : vector<8x1xf32>
    %192 = vector.broadcast %191 : vector<8x1xf32> to vector<8x32xf32>
    %193 = arith.mulf %188, %192 : vector<8x32xf32>
    %194 = vector.broadcast %26 : vector<1x32xf32> to vector<8x32xf32>
    %195 = arith.mulf %193, %194 : vector<8x32xf32>
    %196 = vector.broadcast %28 : vector<1x32xf32> to vector<8x32xf32>
    %197 = arith.addf %195, %196 : vector<8x32xf32>
    %c0_82 = arith.constant 0 : index
    %c0_83 = arith.constant 0 : index
    %198 = vector.load %arg16[%c0_82, %c0_83] : memref<8x32xf32, #tpu.memory_space<vmem>>, vector<8x32xf32>
    tpu.vector_store %arg16[%c0_82, %c0_83], %197 {strides = array<i32>} : memref<8x32xf32, #tpu.memory_space<vmem>>, vector<8x32xf32>,
    return
  }
  func.func @transform_0(%arg0: i32, %arg1: i32) -> (i32, i32, i32) {
    %c0_i32 = arith.constant 0 : i32
    %c0_i32_0 = arith.constant 0 : i32
    %c0_i32_1 = arith.constant 0 : i32
    return %arg0, %c0_i32, %c0_i32_0 : i32, i32, i32
  }
  func.func @transform_1(%arg0: i32, %arg1: i32) -> (i32, i32) {
    %c0_i32 = arith.constant 0 : i32
    %c0_i32_0 = arith.constant 0 : i32
    return %arg0, %c0_i32 : i32, i32
  }
  func.func @transform_2(%arg0: i32, %arg1: i32) -> (i32, i32, i32) {
    %c0_i32 = arith.constant 0 : i32
    %c0_i32_0 = arith.constant 0 : i32
    %c0_i32_1 = arith.constant 0 : i32
    return %arg1, %c0_i32, %c0_i32_0 : i32, i32, i32
  }
  func.func @transform_3(%arg0: i32, %arg1: i32) -> (i32, i32, i32) {
    %c0_i32 = arith.constant 0 : i32
    %c0_i32_0 = arith.constant 0 : i32
    %c0_i32_1 = arith.constant 0 : i32
    return %arg1, %c0_i32, %c0_i32_0 : i32, i32, i32
  }
  func.func @transform_4(%arg0: i32, %arg1: i32) -> (i32, i32, i32) {
    %c0_i32 = arith.constant 0 : i32
    %c0_i32_0 = arith.constant 0 : i32
    %c0_i32_1 = arith.constant 0 : i32
    return %arg1, %c0_i32, %c0_i32_0 : i32, i32, i32
  }
  func.func @transform_5(%arg0: i32, %arg1: i32) -> (i32, i32, i32) {
    %c0_i32 = arith.constant 0 : i32
    %c0_i32_0 = arith.constant 0 : i32
    %c0_i32_1 = arith.constant 0 : i32
    return %arg1, %c0_i32, %c0_i32_0 : i32, i32, i32
  }
  func.func @transform_6(%arg0: i32, %arg1: i32) -> (i32, i32, i32) {
    %c0_i32 = arith.constant 0 : i32
    %c0_i32_0 = arith.constant 0 : i32
    %c0_i32_1 = arith.constant 0 : i32
    return %arg1, %c0_i32, %c0_i32_0 : i32, i32, i32
  }
  func.func @transform_7(%arg0: i32, %arg1: i32) -> (i32, i32, i32) {
    %c0_i32 = arith.constant 0 : i32
    %c0_i32_0 = arith.constant 0 : i32
    %c0_i32_1 = arith.constant 0 : i32
    return %arg1, %c0_i32, %c0_i32_0 : i32, i32, i32
  }
  func.func @transform_8(%arg0: i32, %arg1: i32) -> (i32, i32, i32) {
    %c0_i32 = arith.constant 0 : i32
    %c0_i32_0 = arith.constant 0 : i32
    %c0_i32_1 = arith.constant 0 : i32
    return %arg1, %c0_i32, %c0_i32_0 : i32, i32, i32
  }
  func.func @transform_9(%arg0: i32, %arg1: i32) -> (i32, i32, i32) {
    %c0_i32 = arith.constant 0 : i32
    %c0_i32_0 = arith.constant 0 : i32
    %c0_i32_1 = arith.constant 0 : i32
    return %arg1, %c0_i32, %c0_i32_0 : i32, i32, i32
  }
  func.func @transform_10(%arg0: i32, %arg1: i32) -> (i32, i32, i32) {
    %c0_i32 = arith.constant 0 : i32
    %c0_i32_0 = arith.constant 0 : i32
    %c0_i32_1 = arith.constant 0 : i32
    return %arg1, %c0_i32, %c0_i32_0 : i32, i32, i32
  }
  func.func @transform_11(%arg0: i32, %arg1: i32) -> (i32, i32, i32) {
    %c0_i32 = arith.constant 0 : i32
    %c0_i32_0 = arith.constant 0 : i32
    %c0_i32_1 = arith.constant 0 : i32
    return %arg1, %c0_i32, %c0_i32_0 : i32, i32, i32
  }
  func.func @transform_12(%arg0: i32, %arg1: i32) -> (i32, i32, i32) {
    %c0_i32 = arith.constant 0 : i32
    %c0_i32_0 = arith.constant 0 : i32
    %c0_i32_1 = arith.constant 0 : i32
    return %arg1, %c0_i32, %c0_i32_0 : i32, i32, i32
  }
  func.func @transform_13(%arg0: i32, %arg1: i32) -> (i32, i32, i32) {
    %c0_i32 = arith.constant 0 : i32
    %c0_i32_0 = arith.constant 0 : i32
    %c0_i32_1 = arith.constant 0 : i32
    return %arg1, %c0_i32, %c0_i32_0 : i32, i32, i32
  }
  func.func @transform_14(%arg0: i32, %arg1: i32) -> (i32, i32) {
    %c0_i32 = arith.constant 0 : i32
    %c0_i32_0 = arith.constant 0 : i32
    return %arg0, %c0_i32 : i32, i32
  }
}

module attributes {stable_mosaic.version = 11 : i64} {
  func.func @_gate_mlp_kernel(%arg0: i32, %arg1: memref<2x48xf32, #tpu.memory_space<vmem>>, %arg2: memref<48x64xf32, #tpu.memory_space<vmem>>, %arg3: memref<1x64xf32, #tpu.memory_space<vmem>>, %arg4: memref<64x4xf32, #tpu.memory_space<vmem>>, %arg5: memref<1x4xf32, #tpu.memory_space<vmem>>, %arg6: memref<2x4xf32, #tpu.memory_space<vmem>>) attributes {dimension_semantics = [#tpu.dimension_semantics<arbitrary>], iteration_bounds = array<i64: 1>, scalar_prefetch = 0 : i64, scratch_operands = 0 : i64, tpu.core_type = #tpu.core_type<tc>, window_params = [{pipeline_mode = #tpu.pipeline_mode<synchronous>, transform_indices = @transform_0, window_bounds = array<i64: 2, 48>}, {pipeline_mode = #tpu.pipeline_mode<synchronous>, transform_indices = @transform_1, window_bounds = array<i64: 48, 64>}, {pipeline_mode = #tpu.pipeline_mode<synchronous>, transform_indices = @transform_2, window_bounds = array<i64: 1, 64>}, {pipeline_mode = #tpu.pipeline_mode<synchronous>, transform_indices = @transform_3, window_bounds = array<i64: 64, 4>}, {pipeline_mode = #tpu.pipeline_mode<synchronous>, transform_indices = @transform_4, window_bounds = array<i64: 1, 4>}, {pipeline_mode = #tpu.pipeline_mode<synchronous>, transform_indices = @transform_5, window_bounds = array<i64: 2, 4>}]} {
    %c0 = arith.constant 0 : index
    %c0_0 = arith.constant 0 : index
    %0 = vector.load %arg1[%c0, %c0_0] : memref<2x48xf32, #tpu.memory_space<vmem>>, vector<2x48xf32>
    %c0_1 = arith.constant 0 : index
    %c0_2 = arith.constant 0 : index
    %1 = vector.load %arg2[%c0_1, %c0_2] : memref<48x64xf32, #tpu.memory_space<vmem>>, vector<48x64xf32>
    %cst = arith.constant dense<0.000000e+00> : vector<2x64xf32>
    %2 = tpu.matmul %0, %1, %cst {dimension_numbers = #tpu.dot_dimension_numbers<[1], [0], [0], [1], [0, 0, 1, 1], [], []>} : vector<2x48xf32>, vector<48x64xf32>, vector<2x64xf32> -> vector<2x64xf32>
    %c0_3 = arith.constant 0 : index
    %c0_4 = arith.constant 0 : index
    %3 = vector.load %arg3[%c0_3, %c0_4] : memref<1x64xf32, #tpu.memory_space<vmem>>, vector<1x64xf32>
    %4 = vector.broadcast %3 : vector<1x64xf32> to vector<2x64xf32>
    %5 = arith.addf %2, %4 : vector<2x64xf32>
    %6 = arith.mulf %5, %5 : vector<2x64xf32>
    %7 = arith.mulf %5, %6 : vector<2x64xf32>
    %cst_5 = arith.constant 4.471500e-02 : f32
    %8 = vector.broadcast %cst_5 : f32 to vector<2x64xf32>
    %9 = arith.mulf %8, %7 : vector<2x64xf32>
    %10 = arith.addf %5, %9 : vector<2x64xf32>
    %cst_6 = arith.constant 0.797884583 : f32
    %11 = vector.broadcast %cst_6 : f32 to vector<2x64xf32>
    %12 = arith.mulf %11, %10 : vector<2x64xf32>
    %13 = math.tanh %12 : vector<2x64xf32>
    %cst_7 = arith.constant 1.000000e+00 : f32
    %14 = vector.broadcast %cst_7 : f32 to vector<2x64xf32>
    %15 = arith.addf %14, %13 : vector<2x64xf32>
    %cst_8 = arith.constant 5.000000e-01 : f32
    %16 = vector.broadcast %cst_8 : f32 to vector<2x64xf32>
    %17 = arith.mulf %16, %15 : vector<2x64xf32>
    %18 = arith.mulf %5, %17 : vector<2x64xf32>
    %c0_9 = arith.constant 0 : index
    %c0_10 = arith.constant 0 : index
    %19 = vector.load %arg4[%c0_9, %c0_10] : memref<64x4xf32, #tpu.memory_space<vmem>>, vector<64x4xf32>
    %cst_11 = arith.constant dense<0.000000e+00> : vector<2x4xf32>
    %20 = tpu.matmul %18, %19, %cst_11 {dimension_numbers = #tpu.dot_dimension_numbers<[1], [0], [0], [1], [0, 0, 1, 1], [], []>} : vector<2x64xf32>, vector<64x4xf32>, vector<2x4xf32> -> vector<2x4xf32>
    %c0_12 = arith.constant 0 : index
    %c0_13 = arith.constant 0 : index
    %21 = vector.load %arg5[%c0_12, %c0_13] : memref<1x4xf32, #tpu.memory_space<vmem>>, vector<1x4xf32>
    %22 = vector.broadcast %21 : vector<1x4xf32> to vector<2x4xf32>
    %23 = arith.addf %20, %22 : vector<2x4xf32>
    %cst_14 = arith.constant dense<0xFF800000> : vector<2xf32>
    %24 = vector.multi_reduction <maximumf>, %23, %cst_14 [1] : vector<2x4xf32> to vector<2xf32>
    %25 = vector.shape_cast %24 : vector<2xf32> to vector<2x1xf32>
    %26 = vector.broadcast %25 : vector<2x1xf32> to vector<2x4xf32>
    %27 = arith.subf %23, %26 : vector<2x4xf32>
    %28 = math.exp %27 : vector<2x4xf32>
    %cst_15 = arith.constant dense<0.000000e+00> : vector<2xf32>
    %29 = vector.multi_reduction <add>, %28, %cst_15 [1] : vector<2x4xf32> to vector<2xf32>
    %30 = vector.shape_cast %29 : vector<2xf32> to vector<2x1xf32>
    %31 = tpu.reciprocal %30 {approx = true} : vector<2x1xf32> -> vector<2x1xf32>
    %32 = vector.broadcast %31 : vector<2x1xf32> to vector<2x4xf32>
    %33 = arith.mulf %28, %32 : vector<2x4xf32>
    %c0_16 = arith.constant 0 : index
    %c0_17 = arith.constant 0 : index
    %34 = vector.load %arg6[%c0_16, %c0_17] : memref<2x4xf32, #tpu.memory_space<vmem>>, vector<2x4xf32>
    tpu.vector_store %arg6[%c0_16, %c0_17], %33 {strides = array<i32>} : memref<2x4xf32, #tpu.memory_space<vmem>>, vector<2x4xf32>,
    return
  }
  func.func @transform_0(%arg0: i32) -> (i32, i32) {
    %c0_i32 = arith.constant 0 : i32
    %c0_i32_0 = arith.constant 0 : i32
    %c0_i32_1 = arith.constant 0 : i32
    return %c0_i32, %c0_i32_0 : i32, i32
  }
  func.func @transform_1(%arg0: i32) -> (i32, i32) {
    %c0_i32 = arith.constant 0 : i32
    %c0_i32_0 = arith.constant 0 : i32
    %c0_i32_1 = arith.constant 0 : i32
    return %c0_i32, %c0_i32_0 : i32, i32
  }
  func.func @transform_2(%arg0: i32) -> (i32, i32) {
    %c0_i32 = arith.constant 0 : i32
    %c0_i32_0 = arith.constant 0 : i32
    %c0_i32_1 = arith.constant 0 : i32
    return %c0_i32, %c0_i32_0 : i32, i32
  }
  func.func @transform_3(%arg0: i32) -> (i32, i32) {
    %c0_i32 = arith.constant 0 : i32
    %c0_i32_0 = arith.constant 0 : i32
    %c0_i32_1 = arith.constant 0 : i32
    return %c0_i32, %c0_i32_0 : i32, i32
  }
  func.func @transform_4(%arg0: i32) -> (i32, i32) {
    %c0_i32 = arith.constant 0 : i32
    %c0_i32_0 = arith.constant 0 : i32
    %c0_i32_1 = arith.constant 0 : i32
    return %c0_i32, %c0_i32_0 : i32, i32
  }
  func.func @transform_5(%arg0: i32) -> (i32, i32) {
    %c0_i32 = arith.constant 0 : i32
    %c0_i32_0 = arith.constant 0 : i32
    %c0_i32_1 = arith.constant 0 : i32
    return %c0_i32, %c0_i32_0 : i32, i32
  }
}

module attributes {stable_mosaic.version = 11 : i64} {
  func.func @_peacock_kernel(%arg0: i32, %arg1: i32, %arg2: memref<1x1x8xf32, #tpu.memory_space<vmem>>, %arg3: memref<1x8x1xf32, #tpu.memory_space<vmem>>, %arg4: memref<8x32xf32, #tpu.memory_space<vmem>>, %arg5: memref<1x32x96xf32, #tpu.memory_space<vmem>>, %arg6: memref<1x1x96xf32, #tpu.memory_space<vmem>>, %arg7: memref<1x32x32xf32, #tpu.memory_space<vmem>>, %arg8: memref<1x1x32xf32, #tpu.memory_space<vmem>>, %arg9: memref<1x1x32xf32, #tpu.memory_space<vmem>>, %arg10: memref<1x1x32xf32, #tpu.memory_space<vmem>>, %arg11: memref<1x32x128xf32, #tpu.memory_space<vmem>>, %arg12: memref<1x1x128xf32, #tpu.memory_space<vmem>>, %arg13: memref<1x128x32xf32, #tpu.memory_space<vmem>>, %arg14: memref<1x1x32xf32, #tpu.memory_space<vmem>>, %arg15: memref<1x1x32xf32, #tpu.memory_space<vmem>>, %arg16: memref<1x1x32xf32, #tpu.memory_space<vmem>>, %arg17: memref<8x32xf32, #tpu.memory_space<vmem>>) attributes {dimension_semantics = [#tpu.dimension_semantics<parallel>, #tpu.dimension_semantics<arbitrary>], iteration_bounds = array<i64: 2, 4>, scalar_prefetch = 0 : i64, scratch_operands = 0 : i64, tpu.core_type = #tpu.core_type<tc>, window_params = [{transform_indices = @transform_0, window_bounds = array<i64: 1, 1, 8>}, {transform_indices = @transform_1, window_bounds = array<i64: 1, 8, 1>}, {transform_indices = @transform_2, window_bounds = array<i64: 8, 32>}, {transform_indices = @transform_3, window_bounds = array<i64: 1, 32, 96>}, {transform_indices = @transform_4, window_bounds = array<i64: 1, 1, 96>}, {transform_indices = @transform_5, window_bounds = array<i64: 1, 32, 32>}, {transform_indices = @transform_6, window_bounds = array<i64: 1, 1, 32>}, {transform_indices = @transform_7, window_bounds = array<i64: 1, 1, 32>}, {transform_indices = @transform_8, window_bounds = array<i64: 1, 1, 32>}, {transform_indices = @transform_9, window_bounds = array<i64: 1, 32, 128>}, {transform_indices = @transform_10, window_bounds = array<i64: 1, 1, 128>}, {transform_indices = @transform_11, window_bounds = array<i64: 1, 128, 32>}, {transform_indices = @transform_12, window_bounds = array<i64: 1, 1, 32>}, {transform_indices = @transform_13, window_bounds = array<i64: 1, 1, 32>}, {transform_indices = @transform_14, window_bounds = array<i64: 1, 1, 32>}, {transform_indices = @transform_15, window_bounds = array<i64: 8, 32>}]} {
    %c0_i32 = arith.constant 0 : i32
    %0 = arith.cmpi eq, %arg1, %c0_i32 : i32
    %1 = arith.extui %0 : i1 to i32
    %c0_i32_0 = arith.constant 0 : i32
    %2 = arith.cmpi ne, %1, %c0_i32_0 : i32
    scf.if %2 {
      %cst_89 = arith.constant 0.000000e+00 : f32
      %205 = vector.broadcast %cst_89 : f32 to vector<8x32xf32>
      %c0_90 = arith.constant 0 : index
      %c0_91 = arith.constant 0 : index
      %206 = vector.load %arg17[%c0_90, %c0_91] : memref<8x32xf32, #tpu.memory_space<vmem>>, vector<8x32xf32>
      tpu.vector_store %arg17[%c0_90, %c0_91], %205 {strides = array<i32>} : memref<8x32xf32, #tpu.memory_space<vmem>>, vector<8x32xf32>,
    } else {
    }
    %c0 = arith.constant 0 : index
    %c0_1 = arith.constant 0 : index
    %3 = vector.load %arg4[%c0, %c0_1] : memref<8x32xf32, #tpu.memory_space<vmem>>, vector<8x32xf32>
    %c0_2 = arith.constant 0 : index
    %c0_3 = arith.constant 0 : index
    %c0_4 = arith.constant 0 : index
    %4 = vector.load %arg2[%c0_2, %c0_3, %c0_4] : memref<1x1x8xf32, #tpu.memory_space<vmem>>, vector<1x1x8xf32>
    %c0_5 = arith.constant 0 : index
    %c0_6 = arith.constant 0 : index
    %c0_7 = arith.constant 0 : index
    %5 = vector.load %arg5[%c0_5, %c0_6, %c0_7] : memref<1x32x96xf32, #tpu.memory_space<vmem>>, vector<1x32x96xf32>
    %6 = vector.shape_cast %5 : vector<1x32x96xf32> to vector<32x96xf32>
    %c0_8 = arith.constant 0 : index
    %c0_9 = arith.constant 0 : index
    %c0_10 = arith.constant 0 : index
    %7 = vector.load %arg6[%c0_8, %c0_9, %c0_10] : memref<1x1x96xf32, #tpu.memory_space<vmem>>, vector<1x1x96xf32>
    %8 = vector.shape_cast %7 : vector<1x1x96xf32> to vector<1x96xf32>
    %c0_11 = arith.constant 0 : index
    %c0_12 = arith.constant 0 : index
    %c0_13 = arith.constant 0 : index
    %9 = vector.load %arg7[%c0_11, %c0_12, %c0_13] : memref<1x32x32xf32, #tpu.memory_space<vmem>>, vector<1x32x32xf32>
    %10 = vector.shape_cast %9 : vector<1x32x32xf32> to vector<32x32xf32>
    %c0_14 = arith.constant 0 : index
    %c0_15 = arith.constant 0 : index
    %c0_16 = arith.constant 0 : index
    %11 = vector.load %arg8[%c0_14, %c0_15, %c0_16] : memref<1x1x32xf32, #tpu.memory_space<vmem>>, vector<1x1x32xf32>
    %12 = vector.shape_cast %11 : vector<1x1x32xf32> to vector<1x32xf32>
    %c0_17 = arith.constant 0 : index
    %c0_18 = arith.constant 0 : index
    %c0_19 = arith.constant 0 : index
    %13 = vector.load %arg9[%c0_17, %c0_18, %c0_19] : memref<1x1x32xf32, #tpu.memory_space<vmem>>, vector<1x1x32xf32>
    %14 = vector.shape_cast %13 : vector<1x1x32xf32> to vector<1x32xf32>
    %c0_20 = arith.constant 0 : index
    %c0_21 = arith.constant 0 : index
    %c0_22 = arith.constant 0 : index
    %15 = vector.load %arg10[%c0_20, %c0_21, %c0_22] : memref<1x1x32xf32, #tpu.memory_space<vmem>>, vector<1x1x32xf32>
    %16 = vector.shape_cast %15 : vector<1x1x32xf32> to vector<1x32xf32>
    %c0_23 = arith.constant 0 : index
    %c0_24 = arith.constant 0 : index
    %c0_25 = arith.constant 0 : index
    %17 = vector.load %arg11[%c0_23, %c0_24, %c0_25] : memref<1x32x128xf32, #tpu.memory_space<vmem>>, vector<1x32x128xf32>
    %18 = vector.shape_cast %17 : vector<1x32x128xf32> to vector<32x128xf32>
    %c0_26 = arith.constant 0 : index
    %c0_27 = arith.constant 0 : index
    %c0_28 = arith.constant 0 : index
    %19 = vector.load %arg12[%c0_26, %c0_27, %c0_28] : memref<1x1x128xf32, #tpu.memory_space<vmem>>, vector<1x1x128xf32>
    %20 = vector.shape_cast %19 : vector<1x1x128xf32> to vector<1x128xf32>
    %c0_29 = arith.constant 0 : index
    %c0_30 = arith.constant 0 : index
    %c0_31 = arith.constant 0 : index
    %21 = vector.load %arg13[%c0_29, %c0_30, %c0_31] : memref<1x128x32xf32, #tpu.memory_space<vmem>>, vector<1x128x32xf32>
    %22 = vector.shape_cast %21 : vector<1x128x32xf32> to vector<128x32xf32>
    %c0_32 = arith.constant 0 : index
    %c0_33 = arith.constant 0 : index
    %c0_34 = arith.constant 0 : index
    %23 = vector.load %arg14[%c0_32, %c0_33, %c0_34] : memref<1x1x32xf32, #tpu.memory_space<vmem>>, vector<1x1x32xf32>
    %24 = vector.shape_cast %23 : vector<1x1x32xf32> to vector<1x32xf32>
    %c0_35 = arith.constant 0 : index
    %c0_36 = arith.constant 0 : index
    %c0_37 = arith.constant 0 : index
    %25 = vector.load %arg15[%c0_35, %c0_36, %c0_37] : memref<1x1x32xf32, #tpu.memory_space<vmem>>, vector<1x1x32xf32>
    %26 = vector.shape_cast %25 : vector<1x1x32xf32> to vector<1x32xf32>
    %c0_38 = arith.constant 0 : index
    %c0_39 = arith.constant 0 : index
    %c0_40 = arith.constant 0 : index
    %27 = vector.load %arg16[%c0_38, %c0_39, %c0_40] : memref<1x1x32xf32, #tpu.memory_space<vmem>>, vector<1x1x32xf32>
    %28 = vector.shape_cast %27 : vector<1x1x32xf32> to vector<1x32xf32>
    %cst = arith.constant dense<0.000000e+00> : vector<8x96xf32>
    %29 = tpu.matmul %3, %6, %cst {dimension_numbers = #tpu.dot_dimension_numbers<[1], [0], [0], [1], [0, 0, 1, 1], [], []>} : vector<8x32xf32>, vector<32x96xf32>, vector<8x96xf32> -> vector<8x96xf32>
    %30 = vector.broadcast %8 : vector<1x96xf32> to vector<8x96xf32>
    %31 = arith.addf %29, %30 : vector<8x96xf32>
    %32 = vector.extract_strided_slice %31 {offsets = [0, 0], sizes = [8, 32], strides = [1, 1]} : vector<8x96xf32> to vector<8x32xf32>
    %33 = vector.shape_cast %32 : vector<8x32xf32> to vector<1x8x32xf32>
    %34 = vector.extract_strided_slice %31 {offsets = [0, 32], sizes = [8, 32], strides = [1, 1]} : vector<8x96xf32> to vector<8x32xf32>
    %35 = vector.shape_cast %34 : vector<8x32xf32> to vector<1x8x32xf32>
    %36 = vector.extract_strided_slice %31 {offsets = [0, 64], sizes = [8, 32], strides = [1, 1]} : vector<8x96xf32> to vector<8x32xf32>
    %37 = vector.shape_cast %36 : vector<8x32xf32> to vector<1x8x32xf32>
    %cst_41 = arith.constant 0.000000e+00 : f32
    %38 = vector.broadcast %cst_41 : f32 to vector<8x32xf32>
    %39 = vector.extract_strided_slice %33 {offsets = [0, 0, 0], sizes = [1, 8, 8], strides = [1, 1, 1]} : vector<1x8x32xf32> to vector<1x8x8xf32>
    %40 = vector.extract_strided_slice %35 {offsets = [0, 0, 0], sizes = [1, 8, 8], strides = [1, 1, 1]} : vector<1x8x32xf32> to vector<1x8x8xf32>
    "tpu.trace_start"() <{level = 10 : i32, message = "bqd,bkd->bqk"}> : () -> ()
    %cst_42 = arith.constant dense<0.000000e+00> : vector<1x8x8xf32>
    %41 = tpu.matmul %39, %40, %cst_42 {dimension_numbers = #tpu.dot_dimension_numbers<[2], [2], [1], [1], [0, 0, 0, 1, 1, 1], [0], [0]>} : vector<1x8x8xf32>, vector<1x8x8xf32>, vector<1x8x8xf32> -> vector<1x8x8xf32>
    "tpu.trace_stop"() : () -> ()
    %cst_43 = arith.constant 0.353553385 : f32
    %42 = vector.broadcast %cst_43 : f32 to vector<1x8x8xf32>
    %43 = arith.mulf %41, %42 : vector<1x8x8xf32>
    %44 = vector.broadcast %4 : vector<1x1x8xf32> to vector<1x8x8xf32>
    %45 = arith.addf %43, %44 : vector<1x8x8xf32>
    %cst_44 = arith.constant dense<0xFF800000> : vector<1x8xf32>
    %46 = vector.multi_reduction <maximumf>, %45, %cst_44 [2] : vector<1x8x8xf32> to vector<1x8xf32>
    %47 = vector.shape_cast %46 : vector<1x8xf32> to vector<1x8x1xf32>
    %48 = vector.broadcast %47 : vector<1x8x1xf32> to vector<1x8x8xf32>
    %49 = arith.subf %45, %48 : vector<1x8x8xf32>
    %50 = math.exp %49 : vector<1x8x8xf32>
    %cst_45 = arith.constant dense<0.000000e+00> : vector<1x8xf32>
    %51 = vector.multi_reduction <add>, %50, %cst_45 [2] : vector<1x8x8xf32> to vector<1x8xf32>
    %52 = vector.shape_cast %51 : vector<1x8xf32> to vector<1x8x1xf32>
    %53 = tpu.reciprocal %52 {approx = true} : vector<1x8x1xf32> -> vector<1x8x1xf32>
    %54 = vector.broadcast %53 : vector<1x8x1xf32> to vector<1x8x8xf32>
    %55 = arith.mulf %50, %54 : vector<1x8x8xf32>
    %56 = vector.extract_strided_slice %37 {offsets = [0, 0, 0], sizes = [1, 8, 8], strides = [1, 1, 1]} : vector<1x8x32xf32> to vector<1x8x8xf32>
    "tpu.trace_start"() <{level = 10 : i32, message = "bqk,bkd->bqd"}> : () -> ()
    %cst_46 = arith.constant dense<0.000000e+00> : vector<1x8x8xf32>
    %57 = tpu.matmul %55, %56, %cst_46 {dimension_numbers = #tpu.dot_dimension_numbers<[2], [1], [1], [2], [0, 0, 0, 1, 1, 2], [0], [0]>} : vector<1x8x8xf32>, vector<1x8x8xf32>, vector<1x8x8xf32> -> vector<1x8x8xf32>
    "tpu.trace_stop"() : () -> ()
    %58 = vector.shape_cast %57 : vector<1x8x8xf32> to vector<8x8xf32>
    %59 = vector.extract_strided_slice %10 {offsets = [0, 0], sizes = [8, 32], strides = [1, 1]} : vector<32x32xf32> to vector<8x32xf32>
    %cst_47 = arith.constant dense<0.000000e+00> : vector<8x32xf32>
    %60 = tpu.matmul %58, %59, %cst_47 {dimension_numbers = #tpu.dot_dimension_numbers<[1], [0], [0], [1], [0, 0, 1, 1], [], []>} : vector<8x8xf32>, vector<8x32xf32>, vector<8x32xf32> -> vector<8x32xf32>
    %61 = arith.addf %38, %60 : vector<8x32xf32>
    %62 = vector.extract_strided_slice %33 {offsets = [0, 0, 8], sizes = [1, 8, 8], strides = [1, 1, 1]} : vector<1x8x32xf32> to vector<1x8x8xf32>
    %63 = vector.extract_strided_slice %35 {offsets = [0, 0, 8], sizes = [1, 8, 8], strides = [1, 1, 1]} : vector<1x8x32xf32> to vector<1x8x8xf32>
    "tpu.trace_start"() <{level = 10 : i32, message = "bqd,bkd->bqk"}> : () -> ()
    %cst_48 = arith.constant dense<0.000000e+00> : vector<1x8x8xf32>
    %64 = tpu.matmul %62, %63, %cst_48 {dimension_numbers = #tpu.dot_dimension_numbers<[2], [2], [1], [1], [0, 0, 0, 1, 1, 1], [0], [0]>} : vector<1x8x8xf32>, vector<1x8x8xf32>, vector<1x8x8xf32> -> vector<1x8x8xf32>
    "tpu.trace_stop"() : () -> ()
    %cst_49 = arith.constant 0.353553385 : f32
    %65 = vector.broadcast %cst_49 : f32 to vector<1x8x8xf32>
    %66 = arith.mulf %64, %65 : vector<1x8x8xf32>
    %67 = vector.broadcast %4 : vector<1x1x8xf32> to vector<1x8x8xf32>
    %68 = arith.addf %66, %67 : vector<1x8x8xf32>
    %cst_50 = arith.constant dense<0xFF800000> : vector<1x8xf32>
    %69 = vector.multi_reduction <maximumf>, %68, %cst_50 [2] : vector<1x8x8xf32> to vector<1x8xf32>
    %70 = vector.shape_cast %69 : vector<1x8xf32> to vector<1x8x1xf32>
    %71 = vector.broadcast %70 : vector<1x8x1xf32> to vector<1x8x8xf32>
    %72 = arith.subf %68, %71 : vector<1x8x8xf32>
    %73 = math.exp %72 : vector<1x8x8xf32>
    %cst_51 = arith.constant dense<0.000000e+00> : vector<1x8xf32>
    %74 = vector.multi_reduction <add>, %73, %cst_51 [2] : vector<1x8x8xf32> to vector<1x8xf32>
    %75 = vector.shape_cast %74 : vector<1x8xf32> to vector<1x8x1xf32>
    %76 = tpu.reciprocal %75 {approx = true} : vector<1x8x1xf32> -> vector<1x8x1xf32>
    %77 = vector.broadcast %76 : vector<1x8x1xf32> to vector<1x8x8xf32>
    %78 = arith.mulf %73, %77 : vector<1x8x8xf32>
    %79 = vector.extract_strided_slice %37 {offsets = [0, 0, 8], sizes = [1, 8, 8], strides = [1, 1, 1]} : vector<1x8x32xf32> to vector<1x8x8xf32>
    "tpu.trace_start"() <{level = 10 : i32, message = "bqk,bkd->bqd"}> : () -> ()
    %cst_52 = arith.constant dense<0.000000e+00> : vector<1x8x8xf32>
    %80 = tpu.matmul %78, %79, %cst_52 {dimension_numbers = #tpu.dot_dimension_numbers<[2], [1], [1], [2], [0, 0, 0, 1, 1, 2], [0], [0]>} : vector<1x8x8xf32>, vector<1x8x8xf32>, vector<1x8x8xf32> -> vector<1x8x8xf32>
    "tpu.trace_stop"() : () -> ()
    %81 = vector.shape_cast %80 : vector<1x8x8xf32> to vector<8x8xf32>
    %82 = vector.extract_strided_slice %10 {offsets = [8, 0], sizes = [8, 32], strides = [1, 1]} : vector<32x32xf32> to vector<8x32xf32>
    %cst_53 = arith.constant dense<0.000000e+00> : vector<8x32xf32>
    %83 = tpu.matmul %81, %82, %cst_53 {dimension_numbers = #tpu.dot_dimension_numbers<[1], [0], [0], [1], [0, 0, 1, 1], [], []>} : vector<8x8xf32>, vector<8x32xf32>, vector<8x32xf32> -> vector<8x32xf32>
    %84 = arith.addf %61, %83 : vector<8x32xf32>
    %85 = vector.extract_strided_slice %33 {offsets = [0, 0, 16], sizes = [1, 8, 8], strides = [1, 1, 1]} : vector<1x8x32xf32> to vector<1x8x8xf32>
    %86 = vector.extract_strided_slice %35 {offsets = [0, 0, 16], sizes = [1, 8, 8], strides = [1, 1, 1]} : vector<1x8x32xf32> to vector<1x8x8xf32>
    "tpu.trace_start"() <{level = 10 : i32, message = "bqd,bkd->bqk"}> : () -> ()
    %cst_54 = arith.constant dense<0.000000e+00> : vector<1x8x8xf32>
    %87 = tpu.matmul %85, %86, %cst_54 {dimension_numbers = #tpu.dot_dimension_numbers<[2], [2], [1], [1], [0, 0, 0, 1, 1, 1], [0], [0]>} : vector<1x8x8xf32>, vector<1x8x8xf32>, vector<1x8x8xf32> -> vector<1x8x8xf32>
    "tpu.trace_stop"() : () -> ()
    %cst_55 = arith.constant 0.353553385 : f32
    %88 = vector.broadcast %cst_55 : f32 to vector<1x8x8xf32>
    %89 = arith.mulf %87, %88 : vector<1x8x8xf32>
    %90 = vector.broadcast %4 : vector<1x1x8xf32> to vector<1x8x8xf32>
    %91 = arith.addf %89, %90 : vector<1x8x8xf32>
    %cst_56 = arith.constant dense<0xFF800000> : vector<1x8xf32>
    %92 = vector.multi_reduction <maximumf>, %91, %cst_56 [2] : vector<1x8x8xf32> to vector<1x8xf32>
    %93 = vector.shape_cast %92 : vector<1x8xf32> to vector<1x8x1xf32>
    %94 = vector.broadcast %93 : vector<1x8x1xf32> to vector<1x8x8xf32>
    %95 = arith.subf %91, %94 : vector<1x8x8xf32>
    %96 = math.exp %95 : vector<1x8x8xf32>
    %cst_57 = arith.constant dense<0.000000e+00> : vector<1x8xf32>
    %97 = vector.multi_reduction <add>, %96, %cst_57 [2] : vector<1x8x8xf32> to vector<1x8xf32>
    %98 = vector.shape_cast %97 : vector<1x8xf32> to vector<1x8x1xf32>
    %99 = tpu.reciprocal %98 {approx = true} : vector<1x8x1xf32> -> vector<1x8x1xf32>
    %100 = vector.broadcast %99 : vector<1x8x1xf32> to vector<1x8x8xf32>
    %101 = arith.mulf %96, %100 : vector<1x8x8xf32>
    %102 = vector.extract_strided_slice %37 {offsets = [0, 0, 16], sizes = [1, 8, 8], strides = [1, 1, 1]} : vector<1x8x32xf32> to vector<1x8x8xf32>
    "tpu.trace_start"() <{level = 10 : i32, message = "bqk,bkd->bqd"}> : () -> ()
    %cst_58 = arith.constant dense<0.000000e+00> : vector<1x8x8xf32>
    %103 = tpu.matmul %101, %102, %cst_58 {dimension_numbers = #tpu.dot_dimension_numbers<[2], [1], [1], [2], [0, 0, 0, 1, 1, 2], [0], [0]>} : vector<1x8x8xf32>, vector<1x8x8xf32>, vector<1x8x8xf32> -> vector<1x8x8xf32>
    "tpu.trace_stop"() : () -> ()
    %104 = vector.shape_cast %103 : vector<1x8x8xf32> to vector<8x8xf32>
    %105 = vector.extract_strided_slice %10 {offsets = [16, 0], sizes = [8, 32], strides = [1, 1]} : vector<32x32xf32> to vector<8x32xf32>
    %cst_59 = arith.constant dense<0.000000e+00> : vector<8x32xf32>
    %106 = tpu.matmul %104, %105, %cst_59 {dimension_numbers = #tpu.dot_dimension_numbers<[1], [0], [0], [1], [0, 0, 1, 1], [], []>} : vector<8x8xf32>, vector<8x32xf32>, vector<8x32xf32> -> vector<8x32xf32>
    %107 = arith.addf %84, %106 : vector<8x32xf32>
    %108 = vector.extract_strided_slice %33 {offsets = [0, 0, 24], sizes = [1, 8, 8], strides = [1, 1, 1]} : vector<1x8x32xf32> to vector<1x8x8xf32>
    %109 = vector.extract_strided_slice %35 {offsets = [0, 0, 24], sizes = [1, 8, 8], strides = [1, 1, 1]} : vector<1x8x32xf32> to vector<1x8x8xf32>
    "tpu.trace_start"() <{level = 10 : i32, message = "bqd,bkd->bqk"}> : () -> ()
    %cst_60 = arith.constant dense<0.000000e+00> : vector<1x8x8xf32>
    %110 = tpu.matmul %108, %109, %cst_60 {dimension_numbers = #tpu.dot_dimension_numbers<[2], [2], [1], [1], [0, 0, 0, 1, 1, 1], [0], [0]>} : vector<1x8x8xf32>, vector<1x8x8xf32>, vector<1x8x8xf32> -> vector<1x8x8xf32>
    "tpu.trace_stop"() : () -> ()
    %cst_61 = arith.constant 0.353553385 : f32
    %111 = vector.broadcast %cst_61 : f32 to vector<1x8x8xf32>
    %112 = arith.mulf %110, %111 : vector<1x8x8xf32>
    %113 = vector.broadcast %4 : vector<1x1x8xf32> to vector<1x8x8xf32>
    %114 = arith.addf %112, %113 : vector<1x8x8xf32>
    %cst_62 = arith.constant dense<0xFF800000> : vector<1x8xf32>
    %115 = vector.multi_reduction <maximumf>, %114, %cst_62 [2] : vector<1x8x8xf32> to vector<1x8xf32>
    %116 = vector.shape_cast %115 : vector<1x8xf32> to vector<1x8x1xf32>
    %117 = vector.broadcast %116 : vector<1x8x1xf32> to vector<1x8x8xf32>
    %118 = arith.subf %114, %117 : vector<1x8x8xf32>
    %119 = math.exp %118 : vector<1x8x8xf32>
    %cst_63 = arith.constant dense<0.000000e+00> : vector<1x8xf32>
    %120 = vector.multi_reduction <add>, %119, %cst_63 [2] : vector<1x8x8xf32> to vector<1x8xf32>
    %121 = vector.shape_cast %120 : vector<1x8xf32> to vector<1x8x1xf32>
    %122 = tpu.reciprocal %121 {approx = true} : vector<1x8x1xf32> -> vector<1x8x1xf32>
    %123 = vector.broadcast %122 : vector<1x8x1xf32> to vector<1x8x8xf32>
    %124 = arith.mulf %119, %123 : vector<1x8x8xf32>
    %125 = vector.extract_strided_slice %37 {offsets = [0, 0, 24], sizes = [1, 8, 8], strides = [1, 1, 1]} : vector<1x8x32xf32> to vector<1x8x8xf32>
    "tpu.trace_start"() <{level = 10 : i32, message = "bqk,bkd->bqd"}> : () -> ()
    %cst_64 = arith.constant dense<0.000000e+00> : vector<1x8x8xf32>
    %126 = tpu.matmul %124, %125, %cst_64 {dimension_numbers = #tpu.dot_dimension_numbers<[2], [1], [1], [2], [0, 0, 0, 1, 1, 2], [0], [0]>} : vector<1x8x8xf32>, vector<1x8x8xf32>, vector<1x8x8xf32> -> vector<1x8x8xf32>
    "tpu.trace_stop"() : () -> ()
    %127 = vector.shape_cast %126 : vector<1x8x8xf32> to vector<8x8xf32>
    %128 = vector.extract_strided_slice %10 {offsets = [24, 0], sizes = [8, 32], strides = [1, 1]} : vector<32x32xf32> to vector<8x32xf32>
    %cst_65 = arith.constant dense<0.000000e+00> : vector<8x32xf32>
    %129 = tpu.matmul %127, %128, %cst_65 {dimension_numbers = #tpu.dot_dimension_numbers<[1], [0], [0], [1], [0, 0, 1, 1], [], []>} : vector<8x8xf32>, vector<8x32xf32>, vector<8x32xf32> -> vector<8x32xf32>
    %130 = arith.addf %107, %129 : vector<8x32xf32>
    %131 = vector.broadcast %12 : vector<1x32xf32> to vector<8x32xf32>
    %132 = arith.addf %130, %131 : vector<8x32xf32>
    %133 = arith.addf %132, %3 : vector<8x32xf32>
    %cst_66 = arith.constant dense<0.000000e+00> : vector<8xf32>
    %134 = vector.multi_reduction <add>, %133, %cst_66 [1] : vector<8x32xf32> to vector<8xf32>
    %135 = vector.shape_cast %134 : vector<8xf32> to vector<8x1xf32>
    %cst_67 = arith.constant 3.200000e+01 : f32
    %136 = vector.broadcast %cst_67 : f32 to vector<8x1xf32>
    %137 = arith.divf %135, %136 : vector<8x1xf32>
    %138 = vector.broadcast %137 : vector<8x1xf32> to vector<8x32xf32>
    %139 = arith.subf %133, %138 : vector<8x32xf32>
    %140 = arith.mulf %139, %139 : vector<8x32xf32>
    %cst_68 = arith.constant dense<0.000000e+00> : vector<8xf32>
    %141 = vector.multi_reduction <add>, %140, %cst_68 [1] : vector<8x32xf32> to vector<8xf32>
    %142 = vector.shape_cast %141 : vector<8xf32> to vector<8x1xf32>
    %cst_69 = arith.constant 3.200000e+01 : f32
    %143 = vector.broadcast %cst_69 : f32 to vector<8x1xf32>
    %144 = arith.divf %142, %143 : vector<8x1xf32>
    %145 = vector.broadcast %137 : vector<8x1xf32> to vector<8x32xf32>
    %146 = arith.subf %133, %145 : vector<8x32xf32>
    %cst_70 = arith.constant 9.99999996E-13 : f32
    %147 = vector.broadcast %cst_70 : f32 to vector<8x1xf32>
    %148 = arith.addf %144, %147 : vector<8x1xf32>
    %149 = math.rsqrt %148 : vector<8x1xf32>
    %150 = vector.broadcast %149 : vector<8x1xf32> to vector<8x32xf32>
    %151 = arith.mulf %146, %150 : vector<8x32xf32>
    %152 = vector.broadcast %14 : vector<1x32xf32> to vector<8x32xf32>
    %153 = arith.mulf %151, %152 : vector<8x32xf32>
    %154 = vector.broadcast %16 : vector<1x32xf32> to vector<8x32xf32>
    %155 = arith.addf %153, %154 : vector<8x32xf32>
    %cst_71 = arith.constant dense<0.000000e+00> : vector<8x128xf32>
    %156 = tpu.matmul %155, %18, %cst_71 {dimension_numbers = #tpu.dot_dimension_numbers<[1], [0], [0], [1], [0, 0, 1, 1], [], []>} : vector<8x32xf32>, vector<32x128xf32>, vector<8x128xf32> -> vector<8x128xf32>
    %157 = vector.broadcast %20 : vector<1x128xf32> to vector<8x128xf32>
    %158 = arith.addf %156, %157 : vector<8x128xf32>
    %159 = arith.mulf %158, %158 : vector<8x128xf32>
    %160 = arith.mulf %158, %159 : vector<8x128xf32>
    %cst_72 = arith.constant 4.471500e-02 : f32
    %161 = vector.broadcast %cst_72 : f32 to vector<8x128xf32>
    %162 = arith.mulf %161, %160 : vector<8x128xf32>
    %163 = arith.addf %158, %162 : vector<8x128xf32>
    %cst_73 = arith.constant 0.797884583 : f32
    %164 = vector.broadcast %cst_73 : f32 to vector<8x128xf32>
    %165 = arith.mulf %164, %163 : vector<8x128xf32>
    %166 = math.tanh %165 : vector<8x128xf32>
    %cst_74 = arith.constant 1.000000e+00 : f32
    %167 = vector.broadcast %cst_74 : f32 to vector<8x128xf32>
    %168 = arith.addf %167, %166 : vector<8x128xf32>
    %cst_75 = arith.constant 5.000000e-01 : f32
    %169 = vector.broadcast %cst_75 : f32 to vector<8x128xf32>
    %170 = arith.mulf %169, %168 : vector<8x128xf32>
    %171 = arith.mulf %158, %170 : vector<8x128xf32>
    %cst_76 = arith.constant dense<0.000000e+00> : vector<8x32xf32>
    %172 = tpu.matmul %171, %22, %cst_76 {dimension_numbers = #tpu.dot_dimension_numbers<[1], [0], [0], [1], [0, 0, 1, 1], [], []>} : vector<8x128xf32>, vector<128x32xf32>, vector<8x32xf32> -> vector<8x32xf32>
    %173 = vector.broadcast %24 : vector<1x32xf32> to vector<8x32xf32>
    %174 = arith.addf %172, %173 : vector<8x32xf32>
    %175 = arith.addf %174, %155 : vector<8x32xf32>
    %cst_77 = arith.constant dense<0.000000e+00> : vector<8xf32>
    %176 = vector.multi_reduction <add>, %175, %cst_77 [1] : vector<8x32xf32> to vector<8xf32>
    %177 = vector.shape_cast %176 : vector<8xf32> to vector<8x1xf32>
    %cst_78 = arith.constant 3.200000e+01 : f32
    %178 = vector.broadcast %cst_78 : f32 to vector<8x1xf32>
    %179 = arith.divf %177, %178 : vector<8x1xf32>
    %180 = vector.broadcast %179 : vector<8x1xf32> to vector<8x32xf32>
    %181 = arith.subf %175, %180 : vector<8x32xf32>
    %182 = arith.mulf %181, %181 : vector<8x32xf32>
    %cst_79 = arith.constant dense<0.000000e+00> : vector<8xf32>
    %183 = vector.multi_reduction <add>, %182, %cst_79 [1] : vector<8x32xf32> to vector<8xf32>
    %184 = vector.shape_cast %183 : vector<8xf32> to vector<8x1xf32>
    %cst_80 = arith.constant 3.200000e+01 : f32
    %185 = vector.broadcast %cst_80 : f32 to vector<8x1xf32>
    %186 = arith.divf %184, %185 : vector<8x1xf32>
    %187 = vector.broadcast %179 : vector<8x1xf32> to vector<8x32xf32>
    %188 = arith.subf %175, %187 : vector<8x32xf32>
    %cst_81 = arith.constant 9.99999996E-13 : f32
    %189 = vector.broadcast %cst_81 : f32 to vector<8x1xf32>
    %190 = arith.addf %186, %189 : vector<8x1xf32>
    %191 = math.rsqrt %190 : vector<8x1xf32>
    %192 = vector.broadcast %191 : vector<8x1xf32> to vector<8x32xf32>
    %193 = arith.mulf %188, %192 : vector<8x32xf32>
    %194 = vector.broadcast %26 : vector<1x32xf32> to vector<8x32xf32>
    %195 = arith.mulf %193, %194 : vector<8x32xf32>
    %196 = vector.broadcast %28 : vector<1x32xf32> to vector<8x32xf32>
    %197 = arith.addf %195, %196 : vector<8x32xf32>
    %c0_82 = arith.constant 0 : index
    %c0_83 = arith.constant 0 : index
    %198 = vector.load %arg17[%c0_82, %c0_83] : memref<8x32xf32, #tpu.memory_space<vmem>>, vector<8x32xf32>
    %c0_84 = arith.constant 0 : index
    %c0_85 = arith.constant 0 : index
    %c0_86 = arith.constant 0 : index
    %199 = vector.load %arg3[%c0_84, %c0_85, %c0_86] : memref<1x8x1xf32, #tpu.memory_space<vmem>>, vector<1x8x1xf32>
    %200 = vector.shape_cast %199 : vector<1x8x1xf32> to vector<8x1xf32>
    %201 = vector.broadcast %200 : vector<8x1xf32> to vector<8x32xf32>
    %202 = arith.mulf %201, %197 : vector<8x32xf32>
    %203 = arith.addf %198, %202 : vector<8x32xf32>
    %c0_87 = arith.constant 0 : index
    %c0_88 = arith.constant 0 : index
    %204 = vector.load %arg17[%c0_87, %c0_88] : memref<8x32xf32, #tpu.memory_space<vmem>>, vector<8x32xf32>
    tpu.vector_store %arg17[%c0_87, %c0_88], %203 {strides = array<i32>} : memref<8x32xf32, #tpu.memory_space<vmem>>, vector<8x32xf32>,
    return
  }
  func.func @transform_0(%arg0: i32, %arg1: i32) -> (i32, i32, i32) {
    %c0_i32 = arith.constant 0 : i32
    %c0_i32_0 = arith.constant 0 : i32
    %c0_i32_1 = arith.constant 0 : i32
    return %arg0, %c0_i32, %c0_i32_0 : i32, i32, i32
  }
  func.func @transform_1(%arg0: i32, %arg1: i32) -> (i32, i32, i32) {
    %c0_i32 = arith.constant 0 : i32
    %c0_i32_0 = arith.constant 0 : i32
    return %arg1, %arg0, %c0_i32 : i32, i32, i32
  }
  func.func @transform_2(%arg0: i32, %arg1: i32) -> (i32, i32) {
    %c0_i32 = arith.constant 0 : i32
    %c0_i32_0 = arith.constant 0 : i32
    return %arg0, %c0_i32 : i32, i32
  }
  func.func @transform_3(%arg0: i32, %arg1: i32) -> (i32, i32, i32) {
    %c0_i32 = arith.constant 0 : i32
    %c0_i32_0 = arith.constant 0 : i32
    %c0_i32_1 = arith.constant 0 : i32
    return %arg1, %c0_i32, %c0_i32_0 : i32, i32, i32
  }
  func.func @transform_4(%arg0: i32, %arg1: i32) -> (i32, i32, i32) {
    %c0_i32 = arith.constant 0 : i32
    %c0_i32_0 = arith.constant 0 : i32
    %c0_i32_1 = arith.constant 0 : i32
    return %arg1, %c0_i32, %c0_i32_0 : i32, i32, i32
  }
  func.func @transform_5(%arg0: i32, %arg1: i32) -> (i32, i32, i32) {
    %c0_i32 = arith.constant 0 : i32
    %c0_i32_0 = arith.constant 0 : i32
    %c0_i32_1 = arith.constant 0 : i32
    return %arg1, %c0_i32, %c0_i32_0 : i32, i32, i32
  }
  func.func @transform_6(%arg0: i32, %arg1: i32) -> (i32, i32, i32) {
    %c0_i32 = arith.constant 0 : i32
    %c0_i32_0 = arith.constant 0 : i32
    %c0_i32_1 = arith.constant 0 : i32
    return %arg1, %c0_i32, %c0_i32_0 : i32, i32, i32
  }
  func.func @transform_7(%arg0: i32, %arg1: i32) -> (i32, i32, i32) {
    %c0_i32 = arith.constant 0 : i32
    %c0_i32_0 = arith.constant 0 : i32
    %c0_i32_1 = arith.constant 0 : i32
    return %arg1, %c0_i32, %c0_i32_0 : i32, i32, i32
  }
  func.func @transform_8(%arg0: i32, %arg1: i32) -> (i32, i32, i32) {
    %c0_i32 = arith.constant 0 : i32
    %c0_i32_0 = arith.constant 0 : i32
    %c0_i32_1 = arith.constant 0 : i32
    return %arg1, %c0_i32, %c0_i32_0 : i32, i32, i32
  }
  func.func @transform_9(%arg0: i32, %arg1: i32) -> (i32, i32, i32) {
    %c0_i32 = arith.constant 0 : i32
    %c0_i32_0 = arith.constant 0 : i32
    %c0_i32_1 = arith.constant 0 : i32
    return %arg1, %c0_i32, %c0_i32_0 : i32, i32, i32
  }
  func.func @transform_10(%arg0: i32, %arg1: i32) -> (i32, i32, i32) {
    %c0_i32 = arith.constant 0 : i32
    %c0_i32_0 = arith.constant 0 : i32
    %c0_i32_1 = arith.constant 0 : i32
    return %arg1, %c0_i32, %c0_i32_0 : i32, i32, i32
  }
  func.func @transform_11(%arg0: i32, %arg1: i32) -> (i32, i32, i32) {
    %c0_i32 = arith.constant 0 : i32
    %c0_i32_0 = arith.constant 0 : i32
    %c0_i32_1 = arith.constant 0 : i32
    return %arg1, %c0_i32, %c0_i32_0 : i32, i32, i32
  }
  func.func @transform_12(%arg0: i32, %arg1: i32) -> (i32, i32, i32) {
    %c0_i32 = arith.constant 0 : i32
    %c0_i32_0 = arith.constant 0 : i32
    %c0_i32_1 = arith.constant 0 : i32
    return %arg1, %c0_i32, %c0_i32_0 : i32, i32, i32
  }
  func.func @transform_13(%arg0: i32, %arg1: i32) -> (i32, i32, i32) {
    %c0_i32 = arith.constant 0 : i32
    %c0_i32_0 = arith.constant 0 : i32
    %c0_i32_1 = arith.constant 0 : i32
    return %arg1, %c0_i32, %c0_i32_0 : i32, i32, i32
  }
  func.func @transform_14(%arg0: i32, %arg1: i32) -> (i32, i32, i32) {
    %c0_i32 = arith.constant 0 : i32
    %c0_i32_0 = arith.constant 0 : i32
    %c0_i32_1 = arith.constant 0 : i32
    return %arg1, %c0_i32, %c0_i32_0 : i32, i32, i32
  }
  func.func @transform_15(%arg0: i32, %arg1: i32) -> (i32, i32) {
    %c0_i32 = arith.constant 0 : i32
    %c0_i32_0 = arith.constant 0 : i32
    return %arg0, %c0_i32 : i32, i32
  }
}

module attributes {stable_mosaic.version = 11 : i64} {
  func.func @_mlm_head_loss_kernel(%arg0: i32, %arg1: memref<16x32xf32, #tpu.memory_space<vmem>>, %arg2: memref<32x32xf32, #tpu.memory_space<vmem>>, %arg3: memref<1x32xf32, #tpu.memory_space<vmem>>, %arg4: memref<1x32xf32, #tpu.memory_space<vmem>>, %arg5: memref<1x32xf32, #tpu.memory_space<vmem>>, %arg6: memref<32x128xf32, #tpu.memory_space<vmem>>, %arg7: memref<1x128xf32, #tpu.memory_space<vmem>>, %arg8: memref<16x1xi32, #tpu.memory_space<vmem>>, %arg9: memref<1x1xf32, #tpu.memory_space<vmem>>) attributes {dimension_semantics = [#tpu.dimension_semantics<arbitrary>], iteration_bounds = array<i64: 1>, scalar_prefetch = 0 : i64, scratch_operands = 0 : i64, tpu.core_type = #tpu.core_type<tc>, window_params = [{pipeline_mode = #tpu.pipeline_mode<synchronous>, transform_indices = @transform_0, window_bounds = array<i64: 16, 32>}, {pipeline_mode = #tpu.pipeline_mode<synchronous>, transform_indices = @transform_1, window_bounds = array<i64: 32, 32>}, {pipeline_mode = #tpu.pipeline_mode<synchronous>, transform_indices = @transform_2, window_bounds = array<i64: 1, 32>}, {pipeline_mode = #tpu.pipeline_mode<synchronous>, transform_indices = @transform_3, window_bounds = array<i64: 1, 32>}, {pipeline_mode = #tpu.pipeline_mode<synchronous>, transform_indices = @transform_4, window_bounds = array<i64: 1, 32>}, {pipeline_mode = #tpu.pipeline_mode<synchronous>, transform_indices = @transform_5, window_bounds = array<i64: 32, 128>}, {pipeline_mode = #tpu.pipeline_mode<synchronous>, transform_indices = @transform_6, window_bounds = array<i64: 1, 128>}, {pipeline_mode = #tpu.pipeline_mode<synchronous>, transform_indices = @transform_7, window_bounds = array<i64: 16, 1>}, {pipeline_mode = #tpu.pipeline_mode<synchronous>, transform_indices = @transform_8, window_bounds = array<i64: 1, 1>}]} {
    %c0 = arith.constant 0 : index
    %c0_0 = arith.constant 0 : index
    %0 = vector.load %arg1[%c0, %c0_0] : memref<16x32xf32, #tpu.memory_space<vmem>>, vector<16x32xf32>
    %c0_1 = arith.constant 0 : index
    %c0_2 = arith.constant 0 : index
    %1 = vector.load %arg2[%c0_1, %c0_2] : memref<32x32xf32, #tpu.memory_space<vmem>>, vector<32x32xf32>
    %cst = arith.constant dense<0.000000e+00> : vector<16x32xf32>
    %2 = tpu.matmul %0, %1, %cst {dimension_numbers = #tpu.dot_dimension_numbers<[1], [0], [0], [1], [0, 0, 1, 1], [], []>} : vector<16x32xf32>, vector<32x32xf32>, vector<16x32xf32> -> vector<16x32xf32>
    %c0_3 = arith.constant 0 : index
    %c0_4 = arith.constant 0 : index
    %3 = vector.load %arg3[%c0_3, %c0_4] : memref<1x32xf32, #tpu.memory_space<vmem>>, vector<1x32xf32>
    %4 = vector.broadcast %3 : vector<1x32xf32> to vector<16x32xf32>
    %5 = arith.addf %2, %4 : vector<16x32xf32>
    %6 = arith.mulf %5, %5 : vector<16x32xf32>
    %7 = arith.mulf %5, %6 : vector<16x32xf32>
    %cst_5 = arith.constant 4.471500e-02 : f32
    %8 = vector.broadcast %cst_5 : f32 to vector<16x32xf32>
    %9 = arith.mulf %8, %7 : vector<16x32xf32>
    %10 = arith.addf %5, %9 : vector<16x32xf32>
    %cst_6 = arith.constant 0.797884583 : f32
    %11 = vector.broadcast %cst_6 : f32 to vector<16x32xf32>
    %12 = arith.mulf %11, %10 : vector<16x32xf32>
    %13 = math.tanh %12 : vector<16x32xf32>
    %cst_7 = arith.constant 1.000000e+00 : f32
    %14 = vector.broadcast %cst_7 : f32 to vector<16x32xf32>
    %15 = arith.addf %14, %13 : vector<16x32xf32>
    %cst_8 = arith.constant 5.000000e-01 : f32
    %16 = vector.broadcast %cst_8 : f32 to vector<16x32xf32>
    %17 = arith.mulf %16, %15 : vector<16x32xf32>
    %18 = arith.mulf %5, %17 : vector<16x32xf32>
    %c0_9 = arith.constant 0 : index
    %c0_10 = arith.constant 0 : index
    %19 = vector.load %arg4[%c0_9, %c0_10] : memref<1x32xf32, #tpu.memory_space<vmem>>, vector<1x32xf32>
    %c0_11 = arith.constant 0 : index
    %c0_12 = arith.constant 0 : index
    %20 = vector.load %arg5[%c0_11, %c0_12] : memref<1x32xf32, #tpu.memory_space<vmem>>, vector<1x32xf32>
    %cst_13 = arith.constant dense<0.000000e+00> : vector<16xf32>
    %21 = vector.multi_reduction <add>, %18, %cst_13 [1] : vector<16x32xf32> to vector<16xf32>
    %22 = vector.shape_cast %21 : vector<16xf32> to vector<16x1xf32>
    %cst_14 = arith.constant 3.200000e+01 : f32
    %23 = vector.broadcast %cst_14 : f32 to vector<16x1xf32>
    %24 = arith.divf %22, %23 : vector<16x1xf32>
    %25 = vector.broadcast %24 : vector<16x1xf32> to vector<16x32xf32>
    %26 = arith.subf %18, %25 : vector<16x32xf32>
    %27 = arith.mulf %26, %26 : vector<16x32xf32>
    %cst_15 = arith.constant dense<0.000000e+00> : vector<16xf32>
    %28 = vector.multi_reduction <add>, %27, %cst_15 [1] : vector<16x32xf32> to vector<16xf32>
    %29 = vector.shape_cast %28 : vector<16xf32> to vector<16x1xf32>
    %cst_16 = arith.constant 3.200000e+01 : f32
    %30 = vector.broadcast %cst_16 : f32 to vector<16x1xf32>
    %31 = arith.divf %29, %30 : vector<16x1xf32>
    %32 = vector.broadcast %24 : vector<16x1xf32> to vector<16x32xf32>
    %33 = arith.subf %18, %32 : vector<16x32xf32>
    %cst_17 = arith.constant 9.99999996E-13 : f32
    %34 = vector.broadcast %cst_17 : f32 to vector<16x1xf32>
    %35 = arith.addf %31, %34 : vector<16x1xf32>
    %36 = math.rsqrt %35 : vector<16x1xf32>
    %37 = vector.broadcast %36 : vector<16x1xf32> to vector<16x32xf32>
    %38 = arith.mulf %33, %37 : vector<16x32xf32>
    %39 = vector.broadcast %19 : vector<1x32xf32> to vector<16x32xf32>
    %40 = arith.mulf %38, %39 : vector<16x32xf32>
    %41 = vector.broadcast %20 : vector<1x32xf32> to vector<16x32xf32>
    %42 = arith.addf %40, %41 : vector<16x32xf32>
    %c0_18 = arith.constant 0 : index
    %c0_19 = arith.constant 0 : index
    %43 = vector.load %arg6[%c0_18, %c0_19] : memref<32x128xf32, #tpu.memory_space<vmem>>, vector<32x128xf32>
    %cst_20 = arith.constant dense<0.000000e+00> : vector<16x128xf32>
    %44 = tpu.matmul %42, %43, %cst_20 {dimension_numbers = #tpu.dot_dimension_numbers<[1], [0], [0], [1], [0, 0, 1, 1], [], []>} : vector<16x32xf32>, vector<32x128xf32>, vector<16x128xf32> -> vector<16x128xf32>
    %c0_21 = arith.constant 0 : index
    %c0_22 = arith.constant 0 : index
    %45 = vector.load %arg7[%c0_21, %c0_22] : memref<1x128xf32, #tpu.memory_space<vmem>>, vector<1x128xf32>
    %46 = vector.broadcast %45 : vector<1x128xf32> to vector<16x128xf32>
    %47 = arith.addf %44, %46 : vector<16x128xf32>
    %cst_23 = arith.constant dense<0xFF800000> : vector<16xf32>
    %48 = vector.multi_reduction <maximumf>, %47, %cst_23 [1] : vector<16x128xf32> to vector<16xf32>
    %49 = vector.shape_cast %48 : vector<16xf32> to vector<16x1xf32>
    %50 = vector.broadcast %49 : vector<16x1xf32> to vector<16x128xf32>
    %51 = arith.subf %47, %50 : vector<16x128xf32>
    %52 = math.exp %51 : vector<16x128xf32>
    %cst_24 = arith.constant dense<0.000000e+00> : vector<16xf32>
    %53 = vector.multi_reduction <add>, %52, %cst_24 [1] : vector<16x128xf32> to vector<16xf32>
    %54 = vector.shape_cast %53 : vector<16xf32> to vector<16x1xf32>
    %55 = math.log %54 : vector<16x1xf32>
    %56 = arith.addf %49, %55 : vector<16x1xf32>
    %c0_25 = arith.constant 0 : index
    %c0_26 = arith.constant 0 : index
    %57 = vector.load %arg8[%c0_25, %c0_26] : memref<16x1xi32, #tpu.memory_space<vmem>>, vector<16x1xi32>
    %58 = tpu.iota {dimensions = array<i32: 1>} : vector<16x128xi32>
    %59 = vector.broadcast %57 : vector<16x1xi32> to vector<16x128xi32>
    %60 = arith.cmpi eq, %58, %59 : vector<16x128xi32>
    %cst_27 = arith.constant 0.000000e+00 : f32
    %61 = vector.broadcast %cst_27 : f32 to vector<16x128xf32>
    %62 = arith.select %60, %47, %61 : vector<16x128xi1>, vector<16x128xf32>
    %cst_28 = arith.constant dense<0.000000e+00> : vector<16xf32>
    %63 = vector.multi_reduction <add>, %62, %cst_28 [1] : vector<16x128xf32> to vector<16xf32>
    %64 = vector.shape_cast %63 : vector<16xf32> to vector<16x1xf32>
    %c0_i32 = arith.constant 0 : i32
    %65 = vector.broadcast %c0_i32 : i32 to vector<16x1xi32>
    %66 = arith.cmpi sge, %57, %65 : vector<16x1xi32>
    %67 = arith.extui %66 : vector<16x1xi1> to vector<16x1xi32>
    %68 = arith.sitofp %67 : vector<16x1xi32> to vector<16x1xf32>
    %69 = arith.subf %56, %64 : vector<16x1xf32>
    %70 = arith.mulf %69, %68 : vector<16x1xf32>
    %71 = vector.shape_cast %70 : vector<16x1xf32> to vector<1x16x1xf32>
    %cst_29 = arith.constant dense<0.000000e+00> : vector<1xf32>
    %72 = vector.multi_reduction <add>, %71, %cst_29 [1, 2] : vector<1x16x1xf32> to vector<1xf32>
    %73 = vector.shape_cast %72 : vector<1xf32> to vector<1x1x1xf32>
    %74 = vector.extract %73[0, 0, 0] : f32 from vector<1x1x1xf32>
    %75 = vector.broadcast %74 : f32 to vector<1x1xf32>
    %76 = vector.shape_cast %68 : vector<16x1xf32> to vector<1x16x1xf32>
    %cst_30 = arith.constant dense<0.000000e+00> : vector<1xf32>
    %77 = vector.multi_reduction <add>, %76, %cst_30 [1, 2] : vector<1x16x1xf32> to vector<1xf32>
    %78 = vector.shape_cast %77 : vector<1xf32> to vector<1x1x1xf32>
    %79 = vector.extract %78[0, 0, 0] : f32 from vector<1x1x1xf32>
    %80 = vector.broadcast %79 : f32 to vector<1x1xf32>
    %cst_31 = arith.constant 1.000000e+00 : f32
    %81 = vector.broadcast %cst_31 : f32 to vector<1x1xf32>
    %82 = arith.maximumf %80, %81 : vector<1x1xf32>
    %83 = arith.divf %75, %82 : vector<1x1xf32>
    %c0_32 = arith.constant 0 : index
    %c0_33 = arith.constant 0 : index
    %84 = vector.load %arg9[%c0_32, %c0_33] : memref<1x1xf32, #tpu.memory_space<vmem>>, vector<1x1xf32>
    tpu.vector_store %arg9[%c0_32, %c0_33], %83 {strides = array<i32>} : memref<1x1xf32, #tpu.memory_space<vmem>>, vector<1x1xf32>,
    return
  }
  func.func @transform_0(%arg0: i32) -> (i32, i32) {
    %c0_i32 = arith.constant 0 : i32
    %c0_i32_0 = arith.constant 0 : i32
    %c0_i32_1 = arith.constant 0 : i32
    return %c0_i32, %c0_i32_0 : i32, i32
  }
  func.func @transform_1(%arg0: i32) -> (i32, i32) {
    %c0_i32 = arith.constant 0 : i32
    %c0_i32_0 = arith.constant 0 : i32
    %c0_i32_1 = arith.constant 0 : i32
    return %c0_i32, %c0_i32_0 : i32, i32
  }
  func.func @transform_2(%arg0: i32) -> (i32, i32) {
    %c0_i32 = arith.constant 0 : i32
    %c0_i32_0 = arith.constant 0 : i32
    %c0_i32_1 = arith.constant 0 : i32
    return %c0_i32, %c0_i32_0 : i32, i32
  }
  func.func @transform_3(%arg0: i32) -> (i32, i32) {
    %c0_i32 = arith.constant 0 : i32
    %c0_i32_0 = arith.constant 0 : i32
    %c0_i32_1 = arith.constant 0 : i32
    return %c0_i32, %c0_i32_0 : i32, i32
  }
  func.func @transform_4(%arg0: i32) -> (i32, i32) {
    %c0_i32 = arith.constant 0 : i32
    %c0_i32_0 = arith.constant 0 : i32
    %c0_i32_1 = arith.constant 0 : i32
    return %c0_i32, %c0_i32_0 : i32, i32
  }
  func.func @transform_5(%arg0: i32) -> (i32, i32) {
    %c0_i32 = arith.constant 0 : i32
    %c0_i32_0 = arith.constant 0 : i32
    %c0_i32_1 = arith.constant 0 : i32
    return %c0_i32, %c0_i32_0 : i32, i32
  }
  func.func @transform_6(%arg0: i32) -> (i32, i32) {
    %c0_i32 = arith.constant 0 : i32
    %c0_i32_0 = arith.constant 0 : i32
    %c0_i32_1 = arith.constant 0 : i32
    return %c0_i32, %c0_i32_0 : i32, i32
  }
  func.func @transform_7(%arg0: i32) -> (i32, i32) {
    %c0_i32 = arith.constant 0 : i32
    %c0_i32_0 = arith.constant 0 : i32
    %c0_i32_1 = arith.constant 0 : i32
    return %c0_i32, %c0_i32_0 : i32, i32
  }
  func.func @transform_8(%arg0: i32) -> (i32, i32) {
    %c0_i32 = arith.constant 0 : i32
    %c0_i32_0 = arith.constant 0 : i32
    %c0_i32_1 = arith.constant 0 : i32
    return %c0_i32, %c0_i32_0 : i32, i32
  }
}

module attributes {stable_mosaic.version = 11 : i64} {
  func.func @_encoder_kernel(%arg0: i32, %arg1: i32, %arg2: memref<1x1x8xf32, #tpu.memory_space<vmem>>, %arg3: memref<8x32xf32, #tpu.memory_space<vmem>>, %arg4: memref<1x32x96xf32, #tpu.memory_space<vmem>>, %arg5: memref<1x1x96xf32, #tpu.memory_space<vmem>>, %arg6: memref<1x32x32xf32, #tpu.memory_space<vmem>>, %arg7: memref<1x1x32xf32, #tpu.memory_space<vmem>>, %arg8: memref<1x1x32xf32, #tpu.memory_space<vmem>>, %arg9: memref<1x1x32xf32, #tpu.memory_space<vmem>>, %arg10: memref<1x32x128xf32, #tpu.memory_space<vmem>>, %arg11: memref<1x1x128xf32, #tpu.memory_space<vmem>>, %arg12: memref<1x128x32xf32, #tpu.memory_space<vmem>>, %arg13: memref<1x1x32xf32, #tpu.memory_space<vmem>>, %arg14: memref<1x1x32xf32, #tpu.memory_space<vmem>>, %arg15: memref<1x1x32xf32, #tpu.memory_space<vmem>>, %arg16: memref<8x32xf32, #tpu.memory_space<vmem>>) attributes {dimension_semantics = [#tpu.dimension_semantics<parallel>, #tpu.dimension_semantics<arbitrary>], iteration_bounds = array<i64: 2, 1>, scalar_prefetch = 0 : i64, scratch_operands = 0 : i64, tpu.core_type = #tpu.core_type<tc>, window_params = [{transform_indices = @transform_0, window_bounds = array<i64: 1, 1, 8>}, {transform_indices = @transform_1, window_bounds = array<i64: 8, 32>}, {transform_indices = @transform_2, window_bounds = array<i64: 1, 32, 96>}, {transform_indices = @transform_3, window_bounds = array<i64: 1, 1, 96>}, {transform_indices = @transform_4, window_bounds = array<i64: 1, 32, 32>}, {transform_indices = @transform_5, window_bounds = array<i64: 1, 1, 32>}, {transform_indices = @transform_6, window_bounds = array<i64: 1, 1, 32>}, {transform_indices = @transform_7, window_bounds = array<i64: 1, 1, 32>}, {transform_indices = @transform_8, window_bounds = array<i64: 1, 32, 128>}, {transform_indices = @transform_9, window_bounds = array<i64: 1, 1, 128>}, {transform_indices = @transform_10, window_bounds = array<i64: 1, 128, 32>}, {transform_indices = @transform_11, window_bounds = array<i64: 1, 1, 32>}, {transform_indices = @transform_12, window_bounds = array<i64: 1, 1, 32>}, {transform_indices = @transform_13, window_bounds = array<i64: 1, 1, 32>}, {transform_indices = @transform_14, window_bounds = array<i64: 8, 32>}]} {
    %c0_i32 = arith.constant 0 : i32
    %0 = arith.cmpi eq, %arg1, %c0_i32 : i32
    %1 = arith.extui %0 : i1 to i32
    %c0_i32_0 = arith.constant 0 : i32
    %2 = arith.cmpi ne, %1, %c0_i32_0 : i32
    scf.if %2 {
      %c0_84 = arith.constant 0 : index
      %c0_85 = arith.constant 0 : index
      %199 = vector.load %arg3[%c0_84, %c0_85] : memref<8x32xf32, #tpu.memory_space<vmem>>, vector<8x32xf32>
      %c0_86 = arith.constant 0 : index
      %c0_87 = arith.constant 0 : index
      %200 = vector.load %arg16[%c0_86, %c0_87] : memref<8x32xf32, #tpu.memory_space<vmem>>, vector<8x32xf32>
      tpu.vector_store %arg16[%c0_86, %c0_87], %199 {strides = array<i32>} : memref<8x32xf32, #tpu.memory_space<vmem>>, vector<8x32xf32>,
    } else {
    }
    %c0 = arith.constant 0 : index
    %c0_1 = arith.constant 0 : index
    %3 = vector.load %arg16[%c0, %c0_1] : memref<8x32xf32, #tpu.memory_space<vmem>>, vector<8x32xf32>
    %c0_2 = arith.constant 0 : index
    %c0_3 = arith.constant 0 : index
    %c0_4 = arith.constant 0 : index
    %4 = vector.load %arg2[%c0_2, %c0_3, %c0_4] : memref<1x1x8xf32, #tpu.memory_space<vmem>>, vector<1x1x8xf32>
    %c0_5 = arith.constant 0 : index
    %c0_6 = arith.constant 0 : index
    %c0_7 = arith.constant 0 : index
    %5 = vector.load %arg4[%c0_5, %c0_6, %c0_7] : memref<1x32x96xf32, #tpu.memory_space<vmem>>, vector<1x32x96xf32>
    %6 = vector.shape_cast %5 : vector<1x32x96xf32> to vector<32x96xf32>
    %c0_8 = arith.constant 0 : index
    %c0_9 = arith.constant 0 : index
    %c0_10 = arith.constant 0 : index
    %7 = vector.load %arg5[%c0_8, %c0_9, %c0_10] : memref<1x1x96xf32, #tpu.memory_space<vmem>>, vector<1x1x96xf32>
    %8 = vector.shape_cast %7 : vector<1x1x96xf32> to vector<1x96xf32>
    %c0_11 = arith.constant 0 : index
    %c0_12 = arith.constant 0 : index
    %c0_13 = arith.constant 0 : index
    %9 = vector.load %arg6[%c0_11, %c0_12, %c0_13] : memref<1x32x32xf32, #tpu.memory_space<vmem>>, vector<1x32x32xf32>
    %10 = vector.shape_cast %9 : vector<1x32x32xf32> to vector<32x32xf32>
    %c0_14 = arith.constant 0 : index
    %c0_15 = arith.constant 0 : index
    %c0_16 = arith.constant 0 : index
    %11 = vector.load %arg7[%c0_14, %c0_15, %c0_16] : memref<1x1x32xf32, #tpu.memory_space<vmem>>, vector<1x1x32xf32>
    %12 = vector.shape_cast %11 : vector<1x1x32xf32> to vector<1x32xf32>
    %c0_17 = arith.constant 0 : index
    %c0_18 = arith.constant 0 : index
    %c0_19 = arith.constant 0 : index
    %13 = vector.load %arg8[%c0_17, %c0_18, %c0_19] : memref<1x1x32xf32, #tpu.memory_space<vmem>>, vector<1x1x32xf32>
    %14 = vector.shape_cast %13 : vector<1x1x32xf32> to vector<1x32xf32>
    %c0_20 = arith.constant 0 : index
    %c0_21 = arith.constant 0 : index
    %c0_22 = arith.constant 0 : index
    %15 = vector.load %arg9[%c0_20, %c0_21, %c0_22] : memref<1x1x32xf32, #tpu.memory_space<vmem>>, vector<1x1x32xf32>
    %16 = vector.shape_cast %15 : vector<1x1x32xf32> to vector<1x32xf32>
    %c0_23 = arith.constant 0 : index
    %c0_24 = arith.constant 0 : index
    %c0_25 = arith.constant 0 : index
    %17 = vector.load %arg10[%c0_23, %c0_24, %c0_25] : memref<1x32x128xf32, #tpu.memory_space<vmem>>, vector<1x32x128xf32>
    %18 = vector.shape_cast %17 : vector<1x32x128xf32> to vector<32x128xf32>
    %c0_26 = arith.constant 0 : index
    %c0_27 = arith.constant 0 : index
    %c0_28 = arith.constant 0 : index
    %19 = vector.load %arg11[%c0_26, %c0_27, %c0_28] : memref<1x1x128xf32, #tpu.memory_space<vmem>>, vector<1x1x128xf32>
    %20 = vector.shape_cast %19 : vector<1x1x128xf32> to vector<1x128xf32>
    %c0_29 = arith.constant 0 : index
    %c0_30 = arith.constant 0 : index
    %c0_31 = arith.constant 0 : index
    %21 = vector.load %arg12[%c0_29, %c0_30, %c0_31] : memref<1x128x32xf32, #tpu.memory_space<vmem>>, vector<1x128x32xf32>
    %22 = vector.shape_cast %21 : vector<1x128x32xf32> to vector<128x32xf32>
    %c0_32 = arith.constant 0 : index
    %c0_33 = arith.constant 0 : index
    %c0_34 = arith.constant 0 : index
    %23 = vector.load %arg13[%c0_32, %c0_33, %c0_34] : memref<1x1x32xf32, #tpu.memory_space<vmem>>, vector<1x1x32xf32>
    %24 = vector.shape_cast %23 : vector<1x1x32xf32> to vector<1x32xf32>
    %c0_35 = arith.constant 0 : index
    %c0_36 = arith.constant 0 : index
    %c0_37 = arith.constant 0 : index
    %25 = vector.load %arg14[%c0_35, %c0_36, %c0_37] : memref<1x1x32xf32, #tpu.memory_space<vmem>>, vector<1x1x32xf32>
    %26 = vector.shape_cast %25 : vector<1x1x32xf32> to vector<1x32xf32>
    %c0_38 = arith.constant 0 : index
    %c0_39 = arith.constant 0 : index
    %c0_40 = arith.constant 0 : index
    %27 = vector.load %arg15[%c0_38, %c0_39, %c0_40] : memref<1x1x32xf32, #tpu.memory_space<vmem>>, vector<1x1x32xf32>
    %28 = vector.shape_cast %27 : vector<1x1x32xf32> to vector<1x32xf32>
    %cst = arith.constant dense<0.000000e+00> : vector<8x96xf32>
    %29 = tpu.matmul %3, %6, %cst {dimension_numbers = #tpu.dot_dimension_numbers<[1], [0], [0], [1], [0, 0, 1, 1], [], []>} : vector<8x32xf32>, vector<32x96xf32>, vector<8x96xf32> -> vector<8x96xf32>
    %30 = vector.broadcast %8 : vector<1x96xf32> to vector<8x96xf32>
    %31 = arith.addf %29, %30 : vector<8x96xf32>
    %32 = vector.extract_strided_slice %31 {offsets = [0, 0], sizes = [8, 32], strides = [1, 1]} : vector<8x96xf32> to vector<8x32xf32>
    %33 = vector.shape_cast %32 : vector<8x32xf32> to vector<1x8x32xf32>
    %34 = vector.extract_strided_slice %31 {offsets = [0, 32], sizes = [8, 32], strides = [1, 1]} : vector<8x96xf32> to vector<8x32xf32>
    %35 = vector.shape_cast %34 : vector<8x32xf32> to vector<1x8x32xf32>
    %36 = vector.extract_strided_slice %31 {offsets = [0, 64], sizes = [8, 32], strides = [1, 1]} : vector<8x96xf32> to vector<8x32xf32>
    %37 = vector.shape_cast %36 : vector<8x32xf32> to vector<1x8x32xf32>
    %cst_41 = arith.constant 0.000000e+00 : f32
    %38 = vector.broadcast %cst_41 : f32 to vector<8x32xf32>
    %39 = vector.extract_strided_slice %33 {offsets = [0, 0, 0], sizes = [1, 8, 8], strides = [1, 1, 1]} : vector<1x8x32xf32> to vector<1x8x8xf32>
    %40 = vector.extract_strided_slice %35 {offsets = [0, 0, 0], sizes = [1, 8, 8], strides = [1, 1, 1]} : vector<1x8x32xf32> to vector<1x8x8xf32>
    "tpu.trace_start"() <{level = 10 : i32, message = "bqd,bkd->bqk"}> : () -> ()
    %cst_42 = arith.constant dense<0.000000e+00> : vector<1x8x8xf32>
    %41 = tpu.matmul %39, %40, %cst_42 {dimension_numbers = #tpu.dot_dimension_numbers<[2], [2], [1], [1], [0, 0, 0, 1, 1, 1], [0], [0]>} : vector<1x8x8xf32>, vector<1x8x8xf32>, vector<1x8x8xf32> -> vector<1x8x8xf32>
    "tpu.trace_stop"() : () -> ()
    %cst_43 = arith.constant 0.353553385 : f32
    %42 = vector.broadcast %cst_43 : f32 to vector<1x8x8xf32>
    %43 = arith.mulf %41, %42 : vector<1x8x8xf32>
    %44 = vector.broadcast %4 : vector<1x1x8xf32> to vector<1x8x8xf32>
    %45 = arith.addf %43, %44 : vector<1x8x8xf32>
    %cst_44 = arith.constant dense<0xFF800000> : vector<1x8xf32>
    %46 = vector.multi_reduction <maximumf>, %45, %cst_44 [2] : vector<1x8x8xf32> to vector<1x8xf32>
    %47 = vector.shape_cast %46 : vector<1x8xf32> to vector<1x8x1xf32>
    %48 = vector.broadcast %47 : vector<1x8x1xf32> to vector<1x8x8xf32>
    %49 = arith.subf %45, %48 : vector<1x8x8xf32>
    %50 = math.exp %49 : vector<1x8x8xf32>
    %cst_45 = arith.constant dense<0.000000e+00> : vector<1x8xf32>
    %51 = vector.multi_reduction <add>, %50, %cst_45 [2] : vector<1x8x8xf32> to vector<1x8xf32>
    %52 = vector.shape_cast %51 : vector<1x8xf32> to vector<1x8x1xf32>
    %53 = tpu.reciprocal %52 {approx = true} : vector<1x8x1xf32> -> vector<1x8x1xf32>
    %54 = vector.broadcast %53 : vector<1x8x1xf32> to vector<1x8x8xf32>
    %55 = arith.mulf %50, %54 : vector<1x8x8xf32>
    %56 = vector.extract_strided_slice %37 {offsets = [0, 0, 0], sizes = [1, 8, 8], strides = [1, 1, 1]} : vector<1x8x32xf32> to vector<1x8x8xf32>
    "tpu.trace_start"() <{level = 10 : i32, message = "bqk,bkd->bqd"}> : () -> ()
    %cst_46 = arith.constant dense<0.000000e+00> : vector<1x8x8xf32>
    %57 = tpu.matmul %55, %56, %cst_46 {dimension_numbers = #tpu.dot_dimension_numbers<[2], [1], [1], [2], [0, 0, 0, 1, 1, 2], [0], [0]>} : vector<1x8x8xf32>, vector<1x8x8xf32>, vector<1x8x8xf32> -> vector<1x8x8xf32>
    "tpu.trace_stop"() : () -> ()
    %58 = vector.shape_cast %57 : vector<1x8x8xf32> to vector<8x8xf32>
    %59 = vector.extract_strided_slice %10 {offsets = [0, 0], sizes = [8, 32], strides = [1, 1]} : vector<32x32xf32> to vector<8x32xf32>
    %cst_47 = arith.constant dense<0.000000e+00> : vector<8x32xf32>
    %60 = tpu.matmul %58, %59, %cst_47 {dimension_numbers = #tpu.dot_dimension_numbers<[1], [0], [0], [1], [0, 0, 1, 1], [], []>} : vector<8x8xf32>, vector<8x32xf32>, vector<8x32xf32> -> vector<8x32xf32>
    %61 = arith.addf %38, %60 : vector<8x32xf32>
    %62 = vector.extract_strided_slice %33 {offsets = [0, 0, 8], sizes = [1, 8, 8], strides = [1, 1, 1]} : vector<1x8x32xf32> to vector<1x8x8xf32>
    %63 = vector.extract_strided_slice %35 {offsets = [0, 0, 8], sizes = [1, 8, 8], strides = [1, 1, 1]} : vector<1x8x32xf32> to vector<1x8x8xf32>
    "tpu.trace_start"() <{level = 10 : i32, message = "bqd,bkd->bqk"}> : () -> ()
    %cst_48 = arith.constant dense<0.000000e+00> : vector<1x8x8xf32>
    %64 = tpu.matmul %62, %63, %cst_48 {dimension_numbers = #tpu.dot_dimension_numbers<[2], [2], [1], [1], [0, 0, 0, 1, 1, 1], [0], [0]>} : vector<1x8x8xf32>, vector<1x8x8xf32>, vector<1x8x8xf32> -> vector<1x8x8xf32>
    "tpu.trace_stop"() : () -> ()
    %cst_49 = arith.constant 0.353553385 : f32
    %65 = vector.broadcast %cst_49 : f32 to vector<1x8x8xf32>
    %66 = arith.mulf %64, %65 : vector<1x8x8xf32>
    %67 = vector.broadcast %4 : vector<1x1x8xf32> to vector<1x8x8xf32>
    %68 = arith.addf %66, %67 : vector<1x8x8xf32>
    %cst_50 = arith.constant dense<0xFF800000> : vector<1x8xf32>
    %69 = vector.multi_reduction <maximumf>, %68, %cst_50 [2] : vector<1x8x8xf32> to vector<1x8xf32>
    %70 = vector.shape_cast %69 : vector<1x8xf32> to vector<1x8x1xf32>
    %71 = vector.broadcast %70 : vector<1x8x1xf32> to vector<1x8x8xf32>
    %72 = arith.subf %68, %71 : vector<1x8x8xf32>
    %73 = math.exp %72 : vector<1x8x8xf32>
    %cst_51 = arith.constant dense<0.000000e+00> : vector<1x8xf32>
    %74 = vector.multi_reduction <add>, %73, %cst_51 [2] : vector<1x8x8xf32> to vector<1x8xf32>
    %75 = vector.shape_cast %74 : vector<1x8xf32> to vector<1x8x1xf32>
    %76 = tpu.reciprocal %75 {approx = true} : vector<1x8x1xf32> -> vector<1x8x1xf32>
    %77 = vector.broadcast %76 : vector<1x8x1xf32> to vector<1x8x8xf32>
    %78 = arith.mulf %73, %77 : vector<1x8x8xf32>
    %79 = vector.extract_strided_slice %37 {offsets = [0, 0, 8], sizes = [1, 8, 8], strides = [1, 1, 1]} : vector<1x8x32xf32> to vector<1x8x8xf32>
    "tpu.trace_start"() <{level = 10 : i32, message = "bqk,bkd->bqd"}> : () -> ()
    %cst_52 = arith.constant dense<0.000000e+00> : vector<1x8x8xf32>
    %80 = tpu.matmul %78, %79, %cst_52 {dimension_numbers = #tpu.dot_dimension_numbers<[2], [1], [1], [2], [0, 0, 0, 1, 1, 2], [0], [0]>} : vector<1x8x8xf32>, vector<1x8x8xf32>, vector<1x8x8xf32> -> vector<1x8x8xf32>
    "tpu.trace_stop"() : () -> ()
    %81 = vector.shape_cast %80 : vector<1x8x8xf32> to vector<8x8xf32>
    %82 = vector.extract_strided_slice %10 {offsets = [8, 0], sizes = [8, 32], strides = [1, 1]} : vector<32x32xf32> to vector<8x32xf32>
    %cst_53 = arith.constant dense<0.000000e+00> : vector<8x32xf32>
    %83 = tpu.matmul %81, %82, %cst_53 {dimension_numbers = #tpu.dot_dimension_numbers<[1], [0], [0], [1], [0, 0, 1, 1], [], []>} : vector<8x8xf32>, vector<8x32xf32>, vector<8x32xf32> -> vector<8x32xf32>
    %84 = arith.addf %61, %83 : vector<8x32xf32>
    %85 = vector.extract_strided_slice %33 {offsets = [0, 0, 16], sizes = [1, 8, 8], strides = [1, 1, 1]} : vector<1x8x32xf32> to vector<1x8x8xf32>
    %86 = vector.extract_strided_slice %35 {offsets = [0, 0, 16], sizes = [1, 8, 8], strides = [1, 1, 1]} : vector<1x8x32xf32> to vector<1x8x8xf32>
    "tpu.trace_start"() <{level = 10 : i32, message = "bqd,bkd->bqk"}> : () -> ()
    %cst_54 = arith.constant dense<0.000000e+00> : vector<1x8x8xf32>
    %87 = tpu.matmul %85, %86, %cst_54 {dimension_numbers = #tpu.dot_dimension_numbers<[2], [2], [1], [1], [0, 0, 0, 1, 1, 1], [0], [0]>} : vector<1x8x8xf32>, vector<1x8x8xf32>, vector<1x8x8xf32> -> vector<1x8x8xf32>
    "tpu.trace_stop"() : () -> ()
    %cst_55 = arith.constant 0.353553385 : f32
    %88 = vector.broadcast %cst_55 : f32 to vector<1x8x8xf32>
    %89 = arith.mulf %87, %88 : vector<1x8x8xf32>
    %90 = vector.broadcast %4 : vector<1x1x8xf32> to vector<1x8x8xf32>
    %91 = arith.addf %89, %90 : vector<1x8x8xf32>
    %cst_56 = arith.constant dense<0xFF800000> : vector<1x8xf32>
    %92 = vector.multi_reduction <maximumf>, %91, %cst_56 [2] : vector<1x8x8xf32> to vector<1x8xf32>
    %93 = vector.shape_cast %92 : vector<1x8xf32> to vector<1x8x1xf32>
    %94 = vector.broadcast %93 : vector<1x8x1xf32> to vector<1x8x8xf32>
    %95 = arith.subf %91, %94 : vector<1x8x8xf32>
    %96 = math.exp %95 : vector<1x8x8xf32>
    %cst_57 = arith.constant dense<0.000000e+00> : vector<1x8xf32>
    %97 = vector.multi_reduction <add>, %96, %cst_57 [2] : vector<1x8x8xf32> to vector<1x8xf32>
    %98 = vector.shape_cast %97 : vector<1x8xf32> to vector<1x8x1xf32>
    %99 = tpu.reciprocal %98 {approx = true} : vector<1x8x1xf32> -> vector<1x8x1xf32>
    %100 = vector.broadcast %99 : vector<1x8x1xf32> to vector<1x8x8xf32>
    %101 = arith.mulf %96, %100 : vector<1x8x8xf32>
    %102 = vector.extract_strided_slice %37 {offsets = [0, 0, 16], sizes = [1, 8, 8], strides = [1, 1, 1]} : vector<1x8x32xf32> to vector<1x8x8xf32>
    "tpu.trace_start"() <{level = 10 : i32, message = "bqk,bkd->bqd"}> : () -> ()
    %cst_58 = arith.constant dense<0.000000e+00> : vector<1x8x8xf32>
    %103 = tpu.matmul %101, %102, %cst_58 {dimension_numbers = #tpu.dot_dimension_numbers<[2], [1], [1], [2], [0, 0, 0, 1, 1, 2], [0], [0]>} : vector<1x8x8xf32>, vector<1x8x8xf32>, vector<1x8x8xf32> -> vector<1x8x8xf32>
    "tpu.trace_stop"() : () -> ()
    %104 = vector.shape_cast %103 : vector<1x8x8xf32> to vector<8x8xf32>
    %105 = vector.extract_strided_slice %10 {offsets = [16, 0], sizes = [8, 32], strides = [1, 1]} : vector<32x32xf32> to vector<8x32xf32>
    %cst_59 = arith.constant dense<0.000000e+00> : vector<8x32xf32>
    %106 = tpu.matmul %104, %105, %cst_59 {dimension_numbers = #tpu.dot_dimension_numbers<[1], [0], [0], [1], [0, 0, 1, 1], [], []>} : vector<8x8xf32>, vector<8x32xf32>, vector<8x32xf32> -> vector<8x32xf32>
    %107 = arith.addf %84, %106 : vector<8x32xf32>
    %108 = vector.extract_strided_slice %33 {offsets = [0, 0, 24], sizes = [1, 8, 8], strides = [1, 1, 1]} : vector<1x8x32xf32> to vector<1x8x8xf32>
    %109 = vector.extract_strided_slice %35 {offsets = [0, 0, 24], sizes = [1, 8, 8], strides = [1, 1, 1]} : vector<1x8x32xf32> to vector<1x8x8xf32>
    "tpu.trace_start"() <{level = 10 : i32, message = "bqd,bkd->bqk"}> : () -> ()
    %cst_60 = arith.constant dense<0.000000e+00> : vector<1x8x8xf32>
    %110 = tpu.matmul %108, %109, %cst_60 {dimension_numbers = #tpu.dot_dimension_numbers<[2], [2], [1], [1], [0, 0, 0, 1, 1, 1], [0], [0]>} : vector<1x8x8xf32>, vector<1x8x8xf32>, vector<1x8x8xf32> -> vector<1x8x8xf32>
    "tpu.trace_stop"() : () -> ()
    %cst_61 = arith.constant 0.353553385 : f32
    %111 = vector.broadcast %cst_61 : f32 to vector<1x8x8xf32>
    %112 = arith.mulf %110, %111 : vector<1x8x8xf32>
    %113 = vector.broadcast %4 : vector<1x1x8xf32> to vector<1x8x8xf32>
    %114 = arith.addf %112, %113 : vector<1x8x8xf32>
    %cst_62 = arith.constant dense<0xFF800000> : vector<1x8xf32>
    %115 = vector.multi_reduction <maximumf>, %114, %cst_62 [2] : vector<1x8x8xf32> to vector<1x8xf32>
    %116 = vector.shape_cast %115 : vector<1x8xf32> to vector<1x8x1xf32>
    %117 = vector.broadcast %116 : vector<1x8x1xf32> to vector<1x8x8xf32>
    %118 = arith.subf %114, %117 : vector<1x8x8xf32>
    %119 = math.exp %118 : vector<1x8x8xf32>
    %cst_63 = arith.constant dense<0.000000e+00> : vector<1x8xf32>
    %120 = vector.multi_reduction <add>, %119, %cst_63 [2] : vector<1x8x8xf32> to vector<1x8xf32>
    %121 = vector.shape_cast %120 : vector<1x8xf32> to vector<1x8x1xf32>
    %122 = tpu.reciprocal %121 {approx = true} : vector<1x8x1xf32> -> vector<1x8x1xf32>
    %123 = vector.broadcast %122 : vector<1x8x1xf32> to vector<1x8x8xf32>
    %124 = arith.mulf %119, %123 : vector<1x8x8xf32>
    %125 = vector.extract_strided_slice %37 {offsets = [0, 0, 24], sizes = [1, 8, 8], strides = [1, 1, 1]} : vector<1x8x32xf32> to vector<1x8x8xf32>
    "tpu.trace_start"() <{level = 10 : i32, message = "bqk,bkd->bqd"}> : () -> ()
    %cst_64 = arith.constant dense<0.000000e+00> : vector<1x8x8xf32>
    %126 = tpu.matmul %124, %125, %cst_64 {dimension_numbers = #tpu.dot_dimension_numbers<[2], [1], [1], [2], [0, 0, 0, 1, 1, 2], [0], [0]>} : vector<1x8x8xf32>, vector<1x8x8xf32>, vector<1x8x8xf32> -> vector<1x8x8xf32>
    "tpu.trace_stop"() : () -> ()
    %127 = vector.shape_cast %126 : vector<1x8x8xf32> to vector<8x8xf32>
    %128 = vector.extract_strided_slice %10 {offsets = [24, 0], sizes = [8, 32], strides = [1, 1]} : vector<32x32xf32> to vector<8x32xf32>
    %cst_65 = arith.constant dense<0.000000e+00> : vector<8x32xf32>
    %129 = tpu.matmul %127, %128, %cst_65 {dimension_numbers = #tpu.dot_dimension_numbers<[1], [0], [0], [1], [0, 0, 1, 1], [], []>} : vector<8x8xf32>, vector<8x32xf32>, vector<8x32xf32> -> vector<8x32xf32>
    %130 = arith.addf %107, %129 : vector<8x32xf32>
    %131 = vector.broadcast %12 : vector<1x32xf32> to vector<8x32xf32>
    %132 = arith.addf %130, %131 : vector<8x32xf32>
    %133 = arith.addf %132, %3 : vector<8x32xf32>
    %cst_66 = arith.constant dense<0.000000e+00> : vector<8xf32>
    %134 = vector.multi_reduction <add>, %133, %cst_66 [1] : vector<8x32xf32> to vector<8xf32>
    %135 = vector.shape_cast %134 : vector<8xf32> to vector<8x1xf32>
    %cst_67 = arith.constant 3.200000e+01 : f32
    %136 = vector.broadcast %cst_67 : f32 to vector<8x1xf32>
    %137 = arith.divf %135, %136 : vector<8x1xf32>
    %138 = vector.broadcast %137 : vector<8x1xf32> to vector<8x32xf32>
    %139 = arith.subf %133, %138 : vector<8x32xf32>
    %140 = arith.mulf %139, %139 : vector<8x32xf32>
    %cst_68 = arith.constant dense<0.000000e+00> : vector<8xf32>
    %141 = vector.multi_reduction <add>, %140, %cst_68 [1] : vector<8x32xf32> to vector<8xf32>
    %142 = vector.shape_cast %141 : vector<8xf32> to vector<8x1xf32>
    %cst_69 = arith.constant 3.200000e+01 : f32
    %143 = vector.broadcast %cst_69 : f32 to vector<8x1xf32>
    %144 = arith.divf %142, %143 : vector<8x1xf32>
    %145 = vector.broadcast %137 : vector<8x1xf32> to vector<8x32xf32>
    %146 = arith.subf %133, %145 : vector<8x32xf32>
    %cst_70 = arith.constant 9.99999996E-13 : f32
    %147 = vector.broadcast %cst_70 : f32 to vector<8x1xf32>
    %148 = arith.addf %144, %147 : vector<8x1xf32>
    %149 = math.rsqrt %148 : vector<8x1xf32>
    %150 = vector.broadcast %149 : vector<8x1xf32> to vector<8x32xf32>
    %151 = arith.mulf %146, %150 : vector<8x32xf32>
    %152 = vector.broadcast %14 : vector<1x32xf32> to vector<8x32xf32>
    %153 = arith.mulf %151, %152 : vector<8x32xf32>
    %154 = vector.broadcast %16 : vector<1x32xf32> to vector<8x32xf32>
    %155 = arith.addf %153, %154 : vector<8x32xf32>
    %cst_71 = arith.constant dense<0.000000e+00> : vector<8x128xf32>
    %156 = tpu.matmul %155, %18, %cst_71 {dimension_numbers = #tpu.dot_dimension_numbers<[1], [0], [0], [1], [0, 0, 1, 1], [], []>} : vector<8x32xf32>, vector<32x128xf32>, vector<8x128xf32> -> vector<8x128xf32>
    %157 = vector.broadcast %20 : vector<1x128xf32> to vector<8x128xf32>
    %158 = arith.addf %156, %157 : vector<8x128xf32>
    %159 = arith.mulf %158, %158 : vector<8x128xf32>
    %160 = arith.mulf %158, %159 : vector<8x128xf32>
    %cst_72 = arith.constant 4.471500e-02 : f32
    %161 = vector.broadcast %cst_72 : f32 to vector<8x128xf32>
    %162 = arith.mulf %161, %160 : vector<8x128xf32>
    %163 = arith.addf %158, %162 : vector<8x128xf32>
    %cst_73 = arith.constant 0.797884583 : f32
    %164 = vector.broadcast %cst_73 : f32 to vector<8x128xf32>
    %165 = arith.mulf %164, %163 : vector<8x128xf32>
    %166 = math.tanh %165 : vector<8x128xf32>
    %cst_74 = arith.constant 1.000000e+00 : f32
    %167 = vector.broadcast %cst_74 : f32 to vector<8x128xf32>
    %168 = arith.addf %167, %166 : vector<8x128xf32>
    %cst_75 = arith.constant 5.000000e-01 : f32
    %169 = vector.broadcast %cst_75 : f32 to vector<8x128xf32>
    %170 = arith.mulf %169, %168 : vector<8x128xf32>
    %171 = arith.mulf %158, %170 : vector<8x128xf32>
    %cst_76 = arith.constant dense<0.000000e+00> : vector<8x32xf32>
    %172 = tpu.matmul %171, %22, %cst_76 {dimension_numbers = #tpu.dot_dimension_numbers<[1], [0], [0], [1], [0, 0, 1, 1], [], []>} : vector<8x128xf32>, vector<128x32xf32>, vector<8x32xf32> -> vector<8x32xf32>
    %173 = vector.broadcast %24 : vector<1x32xf32> to vector<8x32xf32>
    %174 = arith.addf %172, %173 : vector<8x32xf32>
    %175 = arith.addf %174, %155 : vector<8x32xf32>
    %cst_77 = arith.constant dense<0.000000e+00> : vector<8xf32>
    %176 = vector.multi_reduction <add>, %175, %cst_77 [1] : vector<8x32xf32> to vector<8xf32>
    %177 = vector.shape_cast %176 : vector<8xf32> to vector<8x1xf32>
    %cst_78 = arith.constant 3.200000e+01 : f32
    %178 = vector.broadcast %cst_78 : f32 to vector<8x1xf32>
    %179 = arith.divf %177, %178 : vector<8x1xf32>
    %180 = vector.broadcast %179 : vector<8x1xf32> to vector<8x32xf32>
    %181 = arith.subf %175, %180 : vector<8x32xf32>
    %182 = arith.mulf %181, %181 : vector<8x32xf32>
    %cst_79 = arith.constant dense<0.000000e+00> : vector<8xf32>
    %183 = vector.multi_reduction <add>, %182, %cst_79 [1] : vector<8x32xf32> to vector<8xf32>
    %184 = vector.shape_cast %183 : vector<8xf32> to vector<8x1xf32>
    %cst_80 = arith.constant 3.200000e+01 : f32
    %185 = vector.broadcast %cst_80 : f32 to vector<8x1xf32>
    %186 = arith.divf %184, %185 : vector<8x1xf32>
    %187 = vector.broadcast %179 : vector<8x1xf32> to vector<8x32xf32>
    %188 = arith.subf %175, %187 : vector<8x32xf32>
    %cst_81 = arith.constant 9.99999996E-13 : f32
    %189 = vector.broadcast %cst_81 : f32 to vector<8x1xf32>
    %190 = arith.addf %186, %189 : vector<8x1xf32>
    %191 = math.rsqrt %190 : vector<8x1xf32>
    %192 = vector.broadcast %191 : vector<8x1xf32> to vector<8x32xf32>
    %193 = arith.mulf %188, %192 : vector<8x32xf32>
    %194 = vector.broadcast %26 : vector<1x32xf32> to vector<8x32xf32>
    %195 = arith.mulf %193, %194 : vector<8x32xf32>
    %196 = vector.broadcast %28 : vector<1x32xf32> to vector<8x32xf32>
    %197 = arith.addf %195, %196 : vector<8x32xf32>
    %c0_82 = arith.constant 0 : index
    %c0_83 = arith.constant 0 : index
    %198 = vector.load %arg16[%c0_82, %c0_83] : memref<8x32xf32, #tpu.memory_space<vmem>>, vector<8x32xf32>
    tpu.vector_store %arg16[%c0_82, %c0_83], %197 {strides = array<i32>} : memref<8x32xf32, #tpu.memory_space<vmem>>, vector<8x32xf32>,
    return
  }
  func.func @transform_0(%arg0: i32, %arg1: i32) -> (i32, i32, i32) {
    %c0_i32 = arith.constant 0 : i32
    %c0_i32_0 = arith.constant 0 : i32
    %c0_i32_1 = arith.constant 0 : i32
    return %arg0, %c0_i32, %c0_i32_0 : i32, i32, i32
  }
  func.func @transform_1(%arg0: i32, %arg1: i32) -> (i32, i32) {
    %c0_i32 = arith.constant 0 : i32
    %c0_i32_0 = arith.constant 0 : i32
    return %arg0, %c0_i32 : i32, i32
  }
  func.func @transform_2(%arg0: i32, %arg1: i32) -> (i32, i32, i32) {
    %c0_i32 = arith.constant 0 : i32
    %c0_i32_0 = arith.constant 0 : i32
    %c0_i32_1 = arith.constant 0 : i32
    return %arg1, %c0_i32, %c0_i32_0 : i32, i32, i32
  }
  func.func @transform_3(%arg0: i32, %arg1: i32) -> (i32, i32, i32) {
    %c0_i32 = arith.constant 0 : i32
    %c0_i32_0 = arith.constant 0 : i32
    %c0_i32_1 = arith.constant 0 : i32
    return %arg1, %c0_i32, %c0_i32_0 : i32, i32, i32
  }
  func.func @transform_4(%arg0: i32, %arg1: i32) -> (i32, i32, i32) {
    %c0_i32 = arith.constant 0 : i32
    %c0_i32_0 = arith.constant 0 : i32
    %c0_i32_1 = arith.constant 0 : i32
    return %arg1, %c0_i32, %c0_i32_0 : i32, i32, i32
  }
  func.func @transform_5(%arg0: i32, %arg1: i32) -> (i32, i32, i32) {
    %c0_i32 = arith.constant 0 : i32
    %c0_i32_0 = arith.constant 0 : i32
    %c0_i32_1 = arith.constant 0 : i32
    return %arg1, %c0_i32, %c0_i32_0 : i32, i32, i32
  }
  func.func @transform_6(%arg0: i32, %arg1: i32) -> (i32, i32, i32) {
    %c0_i32 = arith.constant 0 : i32
    %c0_i32_0 = arith.constant 0 : i32
    %c0_i32_1 = arith.constant 0 : i32
    return %arg1, %c0_i32, %c0_i32_0 : i32, i32, i32
  }
  func.func @transform_7(%arg0: i32, %arg1: i32) -> (i32, i32, i32) {
    %c0_i32 = arith.constant 0 : i32
    %c0_i32_0 = arith.constant 0 : i32
    %c0_i32_1 = arith.constant 0 : i32
    return %arg1, %c0_i32, %c0_i32_0 : i32, i32, i32
  }
  func.func @transform_8(%arg0: i32, %arg1: i32) -> (i32, i32, i32) {
    %c0_i32 = arith.constant 0 : i32
    %c0_i32_0 = arith.constant 0 : i32
    %c0_i32_1 = arith.constant 0 : i32
    return %arg1, %c0_i32, %c0_i32_0 : i32, i32, i32
  }
  func.func @transform_9(%arg0: i32, %arg1: i32) -> (i32, i32, i32) {
    %c0_i32 = arith.constant 0 : i32
    %c0_i32_0 = arith.constant 0 : i32
    %c0_i32_1 = arith.constant 0 : i32
    return %arg1, %c0_i32, %c0_i32_0 : i32, i32, i32
  }
  func.func @transform_10(%arg0: i32, %arg1: i32) -> (i32, i32, i32) {
    %c0_i32 = arith.constant 0 : i32
    %c0_i32_0 = arith.constant 0 : i32
    %c0_i32_1 = arith.constant 0 : i32
    return %arg1, %c0_i32, %c0_i32_0 : i32, i32, i32
  }
  func.func @transform_11(%arg0: i32, %arg1: i32) -> (i32, i32, i32) {
    %c0_i32 = arith.constant 0 : i32
    %c0_i32_0 = arith.constant 0 : i32
    %c0_i32_1 = arith.constant 0 : i32
    return %arg1, %c0_i32, %c0_i32_0 : i32, i32, i32
  }
  func.func @transform_12(%arg0: i32, %arg1: i32) -> (i32, i32, i32) {
    %c0_i32 = arith.constant 0 : i32
    %c0_i32_0 = arith.constant 0 : i32
    %c0_i32_1 = arith.constant 0 : i32
    return %arg1, %c0_i32, %c0_i32_0 : i32, i32, i32
  }
  func.func @transform_13(%arg0: i32, %arg1: i32) -> (i32, i32, i32) {
    %c0_i32 = arith.constant 0 : i32
    %c0_i32_0 = arith.constant 0 : i32
    %c0_i32_1 = arith.constant 0 : i32
    return %arg1, %c0_i32, %c0_i32_0 : i32, i32, i32
  }
  func.func @transform_14(%arg0: i32, %arg1: i32) -> (i32, i32) {
    %c0_i32 = arith.constant 0 : i32
    %c0_i32_0 = arith.constant 0 : i32
    return %arg0, %c0_i32 : i32, i32
  }
}

</mosaic_0001>

<llo_original>
// kernel: loss_fn.6
$region0: #{loss_fn.6}
  #allocation0 [shape = 'u32[]', space=smem, size = 0x4, offset = 0x4, fixed_abs, tag = 'smem constant byte address 0x4 - core index']
  #allocation1 [shape = 'u32[144,128]{1,0:T(1,128)}', space=vmem, size = 0x12000, scoped, tag = 'internal scratch']
  %s0 = inlined_call_operand.vmem [shape: f32[16,32], index: 0, kind: input, shape index: {}]
  %s1 = inlined_call_operand.vmem [shape: f32[1,32], index: 1, kind: input, shape index: {}]
  %s2 = inlined_call_operand.vmem [shape: f32[1,32], index: 2, kind: input, shape index: {}]
  %s3 = inlined_call_operand.vmem [shape: f32[16,32], index: 3, kind: output, shape index: {}]
  %s4 = sld [smem:[#allocation0]]
  $region22: #{loss_fn.6} parent=0
    _
  %s6 = ssub.s32 1, %s4
  %s7 = scalar_select 0, %s6, %s4
  // Predicated region
  $region2: #{loss_fn.6} parent=0 // pred_check
    _
  $region3: #{loss_fn.6} parent=0 // pred_check_branch
    %9 = sbr.rel (0) target = $region5
  $region4: #{loss_fn.6} parent=0 // pred_region
    _
  $region5: #{loss_fn.6} parent=0 // pred_fallthru
    _
  // Predicated region
  $region6: #{loss_fn.6} parent=0 // pred_check
    _
  $region7: #{loss_fn.6} parent=0 // pred_check_branch
    %11 = sbr.rel (0) target = $region9
  $region8: #{loss_fn.6} parent=0 // pred_region
    _
  $region9: #{loss_fn.6} parent=0 // pred_fallthru
    _
  // Predicated region
  $region10: #{loss_fn.6} parent=0 // pred_check
    _
  $region11: #{loss_fn.6} parent=0 // pred_check_branch
    %13 = sbr.rel (0) target = $region13
  $region12: #{loss_fn.6} parent=0 // pred_region
    _
  $region13: #{loss_fn.6} parent=0 // pred_fallthru
    _
  %v14 = vld [vmem:[%s0] sm:$0xff]
  %v15 = vld [vmem:[%s0 + $0x8] sm:$0xff]
  %v16 = vld [vmem:[%s1] sm:$0x1]
  %v17 = vld [vmem:[%s2] sm:$0x1]
  %vm18 = vcmask 261120
  %v19 = vsel %vm18, %v14, 0.0
  %20 = vadd.xlane.f32.xlu0 %v19
  %v21 = vpop.xlane.xlu0 %20
  %v22 = vsel %vm18, %v15, 0.0
  %23 = vadd.xlane.f32.xlu0 %v22
  %v24 = vpop.xlane.xlu0 %23
  %v25 = vrcp.pop 32.0
  %v26 = vmul.f32 %v21, %v25
  %v27 = vmul.f32 %v24, %v25
  %v28 = vsub.f32 %v14, %v26
  %v29 = vsub.f32 %v15, %v27
  %v30 = vmul.f32 %v28, %v28
  %v31 = vmul.f32 %v29, %v29
  %v32 = vsel %vm18, %v30, 0.0
  %33 = vadd.xlane.f32.xlu0 %v32
  %v34 = vpop.xlane.xlu0 %33
  %v35 = vsel %vm18, %v31, 0.0
  %36 = vadd.xlane.f32.xlu0 %v35
  %v37 = vpop.xlane.xlu0 %36
  %v38 = vmul.f32 %v34, %v25
  %v39 = vmul.f32 %v37, %v25
  %v40 = vadd.f32 %v38, 1e-12
  %v41 = vadd.f32 %v39, 1e-12
  %v42 = vrsqrt.pop %v40
  %v43 = vrsqrt.pop %v41
  %v44 = vmul.f32 %v28, %v42
  %v45 = vmul.f32 %v29, %v43
  %v47 = vlaneseq
  %v48 = vshrl.u32 %v47, 7
  %v49 = vsub.s32 0, %v48
  %v50 = vrot.slane %v16, %v49
  %v52 = vmul.f32 %v44, %v50
  %v53 = vmul.f32 %v45, %v50
  %v55 = vlaneseq
  %v56 = vshrl.u32 %v55, 7
  %v57 = vsub.s32 0, %v56
  %v58 = vrot.slane %v17, %v57
  %v60 = vadd.f32 %v52, %v58
  %v61 = vadd.f32 %v53, %v58
  %62 = vst.msk [vmem:[%s3] sm:$0xff] %vm18, %v60
  %63 = vst.msk [vmem:[%s3 + $0x8] sm:$0xff] %vm18, %v61
  // Predicated region
  $region14: #{loss_fn.6} parent=0 // pred_check
    _
  $region15: #{loss_fn.6} parent=0 // pred_check_branch
    %65 = sbr.rel (0) target = $region17
  $region16: #{loss_fn.6} parent=0 // pred_region
    _
  $region17: #{loss_fn.6} parent=0 // pred_fallthru
    _
  // Predicated region
  $region18: #{loss_fn.6} parent=0 // pred_check
    _
  $region19: #{loss_fn.6} parent=0 // pred_check_branch
    %67 = sbr.rel (0) target = $region21
  $region20: #{loss_fn.6} parent=0 // pred_region
    _
  $region21: #{loss_fn.6} parent=0 // pred_fallthru
    _

// kernel: loss_fn.7
$region0: #{loss_fn.7}
  #allocation0 [shape = 'u32[]', space=smem, size = 0x4, offset = 0x4, fixed_abs, tag = 'smem constant byte address 0x4 - core index']
  #allocation1 [shape = 'u32[144,128]{1,0:T(1,128)}', space=vmem, size = 0x12000, scoped, tag = 'internal scratch']
  %s0 = inlined_call_operand.vmem [shape: f32[2,48], index: 0, kind: input, shape index: {}]
  %s1 = inlined_call_operand.vmem [shape: f32[48,64], index: 1, kind: input, shape index: {}]
  %s2 = inlined_call_operand.vmem [shape: f32[1,64], index: 2, kind: input, shape index: {}]
  %s3 = inlined_call_operand.vmem [shape: f32[64,4], index: 3, kind: input, shape index: {}]
  %s4 = inlined_call_operand.vmem [shape: f32[1,4], index: 4, kind: input, shape index: {}]
  %s5 = inlined_call_operand.vmem [shape: f32[2,4], index: 5, kind: output, shape index: {}]
  %s6 = sld [smem:[#allocation0]]
  $region30: #{loss_fn.7} parent=0
    _
  %s8 = ssub.s32 1, %s6
  %s9 = scalar_select 0, %s8, %s6
  // Predicated region
  $region2: #{loss_fn.7} parent=0 // pred_check
    _
  $region3: #{loss_fn.7} parent=0 // pred_check_branch
    %11 = sbr.rel (0) target = $region5
  $region4: #{loss_fn.7} parent=0 // pred_region
    _
  $region5: #{loss_fn.7} parent=0 // pred_fallthru
    _
  // Predicated region
  $region6: #{loss_fn.7} parent=0 // pred_check
    _
  $region7: #{loss_fn.7} parent=0 // pred_check_branch
    %13 = sbr.rel (0) target = $region9
  $region8: #{loss_fn.7} parent=0 // pred_region
    _
  $region9: #{loss_fn.7} parent=0 // pred_fallthru
    _
  // Predicated region
  $region10: #{loss_fn.7} parent=0 // pred_check
    _
  $region11: #{loss_fn.7} parent=0 // pred_check_branch
    %15 = sbr.rel (0) target = $region13
  $region12: #{loss_fn.7} parent=0 // pred_region
    _
  $region13: #{loss_fn.7} parent=0 // pred_fallthru
    _
  // Predicated region
  $region14: #{loss_fn.7} parent=0 // pred_check
    _
  $region15: #{loss_fn.7} parent=0 // pred_check_branch
    %17 = sbr.rel (0) target = $region17
  $region16: #{loss_fn.7} parent=0 // pred_region
    _
  $region17: #{loss_fn.7} parent=0 // pred_fallthru
    _
  // Predicated region
  $region18: #{loss_fn.7} parent=0 // pred_check
    _
  $region19: #{loss_fn.7} parent=0 // pred_check_branch
    %19 = sbr.rel (0) target = $region21
  $region20: #{loss_fn.7} parent=0 // pred_region
    _
  $region21: #{loss_fn.7} parent=0 // pred_fallthru
    _
  %v20 = vld [vmem:[%s0] sm:$0x3]
  %v21 = vld [vmem:[%s1] sm:$0xff]
  %v22 = vld [vmem:[%s1 + $0x8] sm:$0xff]
  %v23 = vld [vmem:[%s1 + $0x10] sm:$0xff]
  %v24 = vld [vmem:[%s1 + $0x18] sm:$0xff]
  %v25 = vld [vmem:[%s1 + $0x20] sm:$0xff]
  %v26 = vld [vmem:[%s1 + $0x28] sm:$0xff]
  %v27 = vld [vmem:[%s2] sm:$0x1]
  %v29 = vlaneseq
  %v30 = vshrl.u32 %v29, 7
  %v31 = vsub.s32 0, %v30
  %v32 = vrot.slane %v27, %v31
  %vm34 = vcmask 392192
  %v36 = vsel %vm34, %v20, 0
  %38 = vmatprep.subr.mxu0 0.0
  %39 = vmatpush1.msra.mxu0 %v21
  %40 = vmatprep.subr.mxu0 0.0
  %41 = vmatpush1.msra.mxu0 %v22
  %42 = vmatprep.subr.mxu0 0.0
  %43 = vmatpush1.msra.mxu0 %v23
  %44 = vmatprep.subr.mxu0 0.0
  %45 = vmatpush1.msra.mxu0 %v24
  %46 = vmatprep.subr.mxu0 0.0
  %47 = vmatpush1.msra.mxu0 %v25
  %48 = vmatprep.subr.mxu0 0.0
  %49 = vmatpush1.msra.mxu0 %v26
  %50 = vmatprep.subr.mxu0 0.0
  %51 = vmatpush1.msra.mxu0 0.0
  %52 = vmatprep.subr.mxu0 0.0
  %53 = vmatpush1.msra.mxu0 0.0
  %54 = vmatprep.subr.mxu0 0.0
  %55 = vmatpush1.msra.mxu0 0.0
  %56 = vmatprep.subr.mxu0 0.0
  %57 = vmatpush1.msra.mxu0 0.0
  %58 = vmatprep.subr.mxu0 0.0
  %59 = vmatpush1.msra.mxu0 0.0
  %60 = vmatprep.subr.mxu0 0.0
  %61 = vmatpush1.msra.mxu0 0.0
  %62 = vmatprep.subr.mxu0 0.0
  %63 = vmatpush1.msra.mxu0 0.0
  %64 = vmatprep.subr.mxu0 0.0
  %65 = vmatpush1.msra.mxu0 0.0
  %66 = vmatprep.subr.mxu0 0.0
  %67 = vmatpush1.msra.mxu0 0.0
  %68 = vmatprep.subr.mxu0 0.0
  %69 = vmatpush1.msra.mxu0 0.0
  %70 = vmatprep.subr.mxu0 0.0
  %71 = vmatpush1.msra.mxu0 0.0
  %72 = vmatprep.subr.mxu0 0.0
  %73 = vmatpush1.msra.mxu0 0.0
  %74 = vmatprep.subr.mxu0 0.0
  %75 = vmatpush1.msra.mxu0 0.0
  %76 = vmatprep.subr.mxu0 0.0
  %77 = vmatpush1.msra.mxu0 0.0
  %78 = vmatprep.subr.mxu0 0.0
  %79 = vmatpush1.msra.mxu0 0.0
  %80 = vmatprep.subr.mxu0 0.0
  %81 = vmatpush1.msra.mxu0 0.0
  %82 = vmatprep.subr.mxu0 0.0
  %83 = vmatpush1.msra.mxu0 0.0
  %84 = vmatprep.subr.mxu0 0.0
  %85 = vmatpush1.msra.mxu0 0.0
  %86 = vmatprep.subr.mxu0 0.0
  %87 = vmatpush1.msra.mxu0 0.0
  %88 = vmatprep.subr.mxu0 0.0
  %89 = vmatpush1.msra.mxu0 0.0
  %90 = vmatprep.subr.mxu0 0.0
  %91 = vmatpush1.msra.mxu0 0.0
  %92 = vmatprep.subr.mxu0 0.0
  %93 = vmatpush1.msra.mxu0 0.0
  %94 = vmatprep.subr.mxu0 0.0
  %95 = vmatpush1.msra.mxu0 0.0
  %96 = vmatprep.subr.mxu0 0.0
  %97 = vmatpush1.msra.mxu0 0.0
  %98 = vmatprep.subr.mxu0 0.0
  %99 = vmatpush1.msra.mxu0 0.0
  %100 = vmatprep.subr.mxu0 0.0
  %101 = vmatpush1.msra.mxu0 0.0
  %102 = vmatprep.mubr.f32.mxu0 0.0
  %103 = vmatmul.mubr.f32.gmra.mrb[0].mxu0 %v36
  %v104 = vpop.f32.mrb[0].mxu0
  %v105 = vadd.f32 %v32, %v104
  %v106 = vpop.f32.mrb[0].mxu0
  %107 = vdwg.mxu0
  %v108 = vmul.f32 %v105, %v105
  %v109 = vmul.f32 %v105, %v108
  %v110 = vmul.f32 %v109, 0.044715
  %v111 = vadd.f32 %v105, %v110
  %v112 = vmul.f32 %v111, 0.7978846
  %v113 = vtanh.pop %v112
  %v114 = vadd.f32 %v113, 1.0
  %v115 = vmul.f32 %v114, 0.5
  %v116 = vmul.f32 %v105, %v115
  %v117 = vld [vmem:[%s3] sm:$0xff]
  %v118 = vld [vmem:[%s3 + $0x8] sm:$0xff]
  %v119 = vld [vmem:[%s3 + $0x10] sm:$0xff]
  %v120 = vld [vmem:[%s3 + $0x18] sm:$0xff]
  %v121 = vld [vmem:[%s3 + $0x20] sm:$0xff]
  %v122 = vld [vmem:[%s3 + $0x28] sm:$0xff]
  %v123 = vld [vmem:[%s3 + $0x30] sm:$0xff]
  %v124 = vld [vmem:[%s3 + $0x38] sm:$0xff]
  %v125 = vld [vmem:[%s4] sm:$0x1]
  %v127 = vlaneseq
  %v128 = vshrl.u32 %v127, 7
  %v129 = vsub.s32 0, %v128
  %v130 = vrot.slane %v125, %v129
  %vm132 = vcmask 523264
  %v134 = vsel %vm132, %v116, 0
  %136 = vmatprep.subr.mxu0 0.0
  %137 = vmatpush1.msra.mxu0 %v117
  %138 = vmatprep.subr.mxu0 0.0
  %139 = vmatpush1.msra.mxu0 %v118
  %140 = vmatprep.subr.mxu0 0.0
  %141 = vmatpush1.msra.mxu0 %v119
  %142 = vmatprep.subr.mxu0 0.0
  %143 = vmatpush1.msra.mxu0 %v120
  %144 = vmatprep.subr.mxu0 0.0
  %145 = vmatpush1.msra.mxu0 %v121
  %146 = vmatprep.subr.mxu0 0.0
  %147 = vmatpush1.msra.mxu0 %v122
  %148 = vmatprep.subr.mxu0 0.0
  %149 = vmatpush1.msra.mxu0 %v123
  %150 = vmatprep.subr.mxu0 0.0
  %151 = vmatpush1.msra.mxu0 %v124
  %152 = vmatprep.subr.mxu0 0.0
  %153 = vmatpush1.msra.mxu0 0.0
  %154 = vmatprep.subr.mxu0 0.0
  %155 = vmatpush1.msra.mxu0 0.0
  %156 = vmatprep.subr.mxu0 0.0
  %157 = vmatpush1.msra.mxu0 0.0
  %158 = vmatprep.subr.mxu0 0.0
  %159 = vmatpush1.msra.mxu0 0.0
  %160 = vmatprep.subr.mxu0 0.0
  %161 = vmatpush1.msra.mxu0 0.0
  %162 = vmatprep.subr.mxu0 0.0
  %163 = vmatpush1.msra.mxu0 0.0
  %164 = vmatprep.subr.mxu0 0.0
  %165 = vmatpush1.msra.mxu0 0.0
  %166 = vmatprep.subr.mxu0 0.0
  %167 = vmatpush1.msra.mxu0 0.0
  %168 = vmatprep.subr.mxu0 0.0
  %169 = vmatpush1.msra.mxu0 0.0
  %170 = vmatprep.subr.mxu0 0.0
  %171 = vmatpush1.msra.mxu0 0.0
  %172 = vmatprep.subr.mxu0 0.0
  %173 = vmatpush1.msra.mxu0 0.0
  %174 = vmatprep.subr.mxu0 0.0
  %175 = vmatpush1.msra.mxu0 0.0
  %176 = vmatprep.subr.mxu0 0.0
  %177 = vmatpush1.msra.mxu0 0.0
  %178 = vmatprep.subr.mxu0 0.0
  %179 = vmatpush1.msra.mxu0 0.0
  %180 = vmatprep.subr.mxu0 0.0
  %181 = vmatpush1.msra.mxu0 0.0
  %182 = vmatprep.subr.mxu0 0.0
  %183 = vmatpush1.msra.mxu0 0.0
  %184 = vmatprep.subr.mxu0 0.0
  %185 = vmatpush1.msra.mxu0 0.0
  %186 = vmatprep.subr.mxu0 0.0
  %187 = vmatpush1.msra.mxu0 0.0
  %188 = vmatprep.subr.mxu0 0.0
  %189 = vmatpush1.msra.mxu0 0.0
  %190 = vmatprep.subr.mxu0 0.0
  %191 = vmatpush1.msra.mxu0 0.0
  %192 = vmatprep.subr.mxu0 0.0
  %193 = vmatpush1.msra.mxu0 0.0
  %194 = vmatprep.subr.mxu0 0.0
  %195 = vmatpush1.msra.mxu0 0.0
  %196 = vmatprep.subr.mxu0 0.0
  %197 = vmatpush1.msra.mxu0 0.0
  %198 = vmatprep.subr.mxu0 0.0
  %199 = vmatpush1.msra.mxu0 0.0
  %200 = vmatprep.mubr.f32.mxu0 0.0
  %201 = vmatmul.mubr.f32.gmra.mrb[0].mxu0 %v134
  %v202 = vpop.f32.mrb[0].mxu0
  %v203 = vadd.f32 %v130, %v202
  %v204 = vpop.f32.mrb[0].mxu0
  %205 = vdwg.mxu0
  %vm206 = vcmask 25600
  %v207 = vsel %vm206, %v203, -inf
  %208 = vmax.xlane.f32.xlu0 %v207
  %v209 = vpop.xlane.xlu0 %208
  %v210 = vsub.f32 %v203, %v209
  %v211 = vmul.f32 %v210, 1.442695
  %v212 = vpow.pop %v211
  %v213 = vsel %vm206, %v212, 0.0
  %214 = vadd.xlane.f32.xlu0 %v213
  %v215 = vpop.xlane.xlu0 %214
  %v216 = vrcp.pop %v215
  %v217 = vmul.f32 %v212, %v216
  %218 = vst.msk [vmem:[%s5] sm:$0x3] %vm206, %v217
  // Predicated region
  $region22: #{loss_fn.7} parent=0 // pred_check
    _
  $region23: #{loss_fn.7} parent=0 // pred_check_branch
    %220 = sbr.rel (0) target = $region25
  $region24: #{loss_fn.7} parent=0 // pred_region
    _
  $region25: #{loss_fn.7} parent=0 // pred_fallthru
    _
  // Predicated region
  $region26: #{loss_fn.7} parent=0 // pred_check
    _
  $region27: #{loss_fn.7} parent=0 // pred_check_branch
    %222 = sbr.rel (0) target = $region29
  $region28: #{loss_fn.7} parent=0 // pred_region
    _
  $region29: #{loss_fn.7} parent=0 // pred_fallthru
    _

// kernel: loss_fn.8
$region0: #{loss_fn.8}
  #allocation0 [shape = 'u32[]', space=smem, size = 0x4, offset = 0x4, fixed_abs, tag = 'smem constant byte address 0x4 - core index']
  #allocation1 [shape = 'u32[144,128]{1,0:T(1,128)}', space=vmem, size = 0x12000, scoped, tag = 'internal scratch']
  %s0 = inlined_call_operand.vmem [shape: f32[2,1,8], index: 0, kind: input, shape index: {}]
  %s1 = inlined_call_operand.vmem [shape: f32[16,32], index: 1, kind: input, shape index: {}]
  %s2 = inlined_call_operand.vmem [shape: f32[10,32,96], index: 2, kind: input, shape index: {}]
  %s3 = inlined_call_operand.vmem [shape: f32[10,1,96], index: 3, kind: input, shape index: {}]
  %s4 = inlined_call_operand.vmem [shape: f32[10,32,32], index: 4, kind: input, shape index: {}]
  %s5 = inlined_call_operand.vmem [shape: f32[10,1,32], index: 5, kind: input, shape index: {}]
  %s6 = inlined_call_operand.vmem [shape: f32[10,1,32], index: 6, kind: input, shape index: {}]
  %s7 = inlined_call_operand.vmem [shape: f32[10,1,32], index: 7, kind: input, shape index: {}]
  %s8 = inlined_call_operand.vmem [shape: f32[10,32,128], index: 8, kind: input, shape index: {}]
  %s9 = inlined_call_operand.vmem [shape: f32[10,1,128], index: 9, kind: input, shape index: {}]
  %s10 = inlined_call_operand.vmem [shape: f32[10,128,32], index: 10, kind: input, shape index: {}]
  %s11 = inlined_call_operand.vmem [shape: f32[10,1,32], index: 11, kind: input, shape index: {}]
  %s12 = inlined_call_operand.vmem [shape: f32[10,1,32], index: 12, kind: input, shape index: {}]
  %s13 = inlined_call_operand.vmem [shape: f32[10,1,32], index: 13, kind: input, shape index: {}]
  %s14 = inlined_call_operand.vmem [shape: f32[16,32], index: 14, kind: output, shape index: {}]
  %s15 = sld [smem:[#allocation0]]
  $region93: #{loss_fn.8} parent=0
    _
  %s17 = ssub.s32 1, %s15
  %s18 = scalar_select 0, %s17, %s15
  loop: start=0, step=1, limit=22
  $region2: #{loss_fn.8} parent=0 // loop_pre_header
    _
  $region3: #{loss_fn.8} parent=0 // loop_header
    %s20 = sphi 0, %s24
    %p21 = scmp.ge.s32.totalorder %s20, 22
    %s27 = sphi 0, %s39
    %s28 = sphi 0, %s35
    %s29 = sphi 0, %s27
    %s30 = sphi 0, %s28
    %s31 = sphi 0, %s29
    %s32 = sphi 0, %s30
    %s42 = sphi 0, %s44
    %s45 = sphi 0, %s42
    %s46 = sphi 0, %s45
    %s62 = sphi 0, %s46
    %s68 = sphi 0, %s70
    %s71 = sphi 0, %s68
    %s72 = sphi 0, %s71
    %s88 = sphi 0, %s72
    %s94 = sphi 0, %s96
    %s97 = sphi 0, %s94
    %s98 = sphi 0, %s97
    %s114 = sphi 0, %s98
    %s120 = sphi 0, %s122
    %s123 = sphi 0, %s120
    %s124 = sphi 0, %s123
    %s140 = sphi 0, %s124
    %s146 = sphi 0, %s148
    %s149 = sphi 0, %s146
    %s150 = sphi 0, %s149
    %s166 = sphi 0, %s150
    %s172 = sphi 0, %s174
    %s175 = sphi 0, %s172
    %s176 = sphi 0, %s175
    %s192 = sphi 0, %s176
    %s198 = sphi 0, %s200
    %s201 = sphi 0, %s198
    %s202 = sphi 0, %s201
    %s218 = sphi 0, %s202
    %s224 = sphi 0, %s226
    %s227 = sphi 0, %s224
    %s228 = sphi 0, %s227
    %s244 = sphi 0, %s228
    %s250 = sphi 0, %s252
    %s253 = sphi 0, %s250
    %s254 = sphi 0, %s253
    %s270 = sphi 0, %s254
    %s276 = sphi 0, %s278
    %s279 = sphi 0, %s276
    %s280 = sphi 0, %s279
    %s296 = sphi 0, %s280
    %s302 = sphi 0, %s304
    %s305 = sphi 0, %s302
    %s306 = sphi 0, %s305
    %s322 = sphi 0, %s306
    %s328 = sphi 0, %s330
    %s331 = sphi 0, %s328
    %s332 = sphi 0, %s331
    %s348 = sphi 0, %s332
    %s354 = sphi 0, %s356
    %s357 = sphi 0, %s354
    %s358 = sphi 0, %s357
    %s374 = sphi 0, %s358
    %s380 = sphi 0, %s382
    %s383 = sphi 0, %s380
    %s384 = sphi 0, %s383
    %s400 = sphi 0, %s384
    %s406 = sphi 0, %s408
    %s409 = sphi 0, %s406
    %s410 = sphi 0, %s409
    %s426 = sphi 0, %s410
  $region4: #{loss_fn.8} parent=0 // loop_header_branch
    %23 = sbr.rel (%p21) target = $region8
  $region5: #{loss_fn.8} parent=0 // loop_body
    %s25 = ssub.s32 %s20, 1
    %s26 = ssub.s32 %s20, 2
    %s33 = sadd.s32 1, %s28
    %p34 = scmp.ge.s32.totalorder %s33, 10
    %s35 = scalar_select %p34, 0, %s33
    %s36 = sadd.s32 1, %s27
    %s37 = scalar_select %p34, %s36, %s27
    %p38 = scmp.ge.s32.totalorder %s37, 2
    %s39 = scalar_select %p38, 0, %s37
    %s40 = ssub.s32 %s27, %s39
    %p41 = scmp.eq.s32.totalorder %s40, 0
    %s43 = sadd.s32 %s42, 1
    %s44 = scalar_select %p41, %s42, %s43
    %p47 = pneg %p41
    %p48 = scmp.eq.s32.totalorder %s20, 19
    %p49 = por %p47, %p48
    %p50 = scmp.ne.s32.totalorder %s42, %s45
    %p51 = scmp.eq.s32.totalorder %s20, 0
    %p52 = por %p50, %p51
    %p53 = scmp.ne.s32.totalorder %s42, %s45
    %p54 = scmp.eq.s32.totalorder %s25, 19
    %p55 = por %p53, %p54
    %p56 = scmp.ne.s32.totalorder %s45, %s46
    %p57 = scmp.eq.s32.totalorder %s25, 0
    %p58 = por %p56, %p57
    %p59 = scmp.ne.s32.totalorder %s45, %s46
    %p60 = scmp.eq.s32.totalorder %s26, 19
    %p61 = por %p59, %p60
    %p63 = scmp.ne.s32.totalorder %s46, %s62
    %p64 = scmp.eq.s32.totalorder %s26, 0
    %p65 = por %p63, %p64
    %s66 = ssub.s32 %s27, %s39
    %p67 = scmp.eq.s32.totalorder %s66, 0
    %s69 = sadd.s32 %s68, 1
    %s70 = scalar_select %p67, %s68, %s69
    %p73 = pneg %p67
    %p74 = scmp.eq.s32.totalorder %s20, 19
    %p75 = por %p73, %p74
    %p76 = scmp.ne.s32.totalorder %s68, %s71
    %p77 = scmp.eq.s32.totalorder %s20, 0
    %p78 = por %p76, %p77
    %p79 = scmp.ne.s32.totalorder %s68, %s71
    %p80 = scmp.eq.s32.totalorder %s25, 19
    %p81 = por %p79, %p80
    %p82 = scmp.ne.s32.totalorder %s71, %s72
    %p83 = scmp.eq.s32.totalorder %s25, 0
    %p84 = por %p82, %p83
    %p85 = scmp.ne.s32.totalorder %s71, %s72
    %p86 = scmp.eq.s32.totalorder %s26, 19
    %p87 = por %p85, %p86
    %p89 = scmp.ne.s32.totalorder %s72, %s88
    %p90 = scmp.eq.s32.totalorder %s26, 0
    %p91 = por %p89, %p90
    %s92 = ssub.s32 %s28, %s35
    %p93 = scmp.eq.s32.totalorder %s92, 0
    %s95 = sadd.s32 %s94, 1
    %s96 = scalar_select %p93, %s94, %s95
    %p99 = pneg %p93
    %p100 = scmp.eq.s32.totalorder %s20, 19
    %p101 = por %p99, %p100
    %p102 = scmp.ne.s32.totalorder %s94, %s97
    %p103 = scmp.eq.s32.totalorder %s20, 0
    %p104 = por %p102, %p103
    %p105 = scmp.ne.s32.totalorder %s94, %s97
    %p106 = scmp.eq.s32.totalorder %s25, 19
    %p107 = por %p105, %p106
    %p108 = scmp.ne.s32.totalorder %s97, %s98
    %p109 = scmp.eq.s32.totalorder %s25, 0
    %p110 = por %p108, %p109
    %p111 = scmp.ne.s32.totalorder %s97, %s98
    %p112 = scmp.eq.s32.totalorder %s26, 19
    %p113 = por %p111, %p112
    %p115 = scmp.ne.s32.totalorder %s98, %s114
    %p116 = scmp.eq.s32.totalorder %s26, 0
    %p117 = por %p115, %p116
    %s118 = ssub.s32 %s28, %s35
    %p119 = scmp.eq.s32.totalorder %s118, 0
    %s121 = sadd.s32 %s120, 1
    %s122 = scalar_select %p119, %s120, %s121
    %p125 = pneg %p119
    %p126 = scmp.eq.s32.totalorder %s20, 19
    %p127 = por %p125, %p126
    %p128 = scmp.ne.s32.totalorder %s120, %s123
    %p129 = scmp.eq.s32.totalorder %s20, 0
    %p130 = por %p128, %p129
    %p131 = scmp.ne.s32.totalorder %s120, %s123
    %p132 = scmp.eq.s32.totalorder %s25, 19
    %p133 = por %p131, %p132
    %p134 = scmp.ne.s32.totalorder %s123, %s124
    %p135 = scmp.eq.s32.totalorder %s25, 0
    %p136 = por %p134, %p135
    %p137 = scmp.ne.s32.totalorder %s123, %s124
    %p138 = scmp.eq.s32.totalorder %s26, 19
    %p139 = por %p137, %p138
    %p141 = scmp.ne.s32.totalorder %s124, %s140
    %p142 = scmp.eq.s32.totalorder %s26, 0
    %p143 = por %p141, %p142
    %s144 = ssub.s32 %s28, %s35
    %p145 = scmp.eq.s32.totalorder %s144, 0
    %s147 = sadd.s32 %s146, 1
    %s148 = scalar_select %p145, %s146, %s147
    %p151 = pneg %p145
    %p152 = scmp.eq.s32.totalorder %s20, 19
    %p153 = por %p151, %p152
    %p154 = scmp.ne.s32.totalorder %s146, %s149
    %p155 = scmp.eq.s32.totalorder %s20, 0
    %p156 = por %p154, %p155
    %p157 = scmp.ne.s32.totalorder %s146, %s149
    %p158 = scmp.eq.s32.totalorder %s25, 19
    %p159 = por %p157, %p158
    %p160 = scmp.ne.s32.totalorder %s149, %s150
    %p161 = scmp.eq.s32.totalorder %s25, 0
    %p162 = por %p160, %p161
    %p163 = scmp.ne.s32.totalorder %s149, %s150
    %p164 = scmp.eq.s32.totalorder %s26, 19
    %p165 = por %p163, %p164
    %p167 = scmp.ne.s32.totalorder %s150, %s166
    %p168 = scmp.eq.s32.totalorder %s26, 0
    %p169 = por %p167, %p168
    %s170 = ssub.s32 %s28, %s35
    %p171 = scmp.eq.s32.totalorder %s170, 0
    %s173 = sadd.s32 %s172, 1
    %s174 = scalar_select %p171, %s172, %s173
    %p177 = pneg %p171
    %p178 = scmp.eq.s32.totalorder %s20, 19
    %p179 = por %p177, %p178
    %p180 = scmp.ne.s32.totalorder %s172, %s175
    %p181 = scmp.eq.s32.totalorder %s20, 0
    %p182 = por %p180, %p181
    %p183 = scmp.ne.s32.totalorder %s172, %s175
    %p184 = scmp.eq.s32.totalorder %s25, 19
    %p185 = por %p183, %p184
    %p186 = scmp.ne.s32.totalorder %s175, %s176
    %p187 = scmp.eq.s32.totalorder %s25, 0
    %p188 = por %p186, %p187
    %p189 = scmp.ne.s32.totalorder %s175, %s176
    %p190 = scmp.eq.s32.totalorder %s26, 19
    %p191 = por %p189, %p190
    %p193 = scmp.ne.s32.totalorder %s176, %s192
    %p194 = scmp.eq.s32.totalorder %s26, 0
    %p195 = por %p193, %p194
    %s196 = ssub.s32 %s28, %s35
    %p197 = scmp.eq.s32.totalorder %s196, 0
    %s199 = sadd.s32 %s198, 1
    %s200 = scalar_select %p197, %s198, %s199
    %p203 = pneg %p197
    %p204 = scmp.eq.s32.totalorder %s20, 19
    %p205 = por %p203, %p204
    %p206 = scmp.ne.s32.totalorder %s198, %s201
    %p207 = scmp.eq.s32.totalorder %s20, 0
    %p208 = por %p206, %p207
    %p209 = scmp.ne.s32.totalorder %s198, %s201
    %p210 = scmp.eq.s32.totalorder %s25, 19
    %p211 = por %p209, %p210
    %p212 = scmp.ne.s32.totalorder %s201, %s202
    %p213 = scmp.eq.s32.totalorder %s25, 0
    %p214 = por %p212, %p213
    %p215 = scmp.ne.s32.totalorder %s201, %s202
    %p216 = scmp.eq.s32.totalorder %s26, 19
    %p217 = por %p215, %p216
    %p219 = scmp.ne.s32.totalorder %s202, %s218
    %p220 = scmp.eq.s32.totalorder %s26, 0
    %p221 = por %p219, %p220
    %s222 = ssub.s32 %s28, %s35
    %p223 = scmp.eq.s32.totalorder %s222, 0
    %s225 = sadd.s32 %s224, 1
    %s226 = scalar_select %p223, %s224, %s225
    %p229 = pneg %p223
    %p230 = scmp.eq.s32.totalorder %s20, 19
    %p231 = por %p229, %p230
    %p232 = scmp.ne.s32.totalorder %s224, %s227
    %p233 = scmp.eq.s32.totalorder %s20, 0
    %p234 = por %p232, %p233
    %p235 = scmp.ne.s32.totalorder %s224, %s227
    %p236 = scmp.eq.s32.totalorder %s25, 19
    %p237 = por %p235, %p236
    %p238 = scmp.ne.s32.totalorder %s227, %s228
    %p239 = scmp.eq.s32.totalorder %s25, 0
    %p240 = por %p238, %p239
    %p241 = scmp.ne.s32.totalorder %s227, %s228
    %p242 = scmp.eq.s32.totalorder %s26, 19
    %p243 = por %p241, %p242
    %p245 = scmp.ne.s32.totalorder %s228, %s244
    %p246 = scmp.eq.s32.totalorder %s26, 0
    %p247 = por %p245, %p246
    %s248 = ssub.s32 %s28, %s35
    %p249 = scmp.eq.s32.totalorder %s248, 0
    %s251 = sadd.s32 %s250, 1
    %s252 = scalar_select %p249, %s250, %s251
    %p255 = pneg %p249
    %p256 = scmp.eq.s32.totalorder %s20, 19
    %p257 = por %p255, %p256
    %p258 = scmp.ne.s32.totalorder %s250, %s253
    %p259 = scmp.eq.s32.totalorder %s20, 0
    %p260 = por %p258, %p259
    %p261 = scmp.ne.s32.totalorder %s250, %s253
    %p262 = scmp.eq.s32.totalorder %s25, 19
    %p263 = por %p261, %p262
    %p264 = scmp.ne.s32.totalorder %s253, %s254
    %p265 = scmp.eq.s32.totalorder %s25, 0
    %p266 = por %p264, %p265
    %p267 = scmp.ne.s32.totalorder %s253, %s254
    %p268 = scmp.eq.s32.totalorder %s26, 19
    %p269 = por %p267, %p268
    %p271 = scmp.ne.s32.totalorder %s254, %s270
    %p272 = scmp.eq.s32.totalorder %s26, 0
    %p273 = por %p271, %p272
    %s274 = ssub.s32 %s28, %s35
    %p275 = scmp.eq.s32.totalorder %s274, 0
    %s277 = sadd.s32 %s276, 1
    %s278 = scalar_select %p275, %s276, %s277
    %p281 = pneg %p275
    %p282 = scmp.eq.s32.totalorder %s20, 19
    %p283 = por %p281, %p282
    %p284 = scmp.ne.s32.totalorder %s276, %s279
    %p285 = scmp.eq.s32.totalorder %s20, 0
    %p286 = por %p284, %p285
    %p287 = scmp.ne.s32.totalorder %s276, %s279
    %p288 = scmp.eq.s32.totalorder %s25, 19
    %p289 = por %p287, %p288
    %p290 = scmp.ne.s32.totalorder %s279, %s280
    %p291 = scmp.eq.s32.totalorder %s25, 0
    %p292 = por %p290, %p291
    %p293 = scmp.ne.s32.totalorder %s279, %s280
    %p294 = scmp.eq.s32.totalorder %s26, 19
    %p295 = por %p293, %p294
    %p297 = scmp.ne.s32.totalorder %s280, %s296
    %p298 = scmp.eq.s32.totalorder %s26, 0
    %p299 = por %p297, %p298
    %s300 = ssub.s32 %s28, %s35
    %p301 = scmp.eq.s32.totalorder %s300, 0
    %s303 = sadd.s32 %s302, 1
    %s304 = scalar_select %p301, %s302, %s303
    %p307 = pneg %p301
    %p308 = scmp.eq.s32.totalorder %s20, 19
    %p309 = por %p307, %p308
    %p310 = scmp.ne.s32.totalorder %s302, %s305
    %p311 = scmp.eq.s32.totalorder %s20, 0
    %p312 = por %p310, %p311
    %p313 = scmp.ne.s32.totalorder %s302, %s305
    %p314 = scmp.eq.s32.totalorder %s25, 19
    %p315 = por %p313, %p314
    %p316 = scmp.ne.s32.totalorder %s305, %s306
    %p317 = scmp.eq.s32.totalorder %s25, 0
    %p318 = por %p316, %p317
    %p319 = scmp.ne.s32.totalorder %s305, %s306
    %p320 = scmp.eq.s32.totalorder %s26, 19
    %p321 = por %p319, %p320
    %p323 = scmp.ne.s32.totalorder %s306, %s322
    %p324 = scmp.eq.s32.totalorder %s26, 0
    %p325 = por %p323, %p324
    %s326 = ssub.s32 %s28, %s35
    %p327 = scmp.eq.s32.totalorder %s326, 0
    %s329 = sadd.s32 %s328, 1
    %s330 = scalar_select %p327, %s328, %s329
    %p333 = pneg %p327
    %p334 = scmp.eq.s32.totalorder %s20, 19
    %p335 = por %p333, %p334
    %p336 = scmp.ne.s32.totalorder %s328, %s331
    %p337 = scmp.eq.s32.totalorder %s20, 0
    %p338 = por %p336, %p337
    %p339 = scmp.ne.s32.totalorder %s328, %s331
    %p340 = scmp.eq.s32.totalorder %s25, 19
    %p341 = por %p339, %p340
    %p342 = scmp.ne.s32.totalorder %s331, %s332
    %p343 = scmp.eq.s32.totalorder %s25, 0
    %p344 = por %p342, %p343
    %p345 = scmp.ne.s32.totalorder %s331, %s332
    %p346 = scmp.eq.s32.totalorder %s26, 19
    %p347 = por %p345, %p346
    %p349 = scmp.ne.s32.totalorder %s332, %s348
    %p350 = scmp.eq.s32.totalorder %s26, 0
    %p351 = por %p349, %p350
    %s352 = ssub.s32 %s28, %s35
    %p353 = scmp.eq.s32.totalorder %s352, 0
    %s355 = sadd.s32 %s354, 1
    %s356 = scalar_select %p353, %s354, %s355
    %p359 = pneg %p353
    %p360 = scmp.eq.s32.totalorder %s20, 19
    %p361 = por %p359, %p360
    %p362 = scmp.ne.s32.totalorder %s354, %s357
    %p363 = scmp.eq.s32.totalorder %s20, 0
    %p364 = por %p362, %p363
    %p365 = scmp.ne.s32.totalorder %s354, %s357
    %p366 = scmp.eq.s32.totalorder %s25, 19
    %p367 = por %p365, %p366
    %p368 = scmp.ne.s32.totalorder %s357, %s358
    %p369 = scmp.eq.s32.totalorder %s25, 0
    %p370 = por %p368, %p369
    %p371 = scmp.ne.s32.totalorder %s357, %s358
    %p372 = scmp.eq.s32.totalorder %s26, 19
    %p373 = por %p371, %p372
    %p375 = scmp.ne.s32.totalorder %s358, %s374
    %p376 = scmp.eq.s32.totalorder %s26, 0
    %p377 = por %p375, %p376
    %s378 = ssub.s32 %s28, %s35
    %p379 = scmp.eq.s32.totalorder %s378, 0
    %s381 = sadd.s32 %s380, 1
    %s382 = scalar_select %p379, %s380, %s381
    %p385 = pneg %p379
    %p386 = scmp.eq.s32.totalorder %s20, 19
    %p387 = por %p385, %p386
    %p388 = scmp.ne.s32.totalorder %s380, %s383
    %p389 = scmp.eq.s32.totalorder %s20, 0
    %p390 = por %p388, %p389
    %p391 = scmp.ne.s32.totalorder %s380, %s383
    %p392 = scmp.eq.s32.totalorder %s25, 19
    %p393 = por %p391, %p392
    %p394 = scmp.ne.s32.totalorder %s383, %s384
    %p395 = scmp.eq.s32.totalorder %s25, 0
    %p396 = por %p394, %p395
    %p397 = scmp.ne.s32.totalorder %s383, %s384
    %p398 = scmp.eq.s32.totalorder %s26, 19
    %p399 = por %p397, %p398
    %p401 = scmp.ne.s32.totalorder %s384, %s400
    %p402 = scmp.eq.s32.totalorder %s26, 0
    %p403 = por %p401, %p402
    %s404 = ssub.s32 %s27, %s39
    %p405 = scmp.eq.s32.totalorder %s404, 0
    %s407 = sadd.s32 %s406, 1
    %s408 = scalar_select %p405, %s406, %s407
    %p411 = pneg %p405
    %p412 = scmp.eq.s32.totalorder %s20, 19
    %p413 = por %p411, %p412
    %p414 = scmp.ne.s32.totalorder %s406, %s409
    %p415 = scmp.eq.s32.totalorder %s20, 0
    %p416 = por %p414, %p415
    %p417 = scmp.ne.s32.totalorder %s406, %s409
    %p418 = scmp.eq.s32.totalorder %s25, 19
    %p419 = por %p417, %p418
    %p420 = scmp.ne.s32.totalorder %s409, %s410
    %p421 = scmp.eq.s32.totalorder %s25, 0
    %p422 = por %p420, %p421
    %p423 = scmp.ne.s32.totalorder %s409, %s410
    %p424 = scmp.eq.s32.totalorder %s26, 19
    %p425 = por %p423, %p424
    %p427 = scmp.ne.s32.totalorder %s410, %s426
    %p428 = scmp.eq.s32.totalorder %s26, 0
    %p429 = por %p427, %p428
    %p430 = scmp.le.s32.totalorder 1, %s20
    %p431 = scmp.lt.s32.totalorder %s20, 21
    %p432 = pnand %p430, %p431
    %p433 = pneg %p432
    // Predicated region
    $region9: #{loss_fn.8} parent=5 // pred_check
      _
    $region10: #{loss_fn.8} parent=5 // pred_check_branch
      %435 = sbr.rel (%p432) target = $region12
    $region11: #{loss_fn.8} parent=5 // pred_region
      %s436 = ssub.s32 %s20, 1
    $region12: #{loss_fn.8} parent=5 // pred_fallthru
      _
    %p437 = scmp.lt.s32.totalorder %s20, 20
    // Predicated region
    $region13: #{loss_fn.8} parent=5 // pred_check
      %p438 = pneg %p437
    $region14: #{loss_fn.8} parent=5 // pred_check_branch
      %440 = sbr.rel (%p438) target = $region16
    $region15: #{loss_fn.8} parent=5 // pred_region
      // Predicated region
      $region17: #{loss_fn.8} parent=15 // pred_check
        %p441 = pneg %p52
      $region18: #{loss_fn.8} parent=15 // pred_check_branch
        %443 = sbr.rel (%p441) target = $region20
      $region19: #{loss_fn.8} parent=15 // pred_region
        %p444 = scmp.lt.s32.totalorder %s27, 1
        %s445 = scalar_select %p444, %s27, 1
        %s446 = scalar_lea.vmem %s0, %s445
      $region20: #{loss_fn.8} parent=15 // pred_fallthru
        _
      // Predicated region
      $region21: #{loss_fn.8} parent=15 // pred_check
        %p447 = pneg %p78
      $region22: #{loss_fn.8} parent=15 // pred_check_branch
        %449 = sbr.rel (%p447) target = $region24
      $region23: #{loss_fn.8} parent=15 // pred_region
        %p450 = scmp.lt.s32.totalorder %s27, 1
        %s451 = scalar_select %p450, %s27, 1
        %s452 = smul.addr %s451, 8
        %s453 = scalar_lea.vmem %s1, %s452
      $region24: #{loss_fn.8} parent=15 // pred_fallthru
        _
      // Predicated region
      $region25: #{loss_fn.8} parent=15 // pred_check
        %p454 = pneg %p104
      $region26: #{loss_fn.8} parent=15 // pred_check_branch
        %456 = sbr.rel (%p454) target = $region28
      $region27: #{loss_fn.8} parent=15 // pred_region
        %p457 = scmp.lt.s32.totalorder %s28, 9
        %s458 = scalar_select %p457, %s28, 9
        %s459 = smul.addr %s458, 4
        %s460 = smul.addr %s459, 8
        %s461 = scalar_lea.vmem %s2, %s460
      $region28: #{loss_fn.8} parent=15 // pred_fallthru
        _
      // Predicated region
      $region29: #{loss_fn.8} parent=15 // pred_check
        %p462 = pneg %p130
      $region30: #{loss_fn.8} parent=15 // pred_check_branch
        %464 = sbr.rel (%p462) target = $region32
      $region31: #{loss_fn.8} parent=15 // pred_region
        %p465 = scmp.lt.s32.totalorder %s28, 9
        %s466 = scalar_select %p465, %s28, 9
        %s467 = scalar_lea.vmem %s3, %s466
      $region32: #{loss_fn.8} parent=15 // pred_fallthru
        _
      // Predicated region
      $region33: #{loss_fn.8} parent=15 // pred_check
        %p468 = pneg %p156
      $region34: #{loss_fn.8} parent=15 // pred_check_branch
        %470 = sbr.rel (%p468) target = $region36
      $region35: #{loss_fn.8} parent=15 // pred_region
        %p471 = scmp.lt.s32.totalorder %s28, 9
        %s472 = scalar_select %p471, %s28, 9
        %s473 = smul.addr %s472, 4
        %s474 = smul.addr %s473, 8
        %s475 = scalar_lea.vmem %s4, %s474
      $region36: #{loss_fn.8} parent=15 // pred_fallthru
        _
      // Predicated region
      $region37: #{loss_fn.8} parent=15 // pred_check
        %p476 = pneg %p182
      $region38: #{loss_fn.8} parent=15 // pred_check_branch
        %478 = sbr.rel (%p476) target = $region40
      $region39: #{loss_fn.8} parent=15 // pred_region
        %p479 = scmp.lt.s32.totalorder %s28, 9
        %s480 = scalar_select %p479, %s28, 9
        %s481 = scalar_lea.vmem %s5, %s480
      $region40: #{loss_fn.8} parent=15 // pred_fallthru
        _
      // Predicated region
      $region41: #{loss_fn.8} parent=15 // pred_check
        %p482 = pneg %p208
      $region42: #{loss_fn.8} parent=15 // pred_check_branch
        %484 = sbr.rel (%p482) target = $region44
      $region43: #{loss_fn.8} parent=15 // pred_region
        %p485 = scmp.lt.s32.totalorder %s28, 9
        %s486 = scalar_select %p485, %s28, 9
        %s487 = scalar_lea.vmem %s6, %s486
      $region44: #{loss_fn.8} parent=15 // pred_fallthru
        _
      // Predicated region
      $region45: #{loss_fn.8} parent=15 // pred_check
        %p488 = pneg %p234
      $region46: #{loss_fn.8} parent=15 // pred_check_branch
        %490 = sbr.rel (%p488) target = $region48
      $region47: #{loss_fn.8} parent=15 // pred_region
        %p491 = scmp.lt.s32.totalorder %s28, 9
        %s492 = scalar_select %p491, %s28, 9
        %s493 = scalar_lea.vmem %s7, %s492
      $region48: #{loss_fn.8} parent=15 // pred_fallthru
        _
      // Predicated region
      $region49: #{loss_fn.8} parent=15 // pred_check
        %p494 = pneg %p260
      $region50: #{loss_fn.8} parent=15 // pred_check_branch
        %496 = sbr.rel (%p494) target = $region52
      $region51: #{loss_fn.8} parent=15 // pred_region
        %p497 = scmp.lt.s32.totalorder %s28, 9
        %s498 = scalar_select %p497, %s28, 9
        %s499 = smul.addr %s498, 4
        %s500 = smul.addr %s499, 8
        %s501 = scalar_lea.vmem %s8, %s500
      $region52: #{loss_fn.8} parent=15 // pred_fallthru
        _
      // Predicated region
      $region53: #{loss_fn.8} parent=15 // pred_check
        %p502 = pneg %p286
      $region54: #{loss_fn.8} parent=15 // pred_check_branch
        %504 = sbr.rel (%p502) target = $region56
      $region55: #{loss_fn.8} parent=15 // pred_region
        %p505 = scmp.lt.s32.totalorder %s28, 9
        %s506 = scalar_select %p505, %s28, 9
        %s507 = scalar_lea.vmem %s9, %s506
      $region56: #{loss_fn.8} parent=15 // pred_fallthru
        _
      // Predicated region
      $region57: #{loss_fn.8} parent=15 // pred_check
        %p508 = pneg %p312
      $region58: #{loss_fn.8} parent=15 // pred_check_branch
        %510 = sbr.rel (%p508) target = $region60
      $region59: #{loss_fn.8} parent=15 // pred_region
        %p511 = scmp.lt.s32.totalorder %s28, 9
        %s512 = scalar_select %p511, %s28, 9
        %s513 = smul.addr %s512, 16
        %s514 = smul.addr %s513, 8
        %s515 = scalar_lea.vmem %s10, %s514
      $region60: #{loss_fn.8} parent=15 // pred_fallthru
        _
      // Predicated region
      $region61: #{loss_fn.8} parent=15 // pred_check
        %p516 = pneg %p338
      $region62: #{loss_fn.8} parent=15 // pred_check_branch
        %518 = sbr.rel (%p516) target = $region64
      $region63: #{loss_fn.8} parent=15 // pred_region
        %p519 = scmp.lt.s32.totalorder %s28, 9
        %s520 = scalar_select %p519, %s28, 9
        %s521 = scalar_lea.vmem %s11, %s520
      $region64: #{loss_fn.8} parent=15 // pred_fallthru
        _
      // Predicated region
      $region65: #{loss_fn.8} parent=15 // pred_check
        %p522 = pneg %p364
      $region66: #{loss_fn.8} parent=15 // pred_check_branch
        %524 = sbr.rel (%p522) target = $region68
      $region67: #{loss_fn.8} parent=15 // pred_region
        %p525 = scmp.lt.s32.totalorder %s28, 9
        %s526 = scalar_select %p525, %s28, 9
        %s527 = scalar_lea.vmem %s12, %s526
      $region68: #{loss_fn.8} parent=15 // pred_fallthru
        _
      // Predicated region
      $region69: #{loss_fn.8} parent=15 // pred_check
        %p528 = pneg %p390
      $region70: #{loss_fn.8} parent=15 // pred_check_branch
        %530 = sbr.rel (%p528) target = $region72
      $region71: #{loss_fn.8} parent=15 // pred_region
        %p531 = scmp.lt.s32.totalorder %s28, 9
        %s532 = scalar_select %p531, %s28, 9
        %s533 = scalar_lea.vmem %s13, %s532
      $region72: #{loss_fn.8} parent=15 // pred_fallthru
        _
    $region16: #{loss_fn.8} parent=5 // pred_fallthru
      _
    %p534 = scmp.le.s32.totalorder 1, %s20
    %p535 = scmp.lt.s32.totalorder %s20, 21
    %p536 = pnand %p534, %p535
    %p537 = pneg %p536
    // Predicated region
    $region73: #{loss_fn.8} parent=5 // pred_check
      _
    $region74: #{loss_fn.8} parent=5 // pred_check_branch
      %539 = sbr.rel (%p536) target = $region76
    $region75: #{loss_fn.8} parent=5 // pred_region
      %s540 = ssub.s32 %s20, 1
      %p541 = scmp.lt.s32.totalorder %s29, 1
      %s542 = scalar_select %p541, %s29, 1
      %s543 = scalar_lea.vmem %s0, %s542
      %p544 = pneg %p58
      %p545 = pneg %p55
      %p546 = scmp.lt.s32.totalorder %s29, 1
      %s547 = scalar_select %p546, %s29, 1
      %s548 = smul.addr %s547, 8
      %s549 = scalar_lea.vmem %s1, %s548
      %p550 = pneg %p84
      %p551 = pneg %p81
      %p552 = scmp.lt.s32.totalorder %s30, 9
      %s553 = scalar_select %p552, %s30, 9
      %s554 = smul.addr %s553, 4
      %s555 = smul.addr %s554, 8
      %s556 = scalar_lea.vmem %s2, %s555
      %p557 = pneg %p110
      %p558 = pneg %p107
      %p559 = scmp.lt.s32.totalorder %s30, 9
      %s560 = scalar_select %p559, %s30, 9
      %s561 = scalar_lea.vmem %s3, %s560
      %p562 = pneg %p136
      %p563 = pneg %p133
      %p564 = scmp.lt.s32.totalorder %s30, 9
      %s565 = scalar_select %p564, %s30, 9
      %s566 = smul.addr %s565, 4
      %s567 = smul.addr %s566, 8
      %s568 = scalar_lea.vmem %s4, %s567
      %p569 = pneg %p162
      %p570 = pneg %p159
      %p571 = scmp.lt.s32.totalorder %s30, 9
      %s572 = scalar_select %p571, %s30, 9
      %s573 = scalar_lea.vmem %s5, %s572
      %p574 = pneg %p188
      %p575 = pneg %p185
      %p576 = scmp.lt.s32.totalorder %s30, 9
      %s577 = scalar_select %p576, %s30, 9
      %s578 = scalar_lea.vmem %s6, %s577
      %p579 = pneg %p214
      %p580 = pneg %p211
      %p581 = scmp.lt.s32.totalorder %s30, 9
      %s582 = scalar_select %p581, %s30, 9
      %s583 = scalar_lea.vmem %s7, %s582
      %p584 = pneg %p240
      %p585 = pneg %p237
      %p586 = scmp.lt.s32.totalorder %s30, 9
      %s587 = scalar_select %p586, %s30, 9
      %s588 = smul.addr %s587, 4
      %s589 = smul.addr %s588, 8
      %s590 = scalar_lea.vmem %s8, %s589
      %p591 = pneg %p266
      %p592 = pneg %p263
      %p593 = scmp.lt.s32.totalorder %s30, 9
      %s594 = scalar_select %p593, %s30, 9
      %s595 = scalar_lea.vmem %s9, %s594
      %p596 = pneg %p292
      %p597 = pneg %p289
      %p598 = scmp.lt.s32.totalorder %s30, 9
      %s599 = scalar_select %p598, %s30, 9
      %s600 = smul.addr %s599, 16
      %s601 = smul.addr %s600, 8
      %s602 = scalar_lea.vmem %s10, %s601
      %p603 = pneg %p318
      %p604 = pneg %p315
      %p605 = scmp.lt.s32.totalorder %s30, 9
      %s606 = scalar_select %p605, %s30, 9
      %s607 = scalar_lea.vmem %s11, %s606
      %p608 = pneg %p344
      %p609 = pneg %p341
      %p610 = scmp.lt.s32.totalorder %s30, 9
      %s611 = scalar_select %p610, %s30, 9
      %s612 = scalar_lea.vmem %s12, %s611
      %p613 = pneg %p370
      %p614 = pneg %p367
      %p615 = scmp.lt.s32.totalorder %s30, 9
      %s616 = scalar_select %p615, %s30, 9
      %s617 = scalar_lea.vmem %s13, %s616
      %p618 = pneg %p396
      %p619 = pneg %p393
      %p620 = pneg %p422
      %p621 = pneg %p419
      %p622 = scmp.lt.s32.totalorder %s29, 1
      %s623 = scalar_select %p622, %s29, 1
      %s624 = smul.addr %s623, 8
      %s625 = scalar_lea.vmem %s14, %s624
      %p626 = scmp.lt.s32.totalorder %s29, 1
      %s627 = scalar_select %p626, %s29, 1
      %s628 = scalar_lea.vmem %s0, %s627
      %p629 = scmp.lt.s32.totalorder %s29, 1
      %s630 = scalar_select %p629, %s29, 1
      %s631 = smul.addr %s630, 8
      %s632 = scalar_lea.vmem %s1, %s631
      %p633 = scmp.lt.s32.totalorder %s30, 9
      %s634 = scalar_select %p633, %s30, 9
      %s635 = smul.addr %s634, 4
      %s636 = smul.addr %s635, 8
      %s637 = scalar_lea.vmem %s2, %s636
      %p638 = scmp.lt.s32.totalorder %s30, 9
      %s639 = scalar_select %p638, %s30, 9
      %s640 = scalar_lea.vmem %s3, %s639
      %p641 = scmp.lt.s32.totalorder %s30, 9
      %s642 = scalar_select %p641, %s30, 9
      %s643 = smul.addr %s642, 4
      %s644 = smul.addr %s643, 8
      %s645 = scalar_lea.vmem %s4, %s644
      %p646 = scmp.lt.s32.totalorder %s30, 9
      %s647 = scalar_select %p646, %s30, 9
      %s648 = scalar_lea.vmem %s5, %s647
      %p649 = scmp.lt.s32.totalorder %s30, 9
      %s650 = scalar_select %p649, %s30, 9
      %s651 = scalar_lea.vmem %s6, %s650
      %p652 = scmp.lt.s32.totalorder %s30, 9
      %s653 = scalar_select %p652, %s30, 9
      %s654 = scalar_lea.vmem %s7, %s653
      %p655 = scmp.lt.s32.totalorder %s30, 9
      %s656 = scalar_select %p655, %s30, 9
      %s657 = smul.addr %s656, 4
      %s658 = smul.addr %s657, 8
      %s659 = scalar_lea.vmem %s8, %s658
      %p660 = scmp.lt.s32.totalorder %s30, 9
      %s661 = scalar_select %p660, %s30, 9
      %s662 = scalar_lea.vmem %s9, %s661
      %p663 = scmp.lt.s32.totalorder %s30, 9
      %s664 = scalar_select %p663, %s30, 9
      %s665 = smul.addr %s664, 16
      %s666 = smul.addr %s665, 8
      %s667 = scalar_lea.vmem %s10, %s666
      %p668 = scmp.lt.s32.totalorder %s30, 9
      %s669 = scalar_select %p668, %s30, 9
      %s670 = scalar_lea.vmem %s11, %s669
      %p671 = scmp.lt.s32.totalorder %s30, 9
      %s672 = scalar_select %p671, %s30, 9
      %s673 = scalar_lea.vmem %s12, %s672
      %p674 = scmp.lt.s32.totalorder %s30, 9
      %s675 = scalar_select %p674, %s30, 9
      %s676 = scalar_lea.vmem %s13, %s675
      %p677 = scmp.lt.s32.totalorder %s29, 1
      %s678 = scalar_select %p677, %s29, 1
      %s679 = smul.addr %s678, 8
      %s680 = scalar_lea.vmem %s14, %s679
      %p681 = scmp.eq.s32.totalorder %s30, 0
      // Predicated region
      $region77: #{loss_fn.8} parent=75 // pred_check
        %p682 = pneg %p681
      $region78: #{loss_fn.8} parent=75 // pred_check_branch
        %684 = sbr.rel (%p682) target = $region80
      $region79: #{loss_fn.8} parent=75 // pred_region
        %v685 = vld [vmem:[%s632] sm:$0xff]
        %vm686 = vcmask 261120
        %687 = vst.msk [vmem:[%s680] sm:$0xff] %vm686, %v685
      $region80: #{loss_fn.8} parent=75 // pred_fallthru
        _
      %v688 = vld [vmem:[%s680] sm:$0xff]
      %v689 = vld [vmem:[%s628] sm:$0x1]
      %v690 = vld [vmem:[%s637] sm:$0xff]
      %v691 = vld [vmem:[%s637 + $0x8] sm:$0xff]
      %v692 = vld [vmem:[%s637 + $0x10] sm:$0xff]
      %v693 = vld [vmem:[%s637 + $0x18] sm:$0xff]
      %v694 = vld [vmem:[%s640] sm:$0x1]
      %v695 = vld [vmem:[%s645] sm:$0xff]
      %v696 = vld [vmem:[%s645 + $0x8] sm:$0xff]
      %v697 = vld [vmem:[%s645 + $0x10] sm:$0xff]
      %v698 = vld [vmem:[%s645 + $0x18] sm:$0xff]
      %v699 = vld [vmem:[%s648] sm:$0x1]
      %v700 = vld [vmem:[%s651] sm:$0x1]
      %v701 = vld [vmem:[%s654] sm:$0x1]
      %v702 = vld [vmem:[%s659] sm:$0xff]
      %v703 = vld [vmem:[%s659 + $0x8] sm:$0xff]
      %v704 = vld [vmem:[%s659 + $0x10] sm:$0xff]
      %v705 = vld [vmem:[%s659 + $0x18] sm:$0xff]
      %v706 = vld [vmem:[%s662] sm:$0x1]
      %v707 = vld [vmem:[%s667] sm:$0xff]
      %v708 = vld [vmem:[%s667 + $0x8] sm:$0xff]
      %v709 = vld [vmem:[%s667 + $0x10] sm:$0xff]
      %v710 = vld [vmem:[%s667 + $0x18] sm:$0xff]
      %v711 = vld [vmem:[%s667 + $0x20] sm:$0xff]
      %v712 = vld [vmem:[%s667 + $0x28] sm:$0xff]
      %v713 = vld [vmem:[%s667 + $0x30] sm:$0xff]
      %v714 = vld [vmem:[%s667 + $0x38] sm:$0xff]
      %v715 = vld [vmem:[%s667 + $0x40] sm:$0xff]
      %v716 = vld [vmem:[%s667 + $0x48] sm:$0xff]
      %v717 = vld [vmem:[%s667 + $0x50] sm:$0xff]
      %v718 = vld [vmem:[%s667 + $0x58] sm:$0xff]
      %v719 = vld [vmem:[%s667 + $0x60] sm:$0xff]
      %v720 = vld [vmem:[%s667 + $0x68] sm:$0xff]
      %v721 = vld [vmem:[%s667 + $0x70] sm:$0xff]
      %v722 = vld [vmem:[%s667 + $0x78] sm:$0xff]
      %v723 = vld [vmem:[%s670] sm:$0x1]
      %v724 = vld [vmem:[%s673] sm:$0x1]
      %v725 = vld [vmem:[%s676] sm:$0x1]
      %v727 = vlaneseq
      %v728 = vshrl.u32 %v727, 7
      %v729 = vsub.s32 0, %v728
      %v730 = vrot.slane %v694, %v729
      %vm732 = vcmask 261120
      %v734 = vsel %vm732, %v688, 0
      %736 = vmatprep.subr.mxu0 0.0
      %737 = vmatpush1.msra.mxu0 %v690
      %738 = vmatprep.subr.mxu0 0.0
      %739 = vmatpush1.msra.mxu0 %v691
      %740 = vmatprep.subr.mxu0 0.0
      %741 = vmatpush1.msra.mxu0 %v692
      %742 = vmatprep.subr.mxu0 0.0
      %743 = vmatpush1.msra.mxu0 %v693
      %744 = vmatprep.subr.mxu0 0.0
      %745 = vmatpush1.msra.mxu0 0.0
      %746 = vmatprep.subr.mxu0 0.0
      %747 = vmatpush1.msra.mxu0 0.0
      %748 = vmatprep.subr.mxu0 0.0
      %749 = vmatpush1.msra.mxu0 0.0
      %750 = vmatprep.subr.mxu0 0.0
      %751 = vmatpush1.msra.mxu0 0.0
      %752 = vmatprep.subr.mxu0 0.0
      %753 = vmatpush1.msra.mxu0 0.0
      %754 = vmatprep.subr.mxu0 0.0
      %755 = vmatpush1.msra.mxu0 0.0
      %756 = vmatprep.subr.mxu0 0.0
      %757 = vmatpush1.msra.mxu0 0.0
      %758 = vmatprep.subr.mxu0 0.0
      %759 = vmatpush1.msra.mxu0 0.0
      %760 = vmatprep.subr.mxu0 0.0
      %761 = vmatpush1.msra.mxu0 0.0
      %762 = vmatprep.subr.mxu0 0.0
      %763 = vmatpush1.msra.mxu0 0.0
      %764 = vmatprep.subr.mxu0 0.0
      %765 = vmatpush1.msra.mxu0 0.0
      %766 = vmatprep.subr.mxu0 0.0
      %767 = vmatpush1.msra.mxu0 0.0
      %768 = vmatprep.subr.mxu0 0.0
      %769 = vmatpush1.msra.mxu0 0.0
      %770 = vmatprep.subr.mxu0 0.0
      %771 = vmatpush1.msra.mxu0 0.0
      %772 = vmatprep.subr.mxu0 0.0
      %773 = vmatpush1.msra.mxu0 0.0
      %774 = vmatprep.subr.mxu0 0.0
      %775 = vmatpush1.msra.mxu0 0.0
      %776 = vmatprep.subr.mxu0 0.0
      %777 = vmatpush1.msra.mxu0 0.0
      %778 = vmatprep.subr.mxu0 0.0
      %779 = vmatpush1.msra.mxu0 0.0
      %780 = vmatprep.subr.mxu0 0.0
      %781 = vmatpush1.msra.mxu0 0.0
      %782 = vmatprep.subr.mxu0 0.0
      %783 = vmatpush1.msra.mxu0 0.0
      %784 = vmatprep.subr.mxu0 0.0
      %785 = vmatpush1.msra.mxu0 0.0
      %786 = vmatprep.subr.mxu0 0.0
      %787 = vmatpush1.msra.mxu0 0.0
      %788 = vmatprep.subr.mxu0 0.0
      %789 = vmatpush1.msra.mxu0 0.0
      %790 = vmatprep.subr.mxu0 0.0
      %791 = vmatpush1.msra.mxu0 0.0
      %792 = vmatprep.subr.mxu0 0.0
      %793 = vmatpush1.msra.mxu0 0.0
      %794 = vmatprep.subr.mxu0 0.0
      %795 = vmatpush1.msra.mxu0 0.0
      %796 = vmatprep.subr.mxu0 0.0
      %797 = vmatpush1.msra.mxu0 0.0
      %798 = vmatprep.subr.mxu0 0.0
      %799 = vmatpush1.msra.mxu0 0.0
      %800 = vmatprep.mubr.f32.mxu0 0.0
      %801 = vmatmul.mubr.f32.gmra.mrb[0].mxu0 %v734
      %v802 = vpop.f32.mrb[0].mxu0
      %v803 = vadd.f32 %v730, %v802
      %v804 = vpop.f32.mrb[0].mxu0
      %805 = vdwg.mxu0
      %807 = vrot.lane.b32.xlu0 %v803, 96
      %v808 = vpop.permute.xlu0 %807
      %vm809 = vcmask 64512
      %v810 = vsel %vm809, %v803, 0
      %v812 = vsel %vm809, %v808, 0
      %814 = vmatprep.subr.mxu0 0.0
      %815 = vmatpush1.xpose.msra.mxu0 %v812
      %816 = vmatprep.subr.mxu0 0.0
      %817 = vmatpush1.xpose.msra.mxu0 0.0
      %818 = vmatprep.subr.mxu0 0.0
      %819 = vmatpush1.xpose.msra.mxu0 0.0
      %820 = vmatprep.subr.mxu0 0.0
      %821 = vmatpush1.xpose.msra.mxu0 0.0
      %822 = vmatprep.subr.mxu0 0.0
      %823 = vmatpush1.xpose.msra.mxu0 0.0
      %824 = vmatprep.subr.mxu0 0.0
      %825 = vmatpush1.xpose.msra.mxu0 0.0
      %826 = vmatprep.subr.mxu0 0.0
      %827 = vmatpush1.xpose.msra.mxu0 0.0
      %828 = vmatprep.subr.mxu0 0.0
      %829 = vmatpush1.xpose.msra.mxu0 0.0
      %830 = vmatprep.subr.mxu0 0.0
      %831 = vmatpush1.xpose.msra.mxu0 0.0
      %832 = vmatprep.subr.mxu0 0.0
      %833 = vmatpush1.xpose.msra.mxu0 0.0
      %834 = vmatprep.subr.mxu0 0.0
      %835 = vmatpush1.xpose.msra.mxu0 0.0
      %836 = vmatprep.subr.mxu0 0.0
      %837 = vmatpush1.xpose.msra.mxu0 0.0
      %838 = vmatprep.subr.mxu0 0.0
      %839 = vmatpush1.xpose.msra.mxu0 0.0
      %840 = vmatprep.subr.mxu0 0.0
      %841 = vmatpush1.xpose.msra.mxu0 0.0
      %842 = vmatprep.subr.mxu0 0.0
      %843 = vmatpush1.xpose.msra.mxu0 0.0
      %844 = vmatprep.subr.mxu0 0.0
      %845 = vmatpush1.xpose.msra.mxu0 0.0
      %846 = vmatprep.subr.mxu0 0.0
      %847 = vmatpush1.xpose.msra.mxu0 0.0
      %848 = vmatprep.subr.mxu0 0.0
      %849 = vmatpush1.xpose.msra.mxu0 0.0
      %850 = vmatprep.subr.mxu0 0.0
      %851 = vmatpush1.xpose.msra.mxu0 0.0
      %852 = vmatprep.subr.mxu0 0.0
      %853 = vmatpush1.xpose.msra.mxu0 0.0
      %854 = vmatprep.subr.mxu0 0.0
      %855 = vmatpush1.xpose.msra.mxu0 0.0
      %856 = vmatprep.subr.mxu0 0.0
      %857 = vmatpush1.xpose.msra.mxu0 0.0
      %858 = vmatprep.subr.mxu0 0.0
      %859 = vmatpush1.xpose.msra.mxu0 0.0
      %860 = vmatprep.subr.mxu0 0.0
      %861 = vmatpush1.xpose.msra.mxu0 0.0
      %862 = vmatprep.subr.mxu0 0.0
      %863 = vmatpush1.xpose.msra.mxu0 0.0
      %864 = vmatprep.subr.mxu0 0.0
      %865 = vmatpush1.xpose.msra.mxu0 0.0
      %866 = vmatprep.subr.mxu0 0.0
      %867 = vmatpush1.xpose.msra.mxu0 0.0
      %868 = vmatprep.subr.mxu0 0.0
      %869 = vmatpush1.xpose.msra.mxu0 0.0
      %870 = vmatprep.subr.mxu0 0.0
      %871 = vmatpush1.xpose.msra.mxu0 0.0
      %872 = vmatprep.subr.mxu0 0.0
      %873 = vmatpush1.xpose.msra.mxu0 0.0
      %874 = vmatprep.subr.mxu0 0.0
      %875 = vmatpush1.xpose.msra.mxu0 0.0
      %876 = vmatprep.subr.mxu0 0.0
      %877 = vmatpush1.xpose.msra.mxu0 0.0
      %878 = vmatprep.mubr.f32.mxu0 0.0
      %879 = vmatmul.mubr.f32.gmra.mrb[0].mxu0 %v810
      %v880 = vpop.f32.mrb[0].mxu0
      %v881 = vadd.f32 0.0, %v880
      %v882 = vpop.f32.mrb[0].mxu0
      %883 = vdwg.mxu0
      %v884 = vmul.f32 %v881, 0.35355338
      %v886 = vlaneseq
      %v887 = vshrl.u32 %v886, 7
      %v888 = vsub.s32 0, %v887
      %v889 = vrot.slane %v689, %v888
      %v891 = vadd.f32 %v884, %v889
      %v892 = vsel %vm809, %v891, -inf
      %893 = vmax.xlane.f32.xlu0 %v892
      %v894 = vpop.xlane.xlu0 %893
      %v895 = vsub.f32 %v891, %v894
      %v896 = vmul.f32 %v895, 1.442695
      %v897 = vpow.pop %v896
      %v898 = vsel %vm809, %v897, 0.0
      %899 = vadd.xlane.f32.xlu0 %v898
      %v900 = vpop.xlane.xlu0 %899
      %v901 = vrcp.pop %v900
      %v902 = vmul.f32 %v897, %v901
      %903 = vrot.lane.b32.xlu0 %v803, 64
      %v904 = vpop.permute.xlu0 %903
      %v907 = vsel %vm809, %v902, 0
      %909 = vmatprep.subr.mxu0 0.0
      %910 = vmatpush1.msra.mxu0 %v904
      %911 = vmatprep.subr.mxu0 0.0
      %912 = vmatpush1.msra.mxu0 0.0
      %913 = vmatprep.subr.mxu0 0.0
      %914 = vmatpush1.msra.mxu0 0.0
      %915 = vmatprep.subr.mxu0 0.0
      %916 = vmatpush1.msra.mxu0 0.0
      %917 = vmatprep.subr.mxu0 0.0
      %918 = vmatpush1.msra.mxu0 0.0
      %919 = vmatprep.subr.mxu0 0.0
      %920 = vmatpush1.msra.mxu0 0.0
      %921 = vmatprep.subr.mxu0 0.0
      %922 = vmatpush1.msra.mxu0 0.0
      %923 = vmatprep.subr.mxu0 0.0
      %924 = vmatpush1.msra.mxu0 0.0
      %925 = vmatprep.subr.mxu0 0.0
      %926 = vmatpush1.msra.mxu0 0.0
      %927 = vmatprep.subr.mxu0 0.0
      %928 = vmatpush1.msra.mxu0 0.0
      %929 = vmatprep.subr.mxu0 0.0
      %930 = vmatpush1.msra.mxu0 0.0
      %931 = vmatprep.subr.mxu0 0.0
      %932 = vmatpush1.msra.mxu0 0.0
      %933 = vmatprep.subr.mxu0 0.0
      %934 = vmatpush1.msra.mxu0 0.0
      %935 = vmatprep.subr.mxu0 0.0
      %936 = vmatpush1.msra.mxu0 0.0
      %937 = vmatprep.subr.mxu0 0.0
      %938 = vmatpush1.msra.mxu0 0.0
      %939 = vmatprep.subr.mxu0 0.0
      %940 = vmatpush1.msra.mxu0 0.0
      %941 = vmatprep.subr.mxu0 0.0
      %942 = vmatpush1.msra.mxu0 0.0
      %943 = vmatprep.subr.mxu0 0.0
      %944 = vmatpush1.msra.mxu0 0.0
      %945 = vmatprep.subr.mxu0 0.0
      %946 = vmatpush1.msra.mxu0 0.0
      %947 = vmatprep.subr.mxu0 0.0
      %948 = vmatpush1.msra.mxu0 0.0
      %949 = vmatprep.subr.mxu0 0.0
      %950 = vmatpush1.msra.mxu0 0.0
      %951 = vmatprep.subr.mxu0 0.0
      %952 = vmatpush1.msra.mxu0 0.0
      %953 = vmatprep.subr.mxu0 0.0
      %954 = vmatpush1.msra.mxu0 0.0
      %955 = vmatprep.subr.mxu0 0.0
      %956 = vmatpush1.msra.mxu0 0.0
      %957 = vmatprep.subr.mxu0 0.0
      %958 = vmatpush1.msra.mxu0 0.0
      %959 = vmatprep.subr.mxu0 0.0
      %960 = vmatpush1.msra.mxu0 0.0
      %961 = vmatprep.subr.mxu0 0.0
      %962 = vmatpush1.msra.mxu0 0.0
      %963 = vmatprep.subr.mxu0 0.0
      %964 = vmatpush1.msra.mxu0 0.0
      %965 = vmatprep.subr.mxu0 0.0
      %966 = vmatpush1.msra.mxu0 0.0
      %967 = vmatprep.subr.mxu0 0.0
      %968 = vmatpush1.msra.mxu0 0.0
      %969 = vmatprep.subr.mxu0 0.0
      %970 = vmatpush1.msra.mxu0 0.0
      %971 = vmatprep.subr.mxu0 0.0
      %972 = vmatpush1.msra.mxu0 0.0
      %973 = vmatprep.mubr.f32.mxu0 0.0
      %974 = vmatmul.mubr.f32.gmra.mrb[0].mxu0 %v907
      %v975 = vpop.f32.mrb[0].mxu0
      %v976 = vadd.f32 0.0, %v975
      %v977 = vpop.f32.mrb[0].mxu0
      %978 = vdwg.mxu0
      %979 = vrot.lane.b32.xlu0 %v803, 120
      %v980 = vpop.permute.xlu0 %979
      %981 = vrot.lane.b32.xlu0 %v803, 88
      %v982 = vpop.permute.xlu0 %981
      %v983 = vsel %vm809, %v980, 0
      %v985 = vsel %vm809, %v982, 0
      %987 = vmatprep.subr.mxu0 0.0
      %988 = vmatpush1.xpose.msra.mxu0 %v985
      %989 = vmatprep.subr.mxu0 0.0
      %990 = vmatpush1.xpose.msra.mxu0 0.0
      %991 = vmatprep.subr.mxu0 0.0
      %992 = vmatpush1.xpose.msra.mxu0 0.0
      %993 = vmatprep.subr.mxu0 0.0
      %994 = vmatpush1.xpose.msra.mxu0 0.0
      %995 = vmatprep.subr.mxu0 0.0
      %996 = vmatpush1.xpose.msra.mxu0 0.0
      %997 = vmatprep.subr.mxu0 0.0
      %998 = vmatpush1.xpose.msra.mxu0 0.0
      %999 = vmatprep.subr.mxu0 0.0
      %1000 = vmatpush1.xpose.msra.mxu0 0.0
      %1001 = vmatprep.subr.mxu0 0.0
      %1002 = vmatpush1.xpose.msra.mxu0 0.0
      %1003 = vmatprep.subr.mxu0 0.0
      %1004 = vmatpush1.xpose.msra.mxu0 0.0
      %1005 = vmatprep.subr.mxu0 0.0
      %1006 = vmatpush1.xpose.msra.mxu0 0.0
      %1007 = vmatprep.subr.mxu0 0.0
      %1008 = vmatpush1.xpose.msra.mxu0 0.0
      %1009 = vmatprep.subr.mxu0 0.0
      %1010 = vmatpush1.xpose.msra.mxu0 0.0
      %1011 = vmatprep.subr.mxu0 0.0
      %1012 = vmatpush1.xpose.msra.mxu0 0.0
      %1013 = vmatprep.subr.mxu0 0.0
      %1014 = vmatpush1.xpose.msra.mxu0 0.0
      %1015 = vmatprep.subr.mxu0 0.0
      %1016 = vmatpush1.xpose.msra.mxu0 0.0
      %1017 = vmatprep.subr.mxu0 0.0
      %1018 = vmatpush1.xpose.msra.mxu0 0.0
      %1019 = vmatprep.subr.mxu0 0.0
      %1020 = vmatpush1.xpose.msra.mxu0 0.0
      %1021 = vmatprep.subr.mxu0 0.0
      %1022 = vmatpush1.xpose.msra.mxu0 0.0
      %1023 = vmatprep.subr.mxu0 0.0
      %1024 = vmatpush1.xpose.msra.mxu0 0.0
      %1025 = vmatprep.subr.mxu0 0.0
      %1026 = vmatpush1.xpose.msra.mxu0 0.0
      %1027 = vmatprep.subr.mxu0 0.0
      %1028 = vmatpush1.xpose.msra.mxu0 0.0
      %1029 = vmatprep.subr.mxu0 0.0
      %1030 = vmatpush1.xpose.msra.mxu0 0.0
      %1031 = vmatprep.subr.mxu0 0.0
      %1032 = vmatpush1.xpose.msra.mxu0 0.0
      %1033 = vmatprep.subr.mxu0 0.0
      %1034 = vmatpush1.xpose.msra.mxu0 0.0
      %1035 = vmatprep.subr.mxu0 0.0
      %1036 = vmatpush1.xpose.msra.mxu0 0.0
      %1037 = vmatprep.subr.mxu0 0.0
      %1038 = vmatpush1.xpose.msra.mxu0 0.0
      %1039 = vmatprep.subr.mxu0 0.0
      %1040 = vmatpush1.xpose.msra.mxu0 0.0
      %1041 = vmatprep.subr.mxu0 0.0
      %1042 = vmatpush1.xpose.msra.mxu0 0.0
      %1043 = vmatprep.subr.mxu0 0.0
      %1044 = vmatpush1.xpose.msra.mxu0 0.0
      %1045 = vmatprep.subr.mxu0 0.0
      %1046 = vmatpush1.xpose.msra.mxu0 0.0
      %1047 = vmatprep.subr.mxu0 0.0
      %1048 = vmatpush1.xpose.msra.mxu0 0.0
      %1049 = vmatprep.subr.mxu0 0.0
      %1050 = vmatpush1.xpose.msra.mxu0 0.0
      %1051 = vmatprep.mubr.f32.mxu0 0.0
      %1052 = vmatmul.mubr.f32.gmra.mrb[0].mxu0 %v983
      %v1053 = vpop.f32.mrb[0].mxu0
      %v1054 = vadd.f32 0.0, %v1053
      %v1055 = vpop.f32.mrb[0].mxu0
      %1056 = vdwg.mxu0
      %v1057 = vmul.f32 %v1054, 0.35355338
      %v1058 = vadd.f32 %v1057, %v889
      %v1059 = vsel %vm809, %v1058, -inf
      %1060 = vmax.xlane.f32.xlu0 %v1059
      %v1061 = vpop.xlane.xlu0 %1060
      %v1062 = vsub.f32 %v1058, %v1061
      %v1063 = vmul.f32 %v1062, 1.442695
      %v1064 = vpow.pop %v1063
      %v1065 = vsel %vm809, %v1064, 0.0
      %1066 = vadd.xlane.f32.xlu0 %v1065
      %v1067 = vpop.xlane.xlu0 %1066
      %v1068 = vrcp.pop %v1067
      %v1069 = vmul.f32 %v1064, %v1068
      %1070 = vrot.lane.b32.xlu0 %v803, 56
      %v1071 = vpop.permute.xlu0 %1070
      %v1074 = vsel %vm809, %v1069, 0
      %1076 = vmatprep.subr.mxu0 0.0
      %1077 = vmatpush1.msra.mxu0 %v1071
      %1078 = vmatprep.subr.mxu0 0.0
      %1079 = vmatpush1.msra.mxu0 0.0
      %1080 = vmatprep.subr.mxu0 0.0
      %1081 = vmatpush1.msra.mxu0 0.0
      %1082 = vmatprep.subr.mxu0 0.0
      %1083 = vmatpush1.msra.mxu0 0.0
      %1084 = vmatprep.subr.mxu0 0.0
      %1085 = vmatpush1.msra.mxu0 0.0
      %1086 = vmatprep.subr.mxu0 0.0
      %1087 = vmatpush1.msra.mxu0 0.0
      %1088 = vmatprep.subr.mxu0 0.0
      %1089 = vmatpush1.msra.mxu0 0.0
      %1090 = vmatprep.subr.mxu0 0.0
      %1091 = vmatpush1.msra.mxu0 0.0
      %1092 = vmatprep.subr.mxu0 0.0
      %1093 = vmatpush1.msra.mxu0 0.0
      %1094 = vmatprep.subr.mxu0 0.0
      %1095 = vmatpush1.msra.mxu0 0.0
      %1096 = vmatprep.subr.mxu0 0.0
      %1097 = vmatpush1.msra.mxu0 0.0
      %1098 = vmatprep.subr.mxu0 0.0
      %1099 = vmatpush1.msra.mxu0 0.0
      %1100 = vmatprep.subr.mxu0 0.0
      %1101 = vmatpush1.msra.mxu0 0.0
      %1102 = vmatprep.subr.mxu0 0.0
      %1103 = vmatpush1.msra.mxu0 0.0
      %1104 = vmatprep.subr.mxu0 0.0
      %1105 = vmatpush1.msra.mxu0 0.0
      %1106 = vmatprep.subr.mxu0 0.0
      %1107 = vmatpush1.msra.mxu0 0.0
      %1108 = vmatprep.subr.mxu0 0.0
      %1109 = vmatpush1.msra.mxu0 0.0
      %1110 = vmatprep.subr.mxu0 0.0
      %1111 = vmatpush1.msra.mxu0 0.0
      %1112 = vmatprep.subr.mxu0 0.0
      %1113 = vmatpush1.msra.mxu0 0.0
      %1114 = vmatprep.subr.mxu0 0.0
      %1115 = vmatpush1.msra.mxu0 0.0
      %1116 = vmatprep.subr.mxu0 0.0
      %1117 = vmatpush1.msra.mxu0 0.0
      %1118 = vmatprep.subr.mxu0 0.0
      %1119 = vmatpush1.msra.mxu0 0.0
      %1120 = vmatprep.subr.mxu0 0.0
      %1121 = vmatpush1.msra.mxu0 0.0
      %1122 = vmatprep.subr.mxu0 0.0
      %1123 = vmatpush1.msra.mxu0 0.0
      %1124 = vmatprep.subr.mxu0 0.0
      %1125 = vmatpush1.msra.mxu0 0.0
      %1126 = vmatprep.subr.mxu0 0.0
      %1127 = vmatpush1.msra.mxu0 0.0
      %1128 = vmatprep.subr.mxu0 0.0
      %1129 = vmatpush1.msra.mxu0 0.0
      %1130 = vmatprep.subr.mxu0 0.0
      %1131 = vmatpush1.msra.mxu0 0.0
      %1132 = vmatprep.subr.mxu0 0.0
      %1133 = vmatpush1.msra.mxu0 0.0
      %1134 = vmatprep.subr.mxu0 0.0
      %1135 = vmatpush1.msra.mxu0 0.0
      %1136 = vmatprep.subr.mxu0 0.0
      %1137 = vmatpush1.msra.mxu0 0.0
      %1138 = vmatprep.subr.mxu0 0.0
      %1139 = vmatpush1.msra.mxu0 0.0
      %1140 = vmatprep.mubr.f32.mxu0 0.0
      %1141 = vmatmul.mubr.f32.gmra.mrb[0].mxu0 %v1074
      %v1142 = vpop.f32.mrb[0].mxu0
      %v1143 = vadd.f32 0.0, %v1142
      %v1144 = vpop.f32.mrb[0].mxu0
      %1145 = vdwg.mxu0
      %v1147 = vsel %vm809, %v1143, 0
      %1149 = vmatprep.subr.mxu0 0.0
      %1150 = vmatpush1.msra.mxu0 %v696
      %1151 = vmatprep.subr.mxu0 0.0
      %1152 = vmatpush1.msra.mxu0 0.0
      %1153 = vmatprep.subr.mxu0 0.0
      %1154 = vmatpush1.msra.mxu0 0.0
      %1155 = vmatprep.subr.mxu0 0.0
      %1156 = vmatpush1.msra.mxu0 0.0
      %1157 = vmatprep.subr.mxu0 0.0
      %1158 = vmatpush1.msra.mxu0 0.0
      %1159 = vmatprep.subr.mxu0 0.0
      %1160 = vmatpush1.msra.mxu0 0.0
      %1161 = vmatprep.subr.mxu0 0.0
      %1162 = vmatpush1.msra.mxu0 0.0
      %1163 = vmatprep.subr.mxu0 0.0
      %1164 = vmatpush1.msra.mxu0 0.0
      %1165 = vmatprep.subr.mxu0 0.0
      %1166 = vmatpush1.msra.mxu0 0.0
      %1167 = vmatprep.subr.mxu0 0.0
      %1168 = vmatpush1.msra.mxu0 0.0
      %1169 = vmatprep.subr.mxu0 0.0
      %1170 = vmatpush1.msra.mxu0 0.0
      %1171 = vmatprep.subr.mxu0 0.0
      %1172 = vmatpush1.msra.mxu0 0.0
      %1173 = vmatprep.subr.mxu0 0.0
      %1174 = vmatpush1.msra.mxu0 0.0
      %1175 = vmatprep.subr.mxu0 0.0
      %1176 = vmatpush1.msra.mxu0 0.0
      %1177 = vmatprep.subr.mxu0 0.0
      %1178 = vmatpush1.msra.mxu0 0.0
      %1179 = vmatprep.subr.mxu0 0.0
      %1180 = vmatpush1.msra.mxu0 0.0
      %1181 = vmatprep.subr.mxu0 0.0
      %1182 = vmatpush1.msra.mxu0 0.0
      %1183 = vmatprep.subr.mxu0 0.0
      %1184 = vmatpush1.msra.mxu0 0.0
      %1185 = vmatprep.subr.mxu0 0.0
      %1186 = vmatpush1.msra.mxu0 0.0
      %1187 = vmatprep.subr.mxu0 0.0
      %1188 = vmatpush1.msra.mxu0 0.0
      %1189 = vmatprep.subr.mxu0 0.0
      %1190 = vmatpush1.msra.mxu0 0.0
      %1191 = vmatprep.subr.mxu0 0.0
      %1192 = vmatpush1.msra.mxu0 0.0
      %1193 = vmatprep.subr.mxu0 0.0
      %1194 = vmatpush1.msra.mxu0 0.0
      %1195 = vmatprep.subr.mxu0 0.0
      %1196 = vmatpush1.msra.mxu0 0.0
      %1197 = vmatprep.subr.mxu0 0.0
      %1198 = vmatpush1.msra.mxu0 0.0
      %1199 = vmatprep.subr.mxu0 0.0
      %1200 = vmatpush1.msra.mxu0 0.0
      %1201 = vmatprep.subr.mxu0 0.0
      %1202 = vmatpush1.msra.mxu0 0.0
      %1203 = vmatprep.subr.mxu0 0.0
      %1204 = vmatpush1.msra.mxu0 0.0
      %1205 = vmatprep.subr.mxu0 0.0
      %1206 = vmatpush1.msra.mxu0 0.0
      %1207 = vmatprep.subr.mxu0 0.0
      %1208 = vmatpush1.msra.mxu0 0.0
      %1209 = vmatprep.subr.mxu0 0.0
      %1210 = vmatpush1.msra.mxu0 0.0
      %1211 = vmatprep.subr.mxu0 0.0
      %1212 = vmatpush1.msra.mxu0 0.0
      %1213 = vmatprep.mubr.f32.mxu0 0.0
      %1214 = vmatmul.mubr.f32.gmra.mrb[0].mxu0 %v1147
      %v1215 = vpop.f32.mrb[0].mxu0
      %v1216 = vadd.f32 0.0, %v1215
      %v1217 = vpop.f32.mrb[0].mxu0
      %1218 = vdwg.mxu0
      %v1220 = vsel %vm809, %v976, 0
      %1222 = vmatprep.subr.mxu0 0.0
      %1223 = vmatpush1.msra.mxu0 %v695
      %1224 = vmatprep.subr.mxu0 0.0
      %1225 = vmatpush1.msra.mxu0 0.0
      %1226 = vmatprep.subr.mxu0 0.0
      %1227 = vmatpush1.msra.mxu0 0.0
      %1228 = vmatprep.subr.mxu0 0.0
      %1229 = vmatpush1.msra.mxu0 0.0
      %1230 = vmatprep.subr.mxu0 0.0
      %1231 = vmatpush1.msra.mxu0 0.0
      %1232 = vmatprep.subr.mxu0 0.0
      %1233 = vmatpush1.msra.mxu0 0.0
      %1234 = vmatprep.subr.mxu0 0.0
      %1235 = vmatpush1.msra.mxu0 0.0
      %1236 = vmatprep.subr.mxu0 0.0
      %1237 = vmatpush1.msra.mxu0 0.0
      %1238 = vmatprep.subr.mxu0 0.0
      %1239 = vmatpush1.msra.mxu0 0.0
      %1240 = vmatprep.subr.mxu0 0.0
      %1241 = vmatpush1.msra.mxu0 0.0
      %1242 = vmatprep.subr.mxu0 0.0
      %1243 = vmatpush1.msra.mxu0 0.0
      %1244 = vmatprep.subr.mxu0 0.0
      %1245 = vmatpush1.msra.mxu0 0.0
      %1246 = vmatprep.subr.mxu0 0.0
      %1247 = vmatpush1.msra.mxu0 0.0
      %1248 = vmatprep.subr.mxu0 0.0
      %1249 = vmatpush1.msra.mxu0 0.0
      %1250 = vmatprep.subr.mxu0 0.0
      %1251 = vmatpush1.msra.mxu0 0.0
      %1252 = vmatprep.subr.mxu0 0.0
      %1253 = vmatpush1.msra.mxu0 0.0
      %1254 = vmatprep.subr.mxu0 0.0
      %1255 = vmatpush1.msra.mxu0 0.0
      %1256 = vmatprep.subr.mxu0 0.0
      %1257 = vmatpush1.msra.mxu0 0.0
      %1258 = vmatprep.subr.mxu0 0.0
      %1259 = vmatpush1.msra.mxu0 0.0
      %1260 = vmatprep.subr.mxu0 0.0
      %1261 = vmatpush1.msra.mxu0 0.0
      %1262 = vmatprep.subr.mxu0 0.0
      %1263 = vmatpush1.msra.mxu0 0.0
      %1264 = vmatprep.subr.mxu0 0.0
      %1265 = vmatpush1.msra.mxu0 0.0
      %1266 = vmatprep.subr.mxu0 0.0
      %1267 = vmatpush1.msra.mxu0 0.0
      %1268 = vmatprep.subr.mxu0 0.0
      %1269 = vmatpush1.msra.mxu0 0.0
      %1270 = vmatprep.subr.mxu0 0.0
      %1271 = vmatpush1.msra.mxu0 0.0
      %1272 = vmatprep.subr.mxu0 0.0
      %1273 = vmatpush1.msra.mxu0 0.0
      %1274 = vmatprep.subr.mxu0 0.0
      %1275 = vmatpush1.msra.mxu0 0.0
      %1276 = vmatprep.subr.mxu0 0.0
      %1277 = vmatpush1.msra.mxu0 0.0
      %1278 = vmatprep.subr.mxu0 0.0
      %1279 = vmatpush1.msra.mxu0 0.0
      %1280 = vmatprep.subr.mxu0 0.0
      %1281 = vmatpush1.msra.mxu0 0.0
      %1282 = vmatprep.subr.mxu0 0.0
      %1283 = vmatpush1.msra.mxu0 0.0
      %1284 = vmatprep.subr.mxu0 0.0
      %1285 = vmatpush1.msra.mxu0 0.0
      %1286 = vmatprep.mubr.f32.mxu0 0.0
      %1287 = vmatmul.mubr.f32.gmra.mrb[0].mxu0 %v1220
      %v1288 = vpop.f32.mrb[0].mxu0
      %v1289 = vadd.f32 %v1216, %v1288
      %v1290 = vpop.f32.mrb[0].mxu0
      %1291 = vdwg.mxu0
      %1292 = vrot.lane.b32.xlu0 %v803, 112
      %v1293 = vpop.permute.xlu0 %1292
      %1294 = vrot.lane.b32.xlu0 %v803, 80
      %v1295 = vpop.permute.xlu0 %1294
      %v1296 = vsel %vm809, %v1293, 0
      %v1298 = vsel %vm809, %v1295, 0
      %1300 = vmatprep.subr.mxu0 0.0
      %1301 = vmatpush1.xpose.msra.mxu0 %v1298
      %1302 = vmatprep.subr.mxu0 0.0
      %1303 = vmatpush1.xpose.msra.mxu0 0.0
      %1304 = vmatprep.subr.mxu0 0.0
      %1305 = vmatpush1.xpose.msra.mxu0 0.0
      %1306 = vmatprep.subr.mxu0 0.0
      %1307 = vmatpush1.xpose.msra.mxu0 0.0
      %1308 = vmatprep.subr.mxu0 0.0
      %1309 = vmatpush1.xpose.msra.mxu0 0.0
      %1310 = vmatprep.subr.mxu0 0.0
      %1311 = vmatpush1.xpose.msra.mxu0 0.0
      %1312 = vmatprep.subr.mxu0 0.0
      %1313 = vmatpush1.xpose.msra.mxu0 0.0
      %1314 = vmatprep.subr.mxu0 0.0
      %1315 = vmatpush1.xpose.msra.mxu0 0.0
      %1316 = vmatprep.subr.mxu0 0.0
      %1317 = vmatpush1.xpose.msra.mxu0 0.0
      %1318 = vmatprep.subr.mxu0 0.0
      %1319 = vmatpush1.xpose.msra.mxu0 0.0
      %1320 = vmatprep.subr.mxu0 0.0
      %1321 = vmatpush1.xpose.msra.mxu0 0.0
      %1322 = vmatprep.subr.mxu0 0.0
      %1323 = vmatpush1.xpose.msra.mxu0 0.0
      %1324 = vmatprep.subr.mxu0 0.0
      %1325 = vmatpush1.xpose.msra.mxu0 0.0
      %1326 = vmatprep.subr.mxu0 0.0
      %1327 = vmatpush1.xpose.msra.mxu0 0.0
      %1328 = vmatprep.subr.mxu0 0.0
      %1329 = vmatpush1.xpose.msra.mxu0 0.0
      %1330 = vmatprep.subr.mxu0 0.0
      %1331 = vmatpush1.xpose.msra.mxu0 0.0
      %1332 = vmatprep.subr.mxu0 0.0
      %1333 = vmatpush1.xpose.msra.mxu0 0.0
      %1334 = vmatprep.subr.mxu0 0.0
      %1335 = vmatpush1.xpose.msra.mxu0 0.0
      %1336 = vmatprep.subr.mxu0 0.0
      %1337 = vmatpush1.xpose.msra.mxu0 0.0
      %1338 = vmatprep.subr.mxu0 0.0
      %1339 = vmatpush1.xpose.msra.mxu0 0.0
      %1340 = vmatprep.subr.mxu0 0.0
      %1341 = vmatpush1.xpose.msra.mxu0 0.0
      %1342 = vmatprep.subr.mxu0 0.0
      %1343 = vmatpush1.xpose.msra.mxu0 0.0
      %1344 = vmatprep.subr.mxu0 0.0
      %1345 = vmatpush1.xpose.msra.mxu0 0.0
      %1346 = vmatprep.subr.mxu0 0.0
      %1347 = vmatpush1.xpose.msra.mxu0 0.0
      %1348 = vmatprep.subr.mxu0 0.0
      %1349 = vmatpush1.xpose.msra.mxu0 0.0
      %1350 = vmatprep.subr.mxu0 0.0
      %1351 = vmatpush1.xpose.msra.mxu0 0.0
      %1352 = vmatprep.subr.mxu0 0.0
      %1353 = vmatpush1.xpose.msra.mxu0 0.0
      %1354 = vmatprep.subr.mxu0 0.0
      %1355 = vmatpush1.xpose.msra.mxu0 0.0
      %1356 = vmatprep.subr.mxu0 0.0
      %1357 = vmatpush1.xpose.msra.mxu0 0.0
      %1358 = vmatprep.subr.mxu0 0.0
      %1359 = vmatpush1.xpose.msra.mxu0 0.0
      %1360 = vmatprep.subr.mxu0 0.0
      %1361 = vmatpush1.xpose.msra.mxu0 0.0
      %1362 = vmatprep.subr.mxu0 0.0
      %1363 = vmatpush1.xpose.msra.mxu0 0.0
      %1364 = vmatprep.mubr.f32.mxu0 0.0
      %1365 = vmatmul.mubr.f32.gmra.mrb[0].mxu0 %v1296
      %v1366 = vpop.f32.mrb[0].mxu0
      %v1367 = vadd.f32 0.0, %v1366
      %v1368 = vpop.f32.mrb[0].mxu0
      %1369 = vdwg.mxu0
      %v1370 = vmul.f32 %v1367, 0.35355338
      %v1371 = vadd.f32 %v1370, %v889
      %v1372 = vsel %vm809, %v1371, -inf
      %1373 = vmax.xlane.f32.xlu0 %v1372
      %v1374 = vpop.xlane.xlu0 %1373
      %v1375 = vsub.f32 %v1371, %v1374
      %v1376 = vmul.f32 %v1375, 1.442695
      %v1377 = vpow.pop %v1376
      %v1378 = vsel %vm809, %v1377, 0.0
      %1379 = vadd.xlane.f32.xlu0 %v1378
      %v1380 = vpop.xlane.xlu0 %1379
      %v1381 = vrcp.pop %v1380
      %v1382 = vmul.f32 %v1377, %v1381
      %1383 = vrot.lane.b32.xlu0 %v803, 48
      %v1384 = vpop.permute.xlu0 %1383
      %v1387 = vsel %vm809, %v1382, 0
      %1389 = vmatprep.subr.mxu0 0.0
      %1390 = vmatpush1.msra.mxu0 %v1384
      %1391 = vmatprep.subr.mxu0 0.0
      %1392 = vmatpush1.msra.mxu0 0.0
      %1393 = vmatprep.subr.mxu0 0.0
      %1394 = vmatpush1.msra.mxu0 0.0
      %1395 = vmatprep.subr.mxu0 0.0
      %1396 = vmatpush1.msra.mxu0 0.0
      %1397 = vmatprep.subr.mxu0 0.0
      %1398 = vmatpush1.msra.mxu0 0.0
      %1399 = vmatprep.subr.mxu0 0.0
      %1400 = vmatpush1.msra.mxu0 0.0
      %1401 = vmatprep.subr.mxu0 0.0
      %1402 = vmatpush1.msra.mxu0 0.0
      %1403 = vmatprep.subr.mxu0 0.0
      %1404 = vmatpush1.msra.mxu0 0.0
      %1405 = vmatprep.subr.mxu0 0.0
      %1406 = vmatpush1.msra.mxu0 0.0
      %1407 = vmatprep.subr.mxu0 0.0
      %1408 = vmatpush1.msra.mxu0 0.0
      %1409 = vmatprep.subr.mxu0 0.0
      %1410 = vmatpush1.msra.mxu0 0.0
      %1411 = vmatprep.subr.mxu0 0.0
      %1412 = vmatpush1.msra.mxu0 0.0
      %1413 = vmatprep.subr.mxu0 0.0
      %1414 = vmatpush1.msra.mxu0 0.0
      %1415 = vmatprep.subr.mxu0 0.0
      %1416 = vmatpush1.msra.mxu0 0.0
      %1417 = vmatprep.subr.mxu0 0.0
      %1418 = vmatpush1.msra.mxu0 0.0
      %1419 = vmatprep.subr.mxu0 0.0
      %1420 = vmatpush1.msra.mxu0 0.0
      %1421 = vmatprep.subr.mxu0 0.0
      %1422 = vmatpush1.msra.mxu0 0.0
      %1423 = vmatprep.subr.mxu0 0.0
      %1424 = vmatpush1.msra.mxu0 0.0
      %1425 = vmatprep.subr.mxu0 0.0
      %1426 = vmatpush1.msra.mxu0 0.0
      %1427 = vmatprep.subr.mxu0 0.0
      %1428 = vmatpush1.msra.mxu0 0.0
      %1429 = vmatprep.subr.mxu0 0.0
      %1430 = vmatpush1.msra.mxu0 0.0
      %1431 = vmatprep.subr.mxu0 0.0
      %1432 = vmatpush1.msra.mxu0 0.0
      %1433 = vmatprep.subr.mxu0 0.0
      %1434 = vmatpush1.msra.mxu0 0.0
      %1435 = vmatprep.subr.mxu0 0.0
      %1436 = vmatpush1.msra.mxu0 0.0
      %1437 = vmatprep.subr.mxu0 0.0
      %1438 = vmatpush1.msra.mxu0 0.0
      %1439 = vmatprep.subr.mxu0 0.0
      %1440 = vmatpush1.msra.mxu0 0.0
      %1441 = vmatprep.subr.mxu0 0.0
      %1442 = vmatpush1.msra.mxu0 0.0
      %1443 = vmatprep.subr.mxu0 0.0
      %1444 = vmatpush1.msra.mxu0 0.0
      %1445 = vmatprep.subr.mxu0 0.0
      %1446 = vmatpush1.msra.mxu0 0.0
      %1447 = vmatprep.subr.mxu0 0.0
      %1448 = vmatpush1.msra.mxu0 0.0
      %1449 = vmatprep.subr.mxu0 0.0
      %1450 = vmatpush1.msra.mxu0 0.0
      %1451 = vmatprep.subr.mxu0 0.0
      %1452 = vmatpush1.msra.mxu0 0.0
      %1453 = vmatprep.mubr.f32.mxu0 0.0
      %1454 = vmatmul.mubr.f32.gmra.mrb[0].mxu0 %v1387
      %v1455 = vpop.f32.mrb[0].mxu0
      %v1456 = vadd.f32 0.0, %v1455
      %v1457 = vpop.f32.mrb[0].mxu0
      %1458 = vdwg.mxu0
      %v1460 = vsel %vm809, %v1456, 0
      %1462 = vmatprep.subr.mxu0 0.0
      %1463 = vmatpush1.msra.mxu0 %v697
      %1464 = vmatprep.subr.mxu0 0.0
      %1465 = vmatpush1.msra.mxu0 0.0
      %1466 = vmatprep.subr.mxu0 0.0
      %1467 = vmatpush1.msra.mxu0 0.0
      %1468 = vmatprep.subr.mxu0 0.0
      %1469 = vmatpush1.msra.mxu0 0.0
      %1470 = vmatprep.subr.mxu0 0.0
      %1471 = vmatpush1.msra.mxu0 0.0
      %1472 = vmatprep.subr.mxu0 0.0
      %1473 = vmatpush1.msra.mxu0 0.0
      %1474 = vmatprep.subr.mxu0 0.0
      %1475 = vmatpush1.msra.mxu0 0.0
      %1476 = vmatprep.subr.mxu0 0.0
      %1477 = vmatpush1.msra.mxu0 0.0
      %1478 = vmatprep.subr.mxu0 0.0
      %1479 = vmatpush1.msra.mxu0 0.0
      %1480 = vmatprep.subr.mxu0 0.0
      %1481 = vmatpush1.msra.mxu0 0.0
      %1482 = vmatprep.subr.mxu0 0.0
      %1483 = vmatpush1.msra.mxu0 0.0
      %1484 = vmatprep.subr.mxu0 0.0
      %1485 = vmatpush1.msra.mxu0 0.0
      %1486 = vmatprep.subr.mxu0 0.0
      %1487 = vmatpush1.msra.mxu0 0.0
      %1488 = vmatprep.subr.mxu0 0.0
      %1489 = vmatpush1.msra.mxu0 0.0
      %1490 = vmatprep.subr.mxu0 0.0
      %1491 = vmatpush1.msra.mxu0 0.0
      %1492 = vmatprep.subr.mxu0 0.0
      %1493 = vmatpush1.msra.mxu0 0.0
      %1494 = vmatprep.subr.mxu0 0.0
      %1495 = vmatpush1.msra.mxu0 0.0
      %1496 = vmatprep.subr.mxu0 0.0
      %1497 = vmatpush1.msra.mxu0 0.0
      %1498 = vmatprep.subr.mxu0 0.0
      %1499 = vmatpush1.msra.mxu0 0.0
      %1500 = vmatprep.subr.mxu0 0.0
      %1501 = vmatpush1.msra.mxu0 0.0
      %1502 = vmatprep.subr.mxu0 0.0
      %1503 = vmatpush1.msra.mxu0 0.0
      %1504 = vmatprep.subr.mxu0 0.0
      %1505 = vmatpush1.msra.mxu0 0.0
      %1506 = vmatprep.subr.mxu0 0.0
      %1507 = vmatpush1.msra.mxu0 0.0
      %1508 = vmatprep.subr.mxu0 0.0
      %1509 = vmatpush1.msra.mxu0 0.0
      %1510 = vmatprep.subr.mxu0 0.0
      %1511 = vmatpush1.msra.mxu0 0.0
      %1512 = vmatprep.subr.mxu0 0.0
      %1513 = vmatpush1.msra.mxu0 0.0
      %1514 = vmatprep.subr.mxu0 0.0
      %1515 = vmatpush1.msra.mxu0 0.0
      %1516 = vmatprep.subr.mxu0 0.0
      %1517 = vmatpush1.msra.mxu0 0.0
      %1518 = vmatprep.subr.mxu0 0.0
      %1519 = vmatpush1.msra.mxu0 0.0
      %1520 = vmatprep.subr.mxu0 0.0
      %1521 = vmatpush1.msra.mxu0 0.0
      %1522 = vmatprep.subr.mxu0 0.0
      %1523 = vmatpush1.msra.mxu0 0.0
      %1524 = vmatprep.subr.mxu0 0.0
      %1525 = vmatpush1.msra.mxu0 0.0
      %1526 = vmatprep.mubr.f32.mxu0 0.0
      %1527 = vmatmul.mubr.f32.gmra.mrb[0].mxu0 %v1460
      %v1528 = vpop.f32.mrb[0].mxu0
      %v1529 = vadd.f32 0.0, %v1528
      %v1530 = vpop.f32.mrb[0].mxu0
      %1531 = vdwg.mxu0
      %v1532 = vadd.f32 %v1289, %v1529
      %1533 = vrot.lane.b32.xlu0 %v803, 104
      %v1534 = vpop.permute.xlu0 %1533
      %1535 = vrot.lane.b32.xlu0 %v803, 72
      %v1536 = vpop.permute.xlu0 %1535
      %v1537 = vsel %vm809, %v1534, 0
      %v1539 = vsel %vm809, %v1536, 0
      %1541 = vmatprep.subr.mxu0 0.0
      %1542 = vmatpush1.xpose.msra.mxu0 %v1539
      %1543 = vmatprep.subr.mxu0 0.0
      %1544 = vmatpush1.xpose.msra.mxu0 0.0
      %1545 = vmatprep.subr.mxu0 0.0
      %1546 = vmatpush1.xpose.msra.mxu0 0.0
      %1547 = vmatprep.subr.mxu0 0.0
      %1548 = vmatpush1.xpose.msra.mxu0 0.0
      %1549 = vmatprep.subr.mxu0 0.0
      %1550 = vmatpush1.xpose.msra.mxu0 0.0
      %1551 = vmatprep.subr.mxu0 0.0
      %1552 = vmatpush1.xpose.msra.mxu0 0.0
      %1553 = vmatprep.subr.mxu0 0.0
      %1554 = vmatpush1.xpose.msra.mxu0 0.0
      %1555 = vmatprep.subr.mxu0 0.0
      %1556 = vmatpush1.xpose.msra.mxu0 0.0
      %1557 = vmatprep.subr.mxu0 0.0
      %1558 = vmatpush1.xpose.msra.mxu0 0.0
      %1559 = vmatprep.subr.mxu0 0.0
      %1560 = vmatpush1.xpose.msra.mxu0 0.0
      %1561 = vmatprep.subr.mxu0 0.0
      %1562 = vmatpush1.xpose.msra.mxu0 0.0
      %1563 = vmatprep.subr.mxu0 0.0
      %1564 = vmatpush1.xpose.msra.mxu0 0.0
      %1565 = vmatprep.subr.mxu0 0.0
      %1566 = vmatpush1.xpose.msra.mxu0 0.0
      %1567 = vmatprep.subr.mxu0 0.0
      %1568 = vmatpush1.xpose.msra.mxu0 0.0
      %1569 = vmatprep.subr.mxu0 0.0
      %1570 = vmatpush1.xpose.msra.mxu0 0.0
      %1571 = vmatprep.subr.mxu0 0.0
      %1572 = vmatpush1.xpose.msra.mxu0 0.0
      %1573 = vmatprep.subr.mxu0 0.0
      %1574 = vmatpush1.xpose.msra.mxu0 0.0
      %1575 = vmatprep.subr.mxu0 0.0
      %1576 = vmatpush1.xpose.msra.mxu0 0.0
      %1577 = vmatprep.subr.mxu0 0.0
      %1578 = vmatpush1.xpose.msra.mxu0 0.0
      %1579 = vmatprep.subr.mxu0 0.0
      %1580 = vmatpush1.xpose.msra.mxu0 0.0
      %1581 = vmatprep.subr.mxu0 0.0
      %1582 = vmatpush1.xpose.msra.mxu0 0.0
      %1583 = vmatprep.subr.mxu0 0.0
      %1584 = vmatpush1.xpose.msra.mxu0 0.0
      %1585 = vmatprep.subr.mxu0 0.0
      %1586 = vmatpush1.xpose.msra.mxu0 0.0
      %1587 = vmatprep.subr.mxu0 0.0
      %1588 = vmatpush1.xpose.msra.mxu0 0.0
      %1589 = vmatprep.subr.mxu0 0.0
      %1590 = vmatpush1.xpose.msra.mxu0 0.0
      %1591 = vmatprep.subr.mxu0 0.0
      %1592 = vmatpush1.xpose.msra.mxu0 0.0
      %1593 = vmatprep.subr.mxu0 0.0
      %1594 = vmatpush1.xpose.msra.mxu0 0.0
      %1595 = vmatprep.subr.mxu0 0.0
      %1596 = vmatpush1.xpose.msra.mxu0 0.0
      %1597 = vmatprep.subr.mxu0 0.0
      %1598 = vmatpush1.xpose.msra.mxu0 0.0
      %1599 = vmatprep.subr.mxu0 0.0
      %1600 = vmatpush1.xpose.msra.mxu0 0.0
      %1601 = vmatprep.subr.mxu0 0.0
      %1602 = vmatpush1.xpose.msra.mxu0 0.0
      %1603 = vmatprep.subr.mxu0 0.0
      %1604 = vmatpush1.xpose.msra.mxu0 0.0
      %1605 = vmatprep.mubr.f32.mxu0 0.0
      %1606 = vmatmul.mubr.f32.gmra.mrb[0].mxu0 %v1537
      %v1607 = vpop.f32.mrb[0].mxu0
      %v1608 = vadd.f32 0.0, %v1607
      %v1609 = vpop.f32.mrb[0].mxu0
      %1610 = vdwg.mxu0
      %v1611 = vmul.f32 %v1608, 0.35355338
      %v1612 = vadd.f32 %v1611, %v889
      %v1613 = vsel %vm809, %v1612, -inf
      %1614 = vmax.xlane.f32.xlu0 %v1613
      %v1615 = vpop.xlane.xlu0 %1614
      %v1616 = vsub.f32 %v1612, %v1615
      %v1617 = vmul.f32 %v1616, 1.442695
      %v1618 = vpow.pop %v1617
      %v1619 = vsel %vm809, %v1618, 0.0
      %1620 = vadd.xlane.f32.xlu0 %v1619
      %v1621 = vpop.xlane.xlu0 %1620
      %v1622 = vrcp.pop %v1621
      %v1623 = vmul.f32 %v1618, %v1622
      %1624 = vrot.lane.b32.xlu0 %v803, 40
      %v1625 = vpop.permute.xlu0 %1624
      %v1628 = vsel %vm809, %v1623, 0
      %1630 = vmatprep.subr.mxu0 0.0
      %1631 = vmatpush1.msra.mxu0 %v1625
      %1632 = vmatprep.subr.mxu0 0.0
      %1633 = vmatpush1.msra.mxu0 0.0
      %1634 = vmatprep.subr.mxu0 0.0
      %1635 = vmatpush1.msra.mxu0 0.0
      %1636 = vmatprep.subr.mxu0 0.0
      %1637 = vmatpush1.msra.mxu0 0.0
      %1638 = vmatprep.subr.mxu0 0.0
      %1639 = vmatpush1.msra.mxu0 0.0
      %1640 = vmatprep.subr.mxu0 0.0
      %1641 = vmatpush1.msra.mxu0 0.0
      %1642 = vmatprep.subr.mxu0 0.0
      %1643 = vmatpush1.msra.mxu0 0.0
      %1644 = vmatprep.subr.mxu0 0.0
      %1645 = vmatpush1.msra.mxu0 0.0
      %1646 = vmatprep.subr.mxu0 0.0
      %1647 = vmatpush1.msra.mxu0 0.0
      %1648 = vmatprep.subr.mxu0 0.0
      %1649 = vmatpush1.msra.mxu0 0.0
      %1650 = vmatprep.subr.mxu0 0.0
      %1651 = vmatpush1.msra.mxu0 0.0
      %1652 = vmatprep.subr.mxu0 0.0
      %1653 = vmatpush1.msra.mxu0 0.0
      %1654 = vmatprep.subr.mxu0 0.0
      %1655 = vmatpush1.msra.mxu0 0.0
      %1656 = vmatprep.subr.mxu0 0.0
      %1657 = vmatpush1.msra.mxu0 0.0
      %1658 = vmatprep.subr.mxu0 0.0
      %1659 = vmatpush1.msra.mxu0 0.0
      %1660 = vmatprep.subr.mxu0 0.0
      %1661 = vmatpush1.msra.mxu0 0.0
      %1662 = vmatprep.subr.mxu0 0.0
      %1663 = vmatpush1.msra.mxu0 0.0
      %1664 = vmatprep.subr.mxu0 0.0
      %1665 = vmatpush1.msra.mxu0 0.0
      %1666 = vmatprep.subr.mxu0 0.0
      %1667 = vmatpush1.msra.mxu0 0.0
      %1668 = vmatprep.subr.mxu0 0.0
      %1669 = vmatpush1.msra.mxu0 0.0
      %1670 = vmatprep.subr.mxu0 0.0
      %1671 = vmatpush1.msra.mxu0 0.0
      %1672 = vmatprep.subr.mxu0 0.0
      %1673 = vmatpush1.msra.mxu0 0.0
      %1674 = vmatprep.subr.mxu0 0.0
      %1675 = vmatpush1.msra.mxu0 0.0
      %1676 = vmatprep.subr.mxu0 0.0
      %1677 = vmatpush1.msra.mxu0 0.0
      %1678 = vmatprep.subr.mxu0 0.0
      %1679 = vmatpush1.msra.mxu0 0.0
      %1680 = vmatprep.subr.mxu0 0.0
      %1681 = vmatpush1.msra.mxu0 0.0
      %1682 = vmatprep.subr.mxu0 0.0
      %1683 = vmatpush1.msra.mxu0 0.0
      %1684 = vmatprep.subr.mxu0 0.0
      %1685 = vmatpush1.msra.mxu0 0.0
      %1686 = vmatprep.subr.mxu0 0.0
      %1687 = vmatpush1.msra.mxu0 0.0
      %1688 = vmatprep.subr.mxu0 0.0
      %1689 = vmatpush1.msra.mxu0 0.0
      %1690 = vmatprep.subr.mxu0 0.0
      %1691 = vmatpush1.msra.mxu0 0.0
      %1692 = vmatprep.subr.mxu0 0.0
      %1693 = vmatpush1.msra.mxu0 0.0
      %1694 = vmatprep.mubr.f32.mxu0 0.0
      %1695 = vmatmul.mubr.f32.gmra.mrb[0].mxu0 %v1628
      %v1696 = vpop.f32.mrb[0].mxu0
      %v1697 = vadd.f32 0.0, %v1696
      %v1698 = vpop.f32.mrb[0].mxu0
      %1699 = vdwg.mxu0
      %v1701 = vsel %vm809, %v1697, 0
      %1703 = vmatprep.subr.mxu0 0.0
      %1704 = vmatpush1.msra.mxu0 %v698
      %1705 = vmatprep.subr.mxu0 0.0
      %1706 = vmatpush1.msra.mxu0 0.0
      %1707 = vmatprep.subr.mxu0 0.0
      %1708 = vmatpush1.msra.mxu0 0.0
      %1709 = vmatprep.subr.mxu0 0.0
      %1710 = vmatpush1.msra.mxu0 0.0
      %1711 = vmatprep.subr.mxu0 0.0
      %1712 = vmatpush1.msra.mxu0 0.0
      %1713 = vmatprep.subr.mxu0 0.0
      %1714 = vmatpush1.msra.mxu0 0.0
      %1715 = vmatprep.subr.mxu0 0.0
      %1716 = vmatpush1.msra.mxu0 0.0
      %1717 = vmatprep.subr.mxu0 0.0
      %1718 = vmatpush1.msra.mxu0 0.0
      %1719 = vmatprep.subr.mxu0 0.0
      %1720 = vmatpush1.msra.mxu0 0.0
      %1721 = vmatprep.subr.mxu0 0.0
      %1722 = vmatpush1.msra.mxu0 0.0
      %1723 = vmatprep.subr.mxu0 0.0
      %1724 = vmatpush1.msra.mxu0 0.0
      %1725 = vmatprep.subr.mxu0 0.0
      %1726 = vmatpush1.msra.mxu0 0.0
      %1727 = vmatprep.subr.mxu0 0.0
      %1728 = vmatpush1.msra.mxu0 0.0
      %1729 = vmatprep.subr.mxu0 0.0
      %1730 = vmatpush1.msra.mxu0 0.0
      %1731 = vmatprep.subr.mxu0 0.0
      %1732 = vmatpush1.msra.mxu0 0.0
      %1733 = vmatprep.subr.mxu0 0.0
      %1734 = vmatpush1.msra.mxu0 0.0
      %1735 = vmatprep.subr.mxu0 0.0
      %1736 = vmatpush1.msra.mxu0 0.0
      %1737 = vmatprep.subr.mxu0 0.0
      %1738 = vmatpush1.msra.mxu0 0.0
      %1739 = vmatprep.subr.mxu0 0.0
      %1740 = vmatpush1.msra.mxu0 0.0
      %1741 = vmatprep.subr.mxu0 0.0
      %1742 = vmatpush1.msra.mxu0 0.0
      %1743 = vmatprep.subr.mxu0 0.0
      %1744 = vmatpush1.msra.mxu0 0.0
      %1745 = vmatprep.subr.mxu0 0.0
      %1746 = vmatpush1.msra.mxu0 0.0
      %1747 = vmatprep.subr.mxu0 0.0
      %1748 = vmatpush1.msra.mxu0 0.0
      %1749 = vmatprep.subr.mxu0 0.0
      %1750 = vmatpush1.msra.mxu0 0.0
      %1751 = vmatprep.subr.mxu0 0.0
      %1752 = vmatpush1.msra.mxu0 0.0
      %1753 = vmatprep.subr.mxu0 0.0
      %1754 = vmatpush1.msra.mxu0 0.0
      %1755 = vmatprep.subr.mxu0 0.0
      %1756 = vmatpush1.msra.mxu0 0.0
      %1757 = vmatprep.subr.mxu0 0.0
      %1758 = vmatpush1.msra.mxu0 0.0
      %1759 = vmatprep.subr.mxu0 0.0
      %1760 = vmatpush1.msra.mxu0 0.0
      %1761 = vmatprep.subr.mxu0 0.0
      %1762 = vmatpush1.msra.mxu0 0.0
      %1763 = vmatprep.subr.mxu0 0.0
      %1764 = vmatpush1.msra.mxu0 0.0
      %1765 = vmatprep.subr.mxu0 0.0
      %1766 = vmatpush1.msra.mxu0 0.0
      %1767 = vmatprep.mubr.f32.mxu0 0.0
      %1768 = vmatmul.mubr.f32.gmra.mrb[0].mxu0 %v1701
      %v1769 = vpop.f32.mrb[0].mxu0
      %v1770 = vadd.f32 0.0, %v1769
      %v1771 = vpop.f32.mrb[0].mxu0
      %1772 = vdwg.mxu0
      %v1773 = vadd.f32 %v1532, %v1770
      %v1775 = vlaneseq
      %v1776 = vshrl.u32 %v1775, 7
      %v1777 = vsub.s32 0, %v1776
      %v1778 = vrot.slane %v699, %v1777
      %v1780 = vadd.f32 %v1773, %v1778
      %v1781 = vadd.f32 %v1780, %v688
      %v1782 = vsel %vm732, %v1781, 0.0
      %1783 = vadd.xlane.f32.xlu0 %v1782
      %v1784 = vpop.xlane.xlu0 %1783
      %v1785 = vrcp.pop 32.0
      %v1786 = vmul.f32 %v1784, %v1785
      %v1787 = vsub.f32 %v1781, %v1786
      %v1788 = vmul.f32 %v1787, %v1787
      %v1789 = vsel %vm732, %v1788, 0.0
      %1790 = vadd.xlane.f32.xlu0 %v1789
      %v1791 = vpop.xlane.xlu0 %1790
      %v1792 = vmul.f32 %v1791, %v1785
      %v1793 = vadd.f32 %v1792, 1e-12
      %v1794 = vrsqrt.pop %v1793
      %v1795 = vmul.f32 %v1787, %v1794
      %v1797 = vlaneseq
      %v1798 = vshrl.u32 %v1797, 7
      %v1799 = vsub.s32 0, %v1798
      %v1800 = vrot.slane %v700, %v1799
      %v1802 = vmul.f32 %v1795, %v1800
      %v1804 = vlaneseq
      %v1805 = vshrl.u32 %v1804, 7
      %v1806 = vsub.s32 0, %v1805
      %v1807 = vrot.slane %v701, %v1806
      %v1809 = vadd.f32 %v1802, %v1807
      %v1811 = vlaneseq
      %v1812 = vshrl.u32 %v1811, 7
      %v1813 = vsub.s32 0, %v1812
      %v1814 = vrot.slane %v706, %v1813
      %v1817 = vsel %vm732, %v1809, 0
      %1819 = vmatprep.subr.mxu0 0.0
      %1820 = vmatpush1.msra.mxu0 %v702
      %1821 = vmatprep.subr.mxu0 0.0
      %1822 = vmatpush1.msra.mxu0 %v703
      %1823 = vmatprep.subr.mxu0 0.0
      %1824 = vmatpush1.msra.mxu0 %v704
      %1825 = vmatprep.subr.mxu0 0.0
      %1826 = vmatpush1.msra.mxu0 %v705
      %1827 = vmatprep.subr.mxu0 0.0
      %1828 = vmatpush1.msra.mxu0 0.0
      %1829 = vmatprep.subr.mxu0 0.0
      %1830 = vmatpush1.msra.mxu0 0.0
      %1831 = vmatprep.subr.mxu0 0.0
      %1832 = vmatpush1.msra.mxu0 0.0
      %1833 = vmatprep.subr.mxu0 0.0
      %1834 = vmatpush1.msra.mxu0 0.0
      %1835 = vmatprep.subr.mxu0 0.0
      %1836 = vmatpush1.msra.mxu0 0.0
      %1837 = vmatprep.subr.mxu0 0.0
      %1838 = vmatpush1.msra.mxu0 0.0
      %1839 = vmatprep.subr.mxu0 0.0
      %1840 = vmatpush1.msra.mxu0 0.0
      %1841 = vmatprep.subr.mxu0 0.0
      %1842 = vmatpush1.msra.mxu0 0.0
      %1843 = vmatprep.subr.mxu0 0.0
      %1844 = vmatpush1.msra.mxu0 0.0
      %1845 = vmatprep.subr.mxu0 0.0
      %1846 = vmatpush1.msra.mxu0 0.0
      %1847 = vmatprep.subr.mxu0 0.0
      %1848 = vmatpush1.msra.mxu0 0.0
      %1849 = vmatprep.subr.mxu0 0.0
      %1850 = vmatpush1.msra.mxu0 0.0
      %1851 = vmatprep.subr.mxu0 0.0
      %1852 = vmatpush1.msra.mxu0 0.0
      %1853 = vmatprep.subr.mxu0 0.0
      %1854 = vmatpush1.msra.mxu0 0.0
      %1855 = vmatprep.subr.mxu0 0.0
      %1856 = vmatpush1.msra.mxu0 0.0
      %1857 = vmatprep.subr.mxu0 0.0
      %1858 = vmatpush1.msra.mxu0 0.0
      %1859 = vmatprep.subr.mxu0 0.0
      %1860 = vmatpush1.msra.mxu0 0.0
      %1861 = vmatprep.subr.mxu0 0.0
      %1862 = vmatpush1.msra.mxu0 0.0
      %1863 = vmatprep.subr.mxu0 0.0
      %1864 = vmatpush1.msra.mxu0 0.0
      %1865 = vmatprep.subr.mxu0 0.0
      %1866 = vmatpush1.msra.mxu0 0.0
      %1867 = vmatprep.subr.mxu0 0.0
      %1868 = vmatpush1.msra.mxu0 0.0
      %1869 = vmatprep.subr.mxu0 0.0
      %1870 = vmatpush1.msra.mxu0 0.0
      %1871 = vmatprep.subr.mxu0 0.0
      %1872 = vmatpush1.msra.mxu0 0.0
      %1873 = vmatprep.subr.mxu0 0.0
      %1874 = vmatpush1.msra.mxu0 0.0
      %1875 = vmatprep.subr.mxu0 0.0
      %1876 = vmatpush1.msra.mxu0 0.0
      %1877 = vmatprep.subr.mxu0 0.0
      %1878 = vmatpush1.msra.mxu0 0.0
      %1879 = vmatprep.subr.mxu0 0.0
      %1880 = vmatpush1.msra.mxu0 0.0
      %1881 = vmatprep.subr.mxu0 0.0
      %1882 = vmatpush1.msra.mxu0 0.0
      %1883 = vmatprep.mubr.f32.mxu0 0.0
      %1884 = vmatmul.mubr.f32.gmra.mrb[0].mxu0 %v1817
      %v1885 = vpop.f32.mrb[0].mxu0
      %v1886 = vadd.f32 %v1814, %v1885
      %v1887 = vpop.f32.mrb[0].mxu0
      %1888 = vdwg.mxu0
      %v1889 = vmul.f32 %v1886, %v1886
      %v1890 = vmul.f32 %v1886, %v1889
      %v1891 = vmul.f32 %v1890, 0.044715
      %v1892 = vadd.f32 %v1886, %v1891
      %v1893 = vmul.f32 %v1892, 0.7978846
      %v1894 = vtanh.pop %v1893
      %v1895 = vadd.f32 %v1894, 1.0
      %v1896 = vmul.f32 %v1895, 0.5
      %v1897 = vmul.f32 %v1886, %v1896
      %v1899 = vlaneseq
      %v1900 = vshrl.u32 %v1899, 7
      %v1901 = vsub.s32 0, %v1900
      %v1902 = vrot.slane %v723, %v1901
      %1904 = vmatprep.subr.mxu0 0.0
      %1905 = vmatpush1.msra.mxu0 %v707
      %1906 = vmatprep.subr.mxu0 0.0
      %1907 = vmatpush1.msra.mxu0 %v708
      %1908 = vmatprep.subr.mxu0 0.0
      %1909 = vmatpush1.msra.mxu0 %v709
      %1910 = vmatprep.subr.mxu0 0.0
      %1911 = vmatpush1.msra.mxu0 %v710
      %1912 = vmatprep.subr.mxu0 0.0
      %1913 = vmatpush1.msra.mxu0 %v711
      %1914 = vmatprep.subr.mxu0 0.0
      %1915 = vmatpush1.msra.mxu0 %v712
      %1916 = vmatprep.subr.mxu0 0.0
      %1917 = vmatpush1.msra.mxu0 %v713
      %1918 = vmatprep.subr.mxu0 0.0
      %1919 = vmatpush1.msra.mxu0 %v714
      %1920 = vmatprep.subr.mxu0 0.0
      %1921 = vmatpush1.msra.mxu0 %v715
      %1922 = vmatprep.subr.mxu0 0.0
      %1923 = vmatpush1.msra.mxu0 %v716
      %1924 = vmatprep.subr.mxu0 0.0
      %1925 = vmatpush1.msra.mxu0 %v717
      %1926 = vmatprep.subr.mxu0 0.0
      %1927 = vmatpush1.msra.mxu0 %v718
      %1928 = vmatprep.subr.mxu0 0.0
      %1929 = vmatpush1.msra.mxu0 %v719
      %1930 = vmatprep.subr.mxu0 0.0
      %1931 = vmatpush1.msra.mxu0 %v720
      %1932 = vmatprep.subr.mxu0 0.0
      %1933 = vmatpush1.msra.mxu0 %v721
      %1934 = vmatprep.subr.mxu0 0.0
      %1935 = vmatpush1.msra.mxu0 %v722
      %1936 = vmatprep.subr.mxu0 0.0
      %1937 = vmatpush1.msra.mxu0 0.0
      %1938 = vmatprep.subr.mxu0 0.0
      %1939 = vmatpush1.msra.mxu0 0.0
      %1940 = vmatprep.subr.mxu0 0.0
      %1941 = vmatpush1.msra.mxu0 0.0
      %1942 = vmatprep.subr.mxu0 0.0
      %1943 = vmatpush1.msra.mxu0 0.0
      %1944 = vmatprep.subr.mxu0 0.0
      %1945 = vmatpush1.msra.mxu0 0.0
      %1946 = vmatprep.subr.mxu0 0.0
      %1947 = vmatpush1.msra.mxu0 0.0
      %1948 = vmatprep.subr.mxu0 0.0
      %1949 = vmatpush1.msra.mxu0 0.0
      %1950 = vmatprep.subr.mxu0 0.0
      %1951 = vmatpush1.msra.mxu0 0.0
      %1952 = vmatprep.subr.mxu0 0.0
      %1953 = vmatpush1.msra.mxu0 0.0
      %1954 = vmatprep.subr.mxu0 0.0
      %1955 = vmatpush1.msra.mxu0 0.0
      %1956 = vmatprep.subr.mxu0 0.0
      %1957 = vmatpush1.msra.mxu0 0.0
      %1958 = vmatprep.subr.mxu0 0.0
      %1959 = vmatpush1.msra.mxu0 0.0
      %1960 = vmatprep.subr.mxu0 0.0
      %1961 = vmatpush1.msra.mxu0 0.0
      %1962 = vmatprep.subr.mxu0 0.0
      %1963 = vmatpush1.msra.mxu0 0.0
      %1964 = vmatprep.subr.mxu0 0.0
      %1965 = vmatpush1.msra.mxu0 0.0
      %1966 = vmatprep.subr.mxu0 0.0
      %1967 = vmatpush1.msra.mxu0 0.0
      %1968 = vmatprep.mubr.f32.mxu0 0.0
      %1969 = vmatmul.mubr.f32.gmra.mrb[0].mxu0 %v1897
      %v1970 = vpop.f32.mrb[0].mxu0
      %v1971 = vadd.f32 %v1902, %v1970
      %v1972 = vpop.f32.mrb[0].mxu0
      %1973 = vdwg.mxu0
      %v1974 = vadd.f32 %v1971, %v1809
      %v1975 = vsel %vm732, %v1974, 0.0
      %1976 = vadd.xlane.f32.xlu0 %v1975
      %v1977 = vpop.xlane.xlu0 %1976
      %v1978 = vmul.f32 %v1977, %v1785
      %v1979 = vsub.f32 %v1974, %v1978
      %v1980 = vmul.f32 %v1979, %v1979
      %v1981 = vsel %vm732, %v1980, 0.0
      %1982 = vadd.xlane.f32.xlu0 %v1981
      %v1983 = vpop.xlane.xlu0 %1982
      %v1984 = vmul.f32 %v1983, %v1785
      %v1985 = vadd.f32 %v1984, 1e-12
      %v1986 = vrsqrt.pop %v1985
      %v1987 = vmul.f32 %v1979, %v1986
      %v1989 = vlaneseq
      %v1990 = vshrl.u32 %v1989, 7
      %v1991 = vsub.s32 0, %v1990
      %v1992 = vrot.slane %v724, %v1991
      %v1994 = vmul.f32 %v1987, %v1992
      %v1996 = vlaneseq
      %v1997 = vshrl.u32 %v1996, 7
      %v1998 = vsub.s32 0, %v1997
      %v1999 = vrot.slane %v725, %v1998
      %v2001 = vadd.f32 %v1994, %v1999
      %2002 = vst.msk [vmem:[%s680] sm:$0xff] %vm732, %v2001
      %p2003 = scmp.lt.s32.totalorder %s29, 1
      %s2004 = scalar_select %p2003, %s29, 1
      %s2005 = smul.addr %s2004, 8
      %s2006 = scalar_lea.vmem %s14, %s2005
      // Predicated region
      $region81: #{loss_fn.8} parent=75 // pred_check
        %p2007 = pneg %p419
      $region82: #{loss_fn.8} parent=75 // pred_check_branch
        %2009 = sbr.rel (%p2007) target = $region84
      $region83: #{loss_fn.8} parent=75 // pred_region
        _
      $region84: #{loss_fn.8} parent=75 // pred_fallthru
        _
    $region76: #{loss_fn.8} parent=5 // pred_fallthru
      _
    %p2010 = scmp.le.s32.totalorder 2, %s20
    // Predicated region
    $region85: #{loss_fn.8} parent=5 // pred_check
      %p2011 = pneg %p2010
    $region86: #{loss_fn.8} parent=5 // pred_check_branch
      %2013 = sbr.rel (%p2011) target = $region88
    $region87: #{loss_fn.8} parent=5 // pred_region
      %s2014 = ssub.s32 %s20, 2
      // Predicated region
      $region89: #{loss_fn.8} parent=87 // pred_check
        %p2015 = pneg %p425
      $region90: #{loss_fn.8} parent=87 // pred_check_branch
        %2017 = sbr.rel (%p2015) target = $region92
      $region91: #{loss_fn.8} parent=87 // pred_region
        %p2018 = scmp.lt.s32.totalorder %s31, 1
        %s2019 = scalar_select %p2018, %s31, 1
        %s2020 = smul.addr %s2019, 8
        %s2021 = scalar_lea.vmem %s14, %s2020
      $region92: #{loss_fn.8} parent=87 // pred_fallthru
        _
    $region88: #{loss_fn.8} parent=5 // pred_fallthru
      _
  $region6: #{loss_fn.8} parent=0 // loop_footer
    %s24 = sadd.s32 1, %s20
  $region7: #{loss_fn.8} parent=0 // loop_footer_branch
    %19 = sbr.rel target = $region3
  $region8: #{loss_fn.8} parent=0 // loop_exit
    _

// kernel: loss_fn.11
$region0: #{loss_fn.11}
  #allocation0 [shape = 'u32[]', space=smem, size = 0x4, offset = 0x4, fixed_abs, tag = 'smem constant byte address 0x4 - core index']
  #allocation1 [shape = 'u32[144,128]{1,0:T(1,128)}', space=vmem, size = 0x12000, scoped, tag = 'internal scratch']
  %s0 = inlined_call_operand.vmem [shape: f32[16,32], index: 0, kind: input, shape index: {}]
  %s1 = inlined_call_operand.vmem [shape: f32[32,32], index: 1, kind: input, shape index: {}]
  %s2 = inlined_call_operand.vmem [shape: f32[1,32], index: 2, kind: input, shape index: {}]
  %s3 = inlined_call_operand.vmem [shape: f32[1,32], index: 3, kind: input, shape index: {}]
  %s4 = inlined_call_operand.vmem [shape: f32[1,32], index: 4, kind: input, shape index: {}]
  %s5 = inlined_call_operand.vmem [shape: f32[32,128], index: 5, kind: input, shape index: {}]
  %s6 = inlined_call_operand.vmem [shape: f32[1,128], index: 6, kind: input, shape index: {}]
  %s7 = inlined_call_operand.vmem [shape: s32[16,1], index: 7, kind: input, shape index: {}]
  %s8 = inlined_call_operand.hbm [shape: f32[1,1], index: 8, kind: output, shape index: {}]
  %s9 = sld [smem:[#allocation0]]
  $region42: #{loss_fn.11} parent=0
    _
  %s11 = ssub.s32 1, %s9
  %s12 = scalar_select 0, %s11, %s9
  $region1: #{loss_fn.11} parent=0
    #allocation2 [shape = 'u8[512]{0}', space=vmem, size = 0x400, scoped, tag = 'output window, operand 0, single buffered']
    #allocation3 [shape = 's32[1]{0}', space=sflag, size = 0x4, scoped, tag = 'scoped memory for loss_fn.11']
    %13 = vsyncpa [#allocation3], 0
    // Predicated region
    $region2: #{loss_fn.11} parent=1 // pred_check
      _
    $region3: #{loss_fn.11} parent=1 // pred_check_branch
      %15 = sbr.rel (0) target = $region5
    $region4: #{loss_fn.11} parent=1 // pred_region
      _
    $region5: #{loss_fn.11} parent=1 // pred_fallthru
      _
    // Predicated region
    $region6: #{loss_fn.11} parent=1 // pred_check
      _
    $region7: #{loss_fn.11} parent=1 // pred_check_branch
      %17 = sbr.rel (0) target = $region9
    $region8: #{loss_fn.11} parent=1 // pred_region
      _
    $region9: #{loss_fn.11} parent=1 // pred_fallthru
      _
    // Predicated region
    $region10: #{loss_fn.11} parent=1 // pred_check
      _
    $region11: #{loss_fn.11} parent=1 // pred_check_branch
      %19 = sbr.rel (0) target = $region13
    $region12: #{loss_fn.11} parent=1 // pred_region
      _
    $region13: #{loss_fn.11} parent=1 // pred_fallthru
      _
    // Predicated region
    $region14: #{loss_fn.11} parent=1 // pred_check
      _
    $region15: #{loss_fn.11} parent=1 // pred_check_branch
      %21 = sbr.rel (0) target = $region17
    $region16: #{loss_fn.11} parent=1 // pred_region
      _
    $region17: #{loss_fn.11} parent=1 // pred_fallthru
      _
    // Predicated region
    $region18: #{loss_fn.11} parent=1 // pred_check
      _
    $region19: #{loss_fn.11} parent=1 // pred_check_branch
      %23 = sbr.rel (0) target = $region21
    $region20: #{loss_fn.11} parent=1 // pred_region
      _
    $region21: #{loss_fn.11} parent=1 // pred_fallthru
      _
    // Predicated region
    $region22: #{loss_fn.11} parent=1 // pred_check
      _
    $region23: #{loss_fn.11} parent=1 // pred_check_branch
      %25 = sbr.rel (0) target = $region25
    $region24: #{loss_fn.11} parent=1 // pred_region
      _
    $region25: #{loss_fn.11} parent=1 // pred_fallthru
      _
    // Predicated region
    $region26: #{loss_fn.11} parent=1 // pred_check
      _
    $region27: #{loss_fn.11} parent=1 // pred_check_branch
      %27 = sbr.rel (0) target = $region29
    $region28: #{loss_fn.11} parent=1 // pred_region
      _
    $region29: #{loss_fn.11} parent=1 // pred_fallthru
      _
    // Predicated region
    $region30: #{loss_fn.11} parent=1 // pred_check
      _
    $region31: #{loss_fn.11} parent=1 // pred_check_branch
      %29 = sbr.rel (0) target = $region33
    $region32: #{loss_fn.11} parent=1 // pred_region
      _
    $region33: #{loss_fn.11} parent=1 // pred_fallthru
      _
    %v30 = vld [vmem:[%s0] sm:$0xff]
    %v31 = vld [vmem:[%s0 + $0x8] sm:$0xff]
    %v32 = vld [vmem:[%s1] sm:$0xff]
    %v33 = vld [vmem:[%s1 + $0x8] sm:$0xff]
    %v34 = vld [vmem:[%s1 + $0x10] sm:$0xff]
    %v35 = vld [vmem:[%s1 + $0x18] sm:$0xff]
    %v36 = vld [vmem:[%s2] sm:$0x1]
    %v38 = vlaneseq
    %v39 = vshrl.u32 %v38, 7
    %v40 = vsub.s32 0, %v39
    %v41 = vrot.slane %v36, %v40
    %vm43 = vcmask 261120
    %v45 = vsel %vm43, %v30, 0
    %v48 = vsel %vm43, %v31, 0
    %50 = vmatprep.subr.mxu0 0.0
    %51 = vmatpush1.msra.mxu0 %v32
    %52 = vmatprep.subr.mxu0 0.0
    %53 = vmatpush1.msra.mxu0 %v33
    %54 = vmatprep.subr.mxu0 0.0
    %55 = vmatpush1.msra.mxu0 %v34
    %56 = vmatprep.subr.mxu0 0.0
    %57 = vmatpush1.msra.mxu0 %v35
    %58 = vmatprep.subr.mxu0 0.0
    %59 = vmatpush1.msra.mxu0 0.0
    %60 = vmatprep.subr.mxu0 0.0
    %61 = vmatpush1.msra.mxu0 0.0
    %62 = vmatprep.subr.mxu0 0.0
    %63 = vmatpush1.msra.mxu0 0.0
    %64 = vmatprep.subr.mxu0 0.0
    %65 = vmatpush1.msra.mxu0 0.0
    %66 = vmatprep.subr.mxu0 0.0
    %67 = vmatpush1.msra.mxu0 0.0
    %68 = vmatprep.subr.mxu0 0.0
    %69 = vmatpush1.msra.mxu0 0.0
    %70 = vmatprep.subr.mxu0 0.0
    %71 = vmatpush1.msra.mxu0 0.0
    %72 = vmatprep.subr.mxu0 0.0
    %73 = vmatpush1.msra.mxu0 0.0
    %74 = vmatprep.subr.mxu0 0.0
    %75 = vmatpush1.msra.mxu0 0.0
    %76 = vmatprep.subr.mxu0 0.0
    %77 = vmatpush1.msra.mxu0 0.0
    %78 = vmatprep.subr.mxu0 0.0
    %79 = vmatpush1.msra.mxu0 0.0
    %80 = vmatprep.subr.mxu0 0.0
    %81 = vmatpush1.msra.mxu0 0.0
    %82 = vmatprep.subr.mxu0 0.0
    %83 = vmatpush1.msra.mxu0 0.0
    %84 = vmatprep.subr.mxu0 0.0
    %85 = vmatpush1.msra.mxu0 0.0
    %86 = vmatprep.subr.mxu0 0.0
    %87 = vmatpush1.msra.mxu0 0.0
    %88 = vmatprep.subr.mxu0 0.0
    %89 = vmatpush1.msra.mxu0 0.0
    %90 = vmatprep.subr.mxu0 0.0
    %91 = vmatpush1.msra.mxu0 0.0
    %92 = vmatprep.subr.mxu0 0.0
    %93 = vmatpush1.msra.mxu0 0.0
    %94 = vmatprep.subr.mxu0 0.0
    %95 = vmatpush1.msra.mxu0 0.0
    %96 = vmatprep.subr.mxu0 0.0
    %97 = vmatpush1.msra.mxu0 0.0
    %98 = vmatprep.subr.mxu0 0.0
    %99 = vmatpush1.msra.mxu0 0.0
    %100 = vmatprep.subr.mxu0 0.0
    %101 = vmatpush1.msra.mxu0 0.0
    %102 = vmatprep.subr.mxu0 0.0
    %103 = vmatpush1.msra.mxu0 0.0
    %104 = vmatprep.subr.mxu0 0.0
    %105 = vmatpush1.msra.mxu0 0.0
    %106 = vmatprep.subr.mxu0 0.0
    %107 = vmatpush1.msra.mxu0 0.0
    %108 = vmatprep.subr.mxu0 0.0
    %109 = vmatpush1.msra.mxu0 0.0
    %110 = vmatprep.subr.mxu0 0.0
    %111 = vmatpush1.msra.mxu0 0.0
    %112 = vmatprep.subr.mxu0 0.0
    %113 = vmatpush1.msra.mxu0 0.0
    %114 = vmatprep.mubr.f32.mxu0 0.0
    %115 = vmatmul.mubr.f32.gmra.mrb[0].mxu0 %v45
    %v116 = vpop.f32.mrb[0].mxu0
    %v117 = vadd.f32 %v41, %v116
    %v118 = vpop.f32.mrb[0].mxu0
    %119 = vmatprep.mubr.f32.mxu0 0.0
    %120 = vmatmul.mubr.f32.gmra.mrb[0].mxu0 %v48
    %v121 = vpop.f32.mrb[0].mxu0
    %v122 = vadd.f32 %v41, %v121
    %v123 = vpop.f32.mrb[0].mxu0
    %124 = vdwg.mxu0
    %v125 = vmul.f32 %v117, %v117
    %v126 = vmul.f32 %v122, %v122
    %v127 = vmul.f32 %v117, %v125
    %v128 = vmul.f32 %v122, %v126
    %v129 = vmul.f32 %v127, 0.044715
    %v130 = vmul.f32 %v128, 0.044715
    %v131 = vadd.f32 %v117, %v129
    %v132 = vadd.f32 %v122, %v130
    %v133 = vmul.f32 %v131, 0.7978846
    %v134 = vmul.f32 %v132, 0.7978846
    %v135 = vtanh.pop %v133
    %v136 = vtanh.pop %v134
    %v137 = vadd.f32 %v135, 1.0
    %v138 = vadd.f32 %v136, 1.0
    %v139 = vmul.f32 %v137, 0.5
    %v140 = vmul.f32 %v138, 0.5
    %v141 = vmul.f32 %v117, %v139
    %v142 = vmul.f32 %v122, %v140
    %v143 = vld [vmem:[%s3] sm:$0x1]
    %v144 = vld [vmem:[%s4] sm:$0x1]
    %v145 = vsel %vm43, %v141, 0.0
    %146 = vadd.xlane.f32.xlu0 %v145
    %v147 = vpop.xlane.xlu0 %146
    %v148 = vsel %vm43, %v142, 0.0
    %149 = vadd.xlane.f32.xlu0 %v148
    %v150 = vpop.xlane.xlu0 %149
    %v151 = vrcp.pop 32.0
    %v152 = vmul.f32 %v147, %v151
    %v153 = vmul.f32 %v150, %v151
    %v154 = vsub.f32 %v141, %v152
    %v155 = vsub.f32 %v142, %v153
    %v156 = vmul.f32 %v154, %v154
    %v157 = vmul.f32 %v155, %v155
    %v158 = vsel %vm43, %v156, 0.0
    %159 = vadd.xlane.f32.xlu0 %v158
    %v160 = vpop.xlane.xlu0 %159
    %v161 = vsel %vm43, %v157, 0.0
    %162 = vadd.xlane.f32.xlu0 %v161
    %v163 = vpop.xlane.xlu0 %162
    %v164 = vmul.f32 %v160, %v151
    %v165 = vmul.f32 %v163, %v151
    %v166 = vadd.f32 %v164, 1e-12
    %v167 = vadd.f32 %v165, 1e-12
    %v168 = vrsqrt.pop %v166
    %v169 = vrsqrt.pop %v167
    %v170 = vmul.f32 %v154, %v168
    %v171 = vmul.f32 %v155, %v169
    %v173 = vlaneseq
    %v174 = vshrl.u32 %v173, 7
    %v175 = vsub.s32 0, %v174
    %v176 = vrot.slane %v143, %v175
    %v178 = vmul.f32 %v170, %v176
    %v179 = vmul.f32 %v171, %v176
    %v181 = vlaneseq
    %v182 = vshrl.u32 %v181, 7
    %v183 = vsub.s32 0, %v182
    %v184 = vrot.slane %v144, %v183
    %v186 = vadd.f32 %v178, %v184
    %v187 = vadd.f32 %v179, %v184
    %v188 = vld [vmem:[%s5] sm:$0xff]
    %v189 = vld [vmem:[%s5 + $0x8] sm:$0xff]
    %v190 = vld [vmem:[%s5 + $0x10] sm:$0xff]
    %v191 = vld [vmem:[%s5 + $0x18] sm:$0xff]
    %v192 = vld [vmem:[%s6] sm:$0x1]
    %v194 = vlaneseq
    %v195 = vshrl.u32 %v194, 7
    %v196 = vsub.s32 0, %v195
    %v197 = vrot.slane %v192, %v196
    %v200 = vsel %vm43, %v186, 0
    %v203 = vsel %vm43, %v187, 0
    %205 = vmatprep.subr.mxu0 0.0
    %206 = vmatpush1.msra.mxu0 %v188
    %207 = vmatprep.subr.mxu0 0.0
    %208 = vmatpush1.msra.mxu0 %v189
    %209 = vmatprep.subr.mxu0 0.0
    %210 = vmatpush1.msra.mxu0 %v190
    %211 = vmatprep.subr.mxu0 0.0
    %212 = vmatpush1.msra.mxu0 %v191
    %213 = vmatprep.subr.mxu0 0.0
    %214 = vmatpush1.msra.mxu0 0.0
    %215 = vmatprep.subr.mxu0 0.0
    %216 = vmatpush1.msra.mxu0 0.0
    %217 = vmatprep.subr.mxu0 0.0
    %218 = vmatpush1.msra.mxu0 0.0
    %219 = vmatprep.subr.mxu0 0.0
    %220 = vmatpush1.msra.mxu0 0.0
    %221 = vmatprep.subr.mxu0 0.0
    %222 = vmatpush1.msra.mxu0 0.0
    %223 = vmatprep.subr.mxu0 0.0
    %224 = vmatpush1.msra.mxu0 0.0
    %225 = vmatprep.subr.mxu0 0.0
    %226 = vmatpush1.msra.mxu0 0.0
    %227 = vmatprep.subr.mxu0 0.0
    %228 = vmatpush1.msra.mxu0 0.0
    %229 = vmatprep.subr.mxu0 0.0
    %230 = vmatpush1.msra.mxu0 0.0
    %231 = vmatprep.subr.mxu0 0.0
    %232 = vmatpush1.msra.mxu0 0.0
    %233 = vmatprep.subr.mxu0 0.0
    %234 = vmatpush1.msra.mxu0 0.0
    %235 = vmatprep.subr.mxu0 0.0
    %236 = vmatpush1.msra.mxu0 0.0
    %237 = vmatprep.subr.mxu0 0.0
    %238 = vmatpush1.msra.mxu0 0.0
    %239 = vmatprep.subr.mxu0 0.0
    %240 = vmatpush1.msra.mxu0 0.0
    %241 = vmatprep.subr.mxu0 0.0
    %242 = vmatpush1.msra.mxu0 0.0
    %243 = vmatprep.subr.mxu0 0.0
    %244 = vmatpush1.msra.mxu0 0.0
    %245 = vmatprep.subr.mxu0 0.0
    %246 = vmatpush1.msra.mxu0 0.0
    %247 = vmatprep.subr.mxu0 0.0
    %248 = vmatpush1.msra.mxu0 0.0
    %249 = vmatprep.subr.mxu0 0.0
    %250 = vmatpush1.msra.mxu0 0.0
    %251 = vmatprep.subr.mxu0 0.0
    %252 = vmatpush1.msra.mxu0 0.0
    %253 = vmatprep.subr.mxu0 0.0
    %254 = vmatpush1.msra.mxu0 0.0
    %255 = vmatprep.subr.mxu0 0.0
    %256 = vmatpush1.msra.mxu0 0.0
    %257 = vmatprep.subr.mxu0 0.0
    %258 = vmatpush1.msra.mxu0 0.0
    %259 = vmatprep.subr.mxu0 0.0
    %260 = vmatpush1.msra.mxu0 0.0
    %261 = vmatprep.subr.mxu0 0.0
    %262 = vmatpush1.msra.mxu0 0.0
    %263 = vmatprep.subr.mxu0 0.0
    %264 = vmatpush1.msra.mxu0 0.0
    %265 = vmatprep.subr.mxu0 0.0
    %266 = vmatpush1.msra.mxu0 0.0
    %267 = vmatprep.subr.mxu0 0.0
    %268 = vmatpush1.msra.mxu0 0.0
    %269 = vmatprep.mubr.f32.mxu0 0.0
    %270 = vmatmul.mubr.f32.gmra.mrb[0].mxu0 %v200
    %v271 = vpop.f32.mrb[0].mxu0
    %v272 = vadd.f32 %v197, %v271
    %v273 = vpop.f32.mrb[0].mxu0
    %274 = vmatprep.mubr.f32.mxu0 0.0
    %275 = vmatmul.mubr.f32.gmra.mrb[0].mxu0 %v203
    %v276 = vpop.f32.mrb[0].mxu0
    %v277 = vadd.f32 %v197, %v276
    %v278 = vpop.f32.mrb[0].mxu0
    %279 = vdwg.mxu0
    %280 = vmax.xlane.f32.xlu0 %v272
    %v281 = vpop.xlane.xlu0 %280
    %282 = vmax.xlane.f32.xlu0 %v277
    %v283 = vpop.xlane.xlu0 %282
    %v284 = vsub.f32 %v272, %v281
    %v285 = vsub.f32 %v277, %v283
    %v286 = vmul.f32 %v284, 1.442695
    %v287 = vpow.pop %v286
    %v288 = vmul.f32 %v285, 1.442695
    %v289 = vpow.pop %v288
    %290 = vadd.xlane.f32.xlu0 %v287
    %v291 = vpop.xlane.xlu0 %290
    %292 = vadd.xlane.f32.xlu0 %v289
    %v293 = vpop.xlane.xlu0 %292
    %v294 = vlog2.pop %v291
    %v295 = vmul.f32 %v294, 0.6931472
    %v296 = vlog2.pop %v293
    %v297 = vmul.f32 %v296, 0.6931472
    %v298 = vadd.f32 %v281, %v295
    %v299 = vadd.f32 %v283, %v297
    %v300 = vld [vmem:[%s7] sm:$0xff]
    %v301 = vld [vmem:[%s7 + $0x8] sm:$0xff]
    %v302 = vlaneseq
    %v303 = vand.u32 %v302, 127
    %304 = vset.pattern.permute.xlu0 0
    %305 = vperm.xlu0 %304, %v300
    %v306 = vpop.permute.xlu0 %305
    %307 = vset.pattern.permute.xlu0 0
    %308 = vperm.xlu0 %307, %v301
    %v309 = vpop.permute.xlu0 %308
    %vm310 = vcmp.eq.s32.totalorder %v303, %v306
    %vm311 = vcmp.eq.s32.totalorder %v303, %v309
    %v312 = vsel %vm310, %v272, 0.0
    %v313 = vsel %vm311, %v277, 0.0
    %314 = vadd.xlane.f32.xlu0 %v312
    %v315 = vpop.xlane.xlu0 %314
    %316 = vadd.xlane.f32.xlu0 %v313
    %v317 = vpop.xlane.xlu0 %316
    %vm318 = vcmp.ge.s32.totalorder %v300, 0
    %vm319 = vcmp.ge.s32.totalorder %v301, 0
    %v320 = vsel %vm318, 1, 0
    %v321 = vsel %vm319, 1, 0
    %v322 = vcvt.s32.f32 %v320
    %v323 = vcvt.s32.f32 %v321
    %v324 = vsub.f32 %v298, %v315
    %v325 = vsub.f32 %v299, %v317
    %v326 = vmul.f32 %v324, %v322
    %v327 = vmul.f32 %v325, %v323
    %vm328 = vcmask 7168
    %v329 = vsel %vm328, %v326, 0.0
    %v330 = vsel %vm328, %v327, 0.0
    %v331 = vadd.f32 %v329, %v330
    %332 = vadd.xlane.f32.xlu0 %v331
    %v333 = vpop.xlane.xlu0 %332
    %v334 = vrot.slane %v333, 4
    %v335 = vadd.f32 %v333, %v334
    %v336 = vrot.slane %v335, 2
    %v337 = vadd.f32 %v335, %v336
    %v338 = vrot.slane %v337, 1
    %v339 = vadd.f32 %v337, %v338
    %s340 = vtos %v339
    %v341 = vstv %s340
    %v342 = vsel %vm328, %v322, 0.0
    %v343 = vsel %vm328, %v323, 0.0
    %v344 = vadd.f32 %v342, %v343
    %345 = vadd.xlane.f32.xlu0 %v344
    %v346 = vpop.xlane.xlu0 %345
    %v347 = vrot.slane %v346, 4
    %v348 = vadd.f32 %v346, %v347
    %v349 = vrot.slane %v348, 2
    %v350 = vadd.f32 %v348, %v349
    %v351 = vrot.slane %v350, 1
    %v352 = vadd.f32 %v350, %v351
    %s353 = vtos %v352
    %v354 = vstv %s353
    %v355 = vmax.f32 %v354, 1.0
    %v356 = vrcp.pop %v355
    %v357 = vmul.f32 %v341, %v356
    %vm358 = vcmask 0
    %359 = vst.msk [vmem:[#allocation2] sm:$0x1] %vm358, %v357
    // Predicated region
    $region34: #{loss_fn.11} parent=1 // pred_check
      _
    $region35: #{loss_fn.11} parent=1 // pred_check_branch
      %361 = sbr.rel (0) target = $region37
    $region36: #{loss_fn.11} parent=1 // pred_region
      %s363 = ssub.s32 16, 16
      %364 = vsyncadd [#allocation3], %s363
      %s366 = sshll.u32 [#allocation2], 4
      %s367 = int_to_ptr.vmem [resolvable:$true] %s366
      %369 = dma.vmem_to_hbm [thread:$0]  %s367, 16, %s8, [#allocation3]
    $region37: #{loss_fn.11} parent=1 // pred_fallthru
      _
    // Predicated region
    $region38: #{loss_fn.11} parent=1 // pred_check
      _
    $region39: #{loss_fn.11} parent=1 // pred_check_branch
      %371 = sbr.rel (0) target = $region41
    $region40: #{loss_fn.11} parent=1 // pred_region
      %372 = dma.done [#allocation3], 16
    $region41: #{loss_fn.11} parent=1 // pred_fallthru
      _
    %373 = vsyncpa [#allocation3], 1

// kernel: loss_fn.9
$region0: #{loss_fn.9}
  #allocation0 [shape = 'u32[]', space=smem, size = 0x4, offset = 0x4, fixed_abs, tag = 'smem constant byte address 0x4 - core index']
  #allocation1 [shape = 'u32[144,128]{1,0:T(1,128)}', space=vmem, size = 0x12000, scoped, tag = 'internal scratch']
  %s0 = inlined_call_operand.vmem [shape: f32[2,1,8], index: 0, kind: input, shape index: {}]
  %s1 = inlined_call_operand.vmem [shape: f32[4,16,1], index: 1, kind: input, shape index: {}]
  %s2 = inlined_call_operand.vmem [shape: f32[16,32], index: 2, kind: input, shape index: {}]
  %s3 = inlined_call_operand.vmem [shape: f32[4,32,96], index: 3, kind: input, shape index: {}]
  %s4 = inlined_call_operand.vmem [shape: f32[4,1,96], index: 4, kind: input, shape index: {}]
  %s5 = inlined_call_operand.vmem [shape: f32[4,32,32], index: 5, kind: input, shape index: {}]
  %s6 = inlined_call_operand.vmem [shape: f32[4,1,32], index: 6, kind: input, shape index: {}]
  %s7 = inlined_call_operand.vmem [shape: f32[4,1,32], index: 7, kind: input, shape index: {}]
  %s8 = inlined_call_operand.vmem [shape: f32[4,1,32], index: 8, kind: input, shape index: {}]
  %s9 = inlined_call_operand.vmem [shape: f32[4,32,128], index: 9, kind: input, shape index: {}]
  %s10 = inlined_call_operand.vmem [shape: f32[4,1,128], index: 10, kind: input, shape index: {}]
  %s11 = inlined_call_operand.vmem [shape: f32[4,128,32], index: 11, kind: input, shape index: {}]
  %s12 = inlined_call_operand.vmem [shape: f32[4,1,32], index: 12, kind: input, shape index: {}]
  %s13 = inlined_call_operand.vmem [shape: f32[4,1,32], index: 13, kind: input, shape index: {}]
  %s14 = inlined_call_operand.vmem [shape: f32[4,1,32], index: 14, kind: input, shape index: {}]
  %s15 = inlined_call_operand.vmem [shape: f32[16,32], index: 15, kind: output, shape index: {}]
  %s16 = sld [smem:[#allocation0]]
  $region97: #{loss_fn.9} parent=0
    _
  %s18 = ssub.s32 1, %s16
  %s19 = scalar_select 0, %s18, %s16
  loop: start=0, step=1, limit=10
  $region2: #{loss_fn.9} parent=0 // loop_pre_header
    _
  $region3: #{loss_fn.9} parent=0 // loop_header
    %s21 = sphi 0, %s25
    %p22 = scmp.ge.s32.totalorder %s21, 10
    %s28 = sphi 0, %s40
    %s29 = sphi 0, %s36
    %s30 = sphi 0, %s28
    %s31 = sphi 0, %s29
    %s32 = sphi 0, %s30
    %s33 = sphi 0, %s31
    %s43 = sphi 0, %s45
    %s46 = sphi 0, %s43
    %s47 = sphi 0, %s46
    %s63 = sphi 0, %s47
    %s71 = sphi 0, %s73
    %s74 = sphi 0, %s71
    %s75 = sphi 0, %s74
    %s91 = sphi 0, %s75
    %s97 = sphi 0, %s99
    %s100 = sphi 0, %s97
    %s101 = sphi 0, %s100
    %s117 = sphi 0, %s101
    %s123 = sphi 0, %s125
    %s126 = sphi 0, %s123
    %s127 = sphi 0, %s126
    %s143 = sphi 0, %s127
    %s149 = sphi 0, %s151
    %s152 = sphi 0, %s149
    %s153 = sphi 0, %s152
    %s169 = sphi 0, %s153
    %s175 = sphi 0, %s177
    %s178 = sphi 0, %s175
    %s179 = sphi 0, %s178
    %s195 = sphi 0, %s179
    %s201 = sphi 0, %s203
    %s204 = sphi 0, %s201
    %s205 = sphi 0, %s204
    %s221 = sphi 0, %s205
    %s227 = sphi 0, %s229
    %s230 = sphi 0, %s227
    %s231 = sphi 0, %s230
    %s247 = sphi 0, %s231
    %s253 = sphi 0, %s255
    %s256 = sphi 0, %s253
    %s257 = sphi 0, %s256
    %s273 = sphi 0, %s257
    %s279 = sphi 0, %s281
    %s282 = sphi 0, %s279
    %s283 = sphi 0, %s282
    %s299 = sphi 0, %s283
    %s305 = sphi 0, %s307
    %s308 = sphi 0, %s305
    %s309 = sphi 0, %s308
    %s325 = sphi 0, %s309
    %s331 = sphi 0, %s333
    %s334 = sphi 0, %s331
    %s335 = sphi 0, %s334
    %s351 = sphi 0, %s335
    %s357 = sphi 0, %s359
    %s360 = sphi 0, %s357
    %s361 = sphi 0, %s360
    %s377 = sphi 0, %s361
    %s383 = sphi 0, %s385
    %s386 = sphi 0, %s383
    %s387 = sphi 0, %s386
    %s403 = sphi 0, %s387
    %s409 = sphi 0, %s411
    %s412 = sphi 0, %s409
    %s413 = sphi 0, %s412
    %s429 = sphi 0, %s413
    %s435 = sphi 0, %s437
    %s438 = sphi 0, %s435
    %s439 = sphi 0, %s438
    %s455 = sphi 0, %s439
  $region4: #{loss_fn.9} parent=0 // loop_header_branch
    %24 = sbr.rel (%p22) target = $region8
  $region5: #{loss_fn.9} parent=0 // loop_body
    %s26 = ssub.s32 %s21, 1
    %s27 = ssub.s32 %s21, 2
    %s34 = sadd.s32 1, %s29
    %p35 = scmp.ge.s32.totalorder %s34, 4
    %s36 = scalar_select %p35, 0, %s34
    %s37 = sadd.s32 1, %s28
    %s38 = scalar_select %p35, %s37, %s28
    %p39 = scmp.ge.s32.totalorder %s38, 2
    %s40 = scalar_select %p39, 0, %s38
    %s41 = ssub.s32 %s28, %s40
    %p42 = scmp.eq.s32.totalorder %s41, 0
    %s44 = sadd.s32 %s43, 1
    %s45 = scalar_select %p42, %s43, %s44
    %p48 = pneg %p42
    %p49 = scmp.eq.s32.totalorder %s21, 7
    %p50 = por %p48, %p49
    %p51 = scmp.ne.s32.totalorder %s43, %s46
    %p52 = scmp.eq.s32.totalorder %s21, 0
    %p53 = por %p51, %p52
    %p54 = scmp.ne.s32.totalorder %s43, %s46
    %p55 = scmp.eq.s32.totalorder %s26, 7
    %p56 = por %p54, %p55
    %p57 = scmp.ne.s32.totalorder %s46, %s47
    %p58 = scmp.eq.s32.totalorder %s26, 0
    %p59 = por %p57, %p58
    %p60 = scmp.ne.s32.totalorder %s46, %s47
    %p61 = scmp.eq.s32.totalorder %s27, 7
    %p62 = por %p60, %p61
    %p64 = scmp.ne.s32.totalorder %s47, %s63
    %p65 = scmp.eq.s32.totalorder %s27, 0
    %p66 = por %p64, %p65
    %s67 = ssub.s32 %s29, %s36
    %s68 = ssub.s32 %s28, %s40
    %s69 = sor.u32 %s67, %s68
    %p70 = scmp.eq.s32.totalorder %s69, 0
    %s72 = sadd.s32 %s71, 1
    %s73 = scalar_select %p70, %s71, %s72
    %p76 = pneg %p70
    %p77 = scmp.eq.s32.totalorder %s21, 7
    %p78 = por %p76, %p77
    %p79 = scmp.ne.s32.totalorder %s71, %s74
    %p80 = scmp.eq.s32.totalorder %s21, 0
    %p81 = por %p79, %p80
    %p82 = scmp.ne.s32.totalorder %s71, %s74
    %p83 = scmp.eq.s32.totalorder %s26, 7
    %p84 = por %p82, %p83
    %p85 = scmp.ne.s32.totalorder %s74, %s75
    %p86 = scmp.eq.s32.totalorder %s26, 0
    %p87 = por %p85, %p86
    %p88 = scmp.ne.s32.totalorder %s74, %s75
    %p89 = scmp.eq.s32.totalorder %s27, 7
    %p90 = por %p88, %p89
    %p92 = scmp.ne.s32.totalorder %s75, %s91
    %p93 = scmp.eq.s32.totalorder %s27, 0
    %p94 = por %p92, %p93
    %s95 = ssub.s32 %s28, %s40
    %p96 = scmp.eq.s32.totalorder %s95, 0
    %s98 = sadd.s32 %s97, 1
    %s99 = scalar_select %p96, %s97, %s98
    %p102 = pneg %p96
    %p103 = scmp.eq.s32.totalorder %s21, 7
    %p104 = por %p102, %p103
    %p105 = scmp.ne.s32.totalorder %s97, %s100
    %p106 = scmp.eq.s32.totalorder %s21, 0
    %p107 = por %p105, %p106
    %p108 = scmp.ne.s32.totalorder %s97, %s100
    %p109 = scmp.eq.s32.totalorder %s26, 7
    %p110 = por %p108, %p109
    %p111 = scmp.ne.s32.totalorder %s100, %s101
    %p112 = scmp.eq.s32.totalorder %s26, 0
    %p113 = por %p111, %p112
    %p114 = scmp.ne.s32.totalorder %s100, %s101
    %p115 = scmp.eq.s32.totalorder %s27, 7
    %p116 = por %p114, %p115
    %p118 = scmp.ne.s32.totalorder %s101, %s117
    %p119 = scmp.eq.s32.totalorder %s27, 0
    %p120 = por %p118, %p119
    %s121 = ssub.s32 %s29, %s36
    %p122 = scmp.eq.s32.totalorder %s121, 0
    %s124 = sadd.s32 %s123, 1
    %s125 = scalar_select %p122, %s123, %s124
    %p128 = pneg %p122
    %p129 = scmp.eq.s32.totalorder %s21, 7
    %p130 = por %p128, %p129
    %p131 = scmp.ne.s32.totalorder %s123, %s126
    %p132 = scmp.eq.s32.totalorder %s21, 0
    %p133 = por %p131, %p132
    %p134 = scmp.ne.s32.totalorder %s123, %s126
    %p135 = scmp.eq.s32.totalorder %s26, 7
    %p136 = por %p134, %p135
    %p137 = scmp.ne.s32.totalorder %s126, %s127
    %p138 = scmp.eq.s32.totalorder %s26, 0
    %p139 = por %p137, %p138
    %p140 = scmp.ne.s32.totalorder %s126, %s127
    %p141 = scmp.eq.s32.totalorder %s27, 7
    %p142 = por %p140, %p141
    %p144 = scmp.ne.s32.totalorder %s127, %s143
    %p145 = scmp.eq.s32.totalorder %s27, 0
    %p146 = por %p144, %p145
    %s147 = ssub.s32 %s29, %s36
    %p148 = scmp.eq.s32.totalorder %s147, 0
    %s150 = sadd.s32 %s149, 1
    %s151 = scalar_select %p148, %s149, %s150
    %p154 = pneg %p148
    %p155 = scmp.eq.s32.totalorder %s21, 7
    %p156 = por %p154, %p155
    %p157 = scmp.ne.s32.totalorder %s149, %s152
    %p158 = scmp.eq.s32.totalorder %s21, 0
    %p159 = por %p157, %p158
    %p160 = scmp.ne.s32.totalorder %s149, %s152
    %p161 = scmp.eq.s32.totalorder %s26, 7
    %p162 = por %p160, %p161
    %p163 = scmp.ne.s32.totalorder %s152, %s153
    %p164 = scmp.eq.s32.totalorder %s26, 0
    %p165 = por %p163, %p164
    %p166 = scmp.ne.s32.totalorder %s152, %s153
    %p167 = scmp.eq.s32.totalorder %s27, 7
    %p168 = por %p166, %p167
    %p170 = scmp.ne.s32.totalorder %s153, %s169
    %p171 = scmp.eq.s32.totalorder %s27, 0
    %p172 = por %p170, %p171
    %s173 = ssub.s32 %s29, %s36
    %p174 = scmp.eq.s32.totalorder %s173, 0
    %s176 = sadd.s32 %s175, 1
    %s177 = scalar_select %p174, %s175, %s176
    %p180 = pneg %p174
    %p181 = scmp.eq.s32.totalorder %s21, 7
    %p182 = por %p180, %p181
    %p183 = scmp.ne.s32.totalorder %s175, %s178
    %p184 = scmp.eq.s32.totalorder %s21, 0
    %p185 = por %p183, %p184
    %p186 = scmp.ne.s32.totalorder %s175, %s178
    %p187 = scmp.eq.s32.totalorder %s26, 7
    %p188 = por %p186, %p187
    %p189 = scmp.ne.s32.totalorder %s178, %s179
    %p190 = scmp.eq.s32.totalorder %s26, 0
    %p191 = por %p189, %p190
    %p192 = scmp.ne.s32.totalorder %s178, %s179
    %p193 = scmp.eq.s32.totalorder %s27, 7
    %p194 = por %p192, %p193
    %p196 = scmp.ne.s32.totalorder %s179, %s195
    %p197 = scmp.eq.s32.totalorder %s27, 0
    %p198 = por %p196, %p197
    %s199 = ssub.s32 %s29, %s36
    %p200 = scmp.eq.s32.totalorder %s199, 0
    %s202 = sadd.s32 %s201, 1
    %s203 = scalar_select %p200, %s201, %s202
    %p206 = pneg %p200
    %p207 = scmp.eq.s32.totalorder %s21, 7
    %p208 = por %p206, %p207
    %p209 = scmp.ne.s32.totalorder %s201, %s204
    %p210 = scmp.eq.s32.totalorder %s21, 0
    %p211 = por %p209, %p210
    %p212 = scmp.ne.s32.totalorder %s201, %s204
    %p213 = scmp.eq.s32.totalorder %s26, 7
    %p214 = por %p212, %p213
    %p215 = scmp.ne.s32.totalorder %s204, %s205
    %p216 = scmp.eq.s32.totalorder %s26, 0
    %p217 = por %p215, %p216
    %p218 = scmp.ne.s32.totalorder %s204, %s205
    %p219 = scmp.eq.s32.totalorder %s27, 7
    %p220 = por %p218, %p219
    %p222 = scmp.ne.s32.totalorder %s205, %s221
    %p223 = scmp.eq.s32.totalorder %s27, 0
    %p224 = por %p222, %p223
    %s225 = ssub.s32 %s29, %s36
    %p226 = scmp.eq.s32.totalorder %s225, 0
    %s228 = sadd.s32 %s227, 1
    %s229 = scalar_select %p226, %s227, %s228
    %p232 = pneg %p226
    %p233 = scmp.eq.s32.totalorder %s21, 7
    %p234 = por %p232, %p233
    %p235 = scmp.ne.s32.totalorder %s227, %s230
    %p236 = scmp.eq.s32.totalorder %s21, 0
    %p237 = por %p235, %p236
    %p238 = scmp.ne.s32.totalorder %s227, %s230
    %p239 = scmp.eq.s32.totalorder %s26, 7
    %p240 = por %p238, %p239
    %p241 = scmp.ne.s32.totalorder %s230, %s231
    %p242 = scmp.eq.s32.totalorder %s26, 0
    %p243 = por %p241, %p242
    %p244 = scmp.ne.s32.totalorder %s230, %s231
    %p245 = scmp.eq.s32.totalorder %s27, 7
    %p246 = por %p244, %p245
    %p248 = scmp.ne.s32.totalorder %s231, %s247
    %p249 = scmp.eq.s32.totalorder %s27, 0
    %p250 = por %p248, %p249
    %s251 = ssub.s32 %s29, %s36
    %p252 = scmp.eq.s32.totalorder %s251, 0
    %s254 = sadd.s32 %s253, 1
    %s255 = scalar_select %p252, %s253, %s254
    %p258 = pneg %p252
    %p259 = scmp.eq.s32.totalorder %s21, 7
    %p260 = por %p258, %p259
    %p261 = scmp.ne.s32.totalorder %s253, %s256
    %p262 = scmp.eq.s32.totalorder %s21, 0
    %p263 = por %p261, %p262
    %p264 = scmp.ne.s32.totalorder %s253, %s256
    %p265 = scmp.eq.s32.totalorder %s26, 7
    %p266 = por %p264, %p265
    %p267 = scmp.ne.s32.totalorder %s256, %s257
    %p268 = scmp.eq.s32.totalorder %s26, 0
    %p269 = por %p267, %p268
    %p270 = scmp.ne.s32.totalorder %s256, %s257
    %p271 = scmp.eq.s32.totalorder %s27, 7
    %p272 = por %p270, %p271
    %p274 = scmp.ne.s32.totalorder %s257, %s273
    %p275 = scmp.eq.s32.totalorder %s27, 0
    %p276 = por %p274, %p275
    %s277 = ssub.s32 %s29, %s36
    %p278 = scmp.eq.s32.totalorder %s277, 0
    %s280 = sadd.s32 %s279, 1
    %s281 = scalar_select %p278, %s279, %s280
    %p284 = pneg %p278
    %p285 = scmp.eq.s32.totalorder %s21, 7
    %p286 = por %p284, %p285
    %p287 = scmp.ne.s32.totalorder %s279, %s282
    %p288 = scmp.eq.s32.totalorder %s21, 0
    %p289 = por %p287, %p288
    %p290 = scmp.ne.s32.totalorder %s279, %s282
    %p291 = scmp.eq.s32.totalorder %s26, 7
    %p292 = por %p290, %p291
    %p293 = scmp.ne.s32.totalorder %s282, %s283
    %p294 = scmp.eq.s32.totalorder %s26, 0
    %p295 = por %p293, %p294
    %p296 = scmp.ne.s32.totalorder %s282, %s283
    %p297 = scmp.eq.s32.totalorder %s27, 7
    %p298 = por %p296, %p297
    %p300 = scmp.ne.s32.totalorder %s283, %s299
    %p301 = scmp.eq.s32.totalorder %s27, 0
    %p302 = por %p300, %p301
    %s303 = ssub.s32 %s29, %s36
    %p304 = scmp.eq.s32.totalorder %s303, 0
    %s306 = sadd.s32 %s305, 1
    %s307 = scalar_select %p304, %s305, %s306
    %p310 = pneg %p304
    %p311 = scmp.eq.s32.totalorder %s21, 7
    %p312 = por %p310, %p311
    %p313 = scmp.ne.s32.totalorder %s305, %s308
    %p314 = scmp.eq.s32.totalorder %s21, 0
    %p315 = por %p313, %p314
    %p316 = scmp.ne.s32.totalorder %s305, %s308
    %p317 = scmp.eq.s32.totalorder %s26, 7
    %p318 = por %p316, %p317
    %p319 = scmp.ne.s32.totalorder %s308, %s309
    %p320 = scmp.eq.s32.totalorder %s26, 0
    %p321 = por %p319, %p320
    %p322 = scmp.ne.s32.totalorder %s308, %s309
    %p323 = scmp.eq.s32.totalorder %s27, 7
    %p324 = por %p322, %p323
    %p326 = scmp.ne.s32.totalorder %s309, %s325
    %p327 = scmp.eq.s32.totalorder %s27, 0
    %p328 = por %p326, %p327
    %s329 = ssub.s32 %s29, %s36
    %p330 = scmp.eq.s32.totalorder %s329, 0
    %s332 = sadd.s32 %s331, 1
    %s333 = scalar_select %p330, %s331, %s332
    %p336 = pneg %p330
    %p337 = scmp.eq.s32.totalorder %s21, 7
    %p338 = por %p336, %p337
    %p339 = scmp.ne.s32.totalorder %s331, %s334
    %p340 = scmp.eq.s32.totalorder %s21, 0
    %p341 = por %p339, %p340
    %p342 = scmp.ne.s32.totalorder %s331, %s334
    %p343 = scmp.eq.s32.totalorder %s26, 7
    %p344 = por %p342, %p343
    %p345 = scmp.ne.s32.totalorder %s334, %s335
    %p346 = scmp.eq.s32.totalorder %s26, 0
    %p347 = por %p345, %p346
    %p348 = scmp.ne.s32.totalorder %s334, %s335
    %p349 = scmp.eq.s32.totalorder %s27, 7
    %p350 = por %p348, %p349
    %p352 = scmp.ne.s32.totalorder %s335, %s351
    %p353 = scmp.eq.s32.totalorder %s27, 0
    %p354 = por %p352, %p353
    %s355 = ssub.s32 %s29, %s36
    %p356 = scmp.eq.s32.totalorder %s355, 0
    %s358 = sadd.s32 %s357, 1
    %s359 = scalar_select %p356, %s357, %s358
    %p362 = pneg %p356
    %p363 = scmp.eq.s32.totalorder %s21, 7
    %p364 = por %p362, %p363
    %p365 = scmp.ne.s32.totalorder %s357, %s360
    %p366 = scmp.eq.s32.totalorder %s21, 0
    %p367 = por %p365, %p366
    %p368 = scmp.ne.s32.totalorder %s357, %s360
    %p369 = scmp.eq.s32.totalorder %s26, 7
    %p370 = por %p368, %p369
    %p371 = scmp.ne.s32.totalorder %s360, %s361
    %p372 = scmp.eq.s32.totalorder %s26, 0
    %p373 = por %p371, %p372
    %p374 = scmp.ne.s32.totalorder %s360, %s361
    %p375 = scmp.eq.s32.totalorder %s27, 7
    %p376 = por %p374, %p375
    %p378 = scmp.ne.s32.totalorder %s361, %s377
    %p379 = scmp.eq.s32.totalorder %s27, 0
    %p380 = por %p378, %p379
    %s381 = ssub.s32 %s29, %s36
    %p382 = scmp.eq.s32.totalorder %s381, 0
    %s384 = sadd.s32 %s383, 1
    %s385 = scalar_select %p382, %s383, %s384
    %p388 = pneg %p382
    %p389 = scmp.eq.s32.totalorder %s21, 7
    %p390 = por %p388, %p389
    %p391 = scmp.ne.s32.totalorder %s383, %s386
    %p392 = scmp.eq.s32.totalorder %s21, 0
    %p393 = por %p391, %p392
    %p394 = scmp.ne.s32.totalorder %s383, %s386
    %p395 = scmp.eq.s32.totalorder %s26, 7
    %p396 = por %p394, %p395
    %p397 = scmp.ne.s32.totalorder %s386, %s387
    %p398 = scmp.eq.s32.totalorder %s26, 0
    %p399 = por %p397, %p398
    %p400 = scmp.ne.s32.totalorder %s386, %s387
    %p401 = scmp.eq.s32.totalorder %s27, 7
    %p402 = por %p400, %p401
    %p404 = scmp.ne.s32.totalorder %s387, %s403
    %p405 = scmp.eq.s32.totalorder %s27, 0
    %p406 = por %p404, %p405
    %s407 = ssub.s32 %s29, %s36
    %p408 = scmp.eq.s32.totalorder %s407, 0
    %s410 = sadd.s32 %s409, 1
    %s411 = scalar_select %p408, %s409, %s410
    %p414 = pneg %p408
    %p415 = scmp.eq.s32.totalorder %s21, 7
    %p416 = por %p414, %p415
    %p417 = scmp.ne.s32.totalorder %s409, %s412
    %p418 = scmp.eq.s32.totalorder %s21, 0
    %p419 = por %p417, %p418
    %p420 = scmp.ne.s32.totalorder %s409, %s412
    %p421 = scmp.eq.s32.totalorder %s26, 7
    %p422 = por %p420, %p421
    %p423 = scmp.ne.s32.totalorder %s412, %s413
    %p424 = scmp.eq.s32.totalorder %s26, 0
    %p425 = por %p423, %p424
    %p426 = scmp.ne.s32.totalorder %s412, %s413
    %p427 = scmp.eq.s32.totalorder %s27, 7
    %p428 = por %p426, %p427
    %p430 = scmp.ne.s32.totalorder %s413, %s429
    %p431 = scmp.eq.s32.totalorder %s27, 0
    %p432 = por %p430, %p431
    %s433 = ssub.s32 %s28, %s40
    %p434 = scmp.eq.s32.totalorder %s433, 0
    %s436 = sadd.s32 %s435, 1
    %s437 = scalar_select %p434, %s435, %s436
    %p440 = pneg %p434
    %p441 = scmp.eq.s32.totalorder %s21, 7
    %p442 = por %p440, %p441
    %p443 = scmp.ne.s32.totalorder %s435, %s438
    %p444 = scmp.eq.s32.totalorder %s21, 0
    %p445 = por %p443, %p444
    %p446 = scmp.ne.s32.totalorder %s435, %s438
    %p447 = scmp.eq.s32.totalorder %s26, 7
    %p448 = por %p446, %p447
    %p449 = scmp.ne.s32.totalorder %s438, %s439
    %p450 = scmp.eq.s32.totalorder %s26, 0
    %p451 = por %p449, %p450
    %p452 = scmp.ne.s32.totalorder %s438, %s439
    %p453 = scmp.eq.s32.totalorder %s27, 7
    %p454 = por %p452, %p453
    %p456 = scmp.ne.s32.totalorder %s439, %s455
    %p457 = scmp.eq.s32.totalorder %s27, 0
    %p458 = por %p456, %p457
    %p459 = scmp.le.s32.totalorder 1, %s21
    %p460 = scmp.lt.s32.totalorder %s21, 9
    %p461 = pnand %p459, %p460
    %p462 = pneg %p461
    // Predicated region
    $region9: #{loss_fn.9} parent=5 // pred_check
      _
    $region10: #{loss_fn.9} parent=5 // pred_check_branch
      %464 = sbr.rel (%p461) target = $region12
    $region11: #{loss_fn.9} parent=5 // pred_region
      %s465 = ssub.s32 %s21, 1
    $region12: #{loss_fn.9} parent=5 // pred_fallthru
      _
    %p466 = scmp.lt.s32.totalorder %s21, 8
    // Predicated region
    $region13: #{loss_fn.9} parent=5 // pred_check
      %p467 = pneg %p466
    $region14: #{loss_fn.9} parent=5 // pred_check_branch
      %469 = sbr.rel (%p467) target = $region16
    $region15: #{loss_fn.9} parent=5 // pred_region
      // Predicated region
      $region17: #{loss_fn.9} parent=15 // pred_check
        %p470 = pneg %p53
      $region18: #{loss_fn.9} parent=15 // pred_check_branch
        %472 = sbr.rel (%p470) target = $region20
      $region19: #{loss_fn.9} parent=15 // pred_region
        %p473 = scmp.lt.s32.totalorder %s28, 1
        %s474 = scalar_select %p473, %s28, 1
        %s475 = scalar_lea.vmem %s0, %s474
      $region20: #{loss_fn.9} parent=15 // pred_fallthru
        _
      // Predicated region
      $region21: #{loss_fn.9} parent=15 // pred_check
        %p476 = pneg %p81
      $region22: #{loss_fn.9} parent=15 // pred_check_branch
        %478 = sbr.rel (%p476) target = $region24
      $region23: #{loss_fn.9} parent=15 // pred_region
        %p479 = scmp.lt.s32.totalorder %s29, 3
        %s480 = scalar_select %p479, %s29, 3
        %p481 = scmp.lt.s32.totalorder %s28, 1
        %s482 = scalar_select %p481, %s28, 1
        %s483 = smul.addr %s480, 2
        %s484 = sadd.s32 %s482, %s483
        %s485 = smul.addr %s484, 8
        %s486 = scalar_lea.vmem %s1, %s485
      $region24: #{loss_fn.9} parent=15 // pred_fallthru
        _
      // Predicated region
      $region25: #{loss_fn.9} parent=15 // pred_check
        %p487 = pneg %p107
      $region26: #{loss_fn.9} parent=15 // pred_check_branch
        %489 = sbr.rel (%p487) target = $region28
      $region27: #{loss_fn.9} parent=15 // pred_region
        %p490 = scmp.lt.s32.totalorder %s28, 1
        %s491 = scalar_select %p490, %s28, 1
        %s492 = smul.addr %s491, 8
        %s493 = scalar_lea.vmem %s2, %s492
      $region28: #{loss_fn.9} parent=15 // pred_fallthru
        _
      // Predicated region
      $region29: #{loss_fn.9} parent=15 // pred_check
        %p494 = pneg %p133
      $region30: #{loss_fn.9} parent=15 // pred_check_branch
        %496 = sbr.rel (%p494) target = $region32
      $region31: #{loss_fn.9} parent=15 // pred_region
        %p497 = scmp.lt.s32.totalorder %s29, 3
        %s498 = scalar_select %p497, %s29, 3
        %s499 = smul.addr %s498, 4
        %s500 = smul.addr %s499, 8
        %s501 = scalar_lea.vmem %s3, %s500
      $region32: #{loss_fn.9} parent=15 // pred_fallthru
        _
      // Predicated region
      $region33: #{loss_fn.9} parent=15 // pred_check
        %p502 = pneg %p159
      $region34: #{loss_fn.9} parent=15 // pred_check_branch
        %504 = sbr.rel (%p502) target = $region36
      $region35: #{loss_fn.9} parent=15 // pred_region
        %p505 = scmp.lt.s32.totalorder %s29, 3
        %s506 = scalar_select %p505, %s29, 3
        %s507 = scalar_lea.vmem %s4, %s506
      $region36: #{loss_fn.9} parent=15 // pred_fallthru
        _
      // Predicated region
      $region37: #{loss_fn.9} parent=15 // pred_check
        %p508 = pneg %p185
      $region38: #{loss_fn.9} parent=15 // pred_check_branch
        %510 = sbr.rel (%p508) target = $region40
      $region39: #{loss_fn.9} parent=15 // pred_region
        %p511 = scmp.lt.s32.totalorder %s29, 3
        %s512 = scalar_select %p511, %s29, 3
        %s513 = smul.addr %s512, 4
        %s514 = smul.addr %s513, 8
        %s515 = scalar_lea.vmem %s5, %s514
      $region40: #{loss_fn.9} parent=15 // pred_fallthru
        _
      // Predicated region
      $region41: #{loss_fn.9} parent=15 // pred_check
        %p516 = pneg %p211
      $region42: #{loss_fn.9} parent=15 // pred_check_branch
        %518 = sbr.rel (%p516) target = $region44
      $region43: #{loss_fn.9} parent=15 // pred_region
        %p519 = scmp.lt.s32.totalorder %s29, 3
        %s520 = scalar_select %p519, %s29, 3
        %s521 = scalar_lea.vmem %s6, %s520
      $region44: #{loss_fn.9} parent=15 // pred_fallthru
        _
      // Predicated region
      $region45: #{loss_fn.9} parent=15 // pred_check
        %p522 = pneg %p237
      $region46: #{loss_fn.9} parent=15 // pred_check_branch
        %524 = sbr.rel (%p522) target = $region48
      $region47: #{loss_fn.9} parent=15 // pred_region
        %p525 = scmp.lt.s32.totalorder %s29, 3
        %s526 = scalar_select %p525, %s29, 3
        %s527 = scalar_lea.vmem %s7, %s526
      $region48: #{loss_fn.9} parent=15 // pred_fallthru
        _
      // Predicated region
      $region49: #{loss_fn.9} parent=15 // pred_check
        %p528 = pneg %p263
      $region50: #{loss_fn.9} parent=15 // pred_check_branch
        %530 = sbr.rel (%p528) target = $region52
      $region51: #{loss_fn.9} parent=15 // pred_region
        %p531 = scmp.lt.s32.totalorder %s29, 3
        %s532 = scalar_select %p531, %s29, 3
        %s533 = scalar_lea.vmem %s8, %s532
      $region52: #{loss_fn.9} parent=15 // pred_fallthru
        _
      // Predicated region
      $region53: #{loss_fn.9} parent=15 // pred_check
        %p534 = pneg %p289
      $region54: #{loss_fn.9} parent=15 // pred_check_branch
        %536 = sbr.rel (%p534) target = $region56
      $region55: #{loss_fn.9} parent=15 // pred_region
        %p537 = scmp.lt.s32.totalorder %s29, 3
        %s538 = scalar_select %p537, %s29, 3
        %s539 = smul.addr %s538, 4
        %s540 = smul.addr %s539, 8
        %s541 = scalar_lea.vmem %s9, %s540
      $region56: #{loss_fn.9} parent=15 // pred_fallthru
        _
      // Predicated region
      $region57: #{loss_fn.9} parent=15 // pred_check
        %p542 = pneg %p315
      $region58: #{loss_fn.9} parent=15 // pred_check_branch
        %544 = sbr.rel (%p542) target = $region60
      $region59: #{loss_fn.9} parent=15 // pred_region
        %p545 = scmp.lt.s32.totalorder %s29, 3
        %s546 = scalar_select %p545, %s29, 3
        %s547 = scalar_lea.vmem %s10, %s546
      $region60: #{loss_fn.9} parent=15 // pred_fallthru
        _
      // Predicated region
      $region61: #{loss_fn.9} parent=15 // pred_check
        %p548 = pneg %p341
      $region62: #{loss_fn.9} parent=15 // pred_check_branch
        %550 = sbr.rel (%p548) target = $region64
      $region63: #{loss_fn.9} parent=15 // pred_region
        %p551 = scmp.lt.s32.totalorder %s29, 3
        %s552 = scalar_select %p551, %s29, 3
        %s553 = smul.addr %s552, 16
        %s554 = smul.addr %s553, 8
        %s555 = scalar_lea.vmem %s11, %s554
      $region64: #{loss_fn.9} parent=15 // pred_fallthru
        _
      // Predicated region
      $region65: #{loss_fn.9} parent=15 // pred_check
        %p556 = pneg %p367
      $region66: #{loss_fn.9} parent=15 // pred_check_branch
        %558 = sbr.rel (%p556) target = $region68
      $region67: #{loss_fn.9} parent=15 // pred_region
        %p559 = scmp.lt.s32.totalorder %s29, 3
        %s560 = scalar_select %p559, %s29, 3
        %s561 = scalar_lea.vmem %s12, %s560
      $region68: #{loss_fn.9} parent=15 // pred_fallthru
        _
      // Predicated region
      $region69: #{loss_fn.9} parent=15 // pred_check
        %p562 = pneg %p393
      $region70: #{loss_fn.9} parent=15 // pred_check_branch
        %564 = sbr.rel (%p562) target = $region72
      $region71: #{loss_fn.9} parent=15 // pred_region
        %p565 = scmp.lt.s32.totalorder %s29, 3
        %s566 = scalar_select %p565, %s29, 3
        %s567 = scalar_lea.vmem %s13, %s566
      $region72: #{loss_fn.9} parent=15 // pred_fallthru
        _
      // Predicated region
      $region73: #{loss_fn.9} parent=15 // pred_check
        %p568 = pneg %p419
      $region74: #{loss_fn.9} parent=15 // pred_check_branch
        %570 = sbr.rel (%p568) target = $region76
      $region75: #{loss_fn.9} parent=15 // pred_region
        %p571 = scmp.lt.s32.totalorder %s29, 3
        %s572 = scalar_select %p571, %s29, 3
        %s573 = scalar_lea.vmem %s14, %s572
      $region76: #{loss_fn.9} parent=15 // pred_fallthru
        _
    $region16: #{loss_fn.9} parent=5 // pred_fallthru
      _
    %p574 = scmp.le.s32.totalorder 1, %s21
    %p575 = scmp.lt.s32.totalorder %s21, 9
    %p576 = pnand %p574, %p575
    %p577 = pneg %p576
    // Predicated region
    $region77: #{loss_fn.9} parent=5 // pred_check
      _
    $region78: #{loss_fn.9} parent=5 // pred_check_branch
      %579 = sbr.rel (%p576) target = $region80
    $region79: #{loss_fn.9} parent=5 // pred_region
      %s580 = ssub.s32 %s21, 1
      %p581 = scmp.lt.s32.totalorder %s30, 1
      %s582 = scalar_select %p581, %s30, 1
      %s583 = scalar_lea.vmem %s0, %s582
      %p584 = pneg %p59
      %p585 = pneg %p56
      %p586 = scmp.lt.s32.totalorder %s31, 3
      %s587 = scalar_select %p586, %s31, 3
      %p588 = scmp.lt.s32.totalorder %s30, 1
      %s589 = scalar_select %p588, %s30, 1
      %s590 = smul.addr %s587, 2
      %s591 = sadd.s32 %s589, %s590
      %s592 = smul.addr %s591, 8
      %s593 = scalar_lea.vmem %s1, %s592
      %p594 = pneg %p87
      %p595 = pneg %p84
      %p596 = scmp.lt.s32.totalorder %s30, 1
      %s597 = scalar_select %p596, %s30, 1
      %s598 = smul.addr %s597, 8
      %s599 = scalar_lea.vmem %s2, %s598
      %p600 = pneg %p113
      %p601 = pneg %p110
      %p602 = scmp.lt.s32.totalorder %s31, 3
      %s603 = scalar_select %p602, %s31, 3
      %s604 = smul.addr %s603, 4
      %s605 = smul.addr %s604, 8
      %s606 = scalar_lea.vmem %s3, %s605
      %p607 = pneg %p139
      %p608 = pneg %p136
      %p609 = scmp.lt.s32.totalorder %s31, 3
      %s610 = scalar_select %p609, %s31, 3
      %s611 = scalar_lea.vmem %s4, %s610
      %p612 = pneg %p165
      %p613 = pneg %p162
      %p614 = scmp.lt.s32.totalorder %s31, 3
      %s615 = scalar_select %p614, %s31, 3
      %s616 = smul.addr %s615, 4
      %s617 = smul.addr %s616, 8
      %s618 = scalar_lea.vmem %s5, %s617
      %p619 = pneg %p191
      %p620 = pneg %p188
      %p621 = scmp.lt.s32.totalorder %s31, 3
      %s622 = scalar_select %p621, %s31, 3
      %s623 = scalar_lea.vmem %s6, %s622
      %p624 = pneg %p217
      %p625 = pneg %p214
      %p626 = scmp.lt.s32.totalorder %s31, 3
      %s627 = scalar_select %p626, %s31, 3
      %s628 = scalar_lea.vmem %s7, %s627
      %p629 = pneg %p243
      %p630 = pneg %p240
      %p631 = scmp.lt.s32.totalorder %s31, 3
      %s632 = scalar_select %p631, %s31, 3
      %s633 = scalar_lea.vmem %s8, %s632
      %p634 = pneg %p269
      %p635 = pneg %p266
      %p636 = scmp.lt.s32.totalorder %s31, 3
      %s637 = scalar_select %p636, %s31, 3
      %s638 = smul.addr %s637, 4
      %s639 = smul.addr %s638, 8
      %s640 = scalar_lea.vmem %s9, %s639
      %p641 = pneg %p295
      %p642 = pneg %p292
      %p643 = scmp.lt.s32.totalorder %s31, 3
      %s644 = scalar_select %p643, %s31, 3
      %s645 = scalar_lea.vmem %s10, %s644
      %p646 = pneg %p321
      %p647 = pneg %p318
      %p648 = scmp.lt.s32.totalorder %s31, 3
      %s649 = scalar_select %p648, %s31, 3
      %s650 = smul.addr %s649, 16
      %s651 = smul.addr %s650, 8
      %s652 = scalar_lea.vmem %s11, %s651
      %p653 = pneg %p347
      %p654 = pneg %p344
      %p655 = scmp.lt.s32.totalorder %s31, 3
      %s656 = scalar_select %p655, %s31, 3
      %s657 = scalar_lea.vmem %s12, %s656
      %p658 = pneg %p373
      %p659 = pneg %p370
      %p660 = scmp.lt.s32.totalorder %s31, 3
      %s661 = scalar_select %p660, %s31, 3
      %s662 = scalar_lea.vmem %s13, %s661
      %p663 = pneg %p399
      %p664 = pneg %p396
      %p665 = scmp.lt.s32.totalorder %s31, 3
      %s666 = scalar_select %p665, %s31, 3
      %s667 = scalar_lea.vmem %s14, %s666
      %p668 = pneg %p425
      %p669 = pneg %p422
      %p670 = pneg %p451
      %p671 = pneg %p448
      %p672 = scmp.lt.s32.totalorder %s30, 1
      %s673 = scalar_select %p672, %s30, 1
      %s674 = smul.addr %s673, 8
      %s675 = scalar_lea.vmem %s15, %s674
      %p676 = scmp.lt.s32.totalorder %s30, 1
      %s677 = scalar_select %p676, %s30, 1
      %s678 = scalar_lea.vmem %s0, %s677
      %p679 = scmp.lt.s32.totalorder %s31, 3
      %s680 = scalar_select %p679, %s31, 3
      %p681 = scmp.lt.s32.totalorder %s30, 1
      %s682 = scalar_select %p681, %s30, 1
      %s683 = smul.addr %s680, 2
      %s684 = sadd.s32 %s682, %s683
      %s685 = smul.addr %s684, 8
      %s686 = scalar_lea.vmem %s1, %s685
      %p687 = scmp.lt.s32.totalorder %s30, 1
      %s688 = scalar_select %p687, %s30, 1
      %s689 = smul.addr %s688, 8
      %s690 = scalar_lea.vmem %s2, %s689
      %p691 = scmp.lt.s32.totalorder %s31, 3
      %s692 = scalar_select %p691, %s31, 3
      %s693 = smul.addr %s692, 4
      %s694 = smul.addr %s693, 8
      %s695 = scalar_lea.vmem %s3, %s694
      %p696 = scmp.lt.s32.totalorder %s31, 3
      %s697 = scalar_select %p696, %s31, 3
      %s698 = scalar_lea.vmem %s4, %s697
      %p699 = scmp.lt.s32.totalorder %s31, 3
      %s700 = scalar_select %p699, %s31, 3
      %s701 = smul.addr %s700, 4
      %s702 = smul.addr %s701, 8
      %s703 = scalar_lea.vmem %s5, %s702
      %p704 = scmp.lt.s32.totalorder %s31, 3
      %s705 = scalar_select %p704, %s31, 3
      %s706 = scalar_lea.vmem %s6, %s705
      %p707 = scmp.lt.s32.totalorder %s31, 3
      %s708 = scalar_select %p707, %s31, 3
      %s709 = scalar_lea.vmem %s7, %s708
      %p710 = scmp.lt.s32.totalorder %s31, 3
      %s711 = scalar_select %p710, %s31, 3
      %s712 = scalar_lea.vmem %s8, %s711
      %p713 = scmp.lt.s32.totalorder %s31, 3
      %s714 = scalar_select %p713, %s31, 3
      %s715 = smul.addr %s714, 4
      %s716 = smul.addr %s715, 8
      %s717 = scalar_lea.vmem %s9, %s716
      %p718 = scmp.lt.s32.totalorder %s31, 3
      %s719 = scalar_select %p718, %s31, 3
      %s720 = scalar_lea.vmem %s10, %s719
      %p721 = scmp.lt.s32.totalorder %s31, 3
      %s722 = scalar_select %p721, %s31, 3
      %s723 = smul.addr %s722, 16
      %s724 = smul.addr %s723, 8
      %s725 = scalar_lea.vmem %s11, %s724
      %p726 = scmp.lt.s32.totalorder %s31, 3
      %s727 = scalar_select %p726, %s31, 3
      %s728 = scalar_lea.vmem %s12, %s727
      %p729 = scmp.lt.s32.totalorder %s31, 3
      %s730 = scalar_select %p729, %s31, 3
      %s731 = scalar_lea.vmem %s13, %s730
      %p732 = scmp.lt.s32.totalorder %s31, 3
      %s733 = scalar_select %p732, %s31, 3
      %s734 = scalar_lea.vmem %s14, %s733
      %p735 = scmp.lt.s32.totalorder %s30, 1
      %s736 = scalar_select %p735, %s30, 1
      %s737 = smul.addr %s736, 8
      %s738 = scalar_lea.vmem %s15, %s737
      %p739 = scmp.eq.s32.totalorder %s31, 0
      // Predicated region
      $region81: #{loss_fn.9} parent=79 // pred_check
        %p740 = pneg %p739
      $region82: #{loss_fn.9} parent=79 // pred_check_branch
        %742 = sbr.rel (%p740) target = $region84
      $region83: #{loss_fn.9} parent=79 // pred_region
        %vm743 = vcmask 261120
        %744 = vst.msk [vmem:[%s738] sm:$0xff] %vm743, 0.0
      $region84: #{loss_fn.9} parent=79 // pred_fallthru
        _
      %v745 = vld [vmem:[%s690] sm:$0xff]
      %v746 = vld [vmem:[%s678] sm:$0x1]
      %v747 = vld [vmem:[%s695] sm:$0xff]
      %v748 = vld [vmem:[%s695 + $0x8] sm:$0xff]
      %v749 = vld [vmem:[%s695 + $0x10] sm:$0xff]
      %v750 = vld [vmem:[%s695 + $0x18] sm:$0xff]
      %v751 = vld [vmem:[%s698] sm:$0x1]
      %v752 = vld [vmem:[%s703] sm:$0xff]
      %v753 = vld [vmem:[%s703 + $0x8] sm:$0xff]
      %v754 = vld [vmem:[%s703 + $0x10] sm:$0xff]
      %v755 = vld [vmem:[%s703 + $0x18] sm:$0xff]
      %v756 = vld [vmem:[%s706] sm:$0x1]
      %v757 = vld [vmem:[%s709] sm:$0x1]
      %v758 = vld [vmem:[%s712] sm:$0x1]
      %v759 = vld [vmem:[%s717] sm:$0xff]
      %v760 = vld [vmem:[%s717 + $0x8] sm:$0xff]
      %v761 = vld [vmem:[%s717 + $0x10] sm:$0xff]
      %v762 = vld [vmem:[%s717 + $0x18] sm:$0xff]
      %v763 = vld [vmem:[%s720] sm:$0x1]
      %v764 = vld [vmem:[%s725] sm:$0xff]
      %v765 = vld [vmem:[%s725 + $0x8] sm:$0xff]
      %v766 = vld [vmem:[%s725 + $0x10] sm:$0xff]
      %v767 = vld [vmem:[%s725 + $0x18] sm:$0xff]
      %v768 = vld [vmem:[%s725 + $0x20] sm:$0xff]
      %v769 = vld [vmem:[%s725 + $0x28] sm:$0xff]
      %v770 = vld [vmem:[%s725 + $0x30] sm:$0xff]
      %v771 = vld [vmem:[%s725 + $0x38] sm:$0xff]
      %v772 = vld [vmem:[%s725 + $0x40] sm:$0xff]
      %v773 = vld [vmem:[%s725 + $0x48] sm:$0xff]
      %v774 = vld [vmem:[%s725 + $0x50] sm:$0xff]
      %v775 = vld [vmem:[%s725 + $0x58] sm:$0xff]
      %v776 = vld [vmem:[%s725 + $0x60] sm:$0xff]
      %v777 = vld [vmem:[%s725 + $0x68] sm:$0xff]
      %v778 = vld [vmem:[%s725 + $0x70] sm:$0xff]
      %v779 = vld [vmem:[%s725 + $0x78] sm:$0xff]
      %v780 = vld [vmem:[%s728] sm:$0x1]
      %v781 = vld [vmem:[%s731] sm:$0x1]
      %v782 = vld [vmem:[%s734] sm:$0x1]
      %v784 = vlaneseq
      %v785 = vshrl.u32 %v784, 7
      %v786 = vsub.s32 0, %v785
      %v787 = vrot.slane %v751, %v786
      %vm789 = vcmask 261120
      %v791 = vsel %vm789, %v745, 0
      %793 = vmatprep.subr.mxu0 0.0
      %794 = vmatpush1.msra.mxu0 %v747
      %795 = vmatprep.subr.mxu0 0.0
      %796 = vmatpush1.msra.mxu0 %v748
      %797 = vmatprep.subr.mxu0 0.0
      %798 = vmatpush1.msra.mxu0 %v749
      %799 = vmatprep.subr.mxu0 0.0
      %800 = vmatpush1.msra.mxu0 %v750
      %801 = vmatprep.subr.mxu0 0.0
      %802 = vmatpush1.msra.mxu0 0.0
      %803 = vmatprep.subr.mxu0 0.0
      %804 = vmatpush1.msra.mxu0 0.0
      %805 = vmatprep.subr.mxu0 0.0
      %806 = vmatpush1.msra.mxu0 0.0
      %807 = vmatprep.subr.mxu0 0.0
      %808 = vmatpush1.msra.mxu0 0.0
      %809 = vmatprep.subr.mxu0 0.0
      %810 = vmatpush1.msra.mxu0 0.0
      %811 = vmatprep.subr.mxu0 0.0
      %812 = vmatpush1.msra.mxu0 0.0
      %813 = vmatprep.subr.mxu0 0.0
      %814 = vmatpush1.msra.mxu0 0.0
      %815 = vmatprep.subr.mxu0 0.0
      %816 = vmatpush1.msra.mxu0 0.0
      %817 = vmatprep.subr.mxu0 0.0
      %818 = vmatpush1.msra.mxu0 0.0
      %819 = vmatprep.subr.mxu0 0.0
      %820 = vmatpush1.msra.mxu0 0.0
      %821 = vmatprep.subr.mxu0 0.0
      %822 = vmatpush1.msra.mxu0 0.0
      %823 = vmatprep.subr.mxu0 0.0
      %824 = vmatpush1.msra.mxu0 0.0
      %825 = vmatprep.subr.mxu0 0.0
      %826 = vmatpush1.msra.mxu0 0.0
      %827 = vmatprep.subr.mxu0 0.0
      %828 = vmatpush1.msra.mxu0 0.0
      %829 = vmatprep.subr.mxu0 0.0
      %830 = vmatpush1.msra.mxu0 0.0
      %831 = vmatprep.subr.mxu0 0.0
      %832 = vmatpush1.msra.mxu0 0.0
      %833 = vmatprep.subr.mxu0 0.0
      %834 = vmatpush1.msra.mxu0 0.0
      %835 = vmatprep.subr.mxu0 0.0
      %836 = vmatpush1.msra.mxu0 0.0
      %837 = vmatprep.subr.mxu0 0.0
      %838 = vmatpush1.msra.mxu0 0.0
      %839 = vmatprep.subr.mxu0 0.0
      %840 = vmatpush1.msra.mxu0 0.0
      %841 = vmatprep.subr.mxu0 0.0
      %842 = vmatpush1.msra.mxu0 0.0
      %843 = vmatprep.subr.mxu0 0.0
      %844 = vmatpush1.msra.mxu0 0.0
      %845 = vmatprep.subr.mxu0 0.0
      %846 = vmatpush1.msra.mxu0 0.0
      %847 = vmatprep.subr.mxu0 0.0
      %848 = vmatpush1.msra.mxu0 0.0
      %849 = vmatprep.subr.mxu0 0.0
      %850 = vmatpush1.msra.mxu0 0.0
      %851 = vmatprep.subr.mxu0 0.0
      %852 = vmatpush1.msra.mxu0 0.0
      %853 = vmatprep.subr.mxu0 0.0
      %854 = vmatpush1.msra.mxu0 0.0
      %855 = vmatprep.subr.mxu0 0.0
      %856 = vmatpush1.msra.mxu0 0.0
      %857 = vmatprep.mubr.f32.mxu0 0.0
      %858 = vmatmul.mubr.f32.gmra.mrb[0].mxu0 %v791
      %v859 = vpop.f32.mrb[0].mxu0
      %v860 = vadd.f32 %v787, %v859
      %v861 = vpop.f32.mrb[0].mxu0
      %862 = vdwg.mxu0
      %864 = vrot.lane.b32.xlu0 %v860, 96
      %v865 = vpop.permute.xlu0 %864
      %vm866 = vcmask 64512
      %v867 = vsel %vm866, %v860, 0
      %v869 = vsel %vm866, %v865, 0
      %871 = vmatprep.subr.mxu0 0.0
      %872 = vmatpush1.xpose.msra.mxu0 %v869
      %873 = vmatprep.subr.mxu0 0.0
      %874 = vmatpush1.xpose.msra.mxu0 0.0
      %875 = vmatprep.subr.mxu0 0.0
      %876 = vmatpush1.xpose.msra.mxu0 0.0
      %877 = vmatprep.subr.mxu0 0.0
      %878 = vmatpush1.xpose.msra.mxu0 0.0
      %879 = vmatprep.subr.mxu0 0.0
      %880 = vmatpush1.xpose.msra.mxu0 0.0
      %881 = vmatprep.subr.mxu0 0.0
      %882 = vmatpush1.xpose.msra.mxu0 0.0
      %883 = vmatprep.subr.mxu0 0.0
      %884 = vmatpush1.xpose.msra.mxu0 0.0
      %885 = vmatprep.subr.mxu0 0.0
      %886 = vmatpush1.xpose.msra.mxu0 0.0
      %887 = vmatprep.subr.mxu0 0.0
      %888 = vmatpush1.xpose.msra.mxu0 0.0
      %889 = vmatprep.subr.mxu0 0.0
      %890 = vmatpush1.xpose.msra.mxu0 0.0
      %891 = vmatprep.subr.mxu0 0.0
      %892 = vmatpush1.xpose.msra.mxu0 0.0
      %893 = vmatprep.subr.mxu0 0.0
      %894 = vmatpush1.xpose.msra.mxu0 0.0
      %895 = vmatprep.subr.mxu0 0.0
      %896 = vmatpush1.xpose.msra.mxu0 0.0
      %897 = vmatprep.subr.mxu0 0.0
      %898 = vmatpush1.xpose.msra.mxu0 0.0
      %899 = vmatprep.subr.mxu0 0.0
      %900 = vmatpush1.xpose.msra.mxu0 0.0
      %901 = vmatprep.subr.mxu0 0.0
      %902 = vmatpush1.xpose.msra.mxu0 0.0
      %903 = vmatprep.subr.mxu0 0.0
      %904 = vmatpush1.xpose.msra.mxu0 0.0
      %905 = vmatprep.subr.mxu0 0.0
      %906 = vmatpush1.xpose.msra.mxu0 0.0
      %907 = vmatprep.subr.mxu0 0.0
      %908 = vmatpush1.xpose.msra.mxu0 0.0
      %909 = vmatprep.subr.mxu0 0.0
      %910 = vmatpush1.xpose.msra.mxu0 0.0
      %911 = vmatprep.subr.mxu0 0.0
      %912 = vmatpush1.xpose.msra.mxu0 0.0
      %913 = vmatprep.subr.mxu0 0.0
      %914 = vmatpush1.xpose.msra.mxu0 0.0
      %915 = vmatprep.subr.mxu0 0.0
      %916 = vmatpush1.xpose.msra.mxu0 0.0
      %917 = vmatprep.subr.mxu0 0.0
      %918 = vmatpush1.xpose.msra.mxu0 0.0
      %919 = vmatprep.subr.mxu0 0.0
      %920 = vmatpush1.xpose.msra.mxu0 0.0
      %921 = vmatprep.subr.mxu0 0.0
      %922 = vmatpush1.xpose.msra.mxu0 0.0
      %923 = vmatprep.subr.mxu0 0.0
      %924 = vmatpush1.xpose.msra.mxu0 0.0
      %925 = vmatprep.subr.mxu0 0.0
      %926 = vmatpush1.xpose.msra.mxu0 0.0
      %927 = vmatprep.subr.mxu0 0.0
      %928 = vmatpush1.xpose.msra.mxu0 0.0
      %929 = vmatprep.subr.mxu0 0.0
      %930 = vmatpush1.xpose.msra.mxu0 0.0
      %931 = vmatprep.subr.mxu0 0.0
      %932 = vmatpush1.xpose.msra.mxu0 0.0
      %933 = vmatprep.subr.mxu0 0.0
      %934 = vmatpush1.xpose.msra.mxu0 0.0
      %935 = vmatprep.mubr.f32.mxu0 0.0
      %936 = vmatmul.mubr.f32.gmra.mrb[0].mxu0 %v867
      %v937 = vpop.f32.mrb[0].mxu0
      %v938 = vadd.f32 0.0, %v937
      %v939 = vpop.f32.mrb[0].mxu0
      %940 = vdwg.mxu0
      %v941 = vmul.f32 %v938, 0.35355338
      %v943 = vlaneseq
      %v944 = vshrl.u32 %v943, 7
      %v945 = vsub.s32 0, %v944
      %v946 = vrot.slane %v746, %v945
      %v948 = vadd.f32 %v941, %v946
      %v949 = vsel %vm866, %v948, -inf
      %950 = vmax.xlane.f32.xlu0 %v949
      %v951 = vpop.xlane.xlu0 %950
      %v952 = vsub.f32 %v948, %v951
      %v953 = vmul.f32 %v952, 1.442695
      %v954 = vpow.pop %v953
      %v955 = vsel %vm866, %v954, 0.0
      %956 = vadd.xlane.f32.xlu0 %v955
      %v957 = vpop.xlane.xlu0 %956
      %v958 = vrcp.pop %v957
      %v959 = vmul.f32 %v954, %v958
      %960 = vrot.lane.b32.xlu0 %v860, 64
      %v961 = vpop.permute.xlu0 %960
      %v964 = vsel %vm866, %v959, 0
      %966 = vmatprep.subr.mxu0 0.0
      %967 = vmatpush1.msra.mxu0 %v961
      %968 = vmatprep.subr.mxu0 0.0
      %969 = vmatpush1.msra.mxu0 0.0
      %970 = vmatprep.subr.mxu0 0.0
      %971 = vmatpush1.msra.mxu0 0.0
      %972 = vmatprep.subr.mxu0 0.0
      %973 = vmatpush1.msra.mxu0 0.0
      %974 = vmatprep.subr.mxu0 0.0
      %975 = vmatpush1.msra.mxu0 0.0
      %976 = vmatprep.subr.mxu0 0.0
      %977 = vmatpush1.msra.mxu0 0.0
      %978 = vmatprep.subr.mxu0 0.0
      %979 = vmatpush1.msra.mxu0 0.0
      %980 = vmatprep.subr.mxu0 0.0
      %981 = vmatpush1.msra.mxu0 0.0
      %982 = vmatprep.subr.mxu0 0.0
      %983 = vmatpush1.msra.mxu0 0.0
      %984 = vmatprep.subr.mxu0 0.0
      %985 = vmatpush1.msra.mxu0 0.0
      %986 = vmatprep.subr.mxu0 0.0
      %987 = vmatpush1.msra.mxu0 0.0
      %988 = vmatprep.subr.mxu0 0.0
      %989 = vmatpush1.msra.mxu0 0.0
      %990 = vmatprep.subr.mxu0 0.0
      %991 = vmatpush1.msra.mxu0 0.0
      %992 = vmatprep.subr.mxu0 0.0
      %993 = vmatpush1.msra.mxu0 0.0
      %994 = vmatprep.subr.mxu0 0.0
      %995 = vmatpush1.msra.mxu0 0.0
      %996 = vmatprep.subr.mxu0 0.0
      %997 = vmatpush1.msra.mxu0 0.0
      %998 = vmatprep.subr.mxu0 0.0
      %999 = vmatpush1.msra.mxu0 0.0
      %1000 = vmatprep.subr.mxu0 0.0
      %1001 = vmatpush1.msra.mxu0 0.0
      %1002 = vmatprep.subr.mxu0 0.0
      %1003 = vmatpush1.msra.mxu0 0.0
      %1004 = vmatprep.subr.mxu0 0.0
      %1005 = vmatpush1.msra.mxu0 0.0
      %1006 = vmatprep.subr.mxu0 0.0
      %1007 = vmatpush1.msra.mxu0 0.0
      %1008 = vmatprep.subr.mxu0 0.0
      %1009 = vmatpush1.msra.mxu0 0.0
      %1010 = vmatprep.subr.mxu0 0.0
      %1011 = vmatpush1.msra.mxu0 0.0
      %1012 = vmatprep.subr.mxu0 0.0
      %1013 = vmatpush1.msra.mxu0 0.0
      %1014 = vmatprep.subr.mxu0 0.0
      %1015 = vmatpush1.msra.mxu0 0.0
      %1016 = vmatprep.subr.mxu0 0.0
      %1017 = vmatpush1.msra.mxu0 0.0
      %1018 = vmatprep.subr.mxu0 0.0
      %1019 = vmatpush1.msra.mxu0 0.0
      %1020 = vmatprep.subr.mxu0 0.0
      %1021 = vmatpush1.msra.mxu0 0.0
      %1022 = vmatprep.subr.mxu0 0.0
      %1023 = vmatpush1.msra.mxu0 0.0
      %1024 = vmatprep.subr.mxu0 0.0
      %1025 = vmatpush1.msra.mxu0 0.0
      %1026 = vmatprep.subr.mxu0 0.0
      %1027 = vmatpush1.msra.mxu0 0.0
      %1028 = vmatprep.subr.mxu0 0.0
      %1029 = vmatpush1.msra.mxu0 0.0
      %1030 = vmatprep.mubr.f32.mxu0 0.0
      %1031 = vmatmul.mubr.f32.gmra.mrb[0].mxu0 %v964
      %v1032 = vpop.f32.mrb[0].mxu0
      %v1033 = vadd.f32 0.0, %v1032
      %v1034 = vpop.f32.mrb[0].mxu0
      %1035 = vdwg.mxu0
      %1036 = vrot.lane.b32.xlu0 %v860, 120
      %v1037 = vpop.permute.xlu0 %1036
      %1038 = vrot.lane.b32.xlu0 %v860, 88
      %v1039 = vpop.permute.xlu0 %1038
      %v1040 = vsel %vm866, %v1037, 0
      %v1042 = vsel %vm866, %v1039, 0
      %1044 = vmatprep.subr.mxu0 0.0
      %1045 = vmatpush1.xpose.msra.mxu0 %v1042
      %1046 = vmatprep.subr.mxu0 0.0
      %1047 = vmatpush1.xpose.msra.mxu0 0.0
      %1048 = vmatprep.subr.mxu0 0.0
      %1049 = vmatpush1.xpose.msra.mxu0 0.0
      %1050 = vmatprep.subr.mxu0 0.0
      %1051 = vmatpush1.xpose.msra.mxu0 0.0
      %1052 = vmatprep.subr.mxu0 0.0
      %1053 = vmatpush1.xpose.msra.mxu0 0.0
      %1054 = vmatprep.subr.mxu0 0.0
      %1055 = vmatpush1.xpose.msra.mxu0 0.0
      %1056 = vmatprep.subr.mxu0 0.0
      %1057 = vmatpush1.xpose.msra.mxu0 0.0
      %1058 = vmatprep.subr.mxu0 0.0
      %1059 = vmatpush1.xpose.msra.mxu0 0.0
      %1060 = vmatprep.subr.mxu0 0.0
      %1061 = vmatpush1.xpose.msra.mxu0 0.0
      %1062 = vmatprep.subr.mxu0 0.0
      %1063 = vmatpush1.xpose.msra.mxu0 0.0
      %1064 = vmatprep.subr.mxu0 0.0
      %1065 = vmatpush1.xpose.msra.mxu0 0.0
      %1066 = vmatprep.subr.mxu0 0.0
      %1067 = vmatpush1.xpose.msra.mxu0 0.0
      %1068 = vmatprep.subr.mxu0 0.0
      %1069 = vmatpush1.xpose.msra.mxu0 0.0
      %1070 = vmatprep.subr.mxu0 0.0
      %1071 = vmatpush1.xpose.msra.mxu0 0.0
      %1072 = vmatprep.subr.mxu0 0.0
      %1073 = vmatpush1.xpose.msra.mxu0 0.0
      %1074 = vmatprep.subr.mxu0 0.0
      %1075 = vmatpush1.xpose.msra.mxu0 0.0
      %1076 = vmatprep.subr.mxu0 0.0
      %1077 = vmatpush1.xpose.msra.mxu0 0.0
      %1078 = vmatprep.subr.mxu0 0.0
      %1079 = vmatpush1.xpose.msra.mxu0 0.0
      %1080 = vmatprep.subr.mxu0 0.0
      %1081 = vmatpush1.xpose.msra.mxu0 0.0
      %1082 = vmatprep.subr.mxu0 0.0
      %1083 = vmatpush1.xpose.msra.mxu0 0.0
      %1084 = vmatprep.subr.mxu0 0.0
      %1085 = vmatpush1.xpose.msra.mxu0 0.0
      %1086 = vmatprep.subr.mxu0 0.0
      %1087 = vmatpush1.xpose.msra.mxu0 0.0
      %1088 = vmatprep.subr.mxu0 0.0
      %1089 = vmatpush1.xpose.msra.mxu0 0.0
      %1090 = vmatprep.subr.mxu0 0.0
      %1091 = vmatpush1.xpose.msra.mxu0 0.0
      %1092 = vmatprep.subr.mxu0 0.0
      %1093 = vmatpush1.xpose.msra.mxu0 0.0
      %1094 = vmatprep.subr.mxu0 0.0
      %1095 = vmatpush1.xpose.msra.mxu0 0.0
      %1096 = vmatprep.subr.mxu0 0.0
      %1097 = vmatpush1.xpose.msra.mxu0 0.0
      %1098 = vmatprep.subr.mxu0 0.0
      %1099 = vmatpush1.xpose.msra.mxu0 0.0
      %1100 = vmatprep.subr.mxu0 0.0
      %1101 = vmatpush1.xpose.msra.mxu0 0.0
      %1102 = vmatprep.subr.mxu0 0.0
      %1103 = vmatpush1.xpose.msra.mxu0 0.0
      %1104 = vmatprep.subr.mxu0 0.0
      %1105 = vmatpush1.xpose.msra.mxu0 0.0
      %1106 = vmatprep.subr.mxu0 0.0
      %1107 = vmatpush1.xpose.msra.mxu0 0.0
      %1108 = vmatprep.mubr.f32.mxu0 0.0
      %1109 = vmatmul.mubr.f32.gmra.mrb[0].mxu0 %v1040
      %v1110 = vpop.f32.mrb[0].mxu0
      %v1111 = vadd.f32 0.0, %v1110
      %v1112 = vpop.f32.mrb[0].mxu0
      %1113 = vdwg.mxu0
      %v1114 = vmul.f32 %v1111, 0.35355338
      %v1115 = vadd.f32 %v1114, %v946
      %v1116 = vsel %vm866, %v1115, -inf
      %1117 = vmax.xlane.f32.xlu0 %v1116
      %v1118 = vpop.xlane.xlu0 %1117
      %v1119 = vsub.f32 %v1115, %v1118
      %v1120 = vmul.f32 %v1119, 1.442695
      %v1121 = vpow.pop %v1120
      %v1122 = vsel %vm866, %v1121, 0.0
      %1123 = vadd.xlane.f32.xlu0 %v1122
      %v1124 = vpop.xlane.xlu0 %1123
      %v1125 = vrcp.pop %v1124
      %v1126 = vmul.f32 %v1121, %v1125
      %1127 = vrot.lane.b32.xlu0 %v860, 56
      %v1128 = vpop.permute.xlu0 %1127
      %v1131 = vsel %vm866, %v1126, 0
      %1133 = vmatprep.subr.mxu0 0.0
      %1134 = vmatpush1.msra.mxu0 %v1128
      %1135 = vmatprep.subr.mxu0 0.0
      %1136 = vmatpush1.msra.mxu0 0.0
      %1137 = vmatprep.subr.mxu0 0.0
      %1138 = vmatpush1.msra.mxu0 0.0
      %1139 = vmatprep.subr.mxu0 0.0
      %1140 = vmatpush1.msra.mxu0 0.0
      %1141 = vmatprep.subr.mxu0 0.0
      %1142 = vmatpush1.msra.mxu0 0.0
      %1143 = vmatprep.subr.mxu0 0.0
      %1144 = vmatpush1.msra.mxu0 0.0
      %1145 = vmatprep.subr.mxu0 0.0
      %1146 = vmatpush1.msra.mxu0 0.0
      %1147 = vmatprep.subr.mxu0 0.0
      %1148 = vmatpush1.msra.mxu0 0.0
      %1149 = vmatprep.subr.mxu0 0.0
      %1150 = vmatpush1.msra.mxu0 0.0
      %1151 = vmatprep.subr.mxu0 0.0
      %1152 = vmatpush1.msra.mxu0 0.0
      %1153 = vmatprep.subr.mxu0 0.0
      %1154 = vmatpush1.msra.mxu0 0.0
      %1155 = vmatprep.subr.mxu0 0.0
      %1156 = vmatpush1.msra.mxu0 0.0
      %1157 = vmatprep.subr.mxu0 0.0
      %1158 = vmatpush1.msra.mxu0 0.0
      %1159 = vmatprep.subr.mxu0 0.0
      %1160 = vmatpush1.msra.mxu0 0.0
      %1161 = vmatprep.subr.mxu0 0.0
      %1162 = vmatpush1.msra.mxu0 0.0
      %1163 = vmatprep.subr.mxu0 0.0
      %1164 = vmatpush1.msra.mxu0 0.0
      %1165 = vmatprep.subr.mxu0 0.0
      %1166 = vmatpush1.msra.mxu0 0.0
      %1167 = vmatprep.subr.mxu0 0.0
      %1168 = vmatpush1.msra.mxu0 0.0
      %1169 = vmatprep.subr.mxu0 0.0
      %1170 = vmatpush1.msra.mxu0 0.0
      %1171 = vmatprep.subr.mxu0 0.0
      %1172 = vmatpush1.msra.mxu0 0.0
      %1173 = vmatprep.subr.mxu0 0.0
      %1174 = vmatpush1.msra.mxu0 0.0
      %1175 = vmatprep.subr.mxu0 0.0
      %1176 = vmatpush1.msra.mxu0 0.0
      %1177 = vmatprep.subr.mxu0 0.0
      %1178 = vmatpush1.msra.mxu0 0.0
      %1179 = vmatprep.subr.mxu0 0.0
      %1180 = vmatpush1.msra.mxu0 0.0
      %1181 = vmatprep.subr.mxu0 0.0
      %1182 = vmatpush1.msra.mxu0 0.0
      %1183 = vmatprep.subr.mxu0 0.0
      %1184 = vmatpush1.msra.mxu0 0.0
      %1185 = vmatprep.subr.mxu0 0.0
      %1186 = vmatpush1.msra.mxu0 0.0
      %1187 = vmatprep.subr.mxu0 0.0
      %1188 = vmatpush1.msra.mxu0 0.0
      %1189 = vmatprep.subr.mxu0 0.0
      %1190 = vmatpush1.msra.mxu0 0.0
      %1191 = vmatprep.subr.mxu0 0.0
      %1192 = vmatpush1.msra.mxu0 0.0
      %1193 = vmatprep.subr.mxu0 0.0
      %1194 = vmatpush1.msra.mxu0 0.0
      %1195 = vmatprep.subr.mxu0 0.0
      %1196 = vmatpush1.msra.mxu0 0.0
      %1197 = vmatprep.mubr.f32.mxu0 0.0
      %1198 = vmatmul.mubr.f32.gmra.mrb[0].mxu0 %v1131
      %v1199 = vpop.f32.mrb[0].mxu0
      %v1200 = vadd.f32 0.0, %v1199
      %v1201 = vpop.f32.mrb[0].mxu0
      %1202 = vdwg.mxu0
      %v1204 = vsel %vm866, %v1200, 0
      %1206 = vmatprep.subr.mxu0 0.0
      %1207 = vmatpush1.msra.mxu0 %v753
      %1208 = vmatprep.subr.mxu0 0.0
      %1209 = vmatpush1.msra.mxu0 0.0
      %1210 = vmatprep.subr.mxu0 0.0
      %1211 = vmatpush1.msra.mxu0 0.0
      %1212 = vmatprep.subr.mxu0 0.0
      %1213 = vmatpush1.msra.mxu0 0.0
      %1214 = vmatprep.subr.mxu0 0.0
      %1215 = vmatpush1.msra.mxu0 0.0
      %1216 = vmatprep.subr.mxu0 0.0
      %1217 = vmatpush1.msra.mxu0 0.0
      %1218 = vmatprep.subr.mxu0 0.0
      %1219 = vmatpush1.msra.mxu0 0.0
      %1220 = vmatprep.subr.mxu0 0.0
      %1221 = vmatpush1.msra.mxu0 0.0
      %1222 = vmatprep.subr.mxu0 0.0
      %1223 = vmatpush1.msra.mxu0 0.0
      %1224 = vmatprep.subr.mxu0 0.0
      %1225 = vmatpush1.msra.mxu0 0.0
      %1226 = vmatprep.subr.mxu0 0.0
      %1227 = vmatpush1.msra.mxu0 0.0
      %1228 = vmatprep.subr.mxu0 0.0
      %1229 = vmatpush1.msra.mxu0 0.0
      %1230 = vmatprep.subr.mxu0 0.0
      %1231 = vmatpush1.msra.mxu0 0.0
      %1232 = vmatprep.subr.mxu0 0.0
      %1233 = vmatpush1.msra.mxu0 0.0
      %1234 = vmatprep.subr.mxu0 0.0
      %1235 = vmatpush1.msra.mxu0 0.0
      %1236 = vmatprep.subr.mxu0 0.0
      %1237 = vmatpush1.msra.mxu0 0.0
      %1238 = vmatprep.subr.mxu0 0.0
      %1239 = vmatpush1.msra.mxu0 0.0
      %1240 = vmatprep.subr.mxu0 0.0
      %1241 = vmatpush1.msra.mxu0 0.0
      %1242 = vmatprep.subr.mxu0 0.0
      %1243 = vmatpush1.msra.mxu0 0.0
      %1244 = vmatprep.subr.mxu0 0.0
      %1245 = vmatpush1.msra.mxu0 0.0
      %1246 = vmatprep.subr.mxu0 0.0
      %1247 = vmatpush1.msra.mxu0 0.0
      %1248 = vmatprep.subr.mxu0 0.0
      %1249 = vmatpush1.msra.mxu0 0.0
      %1250 = vmatprep.subr.mxu0 0.0
      %1251 = vmatpush1.msra.mxu0 0.0
      %1252 = vmatprep.subr.mxu0 0.0
      %1253 = vmatpush1.msra.mxu0 0.0
      %1254 = vmatprep.subr.mxu0 0.0
      %1255 = vmatpush1.msra.mxu0 0.0
      %1256 = vmatprep.subr.mxu0 0.0
      %1257 = vmatpush1.msra.mxu0 0.0
      %1258 = vmatprep.subr.mxu0 0.0
      %1259 = vmatpush1.msra.mxu0 0.0
      %1260 = vmatprep.subr.mxu0 0.0
      %1261 = vmatpush1.msra.mxu0 0.0
      %1262 = vmatprep.subr.mxu0 0.0
      %1263 = vmatpush1.msra.mxu0 0.0
      %1264 = vmatprep.subr.mxu0 0.0
      %1265 = vmatpush1.msra.mxu0 0.0
      %1266 = vmatprep.subr.mxu0 0.0
      %1267 = vmatpush1.msra.mxu0 0.0
      %1268 = vmatprep.subr.mxu0 0.0
      %1269 = vmatpush1.msra.mxu0 0.0
      %1270 = vmatprep.mubr.f32.mxu0 0.0
      %1271 = vmatmul.mubr.f32.gmra.mrb[0].mxu0 %v1204
      %v1272 = vpop.f32.mrb[0].mxu0
      %v1273 = vadd.f32 0.0, %v1272
      %v1274 = vpop.f32.mrb[0].mxu0
      %1275 = vdwg.mxu0
      %v1277 = vsel %vm866, %v1033, 0
      %1279 = vmatprep.subr.mxu0 0.0
      %1280 = vmatpush1.msra.mxu0 %v752
      %1281 = vmatprep.subr.mxu0 0.0
      %1282 = vmatpush1.msra.mxu0 0.0
      %1283 = vmatprep.subr.mxu0 0.0
      %1284 = vmatpush1.msra.mxu0 0.0
      %1285 = vmatprep.subr.mxu0 0.0
      %1286 = vmatpush1.msra.mxu0 0.0
      %1287 = vmatprep.subr.mxu0 0.0
      %1288 = vmatpush1.msra.mxu0 0.0
      %1289 = vmatprep.subr.mxu0 0.0
      %1290 = vmatpush1.msra.mxu0 0.0
      %1291 = vmatprep.subr.mxu0 0.0
      %1292 = vmatpush1.msra.mxu0 0.0
      %1293 = vmatprep.subr.mxu0 0.0
      %1294 = vmatpush1.msra.mxu0 0.0
      %1295 = vmatprep.subr.mxu0 0.0
      %1296 = vmatpush1.msra.mxu0 0.0
      %1297 = vmatprep.subr.mxu0 0.0
      %1298 = vmatpush1.msra.mxu0 0.0
      %1299 = vmatprep.subr.mxu0 0.0
      %1300 = vmatpush1.msra.mxu0 0.0
      %1301 = vmatprep.subr.mxu0 0.0
      %1302 = vmatpush1.msra.mxu0 0.0
      %1303 = vmatprep.subr.mxu0 0.0
      %1304 = vmatpush1.msra.mxu0 0.0
      %1305 = vmatprep.subr.mxu0 0.0
      %1306 = vmatpush1.msra.mxu0 0.0
      %1307 = vmatprep.subr.mxu0 0.0
      %1308 = vmatpush1.msra.mxu0 0.0
      %1309 = vmatprep.subr.mxu0 0.0
      %1310 = vmatpush1.msra.mxu0 0.0
      %1311 = vmatprep.subr.mxu0 0.0
      %1312 = vmatpush1.msra.mxu0 0.0
      %1313 = vmatprep.subr.mxu0 0.0
      %1314 = vmatpush1.msra.mxu0 0.0
      %1315 = vmatprep.subr.mxu0 0.0
      %1316 = vmatpush1.msra.mxu0 0.0
      %1317 = vmatprep.subr.mxu0 0.0
      %1318 = vmatpush1.msra.mxu0 0.0
      %1319 = vmatprep.subr.mxu0 0.0
      %1320 = vmatpush1.msra.mxu0 0.0
      %1321 = vmatprep.subr.mxu0 0.0
      %1322 = vmatpush1.msra.mxu0 0.0
      %1323 = vmatprep.subr.mxu0 0.0
      %1324 = vmatpush1.msra.mxu0 0.0
      %1325 = vmatprep.subr.mxu0 0.0
      %1326 = vmatpush1.msra.mxu0 0.0
      %1327 = vmatprep.subr.mxu0 0.0
      %1328 = vmatpush1.msra.mxu0 0.0
      %1329 = vmatprep.subr.mxu0 0.0
      %1330 = vmatpush1.msra.mxu0 0.0
      %1331 = vmatprep.subr.mxu0 0.0
      %1332 = vmatpush1.msra.mxu0 0.0
      %1333 = vmatprep.subr.mxu0 0.0
      %1334 = vmatpush1.msra.mxu0 0.0
      %1335 = vmatprep.subr.mxu0 0.0
      %1336 = vmatpush1.msra.mxu0 0.0
      %1337 = vmatprep.subr.mxu0 0.0
      %1338 = vmatpush1.msra.mxu0 0.0
      %1339 = vmatprep.subr.mxu0 0.0
      %1340 = vmatpush1.msra.mxu0 0.0
      %1341 = vmatprep.subr.mxu0 0.0
      %1342 = vmatpush1.msra.mxu0 0.0
      %1343 = vmatprep.mubr.f32.mxu0 0.0
      %1344 = vmatmul.mubr.f32.gmra.mrb[0].mxu0 %v1277
      %v1345 = vpop.f32.mrb[0].mxu0
      %v1346 = vadd.f32 %v1273, %v1345
      %v1347 = vpop.f32.mrb[0].mxu0
      %1348 = vdwg.mxu0
      %1349 = vrot.lane.b32.xlu0 %v860, 112
      %v1350 = vpop.permute.xlu0 %1349
      %1351 = vrot.lane.b32.xlu0 %v860, 80
      %v1352 = vpop.permute.xlu0 %1351
      %v1353 = vsel %vm866, %v1350, 0
      %v1355 = vsel %vm866, %v1352, 0
      %1357 = vmatprep.subr.mxu0 0.0
      %1358 = vmatpush1.xpose.msra.mxu0 %v1355
      %1359 = vmatprep.subr.mxu0 0.0
      %1360 = vmatpush1.xpose.msra.mxu0 0.0
      %1361 = vmatprep.subr.mxu0 0.0
      %1362 = vmatpush1.xpose.msra.mxu0 0.0
      %1363 = vmatprep.subr.mxu0 0.0
      %1364 = vmatpush1.xpose.msra.mxu0 0.0
      %1365 = vmatprep.subr.mxu0 0.0
      %1366 = vmatpush1.xpose.msra.mxu0 0.0
      %1367 = vmatprep.subr.mxu0 0.0
      %1368 = vmatpush1.xpose.msra.mxu0 0.0
      %1369 = vmatprep.subr.mxu0 0.0
      %1370 = vmatpush1.xpose.msra.mxu0 0.0
      %1371 = vmatprep.subr.mxu0 0.0
      %1372 = vmatpush1.xpose.msra.mxu0 0.0
      %1373 = vmatprep.subr.mxu0 0.0
      %1374 = vmatpush1.xpose.msra.mxu0 0.0
      %1375 = vmatprep.subr.mxu0 0.0
      %1376 = vmatpush1.xpose.msra.mxu0 0.0
      %1377 = vmatprep.subr.mxu0 0.0
      %1378 = vmatpush1.xpose.msra.mxu0 0.0
      %1379 = vmatprep.subr.mxu0 0.0
      %1380 = vmatpush1.xpose.msra.mxu0 0.0
      %1381 = vmatprep.subr.mxu0 0.0
      %1382 = vmatpush1.xpose.msra.mxu0 0.0
      %1383 = vmatprep.subr.mxu0 0.0
      %1384 = vmatpush1.xpose.msra.mxu0 0.0
      %1385 = vmatprep.subr.mxu0 0.0
      %1386 = vmatpush1.xpose.msra.mxu0 0.0
      %1387 = vmatprep.subr.mxu0 0.0
      %1388 = vmatpush1.xpose.msra.mxu0 0.0
      %1389 = vmatprep.subr.mxu0 0.0
      %1390 = vmatpush1.xpose.msra.mxu0 0.0
      %1391 = vmatprep.subr.mxu0 0.0
      %1392 = vmatpush1.xpose.msra.mxu0 0.0
      %1393 = vmatprep.subr.mxu0 0.0
      %1394 = vmatpush1.xpose.msra.mxu0 0.0
      %1395 = vmatprep.subr.mxu0 0.0
      %1396 = vmatpush1.xpose.msra.mxu0 0.0
      %1397 = vmatprep.subr.mxu0 0.0
      %1398 = vmatpush1.xpose.msra.mxu0 0.0
      %1399 = vmatprep.subr.mxu0 0.0
      %1400 = vmatpush1.xpose.msra.mxu0 0.0
      %1401 = vmatprep.subr.mxu0 0.0
      %1402 = vmatpush1.xpose.msra.mxu0 0.0
      %1403 = vmatprep.subr.mxu0 0.0
      %1404 = vmatpush1.xpose.msra.mxu0 0.0
      %1405 = vmatprep.subr.mxu0 0.0
      %1406 = vmatpush1.xpose.msra.mxu0 0.0
      %1407 = vmatprep.subr.mxu0 0.0
      %1408 = vmatpush1.xpose.msra.mxu0 0.0
      %1409 = vmatprep.subr.mxu0 0.0
      %1410 = vmatpush1.xpose.msra.mxu0 0.0
      %1411 = vmatprep.subr.mxu0 0.0
      %1412 = vmatpush1.xpose.msra.mxu0 0.0
      %1413 = vmatprep.subr.mxu0 0.0
      %1414 = vmatpush1.xpose.msra.mxu0 0.0
      %1415 = vmatprep.subr.mxu0 0.0
      %1416 = vmatpush1.xpose.msra.mxu0 0.0
      %1417 = vmatprep.subr.mxu0 0.0
      %1418 = vmatpush1.xpose.msra.mxu0 0.0
      %1419 = vmatprep.subr.mxu0 0.0
      %1420 = vmatpush1.xpose.msra.mxu0 0.0
      %1421 = vmatprep.mubr.f32.mxu0 0.0
      %1422 = vmatmul.mubr.f32.gmra.mrb[0].mxu0 %v1353
      %v1423 = vpop.f32.mrb[0].mxu0
      %v1424 = vadd.f32 0.0, %v1423
      %v1425 = vpop.f32.mrb[0].mxu0
      %1426 = vdwg.mxu0
      %v1427 = vmul.f32 %v1424, 0.35355338
      %v1428 = vadd.f32 %v1427, %v946
      %v1429 = vsel %vm866, %v1428, -inf
      %1430 = vmax.xlane.f32.xlu0 %v1429
      %v1431 = vpop.xlane.xlu0 %1430
      %v1432 = vsub.f32 %v1428, %v1431
      %v1433 = vmul.f32 %v1432, 1.442695
      %v1434 = vpow.pop %v1433
      %v1435 = vsel %vm866, %v1434, 0.0
      %1436 = vadd.xlane.f32.xlu0 %v1435
      %v1437 = vpop.xlane.xlu0 %1436
      %v1438 = vrcp.pop %v1437
      %v1439 = vmul.f32 %v1434, %v1438
      %1440 = vrot.lane.b32.xlu0 %v860, 48
      %v1441 = vpop.permute.xlu0 %1440
      %v1444 = vsel %vm866, %v1439, 0
      %1446 = vmatprep.subr.mxu0 0.0
      %1447 = vmatpush1.msra.mxu0 %v1441
      %1448 = vmatprep.subr.mxu0 0.0
      %1449 = vmatpush1.msra.mxu0 0.0
      %1450 = vmatprep.subr.mxu0 0.0
      %1451 = vmatpush1.msra.mxu0 0.0
      %1452 = vmatprep.subr.mxu0 0.0
      %1453 = vmatpush1.msra.mxu0 0.0
      %1454 = vmatprep.subr.mxu0 0.0
      %1455 = vmatpush1.msra.mxu0 0.0
      %1456 = vmatprep.subr.mxu0 0.0
      %1457 = vmatpush1.msra.mxu0 0.0
      %1458 = vmatprep.subr.mxu0 0.0
      %1459 = vmatpush1.msra.mxu0 0.0
      %1460 = vmatprep.subr.mxu0 0.0
      %1461 = vmatpush1.msra.mxu0 0.0
      %1462 = vmatprep.subr.mxu0 0.0
      %1463 = vmatpush1.msra.mxu0 0.0
      %1464 = vmatprep.subr.mxu0 0.0
      %1465 = vmatpush1.msra.mxu0 0.0
      %1466 = vmatprep.subr.mxu0 0.0
      %1467 = vmatpush1.msra.mxu0 0.0
      %1468 = vmatprep.subr.mxu0 0.0
      %1469 = vmatpush1.msra.mxu0 0.0
      %1470 = vmatprep.subr.mxu0 0.0
      %1471 = vmatpush1.msra.mxu0 0.0
      %1472 = vmatprep.subr.mxu0 0.0
      %1473 = vmatpush1.msra.mxu0 0.0
      %1474 = vmatprep.subr.mxu0 0.0
      %1475 = vmatpush1.msra.mxu0 0.0
      %1476 = vmatprep.subr.mxu0 0.0
      %1477 = vmatpush1.msra.mxu0 0.0
      %1478 = vmatprep.subr.mxu0 0.0
      %1479 = vmatpush1.msra.mxu0 0.0
      %1480 = vmatprep.subr.mxu0 0.0
      %1481 = vmatpush1.msra.mxu0 0.0
      %1482 = vmatprep.subr.mxu0 0.0
      %1483 = vmatpush1.msra.mxu0 0.0
      %1484 = vmatprep.subr.mxu0 0.0
      %1485 = vmatpush1.msra.mxu0 0.0
      %1486 = vmatprep.subr.mxu0 0.0
      %1487 = vmatpush1.msra.mxu0 0.0
      %1488 = vmatprep.subr.mxu0 0.0
      %1489 = vmatpush1.msra.mxu0 0.0
      %1490 = vmatprep.subr.mxu0 0.0
      %1491 = vmatpush1.msra.mxu0 0.0
      %1492 = vmatprep.subr.mxu0 0.0
      %1493 = vmatpush1.msra.mxu0 0.0
      %1494 = vmatprep.subr.mxu0 0.0
      %1495 = vmatpush1.msra.mxu0 0.0
      %1496 = vmatprep.subr.mxu0 0.0
      %1497 = vmatpush1.msra.mxu0 0.0
      %1498 = vmatprep.subr.mxu0 0.0
      %1499 = vmatpush1.msra.mxu0 0.0
      %1500 = vmatprep.subr.mxu0 0.0
      %1501 = vmatpush1.msra.mxu0 0.0
      %1502 = vmatprep.subr.mxu0 0.0
      %1503 = vmatpush1.msra.mxu0 0.0
      %1504 = vmatprep.subr.mxu0 0.0
      %1505 = vmatpush1.msra.mxu0 0.0
      %1506 = vmatprep.subr.mxu0 0.0
      %1507 = vmatpush1.msra.mxu0 0.0
      %1508 = vmatprep.subr.mxu0 0.0
      %1509 = vmatpush1.msra.mxu0 0.0
      %1510 = vmatprep.mubr.f32.mxu0 0.0
      %1511 = vmatmul.mubr.f32.gmra.mrb[0].mxu0 %v1444
      %v1512 = vpop.f32.mrb[0].mxu0
      %v1513 = vadd.f32 0.0, %v1512
      %v1514 = vpop.f32.mrb[0].mxu0
      %1515 = vdwg.mxu0
      %v1517 = vsel %vm866, %v1513, 0
      %1519 = vmatprep.subr.mxu0 0.0
      %1520 = vmatpush1.msra.mxu0 %v754
      %1521 = vmatprep.subr.mxu0 0.0
      %1522 = vmatpush1.msra.mxu0 0.0
      %1523 = vmatprep.subr.mxu0 0.0
      %1524 = vmatpush1.msra.mxu0 0.0
      %1525 = vmatprep.subr.mxu0 0.0
      %1526 = vmatpush1.msra.mxu0 0.0
      %1527 = vmatprep.subr.mxu0 0.0
      %1528 = vmatpush1.msra.mxu0 0.0
      %1529 = vmatprep.subr.mxu0 0.0
      %1530 = vmatpush1.msra.mxu0 0.0
      %1531 = vmatprep.subr.mxu0 0.0
      %1532 = vmatpush1.msra.mxu0 0.0
      %1533 = vmatprep.subr.mxu0 0.0
      %1534 = vmatpush1.msra.mxu0 0.0
      %1535 = vmatprep.subr.mxu0 0.0
      %1536 = vmatpush1.msra.mxu0 0.0
      %1537 = vmatprep.subr.mxu0 0.0
      %1538 = vmatpush1.msra.mxu0 0.0
      %1539 = vmatprep.subr.mxu0 0.0
      %1540 = vmatpush1.msra.mxu0 0.0
      %1541 = vmatprep.subr.mxu0 0.0
      %1542 = vmatpush1.msra.mxu0 0.0
      %1543 = vmatprep.subr.mxu0 0.0
      %1544 = vmatpush1.msra.mxu0 0.0
      %1545 = vmatprep.subr.mxu0 0.0
      %1546 = vmatpush1.msra.mxu0 0.0
      %1547 = vmatprep.subr.mxu0 0.0
      %1548 = vmatpush1.msra.mxu0 0.0
      %1549 = vmatprep.subr.mxu0 0.0
      %1550 = vmatpush1.msra.mxu0 0.0
      %1551 = vmatprep.subr.mxu0 0.0
      %1552 = vmatpush1.msra.mxu0 0.0
      %1553 = vmatprep.subr.mxu0 0.0
      %1554 = vmatpush1.msra.mxu0 0.0
      %1555 = vmatprep.subr.mxu0 0.0
      %1556 = vmatpush1.msra.mxu0 0.0
      %1557 = vmatprep.subr.mxu0 0.0
      %1558 = vmatpush1.msra.mxu0 0.0
      %1559 = vmatprep.subr.mxu0 0.0
      %1560 = vmatpush1.msra.mxu0 0.0
      %1561 = vmatprep.subr.mxu0 0.0
      %1562 = vmatpush1.msra.mxu0 0.0
      %1563 = vmatprep.subr.mxu0 0.0
      %1564 = vmatpush1.msra.mxu0 0.0
      %1565 = vmatprep.subr.mxu0 0.0
      %1566 = vmatpush1.msra.mxu0 0.0
      %1567 = vmatprep.subr.mxu0 0.0
      %1568 = vmatpush1.msra.mxu0 0.0
      %1569 = vmatprep.subr.mxu0 0.0
      %1570 = vmatpush1.msra.mxu0 0.0
      %1571 = vmatprep.subr.mxu0 0.0
      %1572 = vmatpush1.msra.mxu0 0.0
      %1573 = vmatprep.subr.mxu0 0.0
      %1574 = vmatpush1.msra.mxu0 0.0
      %1575 = vmatprep.subr.mxu0 0.0
      %1576 = vmatpush1.msra.mxu0 0.0
      %1577 = vmatprep.subr.mxu0 0.0
      %1578 = vmatpush1.msra.mxu0 0.0
      %1579 = vmatprep.subr.mxu0 0.0
      %1580 = vmatpush1.msra.mxu0 0.0
      %1581 = vmatprep.subr.mxu0 0.0
      %1582 = vmatpush1.msra.mxu0 0.0
      %1583 = vmatprep.mubr.f32.mxu0 0.0
      %1584 = vmatmul.mubr.f32.gmra.mrb[0].mxu0 %v1517
      %v1585 = vpop.f32.mrb[0].mxu0
      %v1586 = vadd.f32 0.0, %v1585
      %v1587 = vpop.f32.mrb[0].mxu0
      %1588 = vdwg.mxu0
      %v1589 = vadd.f32 %v1346, %v1586
      %1590 = vrot.lane.b32.xlu0 %v860, 104
      %v1591 = vpop.permute.xlu0 %1590
      %1592 = vrot.lane.b32.xlu0 %v860, 72
      %v1593 = vpop.permute.xlu0 %1592
      %v1594 = vsel %vm866, %v1591, 0
      %v1596 = vsel %vm866, %v1593, 0
      %1598 = vmatprep.subr.mxu0 0.0
      %1599 = vmatpush1.xpose.msra.mxu0 %v1596
      %1600 = vmatprep.subr.mxu0 0.0
      %1601 = vmatpush1.xpose.msra.mxu0 0.0
      %1602 = vmatprep.subr.mxu0 0.0
      %1603 = vmatpush1.xpose.msra.mxu0 0.0
      %1604 = vmatprep.subr.mxu0 0.0
      %1605 = vmatpush1.xpose.msra.mxu0 0.0
      %1606 = vmatprep.subr.mxu0 0.0
      %1607 = vmatpush1.xpose.msra.mxu0 0.0
      %1608 = vmatprep.subr.mxu0 0.0
      %1609 = vmatpush1.xpose.msra.mxu0 0.0
      %1610 = vmatprep.subr.mxu0 0.0
      %1611 = vmatpush1.xpose.msra.mxu0 0.0
      %1612 = vmatprep.subr.mxu0 0.0
      %1613 = vmatpush1.xpose.msra.mxu0 0.0
      %1614 = vmatprep.subr.mxu0 0.0
      %1615 = vmatpush1.xpose.msra.mxu0 0.0
      %1616 = vmatprep.subr.mxu0 0.0
      %1617 = vmatpush1.xpose.msra.mxu0 0.0
      %1618 = vmatprep.subr.mxu0 0.0
      %1619 = vmatpush1.xpose.msra.mxu0 0.0
      %1620 = vmatprep.subr.mxu0 0.0
      %1621 = vmatpush1.xpose.msra.mxu0 0.0
      %1622 = vmatprep.subr.mxu0 0.0
      %1623 = vmatpush1.xpose.msra.mxu0 0.0
      %1624 = vmatprep.subr.mxu0 0.0
      %1625 = vmatpush1.xpose.msra.mxu0 0.0
      %1626 = vmatprep.subr.mxu0 0.0
      %1627 = vmatpush1.xpose.msra.mxu0 0.0
      %1628 = vmatprep.subr.mxu0 0.0
      %1629 = vmatpush1.xpose.msra.mxu0 0.0
      %1630 = vmatprep.subr.mxu0 0.0
      %1631 = vmatpush1.xpose.msra.mxu0 0.0
      %1632 = vmatprep.subr.mxu0 0.0
      %1633 = vmatpush1.xpose.msra.mxu0 0.0
      %1634 = vmatprep.subr.mxu0 0.0
      %1635 = vmatpush1.xpose.msra.mxu0 0.0
      %1636 = vmatprep.subr.mxu0 0.0
      %1637 = vmatpush1.xpose.msra.mxu0 0.0
      %1638 = vmatprep.subr.mxu0 0.0
      %1639 = vmatpush1.xpose.msra.mxu0 0.0
      %1640 = vmatprep.subr.mxu0 0.0
      %1641 = vmatpush1.xpose.msra.mxu0 0.0
      %1642 = vmatprep.subr.mxu0 0.0
      %1643 = vmatpush1.xpose.msra.mxu0 0.0
      %1644 = vmatprep.subr.mxu0 0.0
      %1645 = vmatpush1.xpose.msra.mxu0 0.0
      %1646 = vmatprep.subr.mxu0 0.0
      %1647 = vmatpush1.xpose.msra.mxu0 0.0
      %1648 = vmatprep.subr.mxu0 0.0
      %1649 = vmatpush1.xpose.msra.mxu0 0.0
      %1650 = vmatprep.subr.mxu0 0.0
      %1651 = vmatpush1.xpose.msra.mxu0 0.0
      %1652 = vmatprep.subr.mxu0 0.0
      %1653 = vmatpush1.xpose.msra.mxu0 0.0
      %1654 = vmatprep.subr.mxu0 0.0
      %1655 = vmatpush1.xpose.msra.mxu0 0.0
      %1656 = vmatprep.subr.mxu0 0.0
      %1657 = vmatpush1.xpose.msra.mxu0 0.0
      %1658 = vmatprep.subr.mxu0 0.0
      %1659 = vmatpush1.xpose.msra.mxu0 0.0
      %1660 = vmatprep.subr.mxu0 0.0
      %1661 = vmatpush1.xpose.msra.mxu0 0.0
      %1662 = vmatprep.mubr.f32.mxu0 0.0
      %1663 = vmatmul.mubr.f32.gmra.mrb[0].mxu0 %v1594
      %v1664 = vpop.f32.mrb[0].mxu0
      %v1665 = vadd.f32 0.0, %v1664
      %v1666 = vpop.f32.mrb[0].mxu0
      %1667 = vdwg.mxu0
      %v1668 = vmul.f32 %v1665, 0.35355338
      %v1669 = vadd.f32 %v1668, %v946
      %v1670 = vsel %vm866, %v1669, -inf
      %1671 = vmax.xlane.f32.xlu0 %v1670
      %v1672 = vpop.xlane.xlu0 %1671
      %v1673 = vsub.f32 %v1669, %v1672
      %v1674 = vmul.f32 %v1673, 1.442695
      %v1675 = vpow.pop %v1674
      %v1676 = vsel %vm866, %v1675, 0.0
      %1677 = vadd.xlane.f32.xlu0 %v1676
      %v1678 = vpop.xlane.xlu0 %1677
      %v1679 = vrcp.pop %v1678
      %v1680 = vmul.f32 %v1675, %v1679
      %1681 = vrot.lane.b32.xlu0 %v860, 40
      %v1682 = vpop.permute.xlu0 %1681
      %v1685 = vsel %vm866, %v1680, 0
      %1687 = vmatprep.subr.mxu0 0.0
      %1688 = vmatpush1.msra.mxu0 %v1682
      %1689 = vmatprep.subr.mxu0 0.0
      %1690 = vmatpush1.msra.mxu0 0.0
      %1691 = vmatprep.subr.mxu0 0.0
      %1692 = vmatpush1.msra.mxu0 0.0
      %1693 = vmatprep.subr.mxu0 0.0
      %1694 = vmatpush1.msra.mxu0 0.0
      %1695 = vmatprep.subr.mxu0 0.0
      %1696 = vmatpush1.msra.mxu0 0.0
      %1697 = vmatprep.subr.mxu0 0.0
      %1698 = vmatpush1.msra.mxu0 0.0
      %1699 = vmatprep.subr.mxu0 0.0
      %1700 = vmatpush1.msra.mxu0 0.0
      %1701 = vmatprep.subr.mxu0 0.0
      %1702 = vmatpush1.msra.mxu0 0.0
      %1703 = vmatprep.subr.mxu0 0.0
      %1704 = vmatpush1.msra.mxu0 0.0
      %1705 = vmatprep.subr.mxu0 0.0
      %1706 = vmatpush1.msra.mxu0 0.0
      %1707 = vmatprep.subr.mxu0 0.0
      %1708 = vmatpush1.msra.mxu0 0.0
      %1709 = vmatprep.subr.mxu0 0.0
      %1710 = vmatpush1.msra.mxu0 0.0
      %1711 = vmatprep.subr.mxu0 0.0
      %1712 = vmatpush1.msra.mxu0 0.0
      %1713 = vmatprep.subr.mxu0 0.0
      %1714 = vmatpush1.msra.mxu0 0.0
      %1715 = vmatprep.subr.mxu0 0.0
      %1716 = vmatpush1.msra.mxu0 0.0
      %1717 = vmatprep.subr.mxu0 0.0
      %1718 = vmatpush1.msra.mxu0 0.0
      %1719 = vmatprep.subr.mxu0 0.0
      %1720 = vmatpush1.msra.mxu0 0.0
      %1721 = vmatprep.subr.mxu0 0.0
      %1722 = vmatpush1.msra.mxu0 0.0
      %1723 = vmatprep.subr.mxu0 0.0
      %1724 = vmatpush1.msra.mxu0 0.0
      %1725 = vmatprep.subr.mxu0 0.0
      %1726 = vmatpush1.msra.mxu0 0.0
      %1727 = vmatprep.subr.mxu0 0.0
      %1728 = vmatpush1.msra.mxu0 0.0
      %1729 = vmatprep.subr.mxu0 0.0
      %1730 = vmatpush1.msra.mxu0 0.0
      %1731 = vmatprep.subr.mxu0 0.0
      %1732 = vmatpush1.msra.mxu0 0.0
      %1733 = vmatprep.subr.mxu0 0.0
      %1734 = vmatpush1.msra.mxu0 0.0
      %1735 = vmatprep.subr.mxu0 0.0
      %1736 = vmatpush1.msra.mxu0 0.0
      %1737 = vmatprep.subr.mxu0 0.0
      %1738 = vmatpush1.msra.mxu0 0.0
      %1739 = vmatprep.subr.mxu0 0.0
      %1740 = vmatpush1.msra.mxu0 0.0
      %1741 = vmatprep.subr.mxu0 0.0
      %1742 = vmatpush1.msra.mxu0 0.0
      %1743 = vmatprep.subr.mxu0 0.0
      %1744 = vmatpush1.msra.mxu0 0.0
      %1745 = vmatprep.subr.mxu0 0.0
      %1746 = vmatpush1.msra.mxu0 0.0
      %1747 = vmatprep.subr.mxu0 0.0
      %1748 = vmatpush1.msra.mxu0 0.0
      %1749 = vmatprep.subr.mxu0 0.0
      %1750 = vmatpush1.msra.mxu0 0.0
      %1751 = vmatprep.mubr.f32.mxu0 0.0
      %1752 = vmatmul.mubr.f32.gmra.mrb[0].mxu0 %v1685
      %v1753 = vpop.f32.mrb[0].mxu0
      %v1754 = vadd.f32 0.0, %v1753
      %v1755 = vpop.f32.mrb[0].mxu0
      %1756 = vdwg.mxu0
      %v1758 = vsel %vm866, %v1754, 0
      %1760 = vmatprep.subr.mxu0 0.0
      %1761 = vmatpush1.msra.mxu0 %v755
      %1762 = vmatprep.subr.mxu0 0.0
      %1763 = vmatpush1.msra.mxu0 0.0
      %1764 = vmatprep.subr.mxu0 0.0
      %1765 = vmatpush1.msra.mxu0 0.0
      %1766 = vmatprep.subr.mxu0 0.0
      %1767 = vmatpush1.msra.mxu0 0.0
      %1768 = vmatprep.subr.mxu0 0.0
      %1769 = vmatpush1.msra.mxu0 0.0
      %1770 = vmatprep.subr.mxu0 0.0
      %1771 = vmatpush1.msra.mxu0 0.0
      %1772 = vmatprep.subr.mxu0 0.0
      %1773 = vmatpush1.msra.mxu0 0.0
      %1774 = vmatprep.subr.mxu0 0.0
      %1775 = vmatpush1.msra.mxu0 0.0
      %1776 = vmatprep.subr.mxu0 0.0
      %1777 = vmatpush1.msra.mxu0 0.0
      %1778 = vmatprep.subr.mxu0 0.0
      %1779 = vmatpush1.msra.mxu0 0.0
      %1780 = vmatprep.subr.mxu0 0.0
      %1781 = vmatpush1.msra.mxu0 0.0
      %1782 = vmatprep.subr.mxu0 0.0
      %1783 = vmatpush1.msra.mxu0 0.0
      %1784 = vmatprep.subr.mxu0 0.0
      %1785 = vmatpush1.msra.mxu0 0.0
      %1786 = vmatprep.subr.mxu0 0.0
      %1787 = vmatpush1.msra.mxu0 0.0
      %1788 = vmatprep.subr.mxu0 0.0
      %1789 = vmatpush1.msra.mxu0 0.0
      %1790 = vmatprep.subr.mxu0 0.0
      %1791 = vmatpush1.msra.mxu0 0.0
      %1792 = vmatprep.subr.mxu0 0.0
      %1793 = vmatpush1.msra.mxu0 0.0
      %1794 = vmatprep.subr.mxu0 0.0
      %1795 = vmatpush1.msra.mxu0 0.0
      %1796 = vmatprep.subr.mxu0 0.0
      %1797 = vmatpush1.msra.mxu0 0.0
      %1798 = vmatprep.subr.mxu0 0.0
      %1799 = vmatpush1.msra.mxu0 0.0
      %1800 = vmatprep.subr.mxu0 0.0
      %1801 = vmatpush1.msra.mxu0 0.0
      %1802 = vmatprep.subr.mxu0 0.0
      %1803 = vmatpush1.msra.mxu0 0.0
      %1804 = vmatprep.subr.mxu0 0.0
      %1805 = vmatpush1.msra.mxu0 0.0
      %1806 = vmatprep.subr.mxu0 0.0
      %1807 = vmatpush1.msra.mxu0 0.0
      %1808 = vmatprep.subr.mxu0 0.0
      %1809 = vmatpush1.msra.mxu0 0.0
      %1810 = vmatprep.subr.mxu0 0.0
      %1811 = vmatpush1.msra.mxu0 0.0
      %1812 = vmatprep.subr.mxu0 0.0
      %1813 = vmatpush1.msra.mxu0 0.0
      %1814 = vmatprep.subr.mxu0 0.0
      %1815 = vmatpush1.msra.mxu0 0.0
      %1816 = vmatprep.subr.mxu0 0.0
      %1817 = vmatpush1.msra.mxu0 0.0
      %1818 = vmatprep.subr.mxu0 0.0
      %1819 = vmatpush1.msra.mxu0 0.0
      %1820 = vmatprep.subr.mxu0 0.0
      %1821 = vmatpush1.msra.mxu0 0.0
      %1822 = vmatprep.subr.mxu0 0.0
      %1823 = vmatpush1.msra.mxu0 0.0
      %1824 = vmatprep.mubr.f32.mxu0 0.0
      %1825 = vmatmul.mubr.f32.gmra.mrb[0].mxu0 %v1758
      %v1826 = vpop.f32.mrb[0].mxu0
      %v1827 = vadd.f32 0.0, %v1826
      %v1828 = vpop.f32.mrb[0].mxu0
      %1829 = vdwg.mxu0
      %v1830 = vadd.f32 %v1589, %v1827
      %v1832 = vlaneseq
      %v1833 = vshrl.u32 %v1832, 7
      %v1834 = vsub.s32 0, %v1833
      %v1835 = vrot.slane %v756, %v1834
      %v1837 = vadd.f32 %v1830, %v1835
      %v1838 = vadd.f32 %v1837, %v745
      %v1839 = vsel %vm789, %v1838, 0.0
      %1840 = vadd.xlane.f32.xlu0 %v1839
      %v1841 = vpop.xlane.xlu0 %1840
      %v1842 = vrcp.pop 32.0
      %v1843 = vmul.f32 %v1841, %v1842
      %v1844 = vsub.f32 %v1838, %v1843
      %v1845 = vmul.f32 %v1844, %v1844
      %v1846 = vsel %vm789, %v1845, 0.0
      %1847 = vadd.xlane.f32.xlu0 %v1846
      %v1848 = vpop.xlane.xlu0 %1847
      %v1849 = vmul.f32 %v1848, %v1842
      %v1850 = vadd.f32 %v1849, 1e-12
      %v1851 = vrsqrt.pop %v1850
      %v1852 = vmul.f32 %v1844, %v1851
      %v1854 = vlaneseq
      %v1855 = vshrl.u32 %v1854, 7
      %v1856 = vsub.s32 0, %v1855
      %v1857 = vrot.slane %v757, %v1856
      %v1859 = vmul.f32 %v1852, %v1857
      %v1861 = vlaneseq
      %v1862 = vshrl.u32 %v1861, 7
      %v1863 = vsub.s32 0, %v1862
      %v1864 = vrot.slane %v758, %v1863
      %v1866 = vadd.f32 %v1859, %v1864
      %v1868 = vlaneseq
      %v1869 = vshrl.u32 %v1868, 7
      %v1870 = vsub.s32 0, %v1869
      %v1871 = vrot.slane %v763, %v1870
      %v1874 = vsel %vm789, %v1866, 0
      %1876 = vmatprep.subr.mxu0 0.0
      %1877 = vmatpush1.msra.mxu0 %v759
      %1878 = vmatprep.subr.mxu0 0.0
      %1879 = vmatpush1.msra.mxu0 %v760
      %1880 = vmatprep.subr.mxu0 0.0
      %1881 = vmatpush1.msra.mxu0 %v761
      %1882 = vmatprep.subr.mxu0 0.0
      %1883 = vmatpush1.msra.mxu0 %v762
      %1884 = vmatprep.subr.mxu0 0.0
      %1885 = vmatpush1.msra.mxu0 0.0
      %1886 = vmatprep.subr.mxu0 0.0
      %1887 = vmatpush1.msra.mxu0 0.0
      %1888 = vmatprep.subr.mxu0 0.0
      %1889 = vmatpush1.msra.mxu0 0.0
      %1890 = vmatprep.subr.mxu0 0.0
      %1891 = vmatpush1.msra.mxu0 0.0
      %1892 = vmatprep.subr.mxu0 0.0
      %1893 = vmatpush1.msra.mxu0 0.0
      %1894 = vmatprep.subr.mxu0 0.0
      %1895 = vmatpush1.msra.mxu0 0.0
      %1896 = vmatprep.subr.mxu0 0.0
      %1897 = vmatpush1.msra.mxu0 0.0
      %1898 = vmatprep.subr.mxu0 0.0
      %1899 = vmatpush1.msra.mxu0 0.0
      %1900 = vmatprep.subr.mxu0 0.0
      %1901 = vmatpush1.msra.mxu0 0.0
      %1902 = vmatprep.subr.mxu0 0.0
      %1903 = vmatpush1.msra.mxu0 0.0
      %1904 = vmatprep.subr.mxu0 0.0
      %1905 = vmatpush1.msra.mxu0 0.0
      %1906 = vmatprep.subr.mxu0 0.0
      %1907 = vmatpush1.msra.mxu0 0.0
      %1908 = vmatprep.subr.mxu0 0.0
      %1909 = vmatpush1.msra.mxu0 0.0
      %1910 = vmatprep.subr.mxu0 0.0
      %1911 = vmatpush1.msra.mxu0 0.0
      %1912 = vmatprep.subr.mxu0 0.0
      %1913 = vmatpush1.msra.mxu0 0.0
      %1914 = vmatprep.subr.mxu0 0.0
      %1915 = vmatpush1.msra.mxu0 0.0
      %1916 = vmatprep.subr.mxu0 0.0
      %1917 = vmatpush1.msra.mxu0 0.0
      %1918 = vmatprep.subr.mxu0 0.0
      %1919 = vmatpush1.msra.mxu0 0.0
      %1920 = vmatprep.subr.mxu0 0.0
      %1921 = vmatpush1.msra.mxu0 0.0
      %1922 = vmatprep.subr.mxu0 0.0
      %1923 = vmatpush1.msra.mxu0 0.0
      %1924 = vmatprep.subr.mxu0 0.0
      %1925 = vmatpush1.msra.mxu0 0.0
      %1926 = vmatprep.subr.mxu0 0.0
      %1927 = vmatpush1.msra.mxu0 0.0
      %1928 = vmatprep.subr.mxu0 0.0
      %1929 = vmatpush1.msra.mxu0 0.0
      %1930 = vmatprep.subr.mxu0 0.0
      %1931 = vmatpush1.msra.mxu0 0.0
      %1932 = vmatprep.subr.mxu0 0.0
      %1933 = vmatpush1.msra.mxu0 0.0
      %1934 = vmatprep.subr.mxu0 0.0
      %1935 = vmatpush1.msra.mxu0 0.0
      %1936 = vmatprep.subr.mxu0 0.0
      %1937 = vmatpush1.msra.mxu0 0.0
      %1938 = vmatprep.subr.mxu0 0.0
      %1939 = vmatpush1.msra.mxu0 0.0
      %1940 = vmatprep.mubr.f32.mxu0 0.0
      %1941 = vmatmul.mubr.f32.gmra.mrb[0].mxu0 %v1874
      %v1942 = vpop.f32.mrb[0].mxu0
      %v1943 = vadd.f32 %v1871, %v1942
      %v1944 = vpop.f32.mrb[0].mxu0
      %1945 = vdwg.mxu0
      %v1946 = vmul.f32 %v1943, %v1943
      %v1947 = vmul.f32 %v1943, %v1946
      %v1948 = vmul.f32 %v1947, 0.044715
      %v1949 = vadd.f32 %v1943, %v1948
      %v1950 = vmul.f32 %v1949, 0.7978846
      %v1951 = vtanh.pop %v1950
      %v1952 = vadd.f32 %v1951, 1.0
      %v1953 = vmul.f32 %v1952, 0.5
      %v1954 = vmul.f32 %v1943, %v1953
      %v1956 = vlaneseq
      %v1957 = vshrl.u32 %v1956, 7
      %v1958 = vsub.s32 0, %v1957
      %v1959 = vrot.slane %v780, %v1958
      %1961 = vmatprep.subr.mxu0 0.0
      %1962 = vmatpush1.msra.mxu0 %v764
      %1963 = vmatprep.subr.mxu0 0.0
      %1964 = vmatpush1.msra.mxu0 %v765
      %1965 = vmatprep.subr.mxu0 0.0
      %1966 = vmatpush1.msra.mxu0 %v766
      %1967 = vmatprep.subr.mxu0 0.0
      %1968 = vmatpush1.msra.mxu0 %v767
      %1969 = vmatprep.subr.mxu0 0.0
      %1970 = vmatpush1.msra.mxu0 %v768
      %1971 = vmatprep.subr.mxu0 0.0
      %1972 = vmatpush1.msra.mxu0 %v769
      %1973 = vmatprep.subr.mxu0 0.0
      %1974 = vmatpush1.msra.mxu0 %v770
      %1975 = vmatprep.subr.mxu0 0.0
      %1976 = vmatpush1.msra.mxu0 %v771
      %1977 = vmatprep.subr.mxu0 0.0
      %1978 = vmatpush1.msra.mxu0 %v772
      %1979 = vmatprep.subr.mxu0 0.0
      %1980 = vmatpush1.msra.mxu0 %v773
      %1981 = vmatprep.subr.mxu0 0.0
      %1982 = vmatpush1.msra.mxu0 %v774
      %1983 = vmatprep.subr.mxu0 0.0
      %1984 = vmatpush1.msra.mxu0 %v775
      %1985 = vmatprep.subr.mxu0 0.0
      %1986 = vmatpush1.msra.mxu0 %v776
      %1987 = vmatprep.subr.mxu0 0.0
      %1988 = vmatpush1.msra.mxu0 %v777
      %1989 = vmatprep.subr.mxu0 0.0
      %1990 = vmatpush1.msra.mxu0 %v778
      %1991 = vmatprep.subr.mxu0 0.0
      %1992 = vmatpush1.msra.mxu0 %v779
      %1993 = vmatprep.subr.mxu0 0.0
      %1994 = vmatpush1.msra.mxu0 0.0
      %1995 = vmatprep.subr.mxu0 0.0
      %1996 = vmatpush1.msra.mxu0 0.0
      %1997 = vmatprep.subr.mxu0 0.0
      %1998 = vmatpush1.msra.mxu0 0.0
      %1999 = vmatprep.subr.mxu0 0.0
      %2000 = vmatpush1.msra.mxu0 0.0
      %2001 = vmatprep.subr.mxu0 0.0
      %2002 = vmatpush1.msra.mxu0 0.0
      %2003 = vmatprep.subr.mxu0 0.0
      %2004 = vmatpush1.msra.mxu0 0.0
      %2005 = vmatprep.subr.mxu0 0.0
      %2006 = vmatpush1.msra.mxu0 0.0
      %2007 = vmatprep.subr.mxu0 0.0
      %2008 = vmatpush1.msra.mxu0 0.0
      %2009 = vmatprep.subr.mxu0 0.0
      %2010 = vmatpush1.msra.mxu0 0.0
      %2011 = vmatprep.subr.mxu0 0.0
      %2012 = vmatpush1.msra.mxu0 0.0
      %2013 = vmatprep.subr.mxu0 0.0
      %2014 = vmatpush1.msra.mxu0 0.0
      %2015 = vmatprep.subr.mxu0 0.0
      %2016 = vmatpush1.msra.mxu0 0.0
      %2017 = vmatprep.subr.mxu0 0.0
      %2018 = vmatpush1.msra.mxu0 0.0
      %2019 = vmatprep.subr.mxu0 0.0
      %2020 = vmatpush1.msra.mxu0 0.0
      %2021 = vmatprep.subr.mxu0 0.0
      %2022 = vmatpush1.msra.mxu0 0.0
      %2023 = vmatprep.subr.mxu0 0.0
      %2024 = vmatpush1.msra.mxu0 0.0
      %2025 = vmatprep.mubr.f32.mxu0 0.0
      %2026 = vmatmul.mubr.f32.gmra.mrb[0].mxu0 %v1954
      %v2027 = vpop.f32.mrb[0].mxu0
      %v2028 = vadd.f32 %v1959, %v2027
      %v2029 = vpop.f32.mrb[0].mxu0
      %2030 = vdwg.mxu0
      %v2031 = vadd.f32 %v2028, %v1866
      %v2032 = vsel %vm789, %v2031, 0.0
      %2033 = vadd.xlane.f32.xlu0 %v2032
      %v2034 = vpop.xlane.xlu0 %2033
      %v2035 = vmul.f32 %v2034, %v1842
      %v2036 = vsub.f32 %v2031, %v2035
      %v2037 = vmul.f32 %v2036, %v2036
      %v2038 = vsel %vm789, %v2037, 0.0
      %2039 = vadd.xlane.f32.xlu0 %v2038
      %v2040 = vpop.xlane.xlu0 %2039
      %v2041 = vmul.f32 %v2040, %v1842
      %v2042 = vadd.f32 %v2041, 1e-12
      %v2043 = vrsqrt.pop %v2042
      %v2044 = vmul.f32 %v2036, %v2043
      %v2046 = vlaneseq
      %v2047 = vshrl.u32 %v2046, 7
      %v2048 = vsub.s32 0, %v2047
      %v2049 = vrot.slane %v781, %v2048
      %v2051 = vmul.f32 %v2044, %v2049
      %v2053 = vlaneseq
      %v2054 = vshrl.u32 %v2053, 7
      %v2055 = vsub.s32 0, %v2054
      %v2056 = vrot.slane %v782, %v2055
      %v2058 = vadd.f32 %v2051, %v2056
      %v2059 = vld [vmem:[%s738] sm:$0xff]
      %v2060 = vld [vmem:[%s686] sm:$0xff]
      %2062 = vset.pattern.permute.xlu0 0
      %2063 = vperm.xlu0 %2062, %v2060
      %v2064 = vpop.permute.xlu0 %2063
      %v2066 = vmul.f32 %v2064, %v2058
      %v2067 = vadd.f32 %v2059, %v2066
      %2068 = vst.msk [vmem:[%s738] sm:$0xff] %vm789, %v2067
      %p2069 = scmp.lt.s32.totalorder %s30, 1
      %s2070 = scalar_select %p2069, %s30, 1
      %s2071 = smul.addr %s2070, 8
      %s2072 = scalar_lea.vmem %s15, %s2071
      // Predicated region
      $region85: #{loss_fn.9} parent=79 // pred_check
        %p2073 = pneg %p448
      $region86: #{loss_fn.9} parent=79 // pred_check_branch
        %2075 = sbr.rel (%p2073) target = $region88
      $region87: #{loss_fn.9} parent=79 // pred_region
        _
      $region88: #{loss_fn.9} parent=79 // pred_fallthru
        _
    $region80: #{loss_fn.9} parent=5 // pred_fallthru
      _
    %p2076 = scmp.le.s32.totalorder 2, %s21
    // Predicated region
    $region89: #{loss_fn.9} parent=5 // pred_check
      %p2077 = pneg %p2076
    $region90: #{loss_fn.9} parent=5 // pred_check_branch
      %2079 = sbr.rel (%p2077) target = $region92
    $region91: #{loss_fn.9} parent=5 // pred_region
      %s2080 = ssub.s32 %s21, 2
      // Predicated region
      $region93: #{loss_fn.9} parent=91 // pred_check
        %p2081 = pneg %p454
      $region94: #{loss_fn.9} parent=91 // pred_check_branch
        %2083 = sbr.rel (%p2081) target = $region96
      $region95: #{loss_fn.9} parent=91 // pred_region
        %p2084 = scmp.lt.s32.totalorder %s32, 1
        %s2085 = scalar_select %p2084, %s32, 1
        %s2086 = smul.addr %s2085, 8
        %s2087 = scalar_lea.vmem %s15, %s2086
      $region96: #{loss_fn.9} parent=91 // pred_fallthru
        _
    $region92: #{loss_fn.9} parent=5 // pred_fallthru
      _
  $region6: #{loss_fn.9} parent=0 // loop_footer
    %s25 = sadd.s32 1, %s21
  $region7: #{loss_fn.9} parent=0 // loop_footer_branch
    %20 = sbr.rel target = $region3
  $region8: #{loss_fn.9} parent=0 // loop_exit
    _

// kernel: loss_fn.10
$region0: #{loss_fn.10}
  #allocation0 [shape = 'u32[]', space=smem, size = 0x4, offset = 0x4, fixed_abs, tag = 'smem constant byte address 0x4 - core index']
  #allocation1 [shape = 'u32[144,128]{1,0:T(1,128)}', space=vmem, size = 0x12000, scoped, tag = 'internal scratch']
  %s0 = inlined_call_operand.vmem [shape: f32[2,1,8], index: 0, kind: input, shape index: {}]
  %s1 = inlined_call_operand.vmem [shape: f32[16,32], index: 1, kind: input, shape index: {}]
  %s2 = inlined_call_operand.vmem [shape: f32[1,32,96], index: 2, kind: input, shape index: {}]
  %s3 = inlined_call_operand.vmem [shape: f32[1,1,96], index: 3, kind: input, shape index: {}]
  %s4 = inlined_call_operand.vmem [shape: f32[1,32,32], index: 4, kind: input, shape index: {}]
  %s5 = inlined_call_operand.vmem [shape: f32[1,1,32], index: 5, kind: input, shape index: {}]
  %s6 = inlined_call_operand.vmem [shape: f32[1,1,32], index: 6, kind: input, shape index: {}]
  %s7 = inlined_call_operand.vmem [shape: f32[1,1,32], index: 7, kind: input, shape index: {}]
  %s8 = inlined_call_operand.vmem [shape: f32[1,32,128], index: 8, kind: input, shape index: {}]
  %s9 = inlined_call_operand.vmem [shape: f32[1,1,128], index: 9, kind: input, shape index: {}]
  %s10 = inlined_call_operand.vmem [shape: f32[1,128,32], index: 10, kind: input, shape index: {}]
  %s11 = inlined_call_operand.vmem [shape: f32[1,1,32], index: 11, kind: input, shape index: {}]
  %s12 = inlined_call_operand.vmem [shape: f32[1,1,32], index: 12, kind: input, shape index: {}]
  %s13 = inlined_call_operand.vmem [shape: f32[1,1,32], index: 13, kind: input, shape index: {}]
  %s14 = inlined_call_operand.vmem [shape: f32[16,32], index: 14, kind: output, shape index: {}]
  %s15 = sld [smem:[#allocation0]]
  $region93: #{loss_fn.10} parent=0
    _
  %s17 = ssub.s32 1, %s15
  %s18 = scalar_select 0, %s17, %s15
  loop: start=0, step=1, limit=4
  $region2: #{loss_fn.10} parent=0 // loop_pre_header
    _
  $region3: #{loss_fn.10} parent=0 // loop_header
    %s20 = sphi 0, %s24
    %p21 = scmp.ge.s32.totalorder %s20, 4
    %s27 = sphi 0, %s39
    %s28 = sphi 0, %s35
    %s29 = sphi 0, %s27
    %s30 = sphi 0, %s28
    %s31 = sphi 0, %s29
    %s32 = sphi 0, %s30
    %s42 = sphi 0, %s44
    %s45 = sphi 0, %s42
    %s46 = sphi 0, %s45
    %s62 = sphi 0, %s46
    %s68 = sphi 0, %s70
    %s71 = sphi 0, %s68
    %s72 = sphi 0, %s71
    %s88 = sphi 0, %s72
    %s94 = sphi 0, %s96
    %s97 = sphi 0, %s94
    %s98 = sphi 0, %s97
    %s114 = sphi 0, %s98
    %s120 = sphi 0, %s122
    %s123 = sphi 0, %s120
    %s124 = sphi 0, %s123
    %s140 = sphi 0, %s124
    %s146 = sphi 0, %s148
    %s149 = sphi 0, %s146
    %s150 = sphi 0, %s149
    %s166 = sphi 0, %s150
    %s172 = sphi 0, %s174
    %s175 = sphi 0, %s172
    %s176 = sphi 0, %s175
    %s192 = sphi 0, %s176
    %s198 = sphi 0, %s200
    %s201 = sphi 0, %s198
    %s202 = sphi 0, %s201
    %s218 = sphi 0, %s202
    %s224 = sphi 0, %s226
    %s227 = sphi 0, %s224
    %s228 = sphi 0, %s227
    %s244 = sphi 0, %s228
    %s250 = sphi 0, %s252
    %s253 = sphi 0, %s250
    %s254 = sphi 0, %s253
    %s270 = sphi 0, %s254
    %s276 = sphi 0, %s278
    %s279 = sphi 0, %s276
    %s280 = sphi 0, %s279
    %s296 = sphi 0, %s280
    %s302 = sphi 0, %s304
    %s305 = sphi 0, %s302
    %s306 = sphi 0, %s305
    %s322 = sphi 0, %s306
    %s328 = sphi 0, %s330
    %s331 = sphi 0, %s328
    %s332 = sphi 0, %s331
    %s348 = sphi 0, %s332
    %s354 = sphi 0, %s356
    %s357 = sphi 0, %s354
    %s358 = sphi 0, %s357
    %s374 = sphi 0, %s358
    %s380 = sphi 0, %s382
    %s383 = sphi 0, %s380
    %s384 = sphi 0, %s383
    %s400 = sphi 0, %s384
    %s406 = sphi 0, %s408
    %s409 = sphi 0, %s406
    %s410 = sphi 0, %s409
    %s426 = sphi 0, %s410
  $region4: #{loss_fn.10} parent=0 // loop_header_branch
    %23 = sbr.rel (%p21) target = $region8
  $region5: #{loss_fn.10} parent=0 // loop_body
    %s25 = ssub.s32 %s20, 1
    %s26 = ssub.s32 %s20, 2
    %s33 = sadd.s32 1, %s28
    %p34 = scmp.ge.s32.totalorder %s33, 1
    %s35 = scalar_select %p34, 0, %s33
    %s36 = sadd.s32 1, %s27
    %s37 = scalar_select %p34, %s36, %s27
    %p38 = scmp.ge.s32.totalorder %s37, 2
    %s39 = scalar_select %p38, 0, %s37
    %s40 = ssub.s32 %s27, %s39
    %p41 = scmp.eq.s32.totalorder %s40, 0
    %s43 = sadd.s32 %s42, 1
    %s44 = scalar_select %p41, %s42, %s43
    %p47 = pneg %p41
    %p48 = scmp.eq.s32.totalorder %s20, 1
    %p49 = por %p47, %p48
    %p50 = scmp.ne.s32.totalorder %s42, %s45
    %p51 = scmp.eq.s32.totalorder %s20, 0
    %p52 = por %p50, %p51
    %p53 = scmp.ne.s32.totalorder %s42, %s45
    %p54 = scmp.eq.s32.totalorder %s25, 1
    %p55 = por %p53, %p54
    %p56 = scmp.ne.s32.totalorder %s45, %s46
    %p57 = scmp.eq.s32.totalorder %s25, 0
    %p58 = por %p56, %p57
    %p59 = scmp.ne.s32.totalorder %s45, %s46
    %p60 = scmp.eq.s32.totalorder %s26, 1
    %p61 = por %p59, %p60
    %p63 = scmp.ne.s32.totalorder %s46, %s62
    %p64 = scmp.eq.s32.totalorder %s26, 0
    %p65 = por %p63, %p64
    %s66 = ssub.s32 %s27, %s39
    %p67 = scmp.eq.s32.totalorder %s66, 0
    %s69 = sadd.s32 %s68, 1
    %s70 = scalar_select %p67, %s68, %s69
    %p73 = pneg %p67
    %p74 = scmp.eq.s32.totalorder %s20, 1
    %p75 = por %p73, %p74
    %p76 = scmp.ne.s32.totalorder %s68, %s71
    %p77 = scmp.eq.s32.totalorder %s20, 0
    %p78 = por %p76, %p77
    %p79 = scmp.ne.s32.totalorder %s68, %s71
    %p80 = scmp.eq.s32.totalorder %s25, 1
    %p81 = por %p79, %p80
    %p82 = scmp.ne.s32.totalorder %s71, %s72
    %p83 = scmp.eq.s32.totalorder %s25, 0
    %p84 = por %p82, %p83
    %p85 = scmp.ne.s32.totalorder %s71, %s72
    %p86 = scmp.eq.s32.totalorder %s26, 1
    %p87 = por %p85, %p86
    %p89 = scmp.ne.s32.totalorder %s72, %s88
    %p90 = scmp.eq.s32.totalorder %s26, 0
    %p91 = por %p89, %p90
    %s92 = ssub.s32 %s28, %s35
    %p93 = scmp.eq.s32.totalorder %s92, 0
    %s95 = sadd.s32 %s94, 1
    %s96 = scalar_select %p93, %s94, %s95
    %p99 = pneg %p93
    %p100 = scmp.eq.s32.totalorder %s20, 1
    %p101 = por %p99, %p100
    %p102 = scmp.ne.s32.totalorder %s94, %s97
    %p103 = scmp.eq.s32.totalorder %s20, 0
    %p104 = por %p102, %p103
    %p105 = scmp.ne.s32.totalorder %s94, %s97
    %p106 = scmp.eq.s32.totalorder %s25, 1
    %p107 = por %p105, %p106
    %p108 = scmp.ne.s32.totalorder %s97, %s98
    %p109 = scmp.eq.s32.totalorder %s25, 0
    %p110 = por %p108, %p109
    %p111 = scmp.ne.s32.totalorder %s97, %s98
    %p112 = scmp.eq.s32.totalorder %s26, 1
    %p113 = por %p111, %p112
    %p115 = scmp.ne.s32.totalorder %s98, %s114
    %p116 = scmp.eq.s32.totalorder %s26, 0
    %p117 = por %p115, %p116
    %s118 = ssub.s32 %s28, %s35
    %p119 = scmp.eq.s32.totalorder %s118, 0
    %s121 = sadd.s32 %s120, 1
    %s122 = scalar_select %p119, %s120, %s121
    %p125 = pneg %p119
    %p126 = scmp.eq.s32.totalorder %s20, 1
    %p127 = por %p125, %p126
    %p128 = scmp.ne.s32.totalorder %s120, %s123
    %p129 = scmp.eq.s32.totalorder %s20, 0
    %p130 = por %p128, %p129
    %p131 = scmp.ne.s32.totalorder %s120, %s123
    %p132 = scmp.eq.s32.totalorder %s25, 1
    %p133 = por %p131, %p132
    %p134 = scmp.ne.s32.totalorder %s123, %s124
    %p135 = scmp.eq.s32.totalorder %s25, 0
    %p136 = por %p134, %p135
    %p137 = scmp.ne.s32.totalorder %s123, %s124
    %p138 = scmp.eq.s32.totalorder %s26, 1
    %p139 = por %p137, %p138
    %p141 = scmp.ne.s32.totalorder %s124, %s140
    %p142 = scmp.eq.s32.totalorder %s26, 0
    %p143 = por %p141, %p142
    %s144 = ssub.s32 %s28, %s35
    %p145 = scmp.eq.s32.totalorder %s144, 0
    %s147 = sadd.s32 %s146, 1
    %s148 = scalar_select %p145, %s146, %s147
    %p151 = pneg %p145
    %p152 = scmp.eq.s32.totalorder %s20, 1
    %p153 = por %p151, %p152
    %p154 = scmp.ne.s32.totalorder %s146, %s149
    %p155 = scmp.eq.s32.totalorder %s20, 0
    %p156 = por %p154, %p155
    %p157 = scmp.ne.s32.totalorder %s146, %s149
    %p158 = scmp.eq.s32.totalorder %s25, 1
    %p159 = por %p157, %p158
    %p160 = scmp.ne.s32.totalorder %s149, %s150
    %p161 = scmp.eq.s32.totalorder %s25, 0
    %p162 = por %p160, %p161
    %p163 = scmp.ne.s32.totalorder %s149, %s150
    %p164 = scmp.eq.s32.totalorder %s26, 1
    %p165 = por %p163, %p164
    %p167 = scmp.ne.s32.totalorder %s150, %s166
    %p168 = scmp.eq.s32.totalorder %s26, 0
    %p169 = por %p167, %p168
    %s170 = ssub.s32 %s28, %s35
    %p171 = scmp.eq.s32.totalorder %s170, 0
    %s173 = sadd.s32 %s172, 1
    %s174 = scalar_select %p171, %s172, %s173
    %p177 = pneg %p171
    %p178 = scmp.eq.s32.totalorder %s20, 1
    %p179 = por %p177, %p178
    %p180 = scmp.ne.s32.totalorder %s172, %s175
    %p181 = scmp.eq.s32.totalorder %s20, 0
    %p182 = por %p180, %p181
    %p183 = scmp.ne.s32.totalorder %s172, %s175
    %p184 = scmp.eq.s32.totalorder %s25, 1
    %p185 = por %p183, %p184
    %p186 = scmp.ne.s32.totalorder %s175, %s176
    %p187 = scmp.eq.s32.totalorder %s25, 0
    %p188 = por %p186, %p187
    %p189 = scmp.ne.s32.totalorder %s175, %s176
    %p190 = scmp.eq.s32.totalorder %s26, 1
    %p191 = por %p189, %p190
    %p193 = scmp.ne.s32.totalorder %s176, %s192
    %p194 = scmp.eq.s32.totalorder %s26, 0
    %p195 = por %p193, %p194
    %s196 = ssub.s32 %s28, %s35
    %p197 = scmp.eq.s32.totalorder %s196, 0
    %s199 = sadd.s32 %s198, 1
    %s200 = scalar_select %p197, %s198, %s199
    %p203 = pneg %p197
    %p204 = scmp.eq.s32.totalorder %s20, 1
    %p205 = por %p203, %p204
    %p206 = scmp.ne.s32.totalorder %s198, %s201
    %p207 = scmp.eq.s32.totalorder %s20, 0
    %p208 = por %p206, %p207
    %p209 = scmp.ne.s32.totalorder %s198, %s201
    %p210 = scmp.eq.s32.totalorder %s25, 1
    %p211 = por %p209, %p210
    %p212 = scmp.ne.s32.totalorder %s201, %s202
    %p213 = scmp.eq.s32.totalorder %s25, 0
    %p214 = por %p212, %p213
    %p215 = scmp.ne.s32.totalorder %s201, %s202
    %p216 = scmp.eq.s32.totalorder %s26, 1
    %p217 = por %p215, %p216
    %p219 = scmp.ne.s32.totalorder %s202, %s218
    %p220 = scmp.eq.s32.totalorder %s26, 0
    %p221 = por %p219, %p220
    %s222 = ssub.s32 %s28, %s35
    %p223 = scmp.eq.s32.totalorder %s222, 0
    %s225 = sadd.s32 %s224, 1
    %s226 = scalar_select %p223, %s224, %s225
    %p229 = pneg %p223
    %p230 = scmp.eq.s32.totalorder %s20, 1
    %p231 = por %p229, %p230
    %p232 = scmp.ne.s32.totalorder %s224, %s227
    %p233 = scmp.eq.s32.totalorder %s20, 0
    %p234 = por %p232, %p233
    %p235 = scmp.ne.s32.totalorder %s224, %s227
    %p236 = scmp.eq.s32.totalorder %s25, 1
    %p237 = por %p235, %p236
    %p238 = scmp.ne.s32.totalorder %s227, %s228
    %p239 = scmp.eq.s32.totalorder %s25, 0
    %p240 = por %p238, %p239
    %p241 = scmp.ne.s32.totalorder %s227, %s228
    %p242 = scmp.eq.s32.totalorder %s26, 1
    %p243 = por %p241, %p242
    %p245 = scmp.ne.s32.totalorder %s228, %s244
    %p246 = scmp.eq.s32.totalorder %s26, 0
    %p247 = por %p245, %p246
    %s248 = ssub.s32 %s28, %s35
    %p249 = scmp.eq.s32.totalorder %s248, 0
    %s251 = sadd.s32 %s250, 1
    %s252 = scalar_select %p249, %s250, %s251
    %p255 = pneg %p249
    %p256 = scmp.eq.s32.totalorder %s20, 1
    %p257 = por %p255, %p256
    %p258 = scmp.ne.s32.totalorder %s250, %s253
    %p259 = scmp.eq.s32.totalorder %s20, 0
    %p260 = por %p258, %p259
    %p261 = scmp.ne.s32.totalorder %s250, %s253
    %p262 = scmp.eq.s32.totalorder %s25, 1
    %p263 = por %p261, %p262
    %p264 = scmp.ne.s32.totalorder %s253, %s254
    %p265 = scmp.eq.s32.totalorder %s25, 0
    %p266 = por %p264, %p265
    %p267 = scmp.ne.s32.totalorder %s253, %s254
    %p268 = scmp.eq.s32.totalorder %s26, 1
    %p269 = por %p267, %p268
    %p271 = scmp.ne.s32.totalorder %s254, %s270
    %p272 = scmp.eq.s32.totalorder %s26, 0
    %p273 = por %p271, %p272
    %s274 = ssub.s32 %s28, %s35
    %p275 = scmp.eq.s32.totalorder %s274, 0
    %s277 = sadd.s32 %s276, 1
    %s278 = scalar_select %p275, %s276, %s277
    %p281 = pneg %p275
    %p282 = scmp.eq.s32.totalorder %s20, 1
    %p283 = por %p281, %p282
    %p284 = scmp.ne.s32.totalorder %s276, %s279
    %p285 = scmp.eq.s32.totalorder %s20, 0
    %p286 = por %p284, %p285
    %p287 = scmp.ne.s32.totalorder %s276, %s279
    %p288 = scmp.eq.s32.totalorder %s25, 1
    %p289 = por %p287, %p288
    %p290 = scmp.ne.s32.totalorder %s279, %s280
    %p291 = scmp.eq.s32.totalorder %s25, 0
    %p292 = por %p290, %p291
    %p293 = scmp.ne.s32.totalorder %s279, %s280
    %p294 = scmp.eq.s32.totalorder %s26, 1
    %p295 = por %p293, %p294
    %p297 = scmp.ne.s32.totalorder %s280, %s296
    %p298 = scmp.eq.s32.totalorder %s26, 0
    %p299 = por %p297, %p298
    %s300 = ssub.s32 %s28, %s35
    %p301 = scmp.eq.s32.totalorder %s300, 0
    %s303 = sadd.s32 %s302, 1
    %s304 = scalar_select %p301, %s302, %s303
    %p307 = pneg %p301
    %p308 = scmp.eq.s32.totalorder %s20, 1
    %p309 = por %p307, %p308
    %p310 = scmp.ne.s32.totalorder %s302, %s305
    %p311 = scmp.eq.s32.totalorder %s20, 0
    %p312 = por %p310, %p311
    %p313 = scmp.ne.s32.totalorder %s302, %s305
    %p314 = scmp.eq.s32.totalorder %s25, 1
    %p315 = por %p313, %p314
    %p316 = scmp.ne.s32.totalorder %s305, %s306
    %p317 = scmp.eq.s32.totalorder %s25, 0
    %p318 = por %p316, %p317
    %p319 = scmp.ne.s32.totalorder %s305, %s306
    %p320 = scmp.eq.s32.totalorder %s26, 1
    %p321 = por %p319, %p320
    %p323 = scmp.ne.s32.totalorder %s306, %s322
    %p324 = scmp.eq.s32.totalorder %s26, 0
    %p325 = por %p323, %p324
    %s326 = ssub.s32 %s28, %s35
    %p327 = scmp.eq.s32.totalorder %s326, 0
    %s329 = sadd.s32 %s328, 1
    %s330 = scalar_select %p327, %s328, %s329
    %p333 = pneg %p327
    %p334 = scmp.eq.s32.totalorder %s20, 1
    %p335 = por %p333, %p334
    %p336 = scmp.ne.s32.totalorder %s328, %s331
    %p337 = scmp.eq.s32.totalorder %s20, 0
    %p338 = por %p336, %p337
    %p339 = scmp.ne.s32.totalorder %s328, %s331
    %p340 = scmp.eq.s32.totalorder %s25, 1
    %p341 = por %p339, %p340
    %p342 = scmp.ne.s32.totalorder %s331, %s332
    %p343 = scmp.eq.s32.totalorder %s25, 0
    %p344 = por %p342, %p343
    %p345 = scmp.ne.s32.totalorder %s331, %s332
    %p346 = scmp.eq.s32.totalorder %s26, 1
    %p347 = por %p345, %p346
    %p349 = scmp.ne.s32.totalorder %s332, %s348
    %p350 = scmp.eq.s32.totalorder %s26, 0
    %p351 = por %p349, %p350
    %s352 = ssub.s32 %s28, %s35
    %p353 = scmp.eq.s32.totalorder %s352, 0
    %s355 = sadd.s32 %s354, 1
    %s356 = scalar_select %p353, %s354, %s355
    %p359 = pneg %p353
    %p360 = scmp.eq.s32.totalorder %s20, 1
    %p361 = por %p359, %p360
    %p362 = scmp.ne.s32.totalorder %s354, %s357
    %p363 = scmp.eq.s32.totalorder %s20, 0
    %p364 = por %p362, %p363
    %p365 = scmp.ne.s32.totalorder %s354, %s357
    %p366 = scmp.eq.s32.totalorder %s25, 1
    %p367 = por %p365, %p366
    %p368 = scmp.ne.s32.totalorder %s357, %s358
    %p369 = scmp.eq.s32.totalorder %s25, 0
    %p370 = por %p368, %p369
    %p371 = scmp.ne.s32.totalorder %s357, %s358
    %p372 = scmp.eq.s32.totalorder %s26, 1
    %p373 = por %p371, %p372
    %p375 = scmp.ne.s32.totalorder %s358, %s374
    %p376 = scmp.eq.s32.totalorder %s26, 0
    %p377 = por %p375, %p376
    %s378 = ssub.s32 %s28, %s35
    %p379 = scmp.eq.s32.totalorder %s378, 0
    %s381 = sadd.s32 %s380, 1
    %s382 = scalar_select %p379, %s380, %s381
    %p385 = pneg %p379
    %p386 = scmp.eq.s32.totalorder %s20, 1
    %p387 = por %p385, %p386
    %p388 = scmp.ne.s32.totalorder %s380, %s383
    %p389 = scmp.eq.s32.totalorder %s20, 0
    %p390 = por %p388, %p389
    %p391 = scmp.ne.s32.totalorder %s380, %s383
    %p392 = scmp.eq.s32.totalorder %s25, 1
    %p393 = por %p391, %p392
    %p394 = scmp.ne.s32.totalorder %s383, %s384
    %p395 = scmp.eq.s32.totalorder %s25, 0
    %p396 = por %p394, %p395
    %p397 = scmp.ne.s32.totalorder %s383, %s384
    %p398 = scmp.eq.s32.totalorder %s26, 1
    %p399 = por %p397, %p398
    %p401 = scmp.ne.s32.totalorder %s384, %s400
    %p402 = scmp.eq.s32.totalorder %s26, 0
    %p403 = por %p401, %p402
    %s404 = ssub.s32 %s27, %s39
    %p405 = scmp.eq.s32.totalorder %s404, 0
    %s407 = sadd.s32 %s406, 1
    %s408 = scalar_select %p405, %s406, %s407
    %p411 = pneg %p405
    %p412 = scmp.eq.s32.totalorder %s20, 1
    %p413 = por %p411, %p412
    %p414 = scmp.ne.s32.totalorder %s406, %s409
    %p415 = scmp.eq.s32.totalorder %s20, 0
    %p416 = por %p414, %p415
    %p417 = scmp.ne.s32.totalorder %s406, %s409
    %p418 = scmp.eq.s32.totalorder %s25, 1
    %p419 = por %p417, %p418
    %p420 = scmp.ne.s32.totalorder %s409, %s410
    %p421 = scmp.eq.s32.totalorder %s25, 0
    %p422 = por %p420, %p421
    %p423 = scmp.ne.s32.totalorder %s409, %s410
    %p424 = scmp.eq.s32.totalorder %s26, 1
    %p425 = por %p423, %p424
    %p427 = scmp.ne.s32.totalorder %s410, %s426
    %p428 = scmp.eq.s32.totalorder %s26, 0
    %p429 = por %p427, %p428
    %p430 = scmp.le.s32.totalorder 1, %s20
    %p431 = scmp.lt.s32.totalorder %s20, 3
    %p432 = pnand %p430, %p431
    %p433 = pneg %p432
    // Predicated region
    $region9: #{loss_fn.10} parent=5 // pred_check
      _
    $region10: #{loss_fn.10} parent=5 // pred_check_branch
      %435 = sbr.rel (%p432) target = $region12
    $region11: #{loss_fn.10} parent=5 // pred_region
      %s436 = ssub.s32 %s20, 1
      // Predicated region
      $region13: #{loss_fn.10} parent=11 // pred_check
        %p437 = pneg %p110
      $region14: #{loss_fn.10} parent=11 // pred_check_branch
        %439 = sbr.rel (%p437) target = $region16
      $region15: #{loss_fn.10} parent=11 // pred_region
        %p440 = scmp.lt.s32.totalorder %s30, 0
        %s441 = scalar_select %p440, %s30, 0
        %s442 = smul.addr %s441, 4
        %s443 = smul.addr %s442, 8
        %s444 = scalar_lea.vmem %s2, %s443
      $region16: #{loss_fn.10} parent=11 // pred_fallthru
        _
      // Predicated region
      $region17: #{loss_fn.10} parent=11 // pred_check
        %p445 = pneg %p136
      $region18: #{loss_fn.10} parent=11 // pred_check_branch
        %447 = sbr.rel (%p445) target = $region20
      $region19: #{loss_fn.10} parent=11 // pred_region
        %p448 = scmp.lt.s32.totalorder %s30, 0
        %s449 = scalar_select %p448, %s30, 0
        %s450 = scalar_lea.vmem %s3, %s449
      $region20: #{loss_fn.10} parent=11 // pred_fallthru
        _
      // Predicated region
      $region21: #{loss_fn.10} parent=11 // pred_check
        %p451 = pneg %p162
      $region22: #{loss_fn.10} parent=11 // pred_check_branch
        %453 = sbr.rel (%p451) target = $region24
      $region23: #{loss_fn.10} parent=11 // pred_region
        %p454 = scmp.lt.s32.totalorder %s30, 0
        %s455 = scalar_select %p454, %s30, 0
        %s456 = smul.addr %s455, 4
        %s457 = smul.addr %s456, 8
        %s458 = scalar_lea.vmem %s4, %s457
      $region24: #{loss_fn.10} parent=11 // pred_fallthru
        _
      // Predicated region
      $region25: #{loss_fn.10} parent=11 // pred_check
        %p459 = pneg %p188
      $region26: #{loss_fn.10} parent=11 // pred_check_branch
        %461 = sbr.rel (%p459) target = $region28
      $region27: #{loss_fn.10} parent=11 // pred_region
        %p462 = scmp.lt.s32.totalorder %s30, 0
        %s463 = scalar_select %p462, %s30, 0
        %s464 = scalar_lea.vmem %s5, %s463
      $region28: #{loss_fn.10} parent=11 // pred_fallthru
        _
      // Predicated region
      $region29: #{loss_fn.10} parent=11 // pred_check
        %p465 = pneg %p214
      $region30: #{loss_fn.10} parent=11 // pred_check_branch
        %467 = sbr.rel (%p465) target = $region32
      $region31: #{loss_fn.10} parent=11 // pred_region
        %p468 = scmp.lt.s32.totalorder %s30, 0
        %s469 = scalar_select %p468, %s30, 0
        %s470 = scalar_lea.vmem %s6, %s469
      $region32: #{loss_fn.10} parent=11 // pred_fallthru
        _
      // Predicated region
      $region33: #{loss_fn.10} parent=11 // pred_check
        %p471 = pneg %p240
      $region34: #{loss_fn.10} parent=11 // pred_check_branch
        %473 = sbr.rel (%p471) target = $region36
      $region35: #{loss_fn.10} parent=11 // pred_region
        %p474 = scmp.lt.s32.totalorder %s30, 0
        %s475 = scalar_select %p474, %s30, 0
        %s476 = scalar_lea.vmem %s7, %s475
      $region36: #{loss_fn.10} parent=11 // pred_fallthru
        _
      // Predicated region
      $region37: #{loss_fn.10} parent=11 // pred_check
        %p477 = pneg %p266
      $region38: #{loss_fn.10} parent=11 // pred_check_branch
        %479 = sbr.rel (%p477) target = $region40
      $region39: #{loss_fn.10} parent=11 // pred_region
        %p480 = scmp.lt.s32.totalorder %s30, 0
        %s481 = scalar_select %p480, %s30, 0
        %s482 = smul.addr %s481, 4
        %s483 = smul.addr %s482, 8
        %s484 = scalar_lea.vmem %s8, %s483
      $region40: #{loss_fn.10} parent=11 // pred_fallthru
        _
      // Predicated region
      $region41: #{loss_fn.10} parent=11 // pred_check
        %p485 = pneg %p292
      $region42: #{loss_fn.10} parent=11 // pred_check_branch
        %487 = sbr.rel (%p485) target = $region44
      $region43: #{loss_fn.10} parent=11 // pred_region
        %p488 = scmp.lt.s32.totalorder %s30, 0
        %s489 = scalar_select %p488, %s30, 0
        %s490 = scalar_lea.vmem %s9, %s489
      $region44: #{loss_fn.10} parent=11 // pred_fallthru
        _
      // Predicated region
      $region45: #{loss_fn.10} parent=11 // pred_check
        %p491 = pneg %p318
      $region46: #{loss_fn.10} parent=11 // pred_check_branch
        %493 = sbr.rel (%p491) target = $region48
      $region47: #{loss_fn.10} parent=11 // pred_region
        %p494 = scmp.lt.s32.totalorder %s30, 0
        %s495 = scalar_select %p494, %s30, 0
        %s496 = smul.addr %s495, 16
        %s497 = smul.addr %s496, 8
        %s498 = scalar_lea.vmem %s10, %s497
      $region48: #{loss_fn.10} parent=11 // pred_fallthru
        _
      // Predicated region
      $region49: #{loss_fn.10} parent=11 // pred_check
        %p499 = pneg %p344
      $region50: #{loss_fn.10} parent=11 // pred_check_branch
        %501 = sbr.rel (%p499) target = $region52
      $region51: #{loss_fn.10} parent=11 // pred_region
        %p502 = scmp.lt.s32.totalorder %s30, 0
        %s503 = scalar_select %p502, %s30, 0
        %s504 = scalar_lea.vmem %s11, %s503
      $region52: #{loss_fn.10} parent=11 // pred_fallthru
        _
      // Predicated region
      $region53: #{loss_fn.10} parent=11 // pred_check
        %p505 = pneg %p370
      $region54: #{loss_fn.10} parent=11 // pred_check_branch
        %507 = sbr.rel (%p505) target = $region56
      $region55: #{loss_fn.10} parent=11 // pred_region
        %p508 = scmp.lt.s32.totalorder %s30, 0
        %s509 = scalar_select %p508, %s30, 0
        %s510 = scalar_lea.vmem %s12, %s509
      $region56: #{loss_fn.10} parent=11 // pred_fallthru
        _
      // Predicated region
      $region57: #{loss_fn.10} parent=11 // pred_check
        %p511 = pneg %p396
      $region58: #{loss_fn.10} parent=11 // pred_check_branch
        %513 = sbr.rel (%p511) target = $region60
      $region59: #{loss_fn.10} parent=11 // pred_region
        %p514 = scmp.lt.s32.totalorder %s30, 0
        %s515 = scalar_select %p514, %s30, 0
        %s516 = scalar_lea.vmem %s13, %s515
      $region60: #{loss_fn.10} parent=11 // pred_fallthru
        _
    $region12: #{loss_fn.10} parent=5 // pred_fallthru
      _
    %p517 = scmp.lt.s32.totalorder %s20, 2
    // Predicated region
    $region61: #{loss_fn.10} parent=5 // pred_check
      %p518 = pneg %p517
    $region62: #{loss_fn.10} parent=5 // pred_check_branch
      %520 = sbr.rel (%p518) target = $region64
    $region63: #{loss_fn.10} parent=5 // pred_region
      // Predicated region
      $region65: #{loss_fn.10} parent=63 // pred_check
        %p521 = pneg %p52
      $region66: #{loss_fn.10} parent=63 // pred_check_branch
        %523 = sbr.rel (%p521) target = $region68
      $region67: #{loss_fn.10} parent=63 // pred_region
        %p524 = scmp.lt.s32.totalorder %s27, 1
        %s525 = scalar_select %p524, %s27, 1
        %s526 = scalar_lea.vmem %s0, %s525
      $region68: #{loss_fn.10} parent=63 // pred_fallthru
        _
      // Predicated region
      $region69: #{loss_fn.10} parent=63 // pred_check
        %p527 = pneg %p78
      $region70: #{loss_fn.10} parent=63 // pred_check_branch
        %529 = sbr.rel (%p527) target = $region72
      $region71: #{loss_fn.10} parent=63 // pred_region
        %p530 = scmp.lt.s32.totalorder %s27, 1
        %s531 = scalar_select %p530, %s27, 1
        %s532 = smul.addr %s531, 8
        %s533 = scalar_lea.vmem %s1, %s532
      $region72: #{loss_fn.10} parent=63 // pred_fallthru
        _
    $region64: #{loss_fn.10} parent=5 // pred_fallthru
      _
    %p534 = scmp.le.s32.totalorder 1, %s20
    %p535 = scmp.lt.s32.totalorder %s20, 3
    %p536 = pnand %p534, %p535
    %p537 = pneg %p536
    // Predicated region
    $region73: #{loss_fn.10} parent=5 // pred_check
      _
    $region74: #{loss_fn.10} parent=5 // pred_check_branch
      %539 = sbr.rel (%p536) target = $region76
    $region75: #{loss_fn.10} parent=5 // pred_region
      %s540 = ssub.s32 %s20, 1
      %p541 = scmp.lt.s32.totalorder %s29, 1
      %s542 = scalar_select %p541, %s29, 1
      %s543 = scalar_lea.vmem %s0, %s542
      %p544 = pneg %p58
      %p545 = pneg %p55
      %p546 = scmp.lt.s32.totalorder %s29, 1
      %s547 = scalar_select %p546, %s29, 1
      %s548 = smul.addr %s547, 8
      %s549 = scalar_lea.vmem %s1, %s548
      %p550 = pneg %p84
      %p551 = pneg %p81
      %p552 = scmp.lt.s32.totalorder %s30, 0
      %s553 = scalar_select %p552, %s30, 0
      %s554 = smul.addr %s553, 4
      %s555 = smul.addr %s554, 8
      %s556 = scalar_lea.vmem %s2, %s555
      %p557 = pneg %p110
      %p558 = pneg %p107
      %p559 = scmp.lt.s32.totalorder %s30, 0
      %s560 = scalar_select %p559, %s30, 0
      %s561 = scalar_lea.vmem %s3, %s560
      %p562 = pneg %p136
      %p563 = pneg %p133
      %p564 = scmp.lt.s32.totalorder %s30, 0
      %s565 = scalar_select %p564, %s30, 0
      %s566 = smul.addr %s565, 4
      %s567 = smul.addr %s566, 8
      %s568 = scalar_lea.vmem %s4, %s567
      %p569 = pneg %p162
      %p570 = pneg %p159
      %p571 = scmp.lt.s32.totalorder %s30, 0
      %s572 = scalar_select %p571, %s30, 0
      %s573 = scalar_lea.vmem %s5, %s572
      %p574 = pneg %p188
      %p575 = pneg %p185
      %p576 = scmp.lt.s32.totalorder %s30, 0
      %s577 = scalar_select %p576, %s30, 0
      %s578 = scalar_lea.vmem %s6, %s577
      %p579 = pneg %p214
      %p580 = pneg %p211
      %p581 = scmp.lt.s32.totalorder %s30, 0
      %s582 = scalar_select %p581, %s30, 0
      %s583 = scalar_lea.vmem %s7, %s582
      %p584 = pneg %p240
      %p585 = pneg %p237
      %p586 = scmp.lt.s32.totalorder %s30, 0
      %s587 = scalar_select %p586, %s30, 0
      %s588 = smul.addr %s587, 4
      %s589 = smul.addr %s588, 8
      %s590 = scalar_lea.vmem %s8, %s589
      %p591 = pneg %p266
      %p592 = pneg %p263
      %p593 = scmp.lt.s32.totalorder %s30, 0
      %s594 = scalar_select %p593, %s30, 0
      %s595 = scalar_lea.vmem %s9, %s594
      %p596 = pneg %p292
      %p597 = pneg %p289
      %p598 = scmp.lt.s32.totalorder %s30, 0
      %s599 = scalar_select %p598, %s30, 0
      %s600 = smul.addr %s599, 16
      %s601 = smul.addr %s600, 8
      %s602 = scalar_lea.vmem %s10, %s601
      %p603 = pneg %p318
      %p604 = pneg %p315
      %p605 = scmp.lt.s32.totalorder %s30, 0
      %s606 = scalar_select %p605, %s30, 0
      %s607 = scalar_lea.vmem %s11, %s606
      %p608 = pneg %p344
      %p609 = pneg %p341
      %p610 = scmp.lt.s32.totalorder %s30, 0
      %s611 = scalar_select %p610, %s30, 0
      %s612 = scalar_lea.vmem %s12, %s611
      %p613 = pneg %p370
      %p614 = pneg %p367
      %p615 = scmp.lt.s32.totalorder %s30, 0
      %s616 = scalar_select %p615, %s30, 0
      %s617 = scalar_lea.vmem %s13, %s616
      %p618 = pneg %p396
      %p619 = pneg %p393
      %p620 = pneg %p422
      %p621 = pneg %p419
      %p622 = scmp.lt.s32.totalorder %s29, 1
      %s623 = scalar_select %p622, %s29, 1
      %s624 = smul.addr %s623, 8
      %s625 = scalar_lea.vmem %s14, %s624
      %p626 = scmp.lt.s32.totalorder %s29, 1
      %s627 = scalar_select %p626, %s29, 1
      %s628 = scalar_lea.vmem %s0, %s627
      %p629 = scmp.lt.s32.totalorder %s29, 1
      %s630 = scalar_select %p629, %s29, 1
      %s631 = smul.addr %s630, 8
      %s632 = scalar_lea.vmem %s1, %s631
      %p633 = scmp.lt.s32.totalorder %s30, 0
      %s634 = scalar_select %p633, %s30, 0
      %s635 = smul.addr %s634, 4
      %s636 = smul.addr %s635, 8
      %s637 = scalar_lea.vmem %s2, %s636
      %p638 = scmp.lt.s32.totalorder %s30, 0
      %s639 = scalar_select %p638, %s30, 0
      %s640 = scalar_lea.vmem %s3, %s639
      %p641 = scmp.lt.s32.totalorder %s30, 0
      %s642 = scalar_select %p641, %s30, 0
      %s643 = smul.addr %s642, 4
      %s644 = smul.addr %s643, 8
      %s645 = scalar_lea.vmem %s4, %s644
      %p646 = scmp.lt.s32.totalorder %s30, 0
      %s647 = scalar_select %p646, %s30, 0
      %s648 = scalar_lea.vmem %s5, %s647
      %p649 = scmp.lt.s32.totalorder %s30, 0
      %s650 = scalar_select %p649, %s30, 0
      %s651 = scalar_lea.vmem %s6, %s650
      %p652 = scmp.lt.s32.totalorder %s30, 0
      %s653 = scalar_select %p652, %s30, 0
      %s654 = scalar_lea.vmem %s7, %s653
      %p655 = scmp.lt.s32.totalorder %s30, 0
      %s656 = scalar_select %p655, %s30, 0
      %s657 = smul.addr %s656, 4
      %s658 = smul.addr %s657, 8
      %s659 = scalar_lea.vmem %s8, %s658
      %p660 = scmp.lt.s32.totalorder %s30, 0
      %s661 = scalar_select %p660, %s30, 0
      %s662 = scalar_lea.vmem %s9, %s661
      %p663 = scmp.lt.s32.totalorder %s30, 0
      %s664 = scalar_select %p663, %s30, 0
      %s665 = smul.addr %s664, 16
      %s666 = smul.addr %s665, 8
      %s667 = scalar_lea.vmem %s10, %s666
      %p668 = scmp.lt.s32.totalorder %s30, 0
      %s669 = scalar_select %p668, %s30, 0
      %s670 = scalar_lea.vmem %s11, %s669
      %p671 = scmp.lt.s32.totalorder %s30, 0
      %s672 = scalar_select %p671, %s30, 0
      %s673 = scalar_lea.vmem %s12, %s672
      %p674 = scmp.lt.s32.totalorder %s30, 0
      %s675 = scalar_select %p674, %s30, 0
      %s676 = scalar_lea.vmem %s13, %s675
      %p677 = scmp.lt.s32.totalorder %s29, 1
      %s678 = scalar_select %p677, %s29, 1
      %s679 = smul.addr %s678, 8
      %s680 = scalar_lea.vmem %s14, %s679
      %p681 = scmp.eq.s32.totalorder %s30, 0
      // Predicated region
      $region77: #{loss_fn.10} parent=75 // pred_check
        %p682 = pneg %p681
      $region78: #{loss_fn.10} parent=75 // pred_check_branch
        %684 = sbr.rel (%p682) target = $region80
      $region79: #{loss_fn.10} parent=75 // pred_region
        %v685 = vld [vmem:[%s632] sm:$0xff]
        %vm686 = vcmask 261120
        %687 = vst.msk [vmem:[%s680] sm:$0xff] %vm686, %v685
      $region80: #{loss_fn.10} parent=75 // pred_fallthru
        _
      %v688 = vld [vmem:[%s680] sm:$0xff]
      %v689 = vld [vmem:[%s628] sm:$0x1]
      %v690 = vld [vmem:[%s637] sm:$0xff]
      %v691 = vld [vmem:[%s637 + $0x8] sm:$0xff]
      %v692 = vld [vmem:[%s637 + $0x10] sm:$0xff]
      %v693 = vld [vmem:[%s637 + $0x18] sm:$0xff]
      %v694 = vld [vmem:[%s640] sm:$0x1]
      %v695 = vld [vmem:[%s645] sm:$0xff]
      %v696 = vld [vmem:[%s645 + $0x8] sm:$0xff]
      %v697 = vld [vmem:[%s645 + $0x10] sm:$0xff]
      %v698 = vld [vmem:[%s645 + $0x18] sm:$0xff]
      %v699 = vld [vmem:[%s648] sm:$0x1]
      %v700 = vld [vmem:[%s651] sm:$0x1]
      %v701 = vld [vmem:[%s654] sm:$0x1]
      %v702 = vld [vmem:[%s659] sm:$0xff]
      %v703 = vld [vmem:[%s659 + $0x8] sm:$0xff]
      %v704 = vld [vmem:[%s659 + $0x10] sm:$0xff]
      %v705 = vld [vmem:[%s659 + $0x18] sm:$0xff]
      %v706 = vld [vmem:[%s662] sm:$0x1]
      %v707 = vld [vmem:[%s667] sm:$0xff]
      %v708 = vld [vmem:[%s667 + $0x8] sm:$0xff]
      %v709 = vld [vmem:[%s667 + $0x10] sm:$0xff]
      %v710 = vld [vmem:[%s667 + $0x18] sm:$0xff]
      %v711 = vld [vmem:[%s667 + $0x20] sm:$0xff]
      %v712 = vld [vmem:[%s667 + $0x28] sm:$0xff]
      %v713 = vld [vmem:[%s667 + $0x30] sm:$0xff]
      %v714 = vld [vmem:[%s667 + $0x38] sm:$0xff]
      %v715 = vld [vmem:[%s667 + $0x40] sm:$0xff]
      %v716 = vld [vmem:[%s667 + $0x48] sm:$0xff]
      %v717 = vld [vmem:[%s667 + $0x50] sm:$0xff]
      %v718 = vld [vmem:[%s667 + $0x58] sm:$0xff]
      %v719 = vld [vmem:[%s667 + $0x60] sm:$0xff]
      %v720 = vld [vmem:[%s667 + $0x68] sm:$0xff]
      %v721 = vld [vmem:[%s667 + $0x70] sm:$0xff]
      %v722 = vld [vmem:[%s667 + $0x78] sm:$0xff]
      %v723 = vld [vmem:[%s670] sm:$0x1]
      %v724 = vld [vmem:[%s673] sm:$0x1]
      %v725 = vld [vmem:[%s676] sm:$0x1]
      %v727 = vlaneseq
      %v728 = vshrl.u32 %v727, 7
      %v729 = vsub.s32 0, %v728
      %v730 = vrot.slane %v694, %v729
      %vm732 = vcmask 261120
      %v734 = vsel %vm732, %v688, 0
      %736 = vmatprep.subr.mxu0 0.0
      %737 = vmatpush1.msra.mxu0 %v690
      %738 = vmatprep.subr.mxu0 0.0
      %739 = vmatpush1.msra.mxu0 %v691
      %740 = vmatprep.subr.mxu0 0.0
      %741 = vmatpush1.msra.mxu0 %v692
      %742 = vmatprep.subr.mxu0 0.0
      %743 = vmatpush1.msra.mxu0 %v693
      %744 = vmatprep.subr.mxu0 0.0
      %745 = vmatpush1.msra.mxu0 0.0
      %746 = vmatprep.subr.mxu0 0.0
      %747 = vmatpush1.msra.mxu0 0.0
      %748 = vmatprep.subr.mxu0 0.0
      %749 = vmatpush1.msra.mxu0 0.0
      %750 = vmatprep.subr.mxu0 0.0
      %751 = vmatpush1.msra.mxu0 0.0
      %752 = vmatprep.subr.mxu0 0.0
      %753 = vmatpush1.msra.mxu0 0.0
      %754 = vmatprep.subr.mxu0 0.0
      %755 = vmatpush1.msra.mxu0 0.0
      %756 = vmatprep.subr.mxu0 0.0
      %757 = vmatpush1.msra.mxu0 0.0
      %758 = vmatprep.subr.mxu0 0.0
      %759 = vmatpush1.msra.mxu0 0.0
      %760 = vmatprep.subr.mxu0 0.0
      %761 = vmatpush1.msra.mxu0 0.0
      %762 = vmatprep.subr.mxu0 0.0
      %763 = vmatpush1.msra.mxu0 0.0
      %764 = vmatprep.subr.mxu0 0.0
      %765 = vmatpush1.msra.mxu0 0.0
      %766 = vmatprep.subr.mxu0 0.0
      %767 = vmatpush1.msra.mxu0 0.0
      %768 = vmatprep.subr.mxu0 0.0
      %769 = vmatpush1.msra.mxu0 0.0
      %770 = vmatprep.subr.mxu0 0.0
      %771 = vmatpush1.msra.mxu0 0.0
      %772 = vmatprep.subr.mxu0 0.0
      %773 = vmatpush1.msra.mxu0 0.0
      %774 = vmatprep.subr.mxu0 0.0
      %775 = vmatpush1.msra.mxu0 0.0
      %776 = vmatprep.subr.mxu0 0.0
      %777 = vmatpush1.msra.mxu0 0.0
      %778 = vmatprep.subr.mxu0 0.0
      %779 = vmatpush1.msra.mxu0 0.0
      %780 = vmatprep.subr.mxu0 0.0
      %781 = vmatpush1.msra.mxu0 0.0
      %782 = vmatprep.subr.mxu0 0.0
      %783 = vmatpush1.msra.mxu0 0.0
      %784 = vmatprep.subr.mxu0 0.0
      %785 = vmatpush1.msra.mxu0 0.0
      %786 = vmatprep.subr.mxu0 0.0
      %787 = vmatpush1.msra.mxu0 0.0
      %788 = vmatprep.subr.mxu0 0.0
      %789 = vmatpush1.msra.mxu0 0.0
      %790 = vmatprep.subr.mxu0 0.0
      %791 = vmatpush1.msra.mxu0 0.0
      %792 = vmatprep.subr.mxu0 0.0
      %793 = vmatpush1.msra.mxu0 0.0
      %794 = vmatprep.subr.mxu0 0.0
      %795 = vmatpush1.msra.mxu0 0.0
      %796 = vmatprep.subr.mxu0 0.0
      %797 = vmatpush1.msra.mxu0 0.0
      %798 = vmatprep.subr.mxu0 0.0
      %799 = vmatpush1.msra.mxu0 0.0
      %800 = vmatprep.mubr.f32.mxu0 0.0
      %801 = vmatmul.mubr.f32.gmra.mrb[0].mxu0 %v734
      %v802 = vpop.f32.mrb[0].mxu0
      %v803 = vadd.f32 %v730, %v802
      %v804 = vpop.f32.mrb[0].mxu0
      %805 = vdwg.mxu0
      %807 = vrot.lane.b32.xlu0 %v803, 96
      %v808 = vpop.permute.xlu0 %807
      %vm809 = vcmask 64512
      %v810 = vsel %vm809, %v803, 0
      %v812 = vsel %vm809, %v808, 0
      %814 = vmatprep.subr.mxu0 0.0
      %815 = vmatpush1.xpose.msra.mxu0 %v812
      %816 = vmatprep.subr.mxu0 0.0
      %817 = vmatpush1.xpose.msra.mxu0 0.0
      %818 = vmatprep.subr.mxu0 0.0
      %819 = vmatpush1.xpose.msra.mxu0 0.0
      %820 = vmatprep.subr.mxu0 0.0
      %821 = vmatpush1.xpose.msra.mxu0 0.0
      %822 = vmatprep.subr.mxu0 0.0
      %823 = vmatpush1.xpose.msra.mxu0 0.0
      %824 = vmatprep.subr.mxu0 0.0
      %825 = vmatpush1.xpose.msra.mxu0 0.0
      %826 = vmatprep.subr.mxu0 0.0
      %827 = vmatpush1.xpose.msra.mxu0 0.0
      %828 = vmatprep.subr.mxu0 0.0
      %829 = vmatpush1.xpose.msra.mxu0 0.0
      %830 = vmatprep.subr.mxu0 0.0
      %831 = vmatpush1.xpose.msra.mxu0 0.0
      %832 = vmatprep.subr.mxu0 0.0
      %833 = vmatpush1.xpose.msra.mxu0 0.0
      %834 = vmatprep.subr.mxu0 0.0
      %835 = vmatpush1.xpose.msra.mxu0 0.0
      %836 = vmatprep.subr.mxu0 0.0
      %837 = vmatpush1.xpose.msra.mxu0 0.0
      %838 = vmatprep.subr.mxu0 0.0
      %839 = vmatpush1.xpose.msra.mxu0 0.0
      %840 = vmatprep.subr.mxu0 0.0
      %841 = vmatpush1.xpose.msra.mxu0 0.0
      %842 = vmatprep.subr.mxu0 0.0
      %843 = vmatpush1.xpose.msra.mxu0 0.0
      %844 = vmatprep.subr.mxu0 0.0
      %845 = vmatpush1.xpose.msra.mxu0 0.0
      %846 = vmatprep.subr.mxu0 0.0
      %847 = vmatpush1.xpose.msra.mxu0 0.0
      %848 = vmatprep.subr.mxu0 0.0
      %849 = vmatpush1.xpose.msra.mxu0 0.0
      %850 = vmatprep.subr.mxu0 0.0
      %851 = vmatpush1.xpose.msra.mxu0 0.0
      %852 = vmatprep.subr.mxu0 0.0
      %853 = vmatpush1.xpose.msra.mxu0 0.0
      %854 = vmatprep.subr.mxu0 0.0
      %855 = vmatpush1.xpose.msra.mxu0 0.0
      %856 = vmatprep.subr.mxu0 0.0
      %857 = vmatpush1.xpose.msra.mxu0 0.0
      %858 = vmatprep.subr.mxu0 0.0
      %859 = vmatpush1.xpose.msra.mxu0 0.0
      %860 = vmatprep.subr.mxu0 0.0
      %861 = vmatpush1.xpose.msra.mxu0 0.0
      %862 = vmatprep.subr.mxu0 0.0
      %863 = vmatpush1.xpose.msra.mxu0 0.0
      %864 = vmatprep.subr.mxu0 0.0
      %865 = vmatpush1.xpose.msra.mxu0 0.0
      %866 = vmatprep.subr.mxu0 0.0
      %867 = vmatpush1.xpose.msra.mxu0 0.0
      %868 = vmatprep.subr.mxu0 0.0
      %869 = vmatpush1.xpose.msra.mxu0 0.0
      %870 = vmatprep.subr.mxu0 0.0
      %871 = vmatpush1.xpose.msra.mxu0 0.0
      %872 = vmatprep.subr.mxu0 0.0
      %873 = vmatpush1.xpose.msra.mxu0 0.0
      %874 = vmatprep.subr.mxu0 0.0
      %875 = vmatpush1.xpose.msra.mxu0 0.0
      %876 = vmatprep.subr.mxu0 0.0
      %877 = vmatpush1.xpose.msra.mxu0 0.0
      %878 = vmatprep.mubr.f32.mxu0 0.0
      %879 = vmatmul.mubr.f32.gmra.mrb[0].mxu0 %v810
      %v880 = vpop.f32.mrb[0].mxu0
      %v881 = vadd.f32 0.0, %v880
      %v882 = vpop.f32.mrb[0].mxu0
      %883 = vdwg.mxu0
      %v884 = vmul.f32 %v881, 0.35355338
      %v886 = vlaneseq
      %v887 = vshrl.u32 %v886, 7
      %v888 = vsub.s32 0, %v887
      %v889 = vrot.slane %v689, %v888
      %v891 = vadd.f32 %v884, %v889
      %v892 = vsel %vm809, %v891, -inf
      %893 = vmax.xlane.f32.xlu0 %v892
      %v894 = vpop.xlane.xlu0 %893
      %v895 = vsub.f32 %v891, %v894
      %v896 = vmul.f32 %v895, 1.442695
      %v897 = vpow.pop %v896
      %v898 = vsel %vm809, %v897, 0.0
      %899 = vadd.xlane.f32.xlu0 %v898
      %v900 = vpop.xlane.xlu0 %899
      %v901 = vrcp.pop %v900
      %v902 = vmul.f32 %v897, %v901
      %903 = vrot.lane.b32.xlu0 %v803, 64
      %v904 = vpop.permute.xlu0 %903
      %v907 = vsel %vm809, %v902, 0
      %909 = vmatprep.subr.mxu0 0.0
      %910 = vmatpush1.msra.mxu0 %v904
      %911 = vmatprep.subr.mxu0 0.0
      %912 = vmatpush1.msra.mxu0 0.0
      %913 = vmatprep.subr.mxu0 0.0
      %914 = vmatpush1.msra.mxu0 0.0
      %915 = vmatprep.subr.mxu0 0.0
      %916 = vmatpush1.msra.mxu0 0.0
      %917 = vmatprep.subr.mxu0 0.0
      %918 = vmatpush1.msra.mxu0 0.0
      %919 = vmatprep.subr.mxu0 0.0
      %920 = vmatpush1.msra.mxu0 0.0
      %921 = vmatprep.subr.mxu0 0.0
      %922 = vmatpush1.msra.mxu0 0.0
      %923 = vmatprep.subr.mxu0 0.0
      %924 = vmatpush1.msra.mxu0 0.0
      %925 = vmatprep.subr.mxu0 0.0
      %926 = vmatpush1.msra.mxu0 0.0
      %927 = vmatprep.subr.mxu0 0.0
      %928 = vmatpush1.msra.mxu0 0.0
      %929 = vmatprep.subr.mxu0 0.0
      %930 = vmatpush1.msra.mxu0 0.0
      %931 = vmatprep.subr.mxu0 0.0
      %932 = vmatpush1.msra.mxu0 0.0
      %933 = vmatprep.subr.mxu0 0.0
      %934 = vmatpush1.msra.mxu0 0.0
      %935 = vmatprep.subr.mxu0 0.0
      %936 = vmatpush1.msra.mxu0 0.0
      %937 = vmatprep.subr.mxu0 0.0
      %938 = vmatpush1.msra.mxu0 0.0
      %939 = vmatprep.subr.mxu0 0.0
      %940 = vmatpush1.msra.mxu0 0.0
      %941 = vmatprep.subr.mxu0 0.0
      %942 = vmatpush1.msra.mxu0 0.0
      %943 = vmatprep.subr.mxu0 0.0
      %944 = vmatpush1.msra.mxu0 0.0
      %945 = vmatprep.subr.mxu0 0.0
      %946 = vmatpush1.msra.mxu0 0.0
      %947 = vmatprep.subr.mxu0 0.0
      %948 = vmatpush1.msra.mxu0 0.0
      %949 = vmatprep.subr.mxu0 0.0
      %950 = vmatpush1.msra.mxu0 0.0
      %951 = vmatprep.subr.mxu0 0.0
      %952 = vmatpush1.msra.mxu0 0.0
      %953 = vmatprep.subr.mxu0 0.0
      %954 = vmatpush1.msra.mxu0 0.0
      %955 = vmatprep.subr.mxu0 0.0
      %956 = vmatpush1.msra.mxu0 0.0
      %957 = vmatprep.subr.mxu0 0.0
      %958 = vmatpush1.msra.mxu0 0.0
      %959 = vmatprep.subr.mxu0 0.0
      %960 = vmatpush1.msra.mxu0 0.0
      %961 = vmatprep.subr.mxu0 0.0
      %962 = vmatpush1.msra.mxu0 0.0
      %963 = vmatprep.subr.mxu0 0.0
      %964 = vmatpush1.msra.mxu0 0.0
      %965 = vmatprep.subr.mxu0 0.0
      %966 = vmatpush1.msra.mxu0 0.0
      %967 = vmatprep.subr.mxu0 0.0
      %968 = vmatpush1.msra.mxu0 0.0
      %969 = vmatprep.subr.mxu0 0.0
      %970 = vmatpush1.msra.mxu0 0.0
      %971 = vmatprep.subr.mxu0 0.0
      %972 = vmatpush1.msra.mxu0 0.0
      %973 = vmatprep.mubr.f32.mxu0 0.0
      %974 = vmatmul.mubr.f32.gmra.mrb[0].mxu0 %v907
      %v975 = vpop.f32.mrb[0].mxu0
      %v976 = vadd.f32 0.0, %v975
      %v977 = vpop.f32.mrb[0].mxu0
      %978 = vdwg.mxu0
      %979 = vrot.lane.b32.xlu0 %v803, 120
      %v980 = vpop.permute.xlu0 %979
      %981 = vrot.lane.b32.xlu0 %v803, 88
      %v982 = vpop.permute.xlu0 %981
      %v983 = vsel %vm809, %v980, 0
      %v985 = vsel %vm809, %v982, 0
      %987 = vmatprep.subr.mxu0 0.0
      %988 = vmatpush1.xpose.msra.mxu0 %v985
      %989 = vmatprep.subr.mxu0 0.0
      %990 = vmatpush1.xpose.msra.mxu0 0.0
      %991 = vmatprep.subr.mxu0 0.0
      %992 = vmatpush1.xpose.msra.mxu0 0.0
      %993 = vmatprep.subr.mxu0 0.0
      %994 = vmatpush1.xpose.msra.mxu0 0.0
      %995 = vmatprep.subr.mxu0 0.0
      %996 = vmatpush1.xpose.msra.mxu0 0.0
      %997 = vmatprep.subr.mxu0 0.0
      %998 = vmatpush1.xpose.msra.mxu0 0.0
      %999 = vmatprep.subr.mxu0 0.0
      %1000 = vmatpush1.xpose.msra.mxu0 0.0
      %1001 = vmatprep.subr.mxu0 0.0
      %1002 = vmatpush1.xpose.msra.mxu0 0.0
      %1003 = vmatprep.subr.mxu0 0.0
      %1004 = vmatpush1.xpose.msra.mxu0 0.0
      %1005 = vmatprep.subr.mxu0 0.0
      %1006 = vmatpush1.xpose.msra.mxu0 0.0
      %1007 = vmatprep.subr.mxu0 0.0
      %1008 = vmatpush1.xpose.msra.mxu0 0.0
      %1009 = vmatprep.subr.mxu0 0.0
      %1010 = vmatpush1.xpose.msra.mxu0 0.0
      %1011 = vmatprep.subr.mxu0 0.0
      %1012 = vmatpush1.xpose.msra.mxu0 0.0
      %1013 = vmatprep.subr.mxu0 0.0
      %1014 = vmatpush1.xpose.msra.mxu0 0.0
      %1015 = vmatprep.subr.mxu0 0.0
      %1016 = vmatpush1.xpose.msra.mxu0 0.0
      %1017 = vmatprep.subr.mxu0 0.0
      %1018 = vmatpush1.xpose.msra.mxu0 0.0
      %1019 = vmatprep.subr.mxu0 0.0
      %1020 = vmatpush1.xpose.msra.mxu0 0.0
      %1021 = vmatprep.subr.mxu0 0.0
      %1022 = vmatpush1.xpose.msra.mxu0 0.0
      %1023 = vmatprep.subr.mxu0 0.0
      %1024 = vmatpush1.xpose.msra.mxu0 0.0
      %1025 = vmatprep.subr.mxu0 0.0
      %1026 = vmatpush1.xpose.msra.mxu0 0.0
      %1027 = vmatprep.subr.mxu0 0.0
      %1028 = vmatpush1.xpose.msra.mxu0 0.0
      %1029 = vmatprep.subr.mxu0 0.0
      %1030 = vmatpush1.xpose.msra.mxu0 0.0
      %1031 = vmatprep.subr.mxu0 0.0
      %1032 = vmatpush1.xpose.msra.mxu0 0.0
      %1033 = vmatprep.subr.mxu0 0.0
      %1034 = vmatpush1.xpose.msra.mxu0 0.0
      %1035 = vmatprep.subr.mxu0 0.0
      %1036 = vmatpush1.xpose.msra.mxu0 0.0
      %1037 = vmatprep.subr.mxu0 0.0
      %1038 = vmatpush1.xpose.msra.mxu0 0.0
      %1039 = vmatprep.subr.mxu0 0.0
      %1040 = vmatpush1.xpose.msra.mxu0 0.0
      %1041 = vmatprep.subr.mxu0 0.0
      %1042 = vmatpush1.xpose.msra.mxu0 0.0
      %1043 = vmatprep.subr.mxu0 0.0
      %1044 = vmatpush1.xpose.msra.mxu0 0.0
      %1045 = vmatprep.subr.mxu0 0.0
      %1046 = vmatpush1.xpose.msra.mxu0 0.0
      %1047 = vmatprep.subr.mxu0 0.0
      %1048 = vmatpush1.xpose.msra.mxu0 0.0
      %1049 = vmatprep.subr.mxu0 0.0
      %1050 = vmatpush1.xpose.msra.mxu0 0.0
      %1051 = vmatprep.mubr.f32.mxu0 0.0
      %1052 = vmatmul.mubr.f32.gmra.mrb[0].mxu0 %v983
      %v1053 = vpop.f32.mrb[0].mxu0
      %v1054 = vadd.f32 0.0, %v1053
      %v1055 = vpop.f32.mrb[0].mxu0
      %1056 = vdwg.mxu0
      %v1057 = vmul.f32 %v1054, 0.35355338
      %v1058 = vadd.f32 %v1057, %v889
      %v1059 = vsel %vm809, %v1058, -inf
      %1060 = vmax.xlane.f32.xlu0 %v1059
      %v1061 = vpop.xlane.xlu0 %1060
      %v1062 = vsub.f32 %v1058, %v1061
      %v1063 = vmul.f32 %v1062, 1.442695
      %v1064 = vpow.pop %v1063
      %v1065 = vsel %vm809, %v1064, 0.0
      %1066 = vadd.xlane.f32.xlu0 %v1065
      %v1067 = vpop.xlane.xlu0 %1066
      %v1068 = vrcp.pop %v1067
      %v1069 = vmul.f32 %v1064, %v1068
      %1070 = vrot.lane.b32.xlu0 %v803, 56
      %v1071 = vpop.permute.xlu0 %1070
      %v1074 = vsel %vm809, %v1069, 0
      %1076 = vmatprep.subr.mxu0 0.0
      %1077 = vmatpush1.msra.mxu0 %v1071
      %1078 = vmatprep.subr.mxu0 0.0
      %1079 = vmatpush1.msra.mxu0 0.0
      %1080 = vmatprep.subr.mxu0 0.0
      %1081 = vmatpush1.msra.mxu0 0.0
      %1082 = vmatprep.subr.mxu0 0.0
      %1083 = vmatpush1.msra.mxu0 0.0
      %1084 = vmatprep.subr.mxu0 0.0
      %1085 = vmatpush1.msra.mxu0 0.0
      %1086 = vmatprep.subr.mxu0 0.0
      %1087 = vmatpush1.msra.mxu0 0.0
      %1088 = vmatprep.subr.mxu0 0.0
      %1089 = vmatpush1.msra.mxu0 0.0
      %1090 = vmatprep.subr.mxu0 0.0
      %1091 = vmatpush1.msra.mxu0 0.0
      %1092 = vmatprep.subr.mxu0 0.0
      %1093 = vmatpush1.msra.mxu0 0.0
      %1094 = vmatprep.subr.mxu0 0.0
      %1095 = vmatpush1.msra.mxu0 0.0
      %1096 = vmatprep.subr.mxu0 0.0
      %1097 = vmatpush1.msra.mxu0 0.0
      %1098 = vmatprep.subr.mxu0 0.0
      %1099 = vmatpush1.msra.mxu0 0.0
      %1100 = vmatprep.subr.mxu0 0.0
      %1101 = vmatpush1.msra.mxu0 0.0
      %1102 = vmatprep.subr.mxu0 0.0
      %1103 = vmatpush1.msra.mxu0 0.0
      %1104 = vmatprep.subr.mxu0 0.0
      %1105 = vmatpush1.msra.mxu0 0.0
      %1106 = vmatprep.subr.mxu0 0.0
      %1107 = vmatpush1.msra.mxu0 0.0
      %1108 = vmatprep.subr.mxu0 0.0
      %1109 = vmatpush1.msra.mxu0 0.0
      %1110 = vmatprep.subr.mxu0 0.0
      %1111 = vmatpush1.msra.mxu0 0.0
      %1112 = vmatprep.subr.mxu0 0.0
      %1113 = vmatpush1.msra.mxu0 0.0
      %1114 = vmatprep.subr.mxu0 0.0
      %1115 = vmatpush1.msra.mxu0 0.0
      %1116 = vmatprep.subr.mxu0 0.0
      %1117 = vmatpush1.msra.mxu0 0.0
      %1118 = vmatprep.subr.mxu0 0.0
      %1119 = vmatpush1.msra.mxu0 0.0
      %1120 = vmatprep.subr.mxu0 0.0
      %1121 = vmatpush1.msra.mxu0 0.0
      %1122 = vmatprep.subr.mxu0 0.0
      %1123 = vmatpush1.msra.mxu0 0.0
      %1124 = vmatprep.subr.mxu0 0.0
      %1125 = vmatpush1.msra.mxu0 0.0
      %1126 = vmatprep.subr.mxu0 0.0
      %1127 = vmatpush1.msra.mxu0 0.0
      %1128 = vmatprep.subr.mxu0 0.0
      %1129 = vmatpush1.msra.mxu0 0.0
      %1130 = vmatprep.subr.mxu0 0.0
      %1131 = vmatpush1.msra.mxu0 0.0
      %1132 = vmatprep.subr.mxu0 0.0
      %1133 = vmatpush1.msra.mxu0 0.0
      %1134 = vmatprep.subr.mxu0 0.0
      %1135 = vmatpush1.msra.mxu0 0.0
      %1136 = vmatprep.subr.mxu0 0.0
      %1137 = vmatpush1.msra.mxu0 0.0
      %1138 = vmatprep.subr.mxu0 0.0
      %1139 = vmatpush1.msra.mxu0 0.0
      %1140 = vmatprep.mubr.f32.mxu0 0.0
      %1141 = vmatmul.mubr.f32.gmra.mrb[0].mxu0 %v1074
      %v1142 = vpop.f32.mrb[0].mxu0
      %v1143 = vadd.f32 0.0, %v1142
      %v1144 = vpop.f32.mrb[0].mxu0
      %1145 = vdwg.mxu0
      %v1147 = vsel %vm809, %v1143, 0
      %1149 = vmatprep.subr.mxu0 0.0
      %1150 = vmatpush1.msra.mxu0 %v696
      %1151 = vmatprep.subr.mxu0 0.0
      %1152 = vmatpush1.msra.mxu0 0.0
      %1153 = vmatprep.subr.mxu0 0.0
      %1154 = vmatpush1.msra.mxu0 0.0
      %1155 = vmatprep.subr.mxu0 0.0
      %1156 = vmatpush1.msra.mxu0 0.0
      %1157 = vmatprep.subr.mxu0 0.0
      %1158 = vmatpush1.msra.mxu0 0.0
      %1159 = vmatprep.subr.mxu0 0.0
      %1160 = vmatpush1.msra.mxu0 0.0
      %1161 = vmatprep.subr.mxu0 0.0
      %1162 = vmatpush1.msra.mxu0 0.0
      %1163 = vmatprep.subr.mxu0 0.0
      %1164 = vmatpush1.msra.mxu0 0.0
      %1165 = vmatprep.subr.mxu0 0.0
      %1166 = vmatpush1.msra.mxu0 0.0
      %1167 = vmatprep.subr.mxu0 0.0
      %1168 = vmatpush1.msra.mxu0 0.0
      %1169 = vmatprep.subr.mxu0 0.0
      %1170 = vmatpush1.msra.mxu0 0.0
      %1171 = vmatprep.subr.mxu0 0.0
      %1172 = vmatpush1.msra.mxu0 0.0
      %1173 = vmatprep.subr.mxu0 0.0
      %1174 = vmatpush1.msra.mxu0 0.0
      %1175 = vmatprep.subr.mxu0 0.0
      %1176 = vmatpush1.msra.mxu0 0.0
      %1177 = vmatprep.subr.mxu0 0.0
      %1178 = vmatpush1.msra.mxu0 0.0
      %1179 = vmatprep.subr.mxu0 0.0
      %1180 = vmatpush1.msra.mxu0 0.0
      %1181 = vmatprep.subr.mxu0 0.0
      %1182 = vmatpush1.msra.mxu0 0.0
      %1183 = vmatprep.subr.mxu0 0.0
      %1184 = vmatpush1.msra.mxu0 0.0
      %1185 = vmatprep.subr.mxu0 0.0
      %1186 = vmatpush1.msra.mxu0 0.0
      %1187 = vmatprep.subr.mxu0 0.0
      %1188 = vmatpush1.msra.mxu0 0.0
      %1189 = vmatprep.subr.mxu0 0.0
      %1190 = vmatpush1.msra.mxu0 0.0
      %1191 = vmatprep.subr.mxu0 0.0
      %1192 = vmatpush1.msra.mxu0 0.0
      %1193 = vmatprep.subr.mxu0 0.0
      %1194 = vmatpush1.msra.mxu0 0.0
      %1195 = vmatprep.subr.mxu0 0.0
      %1196 = vmatpush1.msra.mxu0 0.0
      %1197 = vmatprep.subr.mxu0 0.0
      %1198 = vmatpush1.msra.mxu0 0.0
      %1199 = vmatprep.subr.mxu0 0.0
      %1200 = vmatpush1.msra.mxu0 0.0
      %1201 = vmatprep.subr.mxu0 0.0
      %1202 = vmatpush1.msra.mxu0 0.0
      %1203 = vmatprep.subr.mxu0 0.0
      %1204 = vmatpush1.msra.mxu0 0.0
      %1205 = vmatprep.subr.mxu0 0.0
      %1206 = vmatpush1.msra.mxu0 0.0
      %1207 = vmatprep.subr.mxu0 0.0
      %1208 = vmatpush1.msra.mxu0 0.0
      %1209 = vmatprep.subr.mxu0 0.0
      %1210 = vmatpush1.msra.mxu0 0.0
      %1211 = vmatprep.subr.mxu0 0.0
      %1212 = vmatpush1.msra.mxu0 0.0
      %1213 = vmatprep.mubr.f32.mxu0 0.0
      %1214 = vmatmul.mubr.f32.gmra.mrb[0].mxu0 %v1147
      %v1215 = vpop.f32.mrb[0].mxu0
      %v1216 = vadd.f32 0.0, %v1215
      %v1217 = vpop.f32.mrb[0].mxu0
      %1218 = vdwg.mxu0
      %v1220 = vsel %vm809, %v976, 0
      %1222 = vmatprep.subr.mxu0 0.0
      %1223 = vmatpush1.msra.mxu0 %v695
      %1224 = vmatprep.subr.mxu0 0.0
      %1225 = vmatpush1.msra.mxu0 0.0
      %1226 = vmatprep.subr.mxu0 0.0
      %1227 = vmatpush1.msra.mxu0 0.0
      %1228 = vmatprep.subr.mxu0 0.0
      %1229 = vmatpush1.msra.mxu0 0.0
      %1230 = vmatprep.subr.mxu0 0.0
      %1231 = vmatpush1.msra.mxu0 0.0
      %1232 = vmatprep.subr.mxu0 0.0
      %1233 = vmatpush1.msra.mxu0 0.0
      %1234 = vmatprep.subr.mxu0 0.0
      %1235 = vmatpush1.msra.mxu0 0.0
      %1236 = vmatprep.subr.mxu0 0.0
      %1237 = vmatpush1.msra.mxu0 0.0
      %1238 = vmatprep.subr.mxu0 0.0
      %1239 = vmatpush1.msra.mxu0 0.0
      %1240 = vmatprep.subr.mxu0 0.0
      %1241 = vmatpush1.msra.mxu0 0.0
      %1242 = vmatprep.subr.mxu0 0.0
      %1243 = vmatpush1.msra.mxu0 0.0
      %1244 = vmatprep.subr.mxu0 0.0
      %1245 = vmatpush1.msra.mxu0 0.0
      %1246 = vmatprep.subr.mxu0 0.0
      %1247 = vmatpush1.msra.mxu0 0.0
      %1248 = vmatprep.subr.mxu0 0.0
      %1249 = vmatpush1.msra.mxu0 0.0
      %1250 = vmatprep.subr.mxu0 0.0
      %1251 = vmatpush1.msra.mxu0 0.0
      %1252 = vmatprep.subr.mxu0 0.0
      %1253 = vmatpush1.msra.mxu0 0.0
      %1254 = vmatprep.subr.mxu0 0.0
      %1255 = vmatpush1.msra.mxu0 0.0
      %1256 = vmatprep.subr.mxu0 0.0
      %1257 = vmatpush1.msra.mxu0 0.0
      %1258 = vmatprep.subr.mxu0 0.0
      %1259 = vmatpush1.msra.mxu0 0.0
      %1260 = vmatprep.subr.mxu0 0.0
      %1261 = vmatpush1.msra.mxu0 0.0
      %1262 = vmatprep.subr.mxu0 0.0
      %1263 = vmatpush1.msra.mxu0 0.0
      %1264 = vmatprep.subr.mxu0 0.0
      %1265 = vmatpush1.msra.mxu0 0.0
      %1266 = vmatprep.subr.mxu0 0.0
      %1267 = vmatpush1.msra.mxu0 0.0
      %1268 = vmatprep.subr.mxu0 0.0
      %1269 = vmatpush1.msra.mxu0 0.0
      %1270 = vmatprep.subr.mxu0 0.0
      %1271 = vmatpush1.msra.mxu0 0.0
      %1272 = vmatprep.subr.mxu0 0.0
      %1273 = vmatpush1.msra.mxu0 0.0
      %1274 = vmatprep.subr.mxu0 0.0
      %1275 = vmatpush1.msra.mxu0 0.0
      %1276 = vmatprep.subr.mxu0 0.0
      %1277 = vmatpush1.msra.mxu0 0.0
      %1278 = vmatprep.subr.mxu0 0.0
      %1279 = vmatpush1.msra.mxu0 0.0
      %1280 = vmatprep.subr.mxu0 0.0
      %1281 = vmatpush1.msra.mxu0 0.0
      %1282 = vmatprep.subr.mxu0 0.0
      %1283 = vmatpush1.msra.mxu0 0.0
      %1284 = vmatprep.subr.mxu0 0.0
      %1285 = vmatpush1.msra.mxu0 0.0
      %1286 = vmatprep.mubr.f32.mxu0 0.0
      %1287 = vmatmul.mubr.f32.gmra.mrb[0].mxu0 %v1220
      %v1288 = vpop.f32.mrb[0].mxu0
      %v1289 = vadd.f32 %v1216, %v1288
      %v1290 = vpop.f32.mrb[0].mxu0
      %1291 = vdwg.mxu0
      %1292 = vrot.lane.b32.xlu0 %v803, 112
      %v1293 = vpop.permute.xlu0 %1292
      %1294 = vrot.lane.b32.xlu0 %v803, 80
      %v1295 = vpop.permute.xlu0 %1294
      %v1296 = vsel %vm809, %v1293, 0
      %v1298 = vsel %vm809, %v1295, 0
      %1300 = vmatprep.subr.mxu0 0.0
      %1301 = vmatpush1.xpose.msra.mxu0 %v1298
      %1302 = vmatprep.subr.mxu0 0.0
      %1303 = vmatpush1.xpose.msra.mxu0 0.0
      %1304 = vmatprep.subr.mxu0 0.0
      %1305 = vmatpush1.xpose.msra.mxu0 0.0
      %1306 = vmatprep.subr.mxu0 0.0
      %1307 = vmatpush1.xpose.msra.mxu0 0.0
      %1308 = vmatprep.subr.mxu0 0.0
      %1309 = vmatpush1.xpose.msra.mxu0 0.0
      %1310 = vmatprep.subr.mxu0 0.0
      %1311 = vmatpush1.xpose.msra.mxu0 0.0
      %1312 = vmatprep.subr.mxu0 0.0
      %1313 = vmatpush1.xpose.msra.mxu0 0.0
      %1314 = vmatprep.subr.mxu0 0.0
      %1315 = vmatpush1.xpose.msra.mxu0 0.0
      %1316 = vmatprep.subr.mxu0 0.0
      %1317 = vmatpush1.xpose.msra.mxu0 0.0
      %1318 = vmatprep.subr.mxu0 0.0
      %1319 = vmatpush1.xpose.msra.mxu0 0.0
      %1320 = vmatprep.subr.mxu0 0.0
      %1321 = vmatpush1.xpose.msra.mxu0 0.0
      %1322 = vmatprep.subr.mxu0 0.0
      %1323 = vmatpush1.xpose.msra.mxu0 0.0
      %1324 = vmatprep.subr.mxu0 0.0
      %1325 = vmatpush1.xpose.msra.mxu0 0.0
      %1326 = vmatprep.subr.mxu0 0.0
      %1327 = vmatpush1.xpose.msra.mxu0 0.0
      %1328 = vmatprep.subr.mxu0 0.0
      %1329 = vmatpush1.xpose.msra.mxu0 0.0
      %1330 = vmatprep.subr.mxu0 0.0
      %1331 = vmatpush1.xpose.msra.mxu0 0.0
      %1332 = vmatprep.subr.mxu0 0.0
      %1333 = vmatpush1.xpose.msra.mxu0 0.0
      %1334 = vmatprep.subr.mxu0 0.0
      %1335 = vmatpush1.xpose.msra.mxu0 0.0
      %1336 = vmatprep.subr.mxu0 0.0
      %1337 = vmatpush1.xpose.msra.mxu0 0.0
      %1338 = vmatprep.subr.mxu0 0.0
      %1339 = vmatpush1.xpose.msra.mxu0 0.0
      %1340 = vmatprep.subr.mxu0 0.0
      %1341 = vmatpush1.xpose.msra.mxu0 0.0
      %1342 = vmatprep.subr.mxu0 0.0
      %1343 = vmatpush1.xpose.msra.mxu0 0.0
      %1344 = vmatprep.subr.mxu0 0.0
      %1345 = vmatpush1.xpose.msra.mxu0 0.0
      %1346 = vmatprep.subr.mxu0 0.0
      %1347 = vmatpush1.xpose.msra.mxu0 0.0
      %1348 = vmatprep.subr.mxu0 0.0
      %1349 = vmatpush1.xpose.msra.mxu0 0.0
      %1350 = vmatprep.subr.mxu0 0.0
      %1351 = vmatpush1.xpose.msra.mxu0 0.0
      %1352 = vmatprep.subr.mxu0 0.0
      %1353 = vmatpush1.xpose.msra.mxu0 0.0
      %1354 = vmatprep.subr.mxu0 0.0
      %1355 = vmatpush1.xpose.msra.mxu0 0.0
      %1356 = vmatprep.subr.mxu0 0.0
      %1357 = vmatpush1.xpose.msra.mxu0 0.0
      %1358 = vmatprep.subr.mxu0 0.0
      %1359 = vmatpush1.xpose.msra.mxu0 0.0
      %1360 = vmatprep.subr.mxu0 0.0
      %1361 = vmatpush1.xpose.msra.mxu0 0.0
      %1362 = vmatprep.subr.mxu0 0.0
      %1363 = vmatpush1.xpose.msra.mxu0 0.0
      %1364 = vmatprep.mubr.f32.mxu0 0.0
      %1365 = vmatmul.mubr.f32.gmra.mrb[0].mxu0 %v1296
      %v1366 = vpop.f32.mrb[0].mxu0
      %v1367 = vadd.f32 0.0, %v1366
      %v1368 = vpop.f32.mrb[0].mxu0
      %1369 = vdwg.mxu0
      %v1370 = vmul.f32 %v1367, 0.35355338
      %v1371 = vadd.f32 %v1370, %v889
      %v1372 = vsel %vm809, %v1371, -inf
      %1373 = vmax.xlane.f32.xlu0 %v1372
      %v1374 = vpop.xlane.xlu0 %1373
      %v1375 = vsub.f32 %v1371, %v1374
      %v1376 = vmul.f32 %v1375, 1.442695
      %v1377 = vpow.pop %v1376
      %v1378 = vsel %vm809, %v1377, 0.0
      %1379 = vadd.xlane.f32.xlu0 %v1378
      %v1380 = vpop.xlane.xlu0 %1379
      %v1381 = vrcp.pop %v1380
      %v1382 = vmul.f32 %v1377, %v1381
      %1383 = vrot.lane.b32.xlu0 %v803, 48
      %v1384 = vpop.permute.xlu0 %1383
      %v1387 = vsel %vm809, %v1382, 0
      %1389 = vmatprep.subr.mxu0 0.0
      %1390 = vmatpush1.msra.mxu0 %v1384
      %1391 = vmatprep.subr.mxu0 0.0
      %1392 = vmatpush1.msra.mxu0 0.0
      %1393 = vmatprep.subr.mxu0 0.0
      %1394 = vmatpush1.msra.mxu0 0.0
      %1395 = vmatprep.subr.mxu0 0.0
      %1396 = vmatpush1.msra.mxu0 0.0
      %1397 = vmatprep.subr.mxu0 0.0
      %1398 = vmatpush1.msra.mxu0 0.0
      %1399 = vmatprep.subr.mxu0 0.0
      %1400 = vmatpush1.msra.mxu0 0.0
      %1401 = vmatprep.subr.mxu0 0.0
      %1402 = vmatpush1.msra.mxu0 0.0
      %1403 = vmatprep.subr.mxu0 0.0
      %1404 = vmatpush1.msra.mxu0 0.0
      %1405 = vmatprep.subr.mxu0 0.0
      %1406 = vmatpush1.msra.mxu0 0.0
      %1407 = vmatprep.subr.mxu0 0.0
      %1408 = vmatpush1.msra.mxu0 0.0
      %1409 = vmatprep.subr.mxu0 0.0
      %1410 = vmatpush1.msra.mxu0 0.0
      %1411 = vmatprep.subr.mxu0 0.0
      %1412 = vmatpush1.msra.mxu0 0.0
      %1413 = vmatprep.subr.mxu0 0.0
      %1414 = vmatpush1.msra.mxu0 0.0
      %1415 = vmatprep.subr.mxu0 0.0
      %1416 = vmatpush1.msra.mxu0 0.0
      %1417 = vmatprep.subr.mxu0 0.0
      %1418 = vmatpush1.msra.mxu0 0.0
      %1419 = vmatprep.subr.mxu0 0.0
      %1420 = vmatpush1.msra.mxu0 0.0
      %1421 = vmatprep.subr.mxu0 0.0
      %1422 = vmatpush1.msra.mxu0 0.0
      %1423 = vmatprep.subr.mxu0 0.0
      %1424 = vmatpush1.msra.mxu0 0.0
      %1425 = vmatprep.subr.mxu0 0.0
      %1426 = vmatpush1.msra.mxu0 0.0
      %1427 = vmatprep.subr.mxu0 0.0
      %1428 = vmatpush1.msra.mxu0 0.0
      %1429 = vmatprep.subr.mxu0 0.0
      %1430 = vmatpush1.msra.mxu0 0.0
      %1431 = vmatprep.subr.mxu0 0.0
      %1432 = vmatpush1.msra.mxu0 0.0
      %1433 = vmatprep.subr.mxu0 0.0
      %1434 = vmatpush1.msra.mxu0 0.0
      %1435 = vmatprep.subr.mxu0 0.0
      %1436 = vmatpush1.msra.mxu0 0.0
      %1437 = vmatprep.subr.mxu0 0.0
      %1438 = vmatpush1.msra.mxu0 0.0
      %1439 = vmatprep.subr.mxu0 0.0
      %1440 = vmatpush1.msra.mxu0 0.0
      %1441 = vmatprep.subr.mxu0 0.0
      %1442 = vmatpush1.msra.mxu0 0.0
      %1443 = vmatprep.subr.mxu0 0.0
      %1444 = vmatpush1.msra.mxu0 0.0
      %1445 = vmatprep.subr.mxu0 0.0
      %1446 = vmatpush1.msra.mxu0 0.0
      %1447 = vmatprep.subr.mxu0 0.0
      %1448 = vmatpush1.msra.mxu0 0.0
      %1449 = vmatprep.subr.mxu0 0.0
      %1450 = vmatpush1.msra.mxu0 0.0
      %1451 = vmatprep.subr.mxu0 0.0
      %1452 = vmatpush1.msra.mxu0 0.0
      %1453 = vmatprep.mubr.f32.mxu0 0.0
      %1454 = vmatmul.mubr.f32.gmra.mrb[0].mxu0 %v1387
      %v1455 = vpop.f32.mrb[0].mxu0
      %v1456 = vadd.f32 0.0, %v1455
      %v1457 = vpop.f32.mrb[0].mxu0
      %1458 = vdwg.mxu0
      %v1460 = vsel %vm809, %v1456, 0
      %1462 = vmatprep.subr.mxu0 0.0
      %1463 = vmatpush1.msra.mxu0 %v697
      %1464 = vmatprep.subr.mxu0 0.0
      %1465 = vmatpush1.msra.mxu0 0.0
      %1466 = vmatprep.subr.mxu0 0.0
      %1467 = vmatpush1.msra.mxu0 0.0
      %1468 = vmatprep.subr.mxu0 0.0
      %1469 = vmatpush1.msra.mxu0 0.0
      %1470 = vmatprep.subr.mxu0 0.0
      %1471 = vmatpush1.msra.mxu0 0.0
      %1472 = vmatprep.subr.mxu0 0.0
      %1473 = vmatpush1.msra.mxu0 0.0
      %1474 = vmatprep.subr.mxu0 0.0
      %1475 = vmatpush1.msra.mxu0 0.0
      %1476 = vmatprep.subr.mxu0 0.0
      %1477 = vmatpush1.msra.mxu0 0.0
      %1478 = vmatprep.subr.mxu0 0.0
      %1479 = vmatpush1.msra.mxu0 0.0
      %1480 = vmatprep.subr.mxu0 0.0
      %1481 = vmatpush1.msra.mxu0 0.0
      %1482 = vmatprep.subr.mxu0 0.0
      %1483 = vmatpush1.msra.mxu0 0.0
      %1484 = vmatprep.subr.mxu0 0.0
      %1485 = vmatpush1.msra.mxu0 0.0
      %1486 = vmatprep.subr.mxu0 0.0
      %1487 = vmatpush1.msra.mxu0 0.0
      %1488 = vmatprep.subr.mxu0 0.0
      %1489 = vmatpush1.msra.mxu0 0.0
      %1490 = vmatprep.subr.mxu0 0.0
      %1491 = vmatpush1.msra.mxu0 0.0
      %1492 = vmatprep.subr.mxu0 0.0
      %1493 = vmatpush1.msra.mxu0 0.0
      %1494 = vmatprep.subr.mxu0 0.0
      %1495 = vmatpush1.msra.mxu0 0.0
      %1496 = vmatprep.subr.mxu0 0.0
      %1497 = vmatpush1.msra.mxu0 0.0
      %1498 = vmatprep.subr.mxu0 0.0
      %1499 = vmatpush1.msra.mxu0 0.0
      %1500 = vmatprep.subr.mxu0 0.0
      %1501 = vmatpush1.msra.mxu0 0.0
      %1502 = vmatprep.subr.mxu0 0.0
      %1503 = vmatpush1.msra.mxu0 0.0
      %1504 = vmatprep.subr.mxu0 0.0
      %1505 = vmatpush1.msra.mxu0 0.0
      %1506 = vmatprep.subr.mxu0 0.0
      %1507 = vmatpush1.msra.mxu0 0.0
      %1508 = vmatprep.subr.mxu0 0.0
      %1509 = vmatpush1.msra.mxu0 0.0
      %1510 = vmatprep.subr.mxu0 0.0
      %1511 = vmatpush1.msra.mxu0 0.0
      %1512 = vmatprep.subr.mxu0 0.0
      %1513 = vmatpush1.msra.mxu0 0.0
      %1514 = vmatprep.subr.mxu0 0.0
      %1515 = vmatpush1.msra.mxu0 0.0
      %1516 = vmatprep.subr.mxu0 0.0
      %1517 = vmatpush1.msra.mxu0 0.0
      %1518 = vmatprep.subr.mxu0 0.0
      %1519 = vmatpush1.msra.mxu0 0.0
      %1520 = vmatprep.subr.mxu0 0.0
      %1521 = vmatpush1.msra.mxu0 0.0
      %1522 = vmatprep.subr.mxu0 0.0
      %1523 = vmatpush1.msra.mxu0 0.0
      %1524 = vmatprep.subr.mxu0 0.0
      %1525 = vmatpush1.msra.mxu0 0.0
      %1526 = vmatprep.mubr.f32.mxu0 0.0
      %1527 = vmatmul.mubr.f32.gmra.mrb[0].mxu0 %v1460
      %v1528 = vpop.f32.mrb[0].mxu0
      %v1529 = vadd.f32 0.0, %v1528
      %v1530 = vpop.f32.mrb[0].mxu0
      %1531 = vdwg.mxu0
      %v1532 = vadd.f32 %v1289, %v1529
      %1533 = vrot.lane.b32.xlu0 %v803, 104
      %v1534 = vpop.permute.xlu0 %1533
      %1535 = vrot.lane.b32.xlu0 %v803, 72
      %v1536 = vpop.permute.xlu0 %1535
      %v1537 = vsel %vm809, %v1534, 0
      %v1539 = vsel %vm809, %v1536, 0
      %1541 = vmatprep.subr.mxu0 0.0
      %1542 = vmatpush1.xpose.msra.mxu0 %v1539
      %1543 = vmatprep.subr.mxu0 0.0
      %1544 = vmatpush1.xpose.msra.mxu0 0.0
      %1545 = vmatprep.subr.mxu0 0.0
      %1546 = vmatpush1.xpose.msra.mxu0 0.0
      %1547 = vmatprep.subr.mxu0 0.0
      %1548 = vmatpush1.xpose.msra.mxu0 0.0
      %1549 = vmatprep.subr.mxu0 0.0
      %1550 = vmatpush1.xpose.msra.mxu0 0.0
      %1551 = vmatprep.subr.mxu0 0.0
      %1552 = vmatpush1.xpose.msra.mxu0 0.0
      %1553 = vmatprep.subr.mxu0 0.0
      %1554 = vmatpush1.xpose.msra.mxu0 0.0
      %1555 = vmatprep.subr.mxu0 0.0
      %1556 = vmatpush1.xpose.msra.mxu0 0.0
      %1557 = vmatprep.subr.mxu0 0.0
      %1558 = vmatpush1.xpose.msra.mxu0 0.0
      %1559 = vmatprep.subr.mxu0 0.0
      %1560 = vmatpush1.xpose.msra.mxu0 0.0
      %1561 = vmatprep.subr.mxu0 0.0
      %1562 = vmatpush1.xpose.msra.mxu0 0.0
      %1563 = vmatprep.subr.mxu0 0.0
      %1564 = vmatpush1.xpose.msra.mxu0 0.0
      %1565 = vmatprep.subr.mxu0 0.0
      %1566 = vmatpush1.xpose.msra.mxu0 0.0
      %1567 = vmatprep.subr.mxu0 0.0
      %1568 = vmatpush1.xpose.msra.mxu0 0.0
      %1569 = vmatprep.subr.mxu0 0.0
      %1570 = vmatpush1.xpose.msra.mxu0 0.0
      %1571 = vmatprep.subr.mxu0 0.0
      %1572 = vmatpush1.xpose.msra.mxu0 0.0
      %1573 = vmatprep.subr.mxu0 0.0
      %1574 = vmatpush1.xpose.msra.mxu0 0.0
      %1575 = vmatprep.subr.mxu0 0.0
      %1576 = vmatpush1.xpose.msra.mxu0 0.0
      %1577 = vmatprep.subr.mxu0 0.0
      %1578 = vmatpush1.xpose.msra.mxu0 0.0
      %1579 = vmatprep.subr.mxu0 0.0
      %1580 = vmatpush1.xpose.msra.mxu0 0.0
      %1581 = vmatprep.subr.mxu0 0.0
      %1582 = vmatpush1.xpose.msra.mxu0 0.0
      %1583 = vmatprep.subr.mxu0 0.0
      %1584 = vmatpush1.xpose.msra.mxu0 0.0
      %1585 = vmatprep.subr.mxu0 0.0
      %1586 = vmatpush1.xpose.msra.mxu0 0.0
      %1587 = vmatprep.subr.mxu0 0.0
      %1588 = vmatpush1.xpose.msra.mxu0 0.0
      %1589 = vmatprep.subr.mxu0 0.0
      %1590 = vmatpush1.xpose.msra.mxu0 0.0
      %1591 = vmatprep.subr.mxu0 0.0
      %1592 = vmatpush1.xpose.msra.mxu0 0.0
      %1593 = vmatprep.subr.mxu0 0.0
      %1594 = vmatpush1.xpose.msra.mxu0 0.0
      %1595 = vmatprep.subr.mxu0 0.0
      %1596 = vmatpush1.xpose.msra.mxu0 0.0
      %1597 = vmatprep.subr.mxu0 0.0
      %1598 = vmatpush1.xpose.msra.mxu0 0.0
      %1599 = vmatprep.subr.mxu0 0.0
      %1600 = vmatpush1.xpose.msra.mxu0 0.0
      %1601 = vmatprep.subr.mxu0 0.0
      %1602 = vmatpush1.xpose.msra.mxu0 0.0
      %1603 = vmatprep.subr.mxu0 0.0
      %1604 = vmatpush1.xpose.msra.mxu0 0.0
      %1605 = vmatprep.mubr.f32.mxu0 0.0
      %1606 = vmatmul.mubr.f32.gmra.mrb[0].mxu0 %v1537
      %v1607 = vpop.f32.mrb[0].mxu0
      %v1608 = vadd.f32 0.0, %v1607
      %v1609 = vpop.f32.mrb[0].mxu0
      %1610 = vdwg.mxu0
      %v1611 = vmul.f32 %v1608, 0.35355338
      %v1612 = vadd.f32 %v1611, %v889
      %v1613 = vsel %vm809, %v1612, -inf
      %1614 = vmax.xlane.f32.xlu0 %v1613
      %v1615 = vpop.xlane.xlu0 %1614
      %v1616 = vsub.f32 %v1612, %v1615
      %v1617 = vmul.f32 %v1616, 1.442695
      %v1618 = vpow.pop %v1617
      %v1619 = vsel %vm809, %v1618, 0.0
      %1620 = vadd.xlane.f32.xlu0 %v1619
      %v1621 = vpop.xlane.xlu0 %1620
      %v1622 = vrcp.pop %v1621
      %v1623 = vmul.f32 %v1618, %v1622
      %1624 = vrot.lane.b32.xlu0 %v803, 40
      %v1625 = vpop.permute.xlu0 %1624
      %v1628 = vsel %vm809, %v1623, 0
      %1630 = vmatprep.subr.mxu0 0.0
      %1631 = vmatpush1.msra.mxu0 %v1625
      %1632 = vmatprep.subr.mxu0 0.0
      %1633 = vmatpush1.msra.mxu0 0.0
      %1634 = vmatprep.subr.mxu0 0.0
      %1635 = vmatpush1.msra.mxu0 0.0
      %1636 = vmatprep.subr.mxu0 0.0
      %1637 = vmatpush1.msra.mxu0 0.0
      %1638 = vmatprep.subr.mxu0 0.0
      %1639 = vmatpush1.msra.mxu0 0.0
      %1640 = vmatprep.subr.mxu0 0.0
      %1641 = vmatpush1.msra.mxu0 0.0
      %1642 = vmatprep.subr.mxu0 0.0
      %1643 = vmatpush1.msra.mxu0 0.0
      %1644 = vmatprep.subr.mxu0 0.0
      %1645 = vmatpush1.msra.mxu0 0.0
      %1646 = vmatprep.subr.mxu0 0.0
      %1647 = vmatpush1.msra.mxu0 0.0
      %1648 = vmatprep.subr.mxu0 0.0
      %1649 = vmatpush1.msra.mxu0 0.0
      %1650 = vmatprep.subr.mxu0 0.0
      %1651 = vmatpush1.msra.mxu0 0.0
      %1652 = vmatprep.subr.mxu0 0.0
      %1653 = vmatpush1.msra.mxu0 0.0
      %1654 = vmatprep.subr.mxu0 0.0
      %1655 = vmatpush1.msra.mxu0 0.0
      %1656 = vmatprep.subr.mxu0 0.0
      %1657 = vmatpush1.msra.mxu0 0.0
      %1658 = vmatprep.subr.mxu0 0.0
      %1659 = vmatpush1.msra.mxu0 0.0
      %1660 = vmatprep.subr.mxu0 0.0
      %1661 = vmatpush1.msra.mxu0 0.0
      %1662 = vmatprep.subr.mxu0 0.0
      %1663 = vmatpush1.msra.mxu0 0.0
      %1664 = vmatprep.subr.mxu0 0.0
      %1665 = vmatpush1.msra.mxu0 0.0
      %1666 = vmatprep.subr.mxu0 0.0
      %1667 = vmatpush1.msra.mxu0 0.0
      %1668 = vmatprep.subr.mxu0 0.0
      %1669 = vmatpush1.msra.mxu0 0.0
      %1670 = vmatprep.subr.mxu0 0.0
      %1671 = vmatpush1.msra.mxu0 0.0
      %1672 = vmatprep.subr.mxu0 0.0
      %1673 = vmatpush1.msra.mxu0 0.0
      %1674 = vmatprep.subr.mxu0 0.0
      %1675 = vmatpush1.msra.mxu0 0.0
      %1676 = vmatprep.subr.mxu0 0.0
      %1677 = vmatpush1.msra.mxu0 0.0
      %1678 = vmatprep.subr.mxu0 0.0
      %1679 = vmatpush1.msra.mxu0 0.0
      %1680 = vmatprep.subr.mxu0 0.0
      %1681 = vmatpush1.msra.mxu0 0.0
      %1682 = vmatprep.subr.mxu0 0.0
      %1683 = vmatpush1.msra.mxu0 0.0
      %1684 = vmatprep.subr.mxu0 0.0
      %1685 = vmatpush1.msra.mxu0 0.0
      %1686 = vmatprep.subr.mxu0 0.0
      %1687 = vmatpush1.msra.mxu0 0.0
      %1688 = vmatprep.subr.mxu0 0.0
      %1689 = vmatpush1.msra.mxu0 0.0
      %1690 = vmatprep.subr.mxu0 0.0
      %1691 = vmatpush1.msra.mxu0 0.0
      %1692 = vmatprep.subr.mxu0 0.0
      %1693 = vmatpush1.msra.mxu0 0.0
      %1694 = vmatprep.mubr.f32.mxu0 0.0
      %1695 = vmatmul.mubr.f32.gmra.mrb[0].mxu0 %v1628
      %v1696 = vpop.f32.mrb[0].mxu0
      %v1697 = vadd.f32 0.0, %v1696
      %v1698 = vpop.f32.mrb[0].mxu0
      %1699 = vdwg.mxu0
      %v1701 = vsel %vm809, %v1697, 0
      %1703 = vmatprep.subr.mxu0 0.0
      %1704 = vmatpush1.msra.mxu0 %v698
      %1705 = vmatprep.subr.mxu0 0.0
      %1706 = vmatpush1.msra.mxu0 0.0
      %1707 = vmatprep.subr.mxu0 0.0
      %1708 = vmatpush1.msra.mxu0 0.0
      %1709 = vmatprep.subr.mxu0 0.0
      %1710 = vmatpush1.msra.mxu0 0.0
      %1711 = vmatprep.subr.mxu0 0.0
      %1712 = vmatpush1.msra.mxu0 0.0
      %1713 = vmatprep.subr.mxu0 0.0
      %1714 = vmatpush1.msra.mxu0 0.0
      %1715 = vmatprep.subr.mxu0 0.0
      %1716 = vmatpush1.msra.mxu0 0.0
      %1717 = vmatprep.subr.mxu0 0.0
      %1718 = vmatpush1.msra.mxu0 0.0
      %1719 = vmatprep.subr.mxu0 0.0
      %1720 = vmatpush1.msra.mxu0 0.0
      %1721 = vmatprep.subr.mxu0 0.0
      %1722 = vmatpush1.msra.mxu0 0.0
      %1723 = vmatprep.subr.mxu0 0.0
      %1724 = vmatpush1.msra.mxu0 0.0
      %1725 = vmatprep.subr.mxu0 0.0
      %1726 = vmatpush1.msra.mxu0 0.0
      %1727 = vmatprep.subr.mxu0 0.0
      %1728 = vmatpush1.msra.mxu0 0.0
      %1729 = vmatprep.subr.mxu0 0.0
      %1730 = vmatpush1.msra.mxu0 0.0
      %1731 = vmatprep.subr.mxu0 0.0
      %1732 = vmatpush1.msra.mxu0 0.0
      %1733 = vmatprep.subr.mxu0 0.0
      %1734 = vmatpush1.msra.mxu0 0.0
      %1735 = vmatprep.subr.mxu0 0.0
      %1736 = vmatpush1.msra.mxu0 0.0
      %1737 = vmatprep.subr.mxu0 0.0
      %1738 = vmatpush1.msra.mxu0 0.0
      %1739 = vmatprep.subr.mxu0 0.0
      %1740 = vmatpush1.msra.mxu0 0.0
      %1741 = vmatprep.subr.mxu0 0.0
      %1742 = vmatpush1.msra.mxu0 0.0
      %1743 = vmatprep.subr.mxu0 0.0
      %1744 = vmatpush1.msra.mxu0 0.0
      %1745 = vmatprep.subr.mxu0 0.0
      %1746 = vmatpush1.msra.mxu0 0.0
      %1747 = vmatprep.subr.mxu0 0.0
      %1748 = vmatpush1.msra.mxu0 0.0
      %1749 = vmatprep.subr.mxu0 0.0
      %1750 = vmatpush1.msra.mxu0 0.0
      %1751 = vmatprep.subr.mxu0 0.0
      %1752 = vmatpush1.msra.mxu0 0.0
      %1753 = vmatprep.subr.mxu0 0.0
      %1754 = vmatpush1.msra.mxu0 0.0
      %1755 = vmatprep.subr.mxu0 0.0
      %1756 = vmatpush1.msra.mxu0 0.0
      %1757 = vmatprep.subr.mxu0 0.0
      %1758 = vmatpush1.msra.mxu0 0.0
      %1759 = vmatprep.subr.mxu0 0.0
      %1760 = vmatpush1.msra.mxu0 0.0
      %1761 = vmatprep.subr.mxu0 0.0
      %1762 = vmatpush1.msra.mxu0 0.0
      %1763 = vmatprep.subr.mxu0 0.0
      %1764 = vmatpush1.msra.mxu0 0.0
      %1765 = vmatprep.subr.mxu0 0.0
      %1766 = vmatpush1.msra.mxu0 0.0
      %1767 = vmatprep.mubr.f32.mxu0 0.0
      %1768 = vmatmul.mubr.f32.gmra.mrb[0].mxu0 %v1701
      %v1769 = vpop.f32.mrb[0].mxu0
      %v1770 = vadd.f32 0.0, %v1769
      %v1771 = vpop.f32.mrb[0].mxu0
      %1772 = vdwg.mxu0
      %v1773 = vadd.f32 %v1532, %v1770
      %v1775 = vlaneseq
      %v1776 = vshrl.u32 %v1775, 7
      %v1777 = vsub.s32 0, %v1776
      %v1778 = vrot.slane %v699, %v1777
      %v1780 = vadd.f32 %v1773, %v1778
      %v1781 = vadd.f32 %v1780, %v688
      %v1782 = vsel %vm732, %v1781, 0.0
      %1783 = vadd.xlane.f32.xlu0 %v1782
      %v1784 = vpop.xlane.xlu0 %1783
      %v1785 = vrcp.pop 32.0
      %v1786 = vmul.f32 %v1784, %v1785
      %v1787 = vsub.f32 %v1781, %v1786
      %v1788 = vmul.f32 %v1787, %v1787
      %v1789 = vsel %vm732, %v1788, 0.0
      %1790 = vadd.xlane.f32.xlu0 %v1789
      %v1791 = vpop.xlane.xlu0 %1790
      %v1792 = vmul.f32 %v1791, %v1785
      %v1793 = vadd.f32 %v1792, 1e-12
      %v1794 = vrsqrt.pop %v1793
      %v1795 = vmul.f32 %v1787, %v1794
      %v1797 = vlaneseq
      %v1798 = vshrl.u32 %v1797, 7
      %v1799 = vsub.s32 0, %v1798
      %v1800 = vrot.slane %v700, %v1799
      %v1802 = vmul.f32 %v1795, %v1800
      %v1804 = vlaneseq
      %v1805 = vshrl.u32 %v1804, 7
      %v1806 = vsub.s32 0, %v1805
      %v1807 = vrot.slane %v701, %v1806
      %v1809 = vadd.f32 %v1802, %v1807
      %v1811 = vlaneseq
      %v1812 = vshrl.u32 %v1811, 7
      %v1813 = vsub.s32 0, %v1812
      %v1814 = vrot.slane %v706, %v1813
      %v1817 = vsel %vm732, %v1809, 0
      %1819 = vmatprep.subr.mxu0 0.0
      %1820 = vmatpush1.msra.mxu0 %v702
      %1821 = vmatprep.subr.mxu0 0.0
      %1822 = vmatpush1.msra.mxu0 %v703
      %1823 = vmatprep.subr.mxu0 0.0
      %1824 = vmatpush1.msra.mxu0 %v704
      %1825 = vmatprep.subr.mxu0 0.0
      %1826 = vmatpush1.msra.mxu0 %v705
      %1827 = vmatprep.subr.mxu0 0.0
      %1828 = vmatpush1.msra.mxu0 0.0
      %1829 = vmatprep.subr.mxu0 0.0
      %1830 = vmatpush1.msra.mxu0 0.0
      %1831 = vmatprep.subr.mxu0 0.0
      %1832 = vmatpush1.msra.mxu0 0.0
      %1833 = vmatprep.subr.mxu0 0.0
      %1834 = vmatpush1.msra.mxu0 0.0
      %1835 = vmatprep.subr.mxu0 0.0
      %1836 = vmatpush1.msra.mxu0 0.0
      %1837 = vmatprep.subr.mxu0 0.0
      %1838 = vmatpush1.msra.mxu0 0.0
      %1839 = vmatprep.subr.mxu0 0.0
      %1840 = vmatpush1.msra.mxu0 0.0
      %1841 = vmatprep.subr.mxu0 0.0
      %1842 = vmatpush1.msra.mxu0 0.0
      %1843 = vmatprep.subr.mxu0 0.0
      %1844 = vmatpush1.msra.mxu0 0.0
      %1845 = vmatprep.subr.mxu0 0.0
      %1846 = vmatpush1.msra.mxu0 0.0
      %1847 = vmatprep.subr.mxu0 0.0
      %1848 = vmatpush1.msra.mxu0 0.0
      %1849 = vmatprep.subr.mxu0 0.0
      %1850 = vmatpush1.msra.mxu0 0.0
      %1851 = vmatprep.subr.mxu0 0.0
      %1852 = vmatpush1.msra.mxu0 0.0
      %1853 = vmatprep.subr.mxu0 0.0
      %1854 = vmatpush1.msra.mxu0 0.0
      %1855 = vmatprep.subr.mxu0 0.0
      %1856 = vmatpush1.msra.mxu0 0.0
      %1857 = vmatprep.subr.mxu0 0.0
      %1858 = vmatpush1.msra.mxu0 0.0
      %1859 = vmatprep.subr.mxu0 0.0
      %1860 = vmatpush1.msra.mxu0 0.0
      %1861 = vmatprep.subr.mxu0 0.0
      %1862 = vmatpush1.msra.mxu0 0.0
      %1863 = vmatprep.subr.mxu0 0.0
      %1864 = vmatpush1.msra.mxu0 0.0
      %1865 = vmatprep.subr.mxu0 0.0
      %1866 = vmatpush1.msra.mxu0 0.0
      %1867 = vmatprep.subr.mxu0 0.0
      %1868 = vmatpush1.msra.mxu0 0.0
      %1869 = vmatprep.subr.mxu0 0.0
      %1870 = vmatpush1.msra.mxu0 0.0
      %1871 = vmatprep.subr.mxu0 0.0
      %1872 = vmatpush1.msra.mxu0 0.0
      %1873 = vmatprep.subr.mxu0 0.0
      %1874 = vmatpush1.msra.mxu0 0.0
      %1875 = vmatprep.subr.mxu0 0.0
      %1876 = vmatpush1.msra.mxu0 0.0
      %1877 = vmatprep.subr.mxu0 0.0
      %1878 = vmatpush1.msra.mxu0 0.0
      %1879 = vmatprep.subr.mxu0 0.0
      %1880 = vmatpush1.msra.mxu0 0.0
      %1881 = vmatprep.subr.mxu0 0.0
      %1882 = vmatpush1.msra.mxu0 0.0
      %1883 = vmatprep.mubr.f32.mxu0 0.0
      %1884 = vmatmul.mubr.f32.gmra.mrb[0].mxu0 %v1817
      %v1885 = vpop.f32.mrb[0].mxu0
      %v1886 = vadd.f32 %v1814, %v1885
      %v1887 = vpop.f32.mrb[0].mxu0
      %1888 = vdwg.mxu0
      %v1889 = vmul.f32 %v1886, %v1886
      %v1890 = vmul.f32 %v1886, %v1889
      %v1891 = vmul.f32 %v1890, 0.044715
      %v1892 = vadd.f32 %v1886, %v1891
      %v1893 = vmul.f32 %v1892, 0.7978846
      %v1894 = vtanh.pop %v1893
      %v1895 = vadd.f32 %v1894, 1.0
      %v1896 = vmul.f32 %v1895, 0.5
      %v1897 = vmul.f32 %v1886, %v1896
      %v1899 = vlaneseq
      %v1900 = vshrl.u32 %v1899, 7
      %v1901 = vsub.s32 0, %v1900
      %v1902 = vrot.slane %v723, %v1901
      %1904 = vmatprep.subr.mxu0 0.0
      %1905 = vmatpush1.msra.mxu0 %v707
      %1906 = vmatprep.subr.mxu0 0.0
      %1907 = vmatpush1.msra.mxu0 %v708
      %1908 = vmatprep.subr.mxu0 0.0
      %1909 = vmatpush1.msra.mxu0 %v709
      %1910 = vmatprep.subr.mxu0 0.0
      %1911 = vmatpush1.msra.mxu0 %v710
      %1912 = vmatprep.subr.mxu0 0.0
      %1913 = vmatpush1.msra.mxu0 %v711
      %1914 = vmatprep.subr.mxu0 0.0
      %1915 = vmatpush1.msra.mxu0 %v712
      %1916 = vmatprep.subr.mxu0 0.0
      %1917 = vmatpush1.msra.mxu0 %v713
      %1918 = vmatprep.subr.mxu0 0.0
      %1919 = vmatpush1.msra.mxu0 %v714
      %1920 = vmatprep.subr.mxu0 0.0
      %1921 = vmatpush1.msra.mxu0 %v715
      %1922 = vmatprep.subr.mxu0 0.0
      %1923 = vmatpush1.msra.mxu0 %v716
      %1924 = vmatprep.subr.mxu0 0.0
      %1925 = vmatpush1.msra.mxu0 %v717
      %1926 = vmatprep.subr.mxu0 0.0
      %1927 = vmatpush1.msra.mxu0 %v718
      %1928 = vmatprep.subr.mxu0 0.0
      %1929 = vmatpush1.msra.mxu0 %v719
      %1930 = vmatprep.subr.mxu0 0.0
      %1931 = vmatpush1.msra.mxu0 %v720
      %1932 = vmatprep.subr.mxu0 0.0
      %1933 = vmatpush1.msra.mxu0 %v721
      %1934 = vmatprep.subr.mxu0 0.0
      %1935 = vmatpush1.msra.mxu0 %v722
      %1936 = vmatprep.subr.mxu0 0.0
      %1937 = vmatpush1.msra.mxu0 0.0
      %1938 = vmatprep.subr.mxu0 0.0
      %1939 = vmatpush1.msra.mxu0 0.0
      %1940 = vmatprep.subr.mxu0 0.0
      %1941 = vmatpush1.msra.mxu0 0.0
      %1942 = vmatprep.subr.mxu0 0.0
      %1943 = vmatpush1.msra.mxu0 0.0
      %1944 = vmatprep.subr.mxu0 0.0
      %1945 = vmatpush1.msra.mxu0 0.0
      %1946 = vmatprep.subr.mxu0 0.0
      %1947 = vmatpush1.msra.mxu0 0.0
      %1948 = vmatprep.subr.mxu0 0.0
      %1949 = vmatpush1.msra.mxu0 0.0
      %1950 = vmatprep.subr.mxu0 0.0
      %1951 = vmatpush1.msra.mxu0 0.0
      %1952 = vmatprep.subr.mxu0 0.0
      %1953 = vmatpush1.msra.mxu0 0.0
      %1954 = vmatprep.subr.mxu0 0.0
      %1955 = vmatpush1.msra.mxu0 0.0
      %1956 = vmatprep.subr.mxu0 0.0
      %1957 = vmatpush1.msra.mxu0 0.0
      %1958 = vmatprep.subr.mxu0 0.0
      %1959 = vmatpush1.msra.mxu0 0.0
      %1960 = vmatprep.subr.mxu0 0.0
      %1961 = vmatpush1.msra.mxu0 0.0
      %1962 = vmatprep.subr.mxu0 0.0
      %1963 = vmatpush1.msra.mxu0 0.0
      %1964 = vmatprep.subr.mxu0 0.0
      %1965 = vmatpush1.msra.mxu0 0.0
      %1966 = vmatprep.subr.mxu0 0.0
      %1967 = vmatpush1.msra.mxu0 0.0
      %1968 = vmatprep.mubr.f32.mxu0 0.0
      %1969 = vmatmul.mubr.f32.gmra.mrb[0].mxu0 %v1897
      %v1970 = vpop.f32.mrb[0].mxu0
      %v1971 = vadd.f32 %v1902, %v1970
      %v1972 = vpop.f32.mrb[0].mxu0
      %1973 = vdwg.mxu0
      %v1974 = vadd.f32 %v1971, %v1809
      %v1975 = vsel %vm732, %v1974, 0.0
      %1976 = vadd.xlane.f32.xlu0 %v1975
      %v1977 = vpop.xlane.xlu0 %1976
      %v1978 = vmul.f32 %v1977, %v1785
      %v1979 = vsub.f32 %v1974, %v1978
      %v1980 = vmul.f32 %v1979, %v1979
      %v1981 = vsel %vm732, %v1980, 0.0
      %1982 = vadd.xlane.f32.xlu0 %v1981
      %v1983 = vpop.xlane.xlu0 %1982
      %v1984 = vmul.f32 %v1983, %v1785
      %v1985 = vadd.f32 %v1984, 1e-12
      %v1986 = vrsqrt.pop %v1985
      %v1987 = vmul.f32 %v1979, %v1986
      %v1989 = vlaneseq
      %v1990 = vshrl.u32 %v1989, 7
      %v1991 = vsub.s32 0, %v1990
      %v1992 = vrot.slane %v724, %v1991
      %v1994 = vmul.f32 %v1987, %v1992
      %v1996 = vlaneseq
      %v1997 = vshrl.u32 %v1996, 7
      %v1998 = vsub.s32 0, %v1997
      %v1999 = vrot.slane %v725, %v1998
      %v2001 = vadd.f32 %v1994, %v1999
      %2002 = vst.msk [vmem:[%s680] sm:$0xff] %vm732, %v2001
      %p2003 = scmp.lt.s32.totalorder %s29, 1
      %s2004 = scalar_select %p2003, %s29, 1
      %s2005 = smul.addr %s2004, 8
      %s2006 = scalar_lea.vmem %s14, %s2005
      // Predicated region
      $region81: #{loss_fn.10} parent=75 // pred_check
        %p2007 = pneg %p419
      $region82: #{loss_fn.10} parent=75 // pred_check_branch
        %2009 = sbr.rel (%p2007) target = $region84
      $region83: #{loss_fn.10} parent=75 // pred_region
        _
      $region84: #{loss_fn.10} parent=75 // pred_fallthru
        _
    $region76: #{loss_fn.10} parent=5 // pred_fallthru
      _
    %p2010 = scmp.le.s32.totalorder 2, %s20
    // Predicated region
    $region85: #{loss_fn.10} parent=5 // pred_check
      %p2011 = pneg %p2010
    $region86: #{loss_fn.10} parent=5 // pred_check_branch
      %2013 = sbr.rel (%p2011) target = $region88
    $region87: #{loss_fn.10} parent=5 // pred_region
      %s2014 = ssub.s32 %s20, 2
      // Predicated region
      $region89: #{loss_fn.10} parent=87 // pred_check
        %p2015 = pneg %p425
      $region90: #{loss_fn.10} parent=87 // pred_check_branch
        %2017 = sbr.rel (%p2015) target = $region92
      $region91: #{loss_fn.10} parent=87 // pred_region
        %p2018 = scmp.lt.s32.totalorder %s31, 1
        %s2019 = scalar_select %p2018, %s31, 1
        %s2020 = smul.addr %s2019, 8
        %s2021 = scalar_lea.vmem %s14, %s2020
      $region92: #{loss_fn.10} parent=87 // pred_fallthru
        _
    $region88: #{loss_fn.10} parent=5 // pred_fallthru
      _
  $region6: #{loss_fn.10} parent=0 // loop_footer
    %s24 = sadd.s32 1, %s20
  $region7: #{loss_fn.10} parent=0 // loop_footer_branch
    %19 = sbr.rel target = $region3
  $region8: #{loss_fn.10} parent=0 // loop_exit
    _

</llo_original>
